<compile_context>
chip_gen: v7x
topology: tpu7x:2x2x1
jax: 0.10.0
libtpu: 0.0.40
codegen_flags: <defaults>
</compile_context>

<pallas_src>
import functools

import jax
import jax.numpy as jnp
from jax.experimental import pallas as pl
from jax.experimental.pallas import tpu as pltpu

EPS = 1e-5
NEG_SLOPE = 0.2
LANES = 128
WPAD = 8  # left/right W margin so the big interior store is sublane-aligned


def _rup(c, m=LANES):
    return ((c + m - 1) // m) * m


def _vmem_limit_bytes():
    """Per-generation scoped-VMEM budget (v5e/v6e: ~100 MiB, v7x: ~48 MiB)."""
    try:
        cap = int(getattr(pltpu.get_tpu_info(), "vmem_capacity_bytes", 0) or 0)
    except Exception:
        cap = 0
    if cap <= 0:
        return 64 * 1024 * 1024
    return int(min(max(cap - (16 << 20), 32 << 20), 100 << 20))


_VMEM_LIMIT = _vmem_limit_bytes()


def _cparams(semantics):
    return pltpu.CompilerParams(
        dimension_semantics=semantics,
        vmem_limit_bytes=_VMEM_LIMIT,
    )


def _leaky(v):
    return jnp.where(v >= 0, v, NEG_SLOPE * v)


# ----------------------------- Pallas kernels ------------------------------ #

def conv_stats_kernel(xp_ref, w_ref, y_ref, stats_ref, *, k, h, w, wbase):
    """KxK conv (stride 1) of one image as k*k shifted bf16 MXU matmuls with f32
    accumulation. Emits the raw conv output (bf16) plus this image's per-channel
    sum / sum-of-squares partials (summed over images in a tiny XLA op)."""
    cout = y_ref.shape[-1]
    # One aligned bf16 load, upcast once; all shifted slices happen on the f32 value
    # (W shifts hoisted out of the ky loop: k slices instead of k*k).
    xf = xp_ref[0].astype(jnp.float32)                        # (hp, wp, cin_p)
    cols = [xf[:, wbase + kx:wbase + kx + w, :] for kx in range(k)]

    acc = jnp.zeros((h * w, cout), jnp.float32)
    for ky in range(k):
        for kx in range(k):
            patch = cols[kx][ky:ky + h].reshape(h * w, -1).astype(jnp.bfloat16)
            acc = acc + jnp.dot(patch, w_ref[ky * k + kx],
                                preferred_element_type=jnp.float32)

    y_ref[0] = acc.astype(y_ref.dtype)                        # bf16 writeback
    stats_ref[0, 0:1, :] = jnp.sum(acc, axis=0, keepdims=True)
    stats_ref[0, 1:2, :] = jnp.sum(acc * acc, axis=0, keepdims=True)


def bn_act_pad_kernel(y_ref, scale_ref, shift_ref, o_ref, *, pad):
    """Folded BN (one FMA) + LeakyReLU; writes only the zero halo strips needed by the
    next conv and stores the interior at a sublane-aligned W offset (WPAD)."""
    v = _leaky(y_ref[0].astype(jnp.float32) * scale_ref[...] + shift_ref[...])
    h, w = v.shape[0], v.shape[1]
    wp_tot = o_ref.shape[2]
    cp = o_ref.shape[3]
    zdt = o_ref.dtype
    if pad:
        zrow = jnp.zeros((pad, wp_tot, cp), zdt)
        o_ref[0, 0:pad, :, :] = zrow                          # top halo rows
        o_ref[0, pad + h:2 * pad + h, :, :] = zrow            # bottom halo rows
    zcol = jnp.zeros((h, WPAD, cp), zdt)
    o_ref[0, pad:pad + h, 0:WPAD, :] = zcol                   # left margin (aligned)
    o_ref[0, pad:pad + h, WPAD + w:wp_tot, :] = zcol          # right margin (aligned)
    o_ref[0, pad:pad + h, WPAD:WPAD + w, :] = v.astype(zdt)   # aligned interior store


def z_stats_kernel(ya_ref, yb_ref, sa_ref, fa_ref, sb_ref, fb_ref, o_ref):
    """Per-image partial stats of z = LeakyReLU(BN(chain)) + BN(down)."""
    a = _leaky(ya_ref[0].astype(jnp.float32) * sa_ref[...] + fa_ref[...])
    z = a + yb_ref[0].astype(jnp.float32) * sb_ref[...] + fb_ref[...]
    o_ref[0, 0:1, :] = jnp.sum(z, axis=0, keepdims=True)
    o_ref[0, 1:2, :] = jnp.sum(z * z, axis=0, keepdims=True)


def final_pool_kernel(ya_ref, yb_ref, sa_ref, fa_ref, sb_ref, fb_ref,
                      sz_ref, fz_ref, o_ref):
    """Residual add + final BN + LeakyReLU + AvgPool2d(2), fused per image.
    Inputs have even/odd W columns packed on the lane axis (2*cp lanes), so the 2x2
    pool needs only lane-aligned slices and a leading-dim row-pair add."""
    cp = o_ref.shape[-1]
    sa, fa = sa_ref[...], fa_ref[...]
    sb, fb = sb_ref[...], fb_ref[...]
    sz, fz = sz_ref[...], fz_ref[...]

    def z_of(col):                                             # col 0: even W, 1: odd W
        lo = col * cp
        ya = ya_ref[0, :, :, lo:lo + cp].astype(jnp.float32)   # (h, w/2, cp)
        yb = yb_ref[0, :, :, lo:lo + cp].astype(jnp.float32)
        a = _leaky(ya * sa + fa)
        z = a + yb * sb + fb
        return _leaky(z * sz + fz)

    s = z_of(0) + z_of(1)                                      # width-pair sum
    ho, wo = s.shape[0] // 2, s.shape[1]
    s = s.reshape(ho, 2, wo, cp)                               # leading-dim split only
    o_ref[0] = (0.25 * (s[:, 0, :, :] + s[:, 1, :, :])).astype(o_ref.dtype)


# ------------------------------ pallas_call glue ---------------------------- #

def _conv_stats(xp, wmat, *, k, h, w, wbase):
    n, hp, wp, cin_p = xp.shape
    kk, _, cout_p = wmat.shape
    hw = h * w
    return pl.pallas_call(
        functools.partial(conv_stats_kernel, k=k, h=h, w=w, wbase=wbase),
        grid=(n,),
        in_specs=[
            pl.BlockSpec((1, hp, wp, cin_p), lambda i: (i, 0, 0, 0)),
            pl.BlockSpec((kk, cin_p, cout_p), lambda i: (0, 0, 0)),
        ],
        out_specs=(
            pl.BlockSpec((1, hw, cout_p), lambda i: (i, 0, 0)),
            pl.BlockSpec((1, 2, cout_p), lambda i: (i, 0, 0)),     # per-image partials
        ),
        out_shape=(
            jax.ShapeDtypeStruct((n, hw, cout_p), jnp.bfloat16),
            jax.ShapeDtypeStruct((n, 2, cout_p), jnp.float32),
        ),
        compiler_params=_cparams(("parallel",)),
    )(xp, wmat)


def _bn_act_pad(y4, scale, shift, *, pad):
    n, h, w, cp = y4.shape
    hp, wp = h + 2 * pad, w + 2 * WPAD
    vec = pl.BlockSpec((1, cp), lambda i: (0, 0))
    return pl.pallas_call(
        functools.partial(bn_act_pad_kernel, pad=pad),
        grid=(n,),
        in_specs=[pl.BlockSpec((1, h, w, cp), lambda i: (i, 0, 0, 0)), vec, vec],
        out_specs=pl.BlockSpec((1, hp, wp, cp), lambda i: (i, 0, 0, 0)),
        out_shape=jax.ShapeDtypeStruct((n, hp, wp, cp), jnp.bfloat16),
        compiler_params=_cparams(("parallel",)),
    )(y4, scale, shift)


def _z_stats(ya, yb, sa, fa, sb, fb):
    n, hw, cp = ya.shape
    vec = pl.BlockSpec((1, cp), lambda i: (0, 0))
    big = pl.BlockSpec((1, hw, cp), lambda i: (i, 0, 0))
    return pl.pallas_call(
        z_stats_kernel,
        grid=(n,),
        in_specs=[big, big, vec, vec, vec, vec],
        out_specs=pl.BlockSpec((1, 2, cp), lambda i: (i, 0, 0)),
        out_shape=jax.ShapeDtypeStruct((n, 2, cp), jnp.float32),
        compiler_params=_cparams(("parallel",)),
    )(ya, yb, sa, fa, sb, fb)


def _final_pool(ya2, yb2, sa, fa, sb, fb, sz, fz):
    n, h, wo, c2 = ya2.shape
    cp = c2 // 2
    ho = h // 2
    vec = pl.BlockSpec((1, cp), lambda i: (0, 0))
    img = pl.BlockSpec((1, h, wo, c2), lambda i: (i, 0, 0, 0))
    return pl.pallas_call(
        final_pool_kernel,
        grid=(n,),
        in_specs=[img, img, vec, vec, vec, vec, vec, vec],
        out_specs=pl.BlockSpec((1, ho, wo, cp), lambda i: (i, 0, 0, 0)),
        out_shape=jax.ShapeDtypeStruct((n, ho, wo, cp), jnp.float32),
        compiler_params=_cparams(("parallel",)),
    )(ya2, yb2, sa, fa, sb, fb, sz, fz)


# --------------------------- parameter packing ------------------------------ #

def _pack_conv_weight(w, cin_p, cout_p):
    """(Cout, Cin, K, K) torch layout -> (K*K, Cin_p, Cout_p) bf16, zero padded."""
    cout, cin, kh, kw = w.shape
    wm = jnp.transpose(w, (2, 3, 1, 0)).reshape(kh * kw, cin, cout)
    wm = jnp.pad(wm, ((0, 0), (0, cin_p - cin), (0, cout_p - cout)))
    return wm.astype(jnp.bfloat16)


# ------------------------------ forward pass -------------------------------- #

def down_res_layer(x_nchw, params, kernel_size_list):
    kernel_size_list = tuple(kernel_size_list)
    for k in kernel_size_list:
        assert k % 2 == 1, "only odd ('same' padding) kernel sizes supported"
    n, cin, h, w = x_nchw.shape
    assert h % 2 == 0 and w % 2 == 0, "AvgPool2d(2) path assumes even H, W"
    assert w % 8 == 0, "W must be a multiple of 8 (TPU sublane tiling)"
    cout = params["down"]["w"].shape[0]
    cin_p, cout_p = _rup(cin), _rup(cout)
    inv_count = 1.0 / float(n * h * w)

    def bn_affine(stats, gamma, beta):
        """Fold batch-stat BN into one per-channel FMA (computed once per pass)."""
        mean = stats[0] * inv_count
        var = jnp.maximum(stats[1] * inv_count - mean * mean, 0.0)   # biased variance
        g = jnp.pad(gamma, (0, cout_p - cout))
        b = jnp.pad(beta, (0, cout_p - cout))
        scale = g * jax.lax.rsqrt(var + EPS)
        shift = b - mean * scale
        return (scale.reshape(1, cout_p).astype(jnp.float32),
                shift.reshape(1, cout_p).astype(jnp.float32))

    # NCHW -> NHWC bf16, channels zero-padded to the lane width.
    x_bf = jnp.transpose(x_nchw, (0, 2, 3, 1))
    x_bf = jnp.pad(x_bf, ((0, 0), (0, 0), (0, 0), (0, cin_p - cin))).astype(jnp.bfloat16)

    # Haloed input for conv #0 (H halo = pad, W margins = WPAD for aligned stores/reads).
    p0 = (kernel_size_list[0] - 1) // 2
    cur = jnp.pad(x_bf, ((0, 0), (p0, p0), (WPAD, WPAD), (0, 0)))
    cur_cin_p = cin_p

    # conv chain: [Conv -> BN -> LeakyReLU] * len(kernel_size_list).
    # Conv biases are not applied: they cancel exactly in the batch-stat BN.
    y = sa = fa = None
    nconv = len(kernel_size_list)
    for i, k in enumerate(kernel_size_list):
        p = params["conv"][i]
        pad_i = (k - 1) // 2
        wk = _pack_conv_weight(p["w"], cur_cin_p, cout_p)
        y, part = _conv_stats(cur, wk, k=k, h=h, w=w, wbase=WPAD - pad_i)
        scale, shift = bn_affine(jnp.sum(part, axis=0), p["gamma"], p["beta"])
        if i + 1 < nconv:
            pad_next = (kernel_size_list[i + 1] - 1) // 2
            cur = _bn_act_pad(y.reshape(n, h, w, cout_p), scale, shift, pad=pad_next)
            cur_cin_p = cout_p
        else:
            sa, fa = scale, shift

    # down_sample branch: Conv2d(1x1) -> BN (no activation); reads the unpadded input.
    wd = _pack_conv_weight(params["down"]["w"], cin_p, cout_p)
    y_dn, part_dn = _conv_stats(x_bf, wd, k=1, h=h, w=w, wbase=0)
    sb, fb = bn_affine(jnp.sum(part_dn, axis=0),
                       params["down"]["gamma"], params["down"]["beta"])

    # Two-pass BN over z = LeakyReLU(BN(chain)) + BN(down): stats pass, then a fully
    # fused normalize + residual + LeakyReLU + AvgPool2d(2) pass.
    part_z = _z_stats(y, y_dn, sa, fa, sb, fb)
    sz, fz = bn_affine(jnp.sum(part_z, axis=0),
                       params["bn"]["gamma"], params["bn"]["beta"])

    # Free views: pack even/odd W columns onto the lane axis for the pooling kernel.
    ya2 = y.reshape(n, h, w // 2, 2 * cout_p)
    yb2 = y_dn.reshape(n, h, w // 2, 2 * cout_p)
    pooled = _final_pool(ya2, yb2, sa, fa, sb, fb, sz, fz)

    out = pooled[:, :, :, :cout]                     # drop lane padding
    return jnp.transpose(out, (0, 3, 1, 2))          # NHWC -> NCHW


# --------------------------- parameter construction ------------------------- #

def init_params(key, in_channel, out_channel, kernel_size_list):
    params = {"conv": []}
    cin = in_channel
    for k in kernel_size_list:
        key, k1, k2, k3, k4 = jax.random.split(key, 5)
        params["conv"].append({
            "w": 0.1 * jax.random.normal(k1, (out_channel, cin, k, k), jnp.float32),
            # bias kept for parity with nn.Conv2d but unused: it cancels exactly under
            # the batch-statistics BatchNorm that follows.
            "b": 0.05 * jax.random.normal(k2, (out_channel,), jnp.float32),
            "gamma": 1.0 + 0.1 * jax.random.normal(k3, (out_channel,), jnp.float32),
            "beta": 0.1 * jax.random.normal(k4, (out_channel,), jnp.float32),
        })
        cin = out_channel
    key, k1, k2, k3, k4 = jax.random.split(key, 5)
    params["down"] = {
        "w": 0.1 * jax.random.normal(k1, (out_channel, in_channel, 1, 1), jnp.float32),
        "b": 0.05 * jax.random.normal(k2, (out_channel,), jnp.float32),  # unused (cancels)
        "gamma": 1.0 + 0.1 * jax.random.normal(k3, (out_channel,), jnp.float32),
        "beta": 0.1 * jax.random.normal(k4, (out_channel,), jnp.float32),
    }
    key, k1, k2 = jax.random.split(key, 3)
    params["bn"] = {
        "gamma": 1.0 + 0.1 * jax.random.normal(k1, (out_channel,), jnp.float32),
        "beta": 0.1 * jax.random.normal(k2, (out_channel,), jnp.float32),
    }
    return params


# ---------------------------------- main ------------------------------------ #

if __name__ == "__main__":
    key = jax.random.PRNGKey(0)
    key, xkey = jax.random.split(key)

    in_channel, out_channel = 4, 8
    kernel_size_list = (3, 3)
    x = jax.random.normal(xkey, (2, in_channel, 16, 16), jnp.float32)   # NCHW like torch

    params = init_params(key, in_channel, out_channel, kernel_size_list)

    fwd = jax.jit(down_res_layer, static_argnums=2)
    out = jax.block_until_ready(fwd(x, params, kernel_size_list))

    assert out.shape == (2, out_channel, 8, 8), out.shape
    assert bool(jnp.all(jnp.isfinite(out)))
    print("KERNEL_OK")
</pallas_src>

<mosaic_0001>
module attributes {stable_mosaic.version = 11 : i64} {
  func.func @conv_stats_kernel(%arg0: i32, %arg1: memref<1x18x32x128xbf16, #tpu.memory_space<vmem>>, %arg2: memref<9x128x128xbf16, #tpu.memory_space<vmem>>, %arg3: memref<1x256x128xbf16, #tpu.memory_space<vmem>>, %arg4: memref<1x2x128xf32, #tpu.memory_space<vmem>>) attributes {dimension_semantics = [#tpu.dimension_semantics<parallel>], iteration_bounds = array<i64: 2>, scalar_prefetch = 0 : i64, scratch_operands = 0 : i64, tpu.core_type = #tpu.core_type<tc>, window_params = [{transform_indices = @transform_0, window_bounds = array<i64: 1, 18, 32, 128>}, {pipeline_mode = #tpu.pipeline_mode<synchronous>, transform_indices = @transform_1, window_bounds = array<i64: 9, 128, 128>}, {transform_indices = @transform_2, window_bounds = array<i64: 1, 256, 128>}, {transform_indices = @transform_3, window_bounds = array<i64: 1, 2, 128>}]} {
    %c0 = arith.constant 0 : index
    %c0_0 = arith.constant 0 : index
    %c0_1 = arith.constant 0 : index
    %c0_2 = arith.constant 0 : index
    %0 = vector.load %arg1[%c0, %c0_0, %c0_1, %c0_2] : memref<1x18x32x128xbf16, #tpu.memory_space<vmem>>, vector<1x18x32x128xbf16>
    %1 = vector.shape_cast %0 : vector<1x18x32x128xbf16> to vector<18x32x128xbf16>
    %2 = arith.extf %1 : vector<18x32x128xbf16> to vector<18x32x128xf32>
    %3 = vector.extract_strided_slice %2 {offsets = [0, 7, 0], sizes = [18, 16, 128], strides = [1, 1, 1]} : vector<18x32x128xf32> to vector<18x16x128xf32>
    %4 = vector.extract_strided_slice %2 {offsets = [0, 8, 0], sizes = [18, 16, 128], strides = [1, 1, 1]} : vector<18x32x128xf32> to vector<18x16x128xf32>
    %5 = vector.extract_strided_slice %2 {offsets = [0, 9, 0], sizes = [18, 16, 128], strides = [1, 1, 1]} : vector<18x32x128xf32> to vector<18x16x128xf32>
    %cst = arith.constant 0.000000e+00 : f32
    %6 = vector.broadcast %cst : f32 to vector<256x128xf32>
    %7 = vector.extract_strided_slice %3 {offsets = [0, 0, 0], sizes = [16, 16, 128], strides = [1, 1, 1]} : vector<18x16x128xf32> to vector<16x16x128xf32>
    %8 = vector.shape_cast %7 : vector<16x16x128xf32> to vector<256x128xf32>
    %9 = arith.truncf %8 : vector<256x128xf32> to vector<256x128xbf16>
    %c0_3 = arith.constant 0 : index
    %c0_4 = arith.constant 0 : index
    %c0_5 = arith.constant 0 : index
    %10 = vector.load %arg2[%c0_3, %c0_4, %c0_5] : memref<9x128x128xbf16, #tpu.memory_space<vmem>>, vector<1x128x128xbf16>
    %11 = vector.shape_cast %10 : vector<1x128x128xbf16> to vector<128x128xbf16>
    %cst_6 = arith.constant dense<0.000000e+00> : vector<256x128xf32>
    %12 = tpu.matmul %9, %11, %cst_6 {dimension_numbers = #tpu.dot_dimension_numbers<[1], [0], [0], [1], [0, 0, 1, 1], [], []>} : vector<256x128xbf16>, vector<128x128xbf16>, vector<256x128xf32> -> vector<256x128xf32>
    %13 = arith.addf %6, %12 : vector<256x128xf32>
    %14 = vector.extract_strided_slice %4 {offsets = [0, 0, 0], sizes = [16, 16, 128], strides = [1, 1, 1]} : vector<18x16x128xf32> to vector<16x16x128xf32>
    %15 = vector.shape_cast %14 : vector<16x16x128xf32> to vector<256x128xf32>
    %16 = arith.truncf %15 : vector<256x128xf32> to vector<256x128xbf16>
    %c1 = arith.constant 1 : index
    %c0_7 = arith.constant 0 : index
    %c0_8 = arith.constant 0 : index
    %17 = vector.load %arg2[%c1, %c0_7, %c0_8] : memref<9x128x128xbf16, #tpu.memory_space<vmem>>, vector<1x128x128xbf16>
    %18 = vector.shape_cast %17 : vector<1x128x128xbf16> to vector<128x128xbf16>
    %cst_9 = arith.constant dense<0.000000e+00> : vector<256x128xf32>
    %19 = tpu.matmul %16, %18, %cst_9 {dimension_numbers = #tpu.dot_dimension_numbers<[1], [0], [0], [1], [0, 0, 1, 1], [], []>} : vector<256x128xbf16>, vector<128x128xbf16>, vector<256x128xf32> -> vector<256x128xf32>
    %20 = arith.addf %13, %19 : vector<256x128xf32>
    %21 = vector.extract_strided_slice %5 {offsets = [0, 0, 0], sizes = [16, 16, 128], strides = [1, 1, 1]} : vector<18x16x128xf32> to vector<16x16x128xf32>
    %22 = vector.shape_cast %21 : vector<16x16x128xf32> to vector<256x128xf32>
    %23 = arith.truncf %22 : vector<256x128xf32> to vector<256x128xbf16>
    %c2 = arith.constant 2 : index
    %c0_10 = arith.constant 0 : index
    %c0_11 = arith.constant 0 : index
    %24 = vector.load %arg2[%c2, %c0_10, %c0_11] : memref<9x128x128xbf16, #tpu.memory_space<vmem>>, vector<1x128x128xbf16>
    %25 = vector.shape_cast %24 : vector<1x128x128xbf16> to vector<128x128xbf16>
    %cst_12 = arith.constant dense<0.000000e+00> : vector<256x128xf32>
    %26 = tpu.matmul %23, %25, %cst_12 {dimension_numbers = #tpu.dot_dimension_numbers<[1], [0], [0], [1], [0, 0, 1, 1], [], []>} : vector<256x128xbf16>, vector<128x128xbf16>, vector<256x128xf32> -> vector<256x128xf32>
    %27 = arith.addf %20, %26 : vector<256x128xf32>
    %28 = vector.extract_strided_slice %3 {offsets = [1, 0, 0], sizes = [16, 16, 128], strides = [1, 1, 1]} : vector<18x16x128xf32> to vector<16x16x128xf32>
    %29 = vector.shape_cast %28 : vector<16x16x128xf32> to vector<256x128xf32>
    %30 = arith.truncf %29 : vector<256x128xf32> to vector<256x128xbf16>
    %c3 = arith.constant 3 : index
    %c0_13 = arith.constant 0 : index
    %c0_14 = arith.constant 0 : index
    %31 = vector.load %arg2[%c3, %c0_13, %c0_14] : memref<9x128x128xbf16, #tpu.memory_space<vmem>>, vector<1x128x128xbf16>
    %32 = vector.shape_cast %31 : vector<1x128x128xbf16> to vector<128x128xbf16>
    %cst_15 = arith.constant dense<0.000000e+00> : vector<256x128xf32>
    %33 = tpu.matmul %30, %32, %cst_15 {dimension_numbers = #tpu.dot_dimension_numbers<[1], [0], [0], [1], [0, 0, 1, 1], [], []>} : vector<256x128xbf16>, vector<128x128xbf16>, vector<256x128xf32> -> vector<256x128xf32>
    %34 = arith.addf %27, %33 : vector<256x128xf32>
    %35 = vector.extract_strided_slice %4 {offsets = [1, 0, 0], sizes = [16, 16, 128], strides = [1, 1, 1]} : vector<18x16x128xf32> to vector<16x16x128xf32>
    %36 = vector.shape_cast %35 : vector<16x16x128xf32> to vector<256x128xf32>
    %37 = arith.truncf %36 : vector<256x128xf32> to vector<256x128xbf16>
    %c4 = arith.constant 4 : index
    %c0_16 = arith.constant 0 : index
    %c0_17 = arith.constant 0 : index
    %38 = vector.load %arg2[%c4, %c0_16, %c0_17] : memref<9x128x128xbf16, #tpu.memory_space<vmem>>, vector<1x128x128xbf16>
    %39 = vector.shape_cast %38 : vector<1x128x128xbf16> to vector<128x128xbf16>
    %cst_18 = arith.constant dense<0.000000e+00> : vector<256x128xf32>
    %40 = tpu.matmul %37, %39, %cst_18 {dimension_numbers = #tpu.dot_dimension_numbers<[1], [0], [0], [1], [0, 0, 1, 1], [], []>} : vector<256x128xbf16>, vector<128x128xbf16>, vector<256x128xf32> -> vector<256x128xf32>
    %41 = arith.addf %34, %40 : vector<256x128xf32>
    %42 = vector.extract_strided_slice %5 {offsets = [1, 0, 0], sizes = [16, 16, 128], strides = [1, 1, 1]} : vector<18x16x128xf32> to vector<16x16x128xf32>
    %43 = vector.shape_cast %42 : vector<16x16x128xf32> to vector<256x128xf32>
    %44 = arith.truncf %43 : vector<256x128xf32> to vector<256x128xbf16>
    %c5 = arith.constant 5 : index
    %c0_19 = arith.constant 0 : index
    %c0_20 = arith.constant 0 : index
    %45 = vector.load %arg2[%c5, %c0_19, %c0_20] : memref<9x128x128xbf16, #tpu.memory_space<vmem>>, vector<1x128x128xbf16>
    %46 = vector.shape_cast %45 : vector<1x128x128xbf16> to vector<128x128xbf16>
    %cst_21 = arith.constant dense<0.000000e+00> : vector<256x128xf32>
    %47 = tpu.matmul %44, %46, %cst_21 {dimension_numbers = #tpu.dot_dimension_numbers<[1], [0], [0], [1], [0, 0, 1, 1], [], []>} : vector<256x128xbf16>, vector<128x128xbf16>, vector<256x128xf32> -> vector<256x128xf32>
    %48 = arith.addf %41, %47 : vector<256x128xf32>
    %49 = vector.extract_strided_slice %3 {offsets = [2, 0, 0], sizes = [16, 16, 128], strides = [1, 1, 1]} : vector<18x16x128xf32> to vector<16x16x128xf32>
    %50 = vector.shape_cast %49 : vector<16x16x128xf32> to vector<256x128xf32>
    %51 = arith.truncf %50 : vector<256x128xf32> to vector<256x128xbf16>
    %c6 = arith.constant 6 : index
    %c0_22 = arith.constant 0 : index
    %c0_23 = arith.constant 0 : index
    %52 = vector.load %arg2[%c6, %c0_22, %c0_23] : memref<9x128x128xbf16, #tpu.memory_space<vmem>>, vector<1x128x128xbf16>
    %53 = vector.shape_cast %52 : vector<1x128x128xbf16> to vector<128x128xbf16>
    %cst_24 = arith.constant dense<0.000000e+00> : vector<256x128xf32>
    %54 = tpu.matmul %51, %53, %cst_24 {dimension_numbers = #tpu.dot_dimension_numbers<[1], [0], [0], [1], [0, 0, 1, 1], [], []>} : vector<256x128xbf16>, vector<128x128xbf16>, vector<256x128xf32> -> vector<256x128xf32>
    %55 = arith.addf %48, %54 : vector<256x128xf32>
    %56 = vector.extract_strided_slice %4 {offsets = [2, 0, 0], sizes = [16, 16, 128], strides = [1, 1, 1]} : vector<18x16x128xf32> to vector<16x16x128xf32>
    %57 = vector.shape_cast %56 : vector<16x16x128xf32> to vector<256x128xf32>
    %58 = arith.truncf %57 : vector<256x128xf32> to vector<256x128xbf16>
    %c7 = arith.constant 7 : index
    %c0_25 = arith.constant 0 : index
    %c0_26 = arith.constant 0 : index
    %59 = vector.load %arg2[%c7, %c0_25, %c0_26] : memref<9x128x128xbf16, #tpu.memory_space<vmem>>, vector<1x128x128xbf16>
    %60 = vector.shape_cast %59 : vector<1x128x128xbf16> to vector<128x128xbf16>
    %cst_27 = arith.constant dense<0.000000e+00> : vector<256x128xf32>
    %61 = tpu.matmul %58, %60, %cst_27 {dimension_numbers = #tpu.dot_dimension_numbers<[1], [0], [0], [1], [0, 0, 1, 1], [], []>} : vector<256x128xbf16>, vector<128x128xbf16>, vector<256x128xf32> -> vector<256x128xf32>
    %62 = arith.addf %55, %61 : vector<256x128xf32>
    %63 = vector.extract_strided_slice %5 {offsets = [2, 0, 0], sizes = [16, 16, 128], strides = [1, 1, 1]} : vector<18x16x128xf32> to vector<16x16x128xf32>
    %64 = vector.shape_cast %63 : vector<16x16x128xf32> to vector<256x128xf32>
    %65 = arith.truncf %64 : vector<256x128xf32> to vector<256x128xbf16>
    %c8 = arith.constant 8 : index
    %c0_28 = arith.constant 0 : index
    %c0_29 = arith.constant 0 : index
    %66 = vector.load %arg2[%c8, %c0_28, %c0_29] : memref<9x128x128xbf16, #tpu.memory_space<vmem>>, vector<1x128x128xbf16>
    %67 = vector.shape_cast %66 : vector<1x128x128xbf16> to vector<128x128xbf16>
    %cst_30 = arith.constant dense<0.000000e+00> : vector<256x128xf32>
    %68 = tpu.matmul %65, %67, %cst_30 {dimension_numbers = #tpu.dot_dimension_numbers<[1], [0], [0], [1], [0, 0, 1, 1], [], []>} : vector<256x128xbf16>, vector<128x128xbf16>, vector<256x128xf32> -> vector<256x128xf32>
    %69 = arith.addf %62, %68 : vector<256x128xf32>
    %70 = arith.truncf %69 : vector<256x128xf32> to vector<256x128xbf16>
    %c0_31 = arith.constant 0 : index
    %c0_32 = arith.constant 0 : index
    %c0_33 = arith.constant 0 : index
    %71 = vector.load %arg3[%c0_31, %c0_32, %c0_33] : memref<1x256x128xbf16, #tpu.memory_space<vmem>>, vector<1x256x128xbf16>
    %72 = vector.shape_cast %71 : vector<1x256x128xbf16> to vector<256x128xbf16>
    %73 = vector.shape_cast %70 : vector<256x128xbf16> to vector<1x256x128xbf16>
    tpu.vector_store %arg3[%c0_31, %c0_32, %c0_33], %73 {strides = array<i32>} : memref<1x256x128xbf16, #tpu.memory_space<vmem>>, vector<1x256x128xbf16>,
    %cst_34 = arith.constant dense<0.000000e+00> : vector<128xf32>
    %74 = vector.multi_reduction <add>, %69, %cst_34 [0] : vector<256x128xf32> to vector<128xf32>
    %75 = vector.shape_cast %74 : vector<128xf32> to vector<1x128xf32>
    %c0_35 = arith.constant 0 : index
    %c0_36 = arith.constant 0 : index
    %c0_37 = arith.constant 0 : index
    %76 = vector.load %arg4[%c0_35, %c0_36, %c0_37] : memref<1x2x128xf32, #tpu.memory_space<vmem>>, vector<1x1x128xf32>
    %77 = vector.shape_cast %76 : vector<1x1x128xf32> to vector<1x128xf32>
    %78 = vector.shape_cast %75 : vector<1x128xf32> to vector<1x1x128xf32>
    tpu.vector_store %arg4[%c0_35, %c0_36, %c0_37], %78 {strides = array<i32>} : memref<1x2x128xf32, #tpu.memory_space<vmem>>, vector<1x1x128xf32>,
    %79 = arith.mulf %69, %69 : vector<256x128xf32>
    %cst_38 = arith.constant dense<0.000000e+00> : vector<128xf32>
    %80 = vector.multi_reduction <add>, %79, %cst_38 [0] : vector<256x128xf32> to vector<128xf32>
    %81 = vector.shape_cast %80 : vector<128xf32> to vector<1x128xf32>
    %c0_39 = arith.constant 0 : index
    %c1_40 = arith.constant 1 : index
    %c0_41 = arith.constant 0 : index
    %82 = vector.load %arg4[%c0_39, %c1_40, %c0_41] : memref<1x2x128xf32, #tpu.memory_space<vmem>>, vector<1x1x128xf32>
    %83 = vector.shape_cast %82 : vector<1x1x128xf32> to vector<1x128xf32>
    %84 = vector.shape_cast %81 : vector<1x128xf32> to vector<1x1x128xf32>
    tpu.vector_store %arg4[%c0_39, %c1_40, %c0_41], %84 {strides = array<i32>} : memref<1x2x128xf32, #tpu.memory_space<vmem>>, vector<1x1x128xf32>,
    return
  }
  func.func @transform_0(%arg0: i32) -> (i32, i32, i32, i32) {
    %c0_i32 = arith.constant 0 : i32
    %c0_i32_0 = arith.constant 0 : i32
    %c0_i32_1 = arith.constant 0 : i32
    %c0_i32_2 = arith.constant 0 : i32
    return %arg0, %c0_i32, %c0_i32_0, %c0_i32_1 : i32, i32, i32, i32
  }
  func.func @transform_1(%arg0: i32) -> (i32, i32, i32) {
    %c0_i32 = arith.constant 0 : i32
    %c0_i32_0 = arith.constant 0 : i32
    %c0_i32_1 = arith.constant 0 : i32
    %c0_i32_2 = arith.constant 0 : i32
    return %c0_i32, %c0_i32_0, %c0_i32_1 : i32, i32, i32
  }
  func.func @transform_2(%arg0: i32) -> (i32, i32, i32) {
    %c0_i32 = arith.constant 0 : i32
    %c0_i32_0 = arith.constant 0 : i32
    %c0_i32_1 = arith.constant 0 : i32
    return %arg0, %c0_i32, %c0_i32_0 : i32, i32, i32
  }
  func.func @transform_3(%arg0: i32) -> (i32, i32, i32) {
    %c0_i32 = arith.constant 0 : i32
    %c0_i32_0 = arith.constant 0 : i32
    %c0_i32_1 = arith.constant 0 : i32
    return %arg0, %c0_i32, %c0_i32_0 : i32, i32, i32
  }
}

module attributes {stable_mosaic.version = 11 : i64} {
  func.func @bn_act_pad_kernel(%arg0: i32, %arg1: memref<1x16x16x128xbf16, #tpu.memory_space<vmem>>, %arg2: memref<1x128xf32, #tpu.memory_space<vmem>>, %arg3: memref<1x128xf32, #tpu.memory_space<vmem>>, %arg4: memref<1x18x32x128xbf16, #tpu.memory_space<vmem>>) attributes {dimension_semantics = [#tpu.dimension_semantics<parallel>], iteration_bounds = array<i64: 2>, scalar_prefetch = 0 : i64, scratch_operands = 0 : i64, tpu.core_type = #tpu.core_type<tc>, window_params = [{transform_indices = @transform_0, window_bounds = array<i64: 1, 16, 16, 128>}, {pipeline_mode = #tpu.pipeline_mode<synchronous>, transform_indices = @transform_1, window_bounds = array<i64: 1, 128>}, {pipeline_mode = #tpu.pipeline_mode<synchronous>, transform_indices = @transform_2, window_bounds = array<i64: 1, 128>}, {transform_indices = @transform_3, window_bounds = array<i64: 1, 18, 32, 128>}]} {
    %c0 = arith.constant 0 : index
    %c0_0 = arith.constant 0 : index
    %c0_1 = arith.constant 0 : index
    %c0_2 = arith.constant 0 : index
    %0 = vector.load %arg1[%c0, %c0_0, %c0_1, %c0_2] : memref<1x16x16x128xbf16, #tpu.memory_space<vmem>>, vector<1x16x16x128xbf16>
    %1 = vector.shape_cast %0 : vector<1x16x16x128xbf16> to vector<16x16x128xbf16>
    %2 = arith.extf %1 : vector<16x16x128xbf16> to vector<16x16x128xf32>
    %c0_3 = arith.constant 0 : index
    %c0_4 = arith.constant 0 : index
    %3 = vector.load %arg2[%c0_3, %c0_4] : memref<1x128xf32, #tpu.memory_space<vmem>>, vector<1x128xf32>
    %4 = vector.shape_cast %3 : vector<1x128xf32> to vector<1x1x128xf32>
    %5 = vector.broadcast %4 : vector<1x1x128xf32> to vector<16x16x128xf32>
    %6 = arith.mulf %2, %5 : vector<16x16x128xf32>
    %c0_5 = arith.constant 0 : index
    %c0_6 = arith.constant 0 : index
    %7 = vector.load %arg3[%c0_5, %c0_6] : memref<1x128xf32, #tpu.memory_space<vmem>>, vector<1x128xf32>
    %8 = vector.shape_cast %7 : vector<1x128xf32> to vector<1x1x128xf32>
    %9 = vector.broadcast %8 : vector<1x1x128xf32> to vector<16x16x128xf32>
    %10 = arith.addf %6, %9 : vector<16x16x128xf32>
    %cst = arith.constant 0.000000e+00 : f32
    %11 = vector.broadcast %cst : f32 to vector<16x16x128xf32>
    %12 = arith.cmpf oge, %10, %11 : vector<16x16x128xf32>
    %cst_7 = arith.constant 2.000000e-01 : f32
    %13 = vector.broadcast %cst_7 : f32 to vector<16x16x128xf32>
    %14 = arith.mulf %13, %10 : vector<16x16x128xf32>
    %15 = arith.select %12, %10, %14 : vector<16x16x128xi1>, vector<16x16x128xf32>
    %cst_8 = arith.constant 0.000000e+00 : bf16
    %16 = vector.broadcast %cst_8 : bf16 to vector<1x32x128xbf16>
    %c0_9 = arith.constant 0 : index
    %c0_10 = arith.constant 0 : index
    %c0_11 = arith.constant 0 : index
    %c0_12 = arith.constant 0 : index
    %17 = vector.load %arg4[%c0_9, %c0_10, %c0_11, %c0_12] : memref<1x18x32x128xbf16, #tpu.memory_space<vmem>>, vector<1x1x32x128xbf16>
    %18 = vector.shape_cast %17 : vector<1x1x32x128xbf16> to vector<1x32x128xbf16>
    %19 = vector.shape_cast %16 : vector<1x32x128xbf16> to vector<1x1x32x128xbf16>
    tpu.vector_store %arg4[%c0_9, %c0_10, %c0_11, %c0_12], %19 {strides = array<i32>} : memref<1x18x32x128xbf16, #tpu.memory_space<vmem>>, vector<1x1x32x128xbf16>,
    %c0_13 = arith.constant 0 : index
    %c17 = arith.constant 17 : index
    %c0_14 = arith.constant 0 : index
    %c0_15 = arith.constant 0 : index
    %20 = vector.load %arg4[%c0_13, %c17, %c0_14, %c0_15] : memref<1x18x32x128xbf16, #tpu.memory_space<vmem>>, vector<1x1x32x128xbf16>
    %21 = vector.shape_cast %20 : vector<1x1x32x128xbf16> to vector<1x32x128xbf16>
    %22 = vector.shape_cast %16 : vector<1x32x128xbf16> to vector<1x1x32x128xbf16>
    tpu.vector_store %arg4[%c0_13, %c17, %c0_14, %c0_15], %22 {strides = array<i32>} : memref<1x18x32x128xbf16, #tpu.memory_space<vmem>>, vector<1x1x32x128xbf16>,
    %cst_16 = arith.constant 0.000000e+00 : bf16
    %23 = vector.broadcast %cst_16 : bf16 to vector<16x8x128xbf16>
    %c0_17 = arith.constant 0 : index
    %c1 = arith.constant 1 : index
    %c0_18 = arith.constant 0 : index
    %c0_19 = arith.constant 0 : index
    %24 = vector.load %arg4[%c0_17, %c1, %c0_18, %c0_19] : memref<1x18x32x128xbf16, #tpu.memory_space<vmem>>, vector<1x16x8x128xbf16>
    %25 = vector.shape_cast %24 : vector<1x16x8x128xbf16> to vector<16x8x128xbf16>
    %26 = vector.shape_cast %23 : vector<16x8x128xbf16> to vector<1x16x8x128xbf16>
    tpu.vector_store %arg4[%c0_17, %c1, %c0_18, %c0_19], %26 {strides = array<i32>} : memref<1x18x32x128xbf16, #tpu.memory_space<vmem>>, vector<1x16x8x128xbf16>,
    %c0_20 = arith.constant 0 : index
    %c1_21 = arith.constant 1 : index
    %c24 = arith.constant 24 : index
    %c0_22 = arith.constant 0 : index
    %27 = vector.load %arg4[%c0_20, %c1_21, %c24, %c0_22] : memref<1x18x32x128xbf16, #tpu.memory_space<vmem>>, vector<1x16x8x128xbf16>
    %28 = vector.shape_cast %27 : vector<1x16x8x128xbf16> to vector<16x8x128xbf16>
    %29 = vector.shape_cast %23 : vector<16x8x128xbf16> to vector<1x16x8x128xbf16>
    tpu.vector_store %arg4[%c0_20, %c1_21, %c24, %c0_22], %29 {strides = array<i32>} : memref<1x18x32x128xbf16, #tpu.memory_space<vmem>>, vector<1x16x8x128xbf16>,
    %30 = arith.truncf %15 : vector<16x16x128xf32> to vector<16x16x128xbf16>
    %c0_23 = arith.constant 0 : index
    %c1_24 = arith.constant 1 : index
    %c8 = arith.constant 8 : index
    %c0_25 = arith.constant 0 : index
    %31 = vector.load %arg4[%c0_23, %c1_24, %c8, %c0_25] : memref<1x18x32x128xbf16, #tpu.memory_space<vmem>>, vector<1x16x16x128xbf16>
    %32 = vector.shape_cast %31 : vector<1x16x16x128xbf16> to vector<16x16x128xbf16>
    %33 = vector.shape_cast %30 : vector<16x16x128xbf16> to vector<1x16x16x128xbf16>
    tpu.vector_store %arg4[%c0_23, %c1_24, %c8, %c0_25], %33 {strides = array<i32>} : memref<1x18x32x128xbf16, #tpu.memory_space<vmem>>, vector<1x16x16x128xbf16>,
    return
  }
  func.func @transform_0(%arg0: i32) -> (i32, i32, i32, i32) {
    %c0_i32 = arith.constant 0 : i32
    %c0_i32_0 = arith.constant 0 : i32
    %c0_i32_1 = arith.constant 0 : i32
    %c0_i32_2 = arith.constant 0 : i32
    return %arg0, %c0_i32, %c0_i32_0, %c0_i32_1 : i32, i32, i32, i32
  }
  func.func @transform_1(%arg0: i32) -> (i32, i32) {
    %c0_i32 = arith.constant 0 : i32
    %c0_i32_0 = arith.constant 0 : i32
    %c0_i32_1 = arith.constant 0 : i32
    return %c0_i32, %c0_i32_0 : i32, i32
  }
  func.func @transform_2(%arg0: i32) -> (i32, i32) {
    %c0_i32 = arith.constant 0 : i32
    %c0_i32_0 = arith.constant 0 : i32
    %c0_i32_1 = arith.constant 0 : i32
    return %c0_i32, %c0_i32_0 : i32, i32
  }
  func.func @transform_3(%arg0: i32) -> (i32, i32, i32, i32) {
    %c0_i32 = arith.constant 0 : i32
    %c0_i32_0 = arith.constant 0 : i32
    %c0_i32_1 = arith.constant 0 : i32
    %c0_i32_2 = arith.constant 0 : i32
    return %arg0, %c0_i32, %c0_i32_0, %c0_i32_1 : i32, i32, i32, i32
  }
}

module attributes {stable_mosaic.version = 11 : i64} {
  func.func @conv_stats_kernel(%arg0: i32, %arg1: memref<1x16x16x128xbf16, #tpu.memory_space<vmem>>, %arg2: memref<1x128x128xbf16, #tpu.memory_space<vmem>>, %arg3: memref<1x256x128xbf16, #tpu.memory_space<vmem>>, %arg4: memref<1x2x128xf32, #tpu.memory_space<vmem>>) attributes {dimension_semantics = [#tpu.dimension_semantics<parallel>], iteration_bounds = array<i64: 2>, scalar_prefetch = 0 : i64, scratch_operands = 0 : i64, tpu.core_type = #tpu.core_type<tc>, window_params = [{transform_indices = @transform_0, window_bounds = array<i64: 1, 16, 16, 128>}, {pipeline_mode = #tpu.pipeline_mode<synchronous>, transform_indices = @transform_1, window_bounds = array<i64: 1, 128, 128>}, {transform_indices = @transform_2, window_bounds = array<i64: 1, 256, 128>}, {transform_indices = @transform_3, window_bounds = array<i64: 1, 2, 128>}]} {
    %c0 = arith.constant 0 : index
    %c0_0 = arith.constant 0 : index
    %c0_1 = arith.constant 0 : index
    %c0_2 = arith.constant 0 : index
    %0 = vector.load %arg1[%c0, %c0_0, %c0_1, %c0_2] : memref<1x16x16x128xbf16, #tpu.memory_space<vmem>>, vector<1x16x16x128xbf16>
    %1 = vector.shape_cast %0 : vector<1x16x16x128xbf16> to vector<16x16x128xbf16>
    %2 = arith.extf %1 : vector<16x16x128xbf16> to vector<16x16x128xf32>
    %cst = arith.constant 0.000000e+00 : f32
    %3 = vector.broadcast %cst : f32 to vector<256x128xf32>
    %4 = vector.shape_cast %2 : vector<16x16x128xf32> to vector<256x128xf32>
    %5 = arith.truncf %4 : vector<256x128xf32> to vector<256x128xbf16>
    %c0_3 = arith.constant 0 : index
    %c0_4 = arith.constant 0 : index
    %c0_5 = arith.constant 0 : index
    %6 = vector.load %arg2[%c0_3, %c0_4, %c0_5] : memref<1x128x128xbf16, #tpu.memory_space<vmem>>, vector<1x128x128xbf16>
    %7 = vector.shape_cast %6 : vector<1x128x128xbf16> to vector<128x128xbf16>
    %cst_6 = arith.constant dense<0.000000e+00> : vector<256x128xf32>
    %8 = tpu.matmul %5, %7, %cst_6 {dimension_numbers = #tpu.dot_dimension_numbers<[1], [0], [0], [1], [0, 0, 1, 1], [], []>} : vector<256x128xbf16>, vector<128x128xbf16>, vector<256x128xf32> -> vector<256x128xf32>
    %9 = arith.addf %3, %8 : vector<256x128xf32>
    %10 = arith.truncf %9 : vector<256x128xf32> to vector<256x128xbf16>
    %c0_7 = arith.constant 0 : index
    %c0_8 = arith.constant 0 : index
    %c0_9 = arith.constant 0 : index
    %11 = vector.load %arg3[%c0_7, %c0_8, %c0_9] : memref<1x256x128xbf16, #tpu.memory_space<vmem>>, vector<1x256x128xbf16>
    %12 = vector.shape_cast %11 : vector<1x256x128xbf16> to vector<256x128xbf16>
    %13 = vector.shape_cast %10 : vector<256x128xbf16> to vector<1x256x128xbf16>
    tpu.vector_store %arg3[%c0_7, %c0_8, %c0_9], %13 {strides = array<i32>} : memref<1x256x128xbf16, #tpu.memory_space<vmem>>, vector<1x256x128xbf16>,
    %cst_10 = arith.constant dense<0.000000e+00> : vector<128xf32>
    %14 = vector.multi_reduction <add>, %9, %cst_10 [0] : vector<256x128xf32> to vector<128xf32>
    %15 = vector.shape_cast %14 : vector<128xf32> to vector<1x128xf32>
    %c0_11 = arith.constant 0 : index
    %c0_12 = arith.constant 0 : index
    %c0_13 = arith.constant 0 : index
    %16 = vector.load %arg4[%c0_11, %c0_12, %c0_13] : memref<1x2x128xf32, #tpu.memory_space<vmem>>, vector<1x1x128xf32>
    %17 = vector.shape_cast %16 : vector<1x1x128xf32> to vector<1x128xf32>
    %18 = vector.shape_cast %15 : vector<1x128xf32> to vector<1x1x128xf32>
    tpu.vector_store %arg4[%c0_11, %c0_12, %c0_13], %18 {strides = array<i32>} : memref<1x2x128xf32, #tpu.memory_space<vmem>>, vector<1x1x128xf32>,
    %19 = arith.mulf %9, %9 : vector<256x128xf32>
    %cst_14 = arith.constant dense<0.000000e+00> : vector<128xf32>
    %20 = vector.multi_reduction <add>, %19, %cst_14 [0] : vector<256x128xf32> to vector<128xf32>
    %21 = vector.shape_cast %20 : vector<128xf32> to vector<1x128xf32>
    %c0_15 = arith.constant 0 : index
    %c1 = arith.constant 1 : index
    %c0_16 = arith.constant 0 : index
    %22 = vector.load %arg4[%c0_15, %c1, %c0_16] : memref<1x2x128xf32, #tpu.memory_space<vmem>>, vector<1x1x128xf32>
    %23 = vector.shape_cast %22 : vector<1x1x128xf32> to vector<1x128xf32>
    %24 = vector.shape_cast %21 : vector<1x128xf32> to vector<1x1x128xf32>
    tpu.vector_store %arg4[%c0_15, %c1, %c0_16], %24 {strides = array<i32>} : memref<1x2x128xf32, #tpu.memory_space<vmem>>, vector<1x1x128xf32>,
    return
  }
  func.func @transform_0(%arg0: i32) -> (i32, i32, i32, i32) {
    %c0_i32 = arith.constant 0 : i32
    %c0_i32_0 = arith.constant 0 : i32
    %c0_i32_1 = arith.constant 0 : i32
    %c0_i32_2 = arith.constant 0 : i32
    return %arg0, %c0_i32, %c0_i32_0, %c0_i32_1 : i32, i32, i32, i32
  }
  func.func @transform_1(%arg0: i32) -> (i32, i32, i32) {
    %c0_i32 = arith.constant 0 : i32
    %c0_i32_0 = arith.constant 0 : i32
    %c0_i32_1 = arith.constant 0 : i32
    %c0_i32_2 = arith.constant 0 : i32
    return %c0_i32, %c0_i32_0, %c0_i32_1 : i32, i32, i32
  }
  func.func @transform_2(%arg0: i32) -> (i32, i32, i32) {
    %c0_i32 = arith.constant 0 : i32
    %c0_i32_0 = arith.constant 0 : i32
    %c0_i32_1 = arith.constant 0 : i32
    return %arg0, %c0_i32, %c0_i32_0 : i32, i32, i32
  }
  func.func @transform_3(%arg0: i32) -> (i32, i32, i32) {
    %c0_i32 = arith.constant 0 : i32
    %c0_i32_0 = arith.constant 0 : i32
    %c0_i32_1 = arith.constant 0 : i32
    return %arg0, %c0_i32, %c0_i32_0 : i32, i32, i32
  }
}

module attributes {stable_mosaic.version = 11 : i64} {
  func.func @z_stats_kernel(%arg0: i32, %arg1: memref<1x256x128xbf16, #tpu.memory_space<vmem>>, %arg2: memref<1x256x128xbf16, #tpu.memory_space<vmem>>, %arg3: memref<1x128xf32, #tpu.memory_space<vmem>>, %arg4: memref<1x128xf32, #tpu.memory_space<vmem>>, %arg5: memref<1x128xf32, #tpu.memory_space<vmem>>, %arg6: memref<1x128xf32, #tpu.memory_space<vmem>>, %arg7: memref<1x2x128xf32, #tpu.memory_space<vmem>>) attributes {dimension_semantics = [#tpu.dimension_semantics<parallel>], iteration_bounds = array<i64: 2>, scalar_prefetch = 0 : i64, scratch_operands = 0 : i64, tpu.core_type = #tpu.core_type<tc>, window_params = [{transform_indices = @transform_0, window_bounds = array<i64: 1, 256, 128>}, {transform_indices = @transform_1, window_bounds = array<i64: 1, 256, 128>}, {pipeline_mode = #tpu.pipeline_mode<synchronous>, transform_indices = @transform_2, window_bounds = array<i64: 1, 128>}, {pipeline_mode = #tpu.pipeline_mode<synchronous>, transform_indices = @transform_3, window_bounds = array<i64: 1, 128>}, {pipeline_mode = #tpu.pipeline_mode<synchronous>, transform_indices = @transform_4, window_bounds = array<i64: 1, 128>}, {pipeline_mode = #tpu.pipeline_mode<synchronous>, transform_indices = @transform_5, window_bounds = array<i64: 1, 128>}, {transform_indices = @transform_6, window_bounds = array<i64: 1, 2, 128>}]} {
    %c0 = arith.constant 0 : index
    %c0_0 = arith.constant 0 : index
    %c0_1 = arith.constant 0 : index
    %0 = vector.load %arg1[%c0, %c0_0, %c0_1] : memref<1x256x128xbf16, #tpu.memory_space<vmem>>, vector<1x256x128xbf16>
    %1 = vector.shape_cast %0 : vector<1x256x128xbf16> to vector<256x128xbf16>
    %2 = arith.extf %1 : vector<256x128xbf16> to vector<256x128xf32>
    %c0_2 = arith.constant 0 : index
    %c0_3 = arith.constant 0 : index
    %3 = vector.load %arg3[%c0_2, %c0_3] : memref<1x128xf32, #tpu.memory_space<vmem>>, vector<1x128xf32>
    %4 = vector.broadcast %3 : vector<1x128xf32> to vector<256x128xf32>
    %5 = arith.mulf %2, %4 : vector<256x128xf32>
    %c0_4 = arith.constant 0 : index
    %c0_5 = arith.constant 0 : index
    %6 = vector.load %arg4[%c0_4, %c0_5] : memref<1x128xf32, #tpu.memory_space<vmem>>, vector<1x128xf32>
    %7 = vector.broadcast %6 : vector<1x128xf32> to vector<256x128xf32>
    %8 = arith.addf %5, %7 : vector<256x128xf32>
    %cst = arith.constant 0.000000e+00 : f32
    %9 = vector.broadcast %cst : f32 to vector<256x128xf32>
    %10 = arith.cmpf oge, %8, %9 : vector<256x128xf32>
    %cst_6 = arith.constant 2.000000e-01 : f32
    %11 = vector.broadcast %cst_6 : f32 to vector<256x128xf32>
    %12 = arith.mulf %11, %8 : vector<256x128xf32>
    %13 = arith.select %10, %8, %12 : vector<256x128xi1>, vector<256x128xf32>
    %c0_7 = arith.constant 0 : index
    %c0_8 = arith.constant 0 : index
    %c0_9 = arith.constant 0 : index
    %14 = vector.load %arg2[%c0_7, %c0_8, %c0_9] : memref<1x256x128xbf16, #tpu.memory_space<vmem>>, vector<1x256x128xbf16>
    %15 = vector.shape_cast %14 : vector<1x256x128xbf16> to vector<256x128xbf16>
    %16 = arith.extf %15 : vector<256x128xbf16> to vector<256x128xf32>
    %c0_10 = arith.constant 0 : index
    %c0_11 = arith.constant 0 : index
    %17 = vector.load %arg5[%c0_10, %c0_11] : memref<1x128xf32, #tpu.memory_space<vmem>>, vector<1x128xf32>
    %18 = vector.broadcast %17 : vector<1x128xf32> to vector<256x128xf32>
    %19 = arith.mulf %16, %18 : vector<256x128xf32>
    %20 = arith.addf %13, %19 : vector<256x128xf32>
    %c0_12 = arith.constant 0 : index
    %c0_13 = arith.constant 0 : index
    %21 = vector.load %arg6[%c0_12, %c0_13] : memref<1x128xf32, #tpu.memory_space<vmem>>, vector<1x128xf32>
    %22 = vector.broadcast %21 : vector<1x128xf32> to vector<256x128xf32>
    %23 = arith.addf %20, %22 : vector<256x128xf32>
    %cst_14 = arith.constant dense<0.000000e+00> : vector<128xf32>
    %24 = vector.multi_reduction <add>, %23, %cst_14 [0] : vector<256x128xf32> to vector<128xf32>
    %25 = vector.shape_cast %24 : vector<128xf32> to vector<1x128xf32>
    %c0_15 = arith.constant 0 : index
    %c0_16 = arith.constant 0 : index
    %c0_17 = arith.constant 0 : index
    %26 = vector.load %arg7[%c0_15, %c0_16, %c0_17] : memref<1x2x128xf32, #tpu.memory_space<vmem>>, vector<1x1x128xf32>
    %27 = vector.shape_cast %26 : vector<1x1x128xf32> to vector<1x128xf32>
    %28 = vector.shape_cast %25 : vector<1x128xf32> to vector<1x1x128xf32>
    tpu.vector_store %arg7[%c0_15, %c0_16, %c0_17], %28 {strides = array<i32>} : memref<1x2x128xf32, #tpu.memory_space<vmem>>, vector<1x1x128xf32>,
    %29 = arith.mulf %23, %23 : vector<256x128xf32>
    %cst_18 = arith.constant dense<0.000000e+00> : vector<128xf32>
    %30 = vector.multi_reduction <add>, %29, %cst_18 [0] : vector<256x128xf32> to vector<128xf32>
    %31 = vector.shape_cast %30 : vector<128xf32> to vector<1x128xf32>
    %c0_19 = arith.constant 0 : index
    %c1 = arith.constant 1 : index
    %c0_20 = arith.constant 0 : index
    %32 = vector.load %arg7[%c0_19, %c1, %c0_20] : memref<1x2x128xf32, #tpu.memory_space<vmem>>, vector<1x1x128xf32>
    %33 = vector.shape_cast %32 : vector<1x1x128xf32> to vector<1x128xf32>
    %34 = vector.shape_cast %31 : vector<1x128xf32> to vector<1x1x128xf32>
    tpu.vector_store %arg7[%c0_19, %c1, %c0_20], %34 {strides = array<i32>} : memref<1x2x128xf32, #tpu.memory_space<vmem>>, vector<1x1x128xf32>,
    return
  }
  func.func @transform_0(%arg0: i32) -> (i32, i32, i32) {
    %c0_i32 = arith.constant 0 : i32
    %c0_i32_0 = arith.constant 0 : i32
    %c0_i32_1 = arith.constant 0 : i32
    return %arg0, %c0_i32, %c0_i32_0 : i32, i32, i32
  }
  func.func @transform_1(%arg0: i32) -> (i32, i32, i32) {
    %c0_i32 = arith.constant 0 : i32
    %c0_i32_0 = arith.constant 0 : i32
    %c0_i32_1 = arith.constant 0 : i32
    return %arg0, %c0_i32, %c0_i32_0 : i32, i32, i32
  }
  func.func @transform_2(%arg0: i32) -> (i32, i32) {
    %c0_i32 = arith.constant 0 : i32
    %c0_i32_0 = arith.constant 0 : i32
    %c0_i32_1 = arith.constant 0 : i32
    return %c0_i32, %c0_i32_0 : i32, i32
  }
  func.func @transform_3(%arg0: i32) -> (i32, i32) {
    %c0_i32 = arith.constant 0 : i32
    %c0_i32_0 = arith.constant 0 : i32
    %c0_i32_1 = arith.constant 0 : i32
    return %c0_i32, %c0_i32_0 : i32, i32
  }
  func.func @transform_4(%arg0: i32) -> (i32, i32) {
    %c0_i32 = arith.constant 0 : i32
    %c0_i32_0 = arith.constant 0 : i32
    %c0_i32_1 = arith.constant 0 : i32
    return %c0_i32, %c0_i32_0 : i32, i32
  }
  func.func @transform_5(%arg0: i32) -> (i32, i32) {
    %c0_i32 = arith.constant 0 : i32
    %c0_i32_0 = arith.constant 0 : i32
    %c0_i32_1 = arith.constant 0 : i32
    return %c0_i32, %c0_i32_0 : i32, i32
  }
  func.func @transform_6(%arg0: i32) -> (i32, i32, i32) {
    %c0_i32 = arith.constant 0 : i32
    %c0_i32_0 = arith.constant 0 : i32
    %c0_i32_1 = arith.constant 0 : i32
    return %arg0, %c0_i32, %c0_i32_0 : i32, i32, i32
  }
}

module attributes {stable_mosaic.version = 11 : i64} {
  func.func @final_pool_kernel(%arg0: i32, %arg1: memref<1x16x8x256xbf16, #tpu.memory_space<vmem>>, %arg2: memref<1x16x8x256xbf16, #tpu.memory_space<vmem>>, %arg3: memref<1x128xf32, #tpu.memory_space<vmem>>, %arg4: memref<1x128xf32, #tpu.memory_space<vmem>>, %arg5: memref<1x128xf32, #tpu.memory_space<vmem>>, %arg6: memref<1x128xf32, #tpu.memory_space<vmem>>, %arg7: memref<1x128xf32, #tpu.memory_space<vmem>>, %arg8: memref<1x128xf32, #tpu.memory_space<vmem>>, %arg9: memref<1x8x8x128xf32, #tpu.memory_space<vmem>>) attributes {dimension_semantics = [#tpu.dimension_semantics<parallel>], iteration_bounds = array<i64: 2>, scalar_prefetch = 0 : i64, scratch_operands = 0 : i64, tpu.core_type = #tpu.core_type<tc>, window_params = [{transform_indices = @transform_0, window_bounds = array<i64: 1, 16, 8, 256>}, {transform_indices = @transform_1, window_bounds = array<i64: 1, 16, 8, 256>}, {pipeline_mode = #tpu.pipeline_mode<synchronous>, transform_indices = @transform_2, window_bounds = array<i64: 1, 128>}, {pipeline_mode = #tpu.pipeline_mode<synchronous>, transform_indices = @transform_3, window_bounds = array<i64: 1, 128>}, {pipeline_mode = #tpu.pipeline_mode<synchronous>, transform_indices = @transform_4, window_bounds = array<i64: 1, 128>}, {pipeline_mode = #tpu.pipeline_mode<synchronous>, transform_indices = @transform_5, window_bounds = array<i64: 1, 128>}, {pipeline_mode = #tpu.pipeline_mode<synchronous>, transform_indices = @transform_6, window_bounds = array<i64: 1, 128>}, {pipeline_mode = #tpu.pipeline_mode<synchronous>, transform_indices = @transform_7, window_bounds = array<i64: 1, 128>}, {transform_indices = @transform_8, window_bounds = array<i64: 1, 8, 8, 128>}]} {
    %c0 = arith.constant 0 : index
    %c0_0 = arith.constant 0 : index
    %0 = vector.load %arg3[%c0, %c0_0] : memref<1x128xf32, #tpu.memory_space<vmem>>, vector<1x128xf32>
    %c0_1 = arith.constant 0 : index
    %c0_2 = arith.constant 0 : index
    %1 = vector.load %arg4[%c0_1, %c0_2] : memref<1x128xf32, #tpu.memory_space<vmem>>, vector<1x128xf32>
    %c0_3 = arith.constant 0 : index
    %c0_4 = arith.constant 0 : index
    %2 = vector.load %arg5[%c0_3, %c0_4] : memref<1x128xf32, #tpu.memory_space<vmem>>, vector<1x128xf32>
    %c0_5 = arith.constant 0 : index
    %c0_6 = arith.constant 0 : index
    %3 = vector.load %arg6[%c0_5, %c0_6] : memref<1x128xf32, #tpu.memory_space<vmem>>, vector<1x128xf32>
    %c0_7 = arith.constant 0 : index
    %c0_8 = arith.constant 0 : index
    %4 = vector.load %arg7[%c0_7, %c0_8] : memref<1x128xf32, #tpu.memory_space<vmem>>, vector<1x128xf32>
    %c0_9 = arith.constant 0 : index
    %c0_10 = arith.constant 0 : index
    %5 = vector.load %arg8[%c0_9, %c0_10] : memref<1x128xf32, #tpu.memory_space<vmem>>, vector<1x128xf32>
    %c0_11 = arith.constant 0 : index
    %c0_12 = arith.constant 0 : index
    %c0_13 = arith.constant 0 : index
    %c0_14 = arith.constant 0 : index
    %6 = vector.load %arg1[%c0_11, %c0_12, %c0_13, %c0_14] : memref<1x16x8x256xbf16, #tpu.memory_space<vmem>>, vector<1x16x8x128xbf16>
    %7 = vector.shape_cast %6 : vector<1x16x8x128xbf16> to vector<16x8x128xbf16>
    %8 = arith.extf %7 : vector<16x8x128xbf16> to vector<16x8x128xf32>
    %c0_15 = arith.constant 0 : index
    %c0_16 = arith.constant 0 : index
    %c0_17 = arith.constant 0 : index
    %c0_18 = arith.constant 0 : index
    %9 = vector.load %arg2[%c0_15, %c0_16, %c0_17, %c0_18] : memref<1x16x8x256xbf16, #tpu.memory_space<vmem>>, vector<1x16x8x128xbf16>
    %10 = vector.shape_cast %9 : vector<1x16x8x128xbf16> to vector<16x8x128xbf16>
    %11 = arith.extf %10 : vector<16x8x128xbf16> to vector<16x8x128xf32>
    %12 = vector.shape_cast %0 : vector<1x128xf32> to vector<1x1x128xf32>
    %13 = vector.broadcast %12 : vector<1x1x128xf32> to vector<16x8x128xf32>
    %14 = arith.mulf %8, %13 : vector<16x8x128xf32>
    %15 = vector.shape_cast %1 : vector<1x128xf32> to vector<1x1x128xf32>
    %16 = vector.broadcast %15 : vector<1x1x128xf32> to vector<16x8x128xf32>
    %17 = arith.addf %14, %16 : vector<16x8x128xf32>
    %cst = arith.constant 0.000000e+00 : f32
    %18 = vector.broadcast %cst : f32 to vector<16x8x128xf32>
    %19 = arith.cmpf oge, %17, %18 : vector<16x8x128xf32>
    %cst_19 = arith.constant 2.000000e-01 : f32
    %20 = vector.broadcast %cst_19 : f32 to vector<16x8x128xf32>
    %21 = arith.mulf %20, %17 : vector<16x8x128xf32>
    %22 = arith.select %19, %17, %21 : vector<16x8x128xi1>, vector<16x8x128xf32>
    %23 = vector.shape_cast %2 : vector<1x128xf32> to vector<1x1x128xf32>
    %24 = vector.broadcast %23 : vector<1x1x128xf32> to vector<16x8x128xf32>
    %25 = arith.mulf %11, %24 : vector<16x8x128xf32>
    %26 = arith.addf %22, %25 : vector<16x8x128xf32>
    %27 = vector.shape_cast %3 : vector<1x128xf32> to vector<1x1x128xf32>
    %28 = vector.broadcast %27 : vector<1x1x128xf32> to vector<16x8x128xf32>
    %29 = arith.addf %26, %28 : vector<16x8x128xf32>
    %30 = vector.shape_cast %4 : vector<1x128xf32> to vector<1x1x128xf32>
    %31 = vector.broadcast %30 : vector<1x1x128xf32> to vector<16x8x128xf32>
    %32 = arith.mulf %29, %31 : vector<16x8x128xf32>
    %33 = vector.shape_cast %5 : vector<1x128xf32> to vector<1x1x128xf32>
    %34 = vector.broadcast %33 : vector<1x1x128xf32> to vector<16x8x128xf32>
    %35 = arith.addf %32, %34 : vector<16x8x128xf32>
    %cst_20 = arith.constant 0.000000e+00 : f32
    %36 = vector.broadcast %cst_20 : f32 to vector<16x8x128xf32>
    %37 = arith.cmpf oge, %35, %36 : vector<16x8x128xf32>
    %cst_21 = arith.constant 2.000000e-01 : f32
    %38 = vector.broadcast %cst_21 : f32 to vector<16x8x128xf32>
    %39 = arith.mulf %38, %35 : vector<16x8x128xf32>
    %40 = arith.select %37, %35, %39 : vector<16x8x128xi1>, vector<16x8x128xf32>
    %c0_22 = arith.constant 0 : index
    %c0_23 = arith.constant 0 : index
    %c0_24 = arith.constant 0 : index
    %c128 = arith.constant 128 : index
    %41 = vector.load %arg1[%c0_22, %c0_23, %c0_24, %c128] : memref<1x16x8x256xbf16, #tpu.memory_space<vmem>>, vector<1x16x8x128xbf16>
    %42 = vector.shape_cast %41 : vector<1x16x8x128xbf16> to vector<16x8x128xbf16>
    %43 = arith.extf %42 : vector<16x8x128xbf16> to vector<16x8x128xf32>
    %c0_25 = arith.constant 0 : index
    %c0_26 = arith.constant 0 : index
    %c0_27 = arith.constant 0 : index
    %c128_28 = arith.constant 128 : index
    %44 = vector.load %arg2[%c0_25, %c0_26, %c0_27, %c128_28] : memref<1x16x8x256xbf16, #tpu.memory_space<vmem>>, vector<1x16x8x128xbf16>
    %45 = vector.shape_cast %44 : vector<1x16x8x128xbf16> to vector<16x8x128xbf16>
    %46 = arith.extf %45 : vector<16x8x128xbf16> to vector<16x8x128xf32>
    %47 = vector.shape_cast %0 : vector<1x128xf32> to vector<1x1x128xf32>
    %48 = vector.broadcast %47 : vector<1x1x128xf32> to vector<16x8x128xf32>
    %49 = arith.mulf %43, %48 : vector<16x8x128xf32>
    %50 = vector.shape_cast %1 : vector<1x128xf32> to vector<1x1x128xf32>
    %51 = vector.broadcast %50 : vector<1x1x128xf32> to vector<16x8x128xf32>
    %52 = arith.addf %49, %51 : vector<16x8x128xf32>
    %cst_29 = arith.constant 0.000000e+00 : f32
    %53 = vector.broadcast %cst_29 : f32 to vector<16x8x128xf32>
    %54 = arith.cmpf oge, %52, %53 : vector<16x8x128xf32>
    %cst_30 = arith.constant 2.000000e-01 : f32
    %55 = vector.broadcast %cst_30 : f32 to vector<16x8x128xf32>
    %56 = arith.mulf %55, %52 : vector<16x8x128xf32>
    %57 = arith.select %54, %52, %56 : vector<16x8x128xi1>, vector<16x8x128xf32>
    %58 = vector.shape_cast %2 : vector<1x128xf32> to vector<1x1x128xf32>
    %59 = vector.broadcast %58 : vector<1x1x128xf32> to vector<16x8x128xf32>
    %60 = arith.mulf %46, %59 : vector<16x8x128xf32>
    %61 = arith.addf %57, %60 : vector<16x8x128xf32>
    %62 = vector.shape_cast %3 : vector<1x128xf32> to vector<1x1x128xf32>
    %63 = vector.broadcast %62 : vector<1x1x128xf32> to vector<16x8x128xf32>
    %64 = arith.addf %61, %63 : vector<16x8x128xf32>
    %65 = vector.shape_cast %4 : vector<1x128xf32> to vector<1x1x128xf32>
    %66 = vector.broadcast %65 : vector<1x1x128xf32> to vector<16x8x128xf32>
    %67 = arith.mulf %64, %66 : vector<16x8x128xf32>
    %68 = vector.shape_cast %5 : vector<1x128xf32> to vector<1x1x128xf32>
    %69 = vector.broadcast %68 : vector<1x1x128xf32> to vector<16x8x128xf32>
    %70 = arith.addf %67, %69 : vector<16x8x128xf32>
    %cst_31 = arith.constant 0.000000e+00 : f32
    %71 = vector.broadcast %cst_31 : f32 to vector<16x8x128xf32>
    %72 = arith.cmpf oge, %70, %71 : vector<16x8x128xf32>
    %cst_32 = arith.constant 2.000000e-01 : f32
    %73 = vector.broadcast %cst_32 : f32 to vector<16x8x128xf32>
    %74 = arith.mulf %73, %70 : vector<16x8x128xf32>
    %75 = arith.select %72, %70, %74 : vector<16x8x128xi1>, vector<16x8x128xf32>
    %76 = arith.addf %40, %75 : vector<16x8x128xf32>
    %77 = vector.shape_cast %76 : vector<16x8x128xf32> to vector<8x2x8x128xf32>
    %78 = vector.extract_strided_slice %77 {offsets = [0, 0, 0, 0], sizes = [8, 1, 8, 128], strides = [1, 1, 1, 1]} : vector<8x2x8x128xf32> to vector<8x1x8x128xf32>
    %79 = vector.shape_cast %78 : vector<8x1x8x128xf32> to vector<8x8x128xf32>
    %80 = vector.extract_strided_slice %77 {offsets = [0, 1, 0, 0], sizes = [8, 1, 8, 128], strides = [1, 1, 1, 1]} : vector<8x2x8x128xf32> to vector<8x1x8x128xf32>
    %81 = vector.shape_cast %80 : vector<8x1x8x128xf32> to vector<8x8x128xf32>
    %82 = arith.addf %79, %81 : vector<8x8x128xf32>
    %cst_33 = arith.constant 2.500000e-01 : f32
    %83 = vector.broadcast %cst_33 : f32 to vector<8x8x128xf32>
    %84 = arith.mulf %83, %82 : vector<8x8x128xf32>
    %c0_34 = arith.constant 0 : index
    %c0_35 = arith.constant 0 : index
    %c0_36 = arith.constant 0 : index
    %c0_37 = arith.constant 0 : index
    %85 = vector.load %arg9[%c0_34, %c0_35, %c0_36, %c0_37] : memref<1x8x8x128xf32, #tpu.memory_space<vmem>>, vector<1x8x8x128xf32>
    %86 = vector.shape_cast %85 : vector<1x8x8x128xf32> to vector<8x8x128xf32>
    %87 = vector.shape_cast %84 : vector<8x8x128xf32> to vector<1x8x8x128xf32>
    tpu.vector_store %arg9[%c0_34, %c0_35, %c0_36, %c0_37], %87 {strides = array<i32>} : memref<1x8x8x128xf32, #tpu.memory_space<vmem>>, vector<1x8x8x128xf32>,
    return
  }
  func.func @transform_0(%arg0: i32) -> (i32, i32, i32, i32) {
    %c0_i32 = arith.constant 0 : i32
    %c0_i32_0 = arith.constant 0 : i32
    %c0_i32_1 = arith.constant 0 : i32
    %c0_i32_2 = arith.constant 0 : i32
    return %arg0, %c0_i32, %c0_i32_0, %c0_i32_1 : i32, i32, i32, i32
  }
  func.func @transform_1(%arg0: i32) -> (i32, i32, i32, i32) {
    %c0_i32 = arith.constant 0 : i32
    %c0_i32_0 = arith.constant 0 : i32
    %c0_i32_1 = arith.constant 0 : i32
    %c0_i32_2 = arith.constant 0 : i32
    return %arg0, %c0_i32, %c0_i32_0, %c0_i32_1 : i32, i32, i32, i32
  }
  func.func @transform_2(%arg0: i32) -> (i32, i32) {
    %c0_i32 = arith.constant 0 : i32
    %c0_i32_0 = arith.constant 0 : i32
    %c0_i32_1 = arith.constant 0 : i32
    return %c0_i32, %c0_i32_0 : i32, i32
  }
  func.func @transform_3(%arg0: i32) -> (i32, i32) {
    %c0_i32 = arith.constant 0 : i32
    %c0_i32_0 = arith.constant 0 : i32
    %c0_i32_1 = arith.constant 0 : i32
    return %c0_i32, %c0_i32_0 : i32, i32
  }
  func.func @transform_4(%arg0: i32) -> (i32, i32) {
    %c0_i32 = arith.constant 0 : i32
    %c0_i32_0 = arith.constant 0 : i32
    %c0_i32_1 = arith.constant 0 : i32
    return %c0_i32, %c0_i32_0 : i32, i32
  }
  func.func @transform_5(%arg0: i32) -> (i32, i32) {
    %c0_i32 = arith.constant 0 : i32
    %c0_i32_0 = arith.constant 0 : i32
    %c0_i32_1 = arith.constant 0 : i32
    return %c0_i32, %c0_i32_0 : i32, i32
  }
  func.func @transform_6(%arg0: i32) -> (i32, i32) {
    %c0_i32 = arith.constant 0 : i32
    %c0_i32_0 = arith.constant 0 : i32
    %c0_i32_1 = arith.constant 0 : i32
    return %c0_i32, %c0_i32_0 : i32, i32
  }
  func.func @transform_7(%arg0: i32) -> (i32, i32) {
    %c0_i32 = arith.constant 0 : i32
    %c0_i32_0 = arith.constant 0 : i32
    %c0_i32_1 = arith.constant 0 : i32
    return %c0_i32, %c0_i32_0 : i32, i32
  }
  func.func @transform_8(%arg0: i32) -> (i32, i32, i32, i32) {
    %c0_i32 = arith.constant 0 : i32
    %c0_i32_0 = arith.constant 0 : i32
    %c0_i32_1 = arith.constant 0 : i32
    %c0_i32_2 = arith.constant 0 : i32
    return %arg0, %c0_i32, %c0_i32_0, %c0_i32_1 : i32, i32, i32, i32
  }
}

</mosaic_0001>

<llo_original>
// kernel: down_res_layer.7
$region0: #{down_res_layer.7}
  #allocation0 [shape = 'u32[]', space=smem, size = 0x4, offset = 0x4, fixed_abs, tag = 'smem constant byte address 0x4 - core index']
  #allocation1 [shape = 'u32[144,128]{1,0:T(1,128)}', space=vmem, size = 0x12000, scoped, tag = 'internal scratch']
  %s0 = inlined_call_operand.hbm [shape: bf16[2,16,16,128], index: 0, kind: input, shape index: {}]
  %s1 = inlined_call_operand.hbm [shape: f32[1,128], index: 1, kind: input, shape index: {}]
  %s2 = inlined_call_operand.hbm [shape: f32[1,128], index: 2, kind: input, shape index: {}]
  %s3 = inlined_call_operand.hbm [shape: bf16[2,18,32,128], index: 3, kind: output, shape index: {}]
  %s4 = sld [smem:[#allocation0]]
  $region57: #{down_res_layer.7} parent=0
    _
  %s6 = ssub.s32 1, %s4
  %s7 = scalar_select 0, %s6, %s4
  $region1: #{down_res_layer.7} parent=0
    #allocation2 [shape = 'u8[131072]{0}', space=vmem, size = 0x20000, scoped, tag = 'input window, operand 0']
    #allocation3 [shape = 's32[2]{0}', space=sflag, size = 0x8, scoped, tag = 'scoped memory for down_res_layer.7']
    #allocation4 [shape = 's32[2]{0}', space=sflag, size = 0x8, scoped, tag = 'scoped memory for down_res_layer.7']
    #allocation5 [shape = 'u8[512]{0}', space=vmem, size = 0x400, scoped, tag = 'input window, operand 1, single buffered']
    #allocation6 [shape = 's32[1]{0}', space=sflag, size = 0x4, scoped, tag = 'scoped memory for down_res_layer.7']
    #allocation7 [shape = 'u8[512]{0}', space=vmem, size = 0x400, scoped, tag = 'input window, operand 2, single buffered']
    #allocation8 [shape = 'u8[294912]{0}', space=vmem, size = 0x48000, scoped, tag = 'output window, operand 0']
    %8 = vsyncpa [#allocation3], 0
    %s9 = scalar_lea.sflag [#allocation3], 1
    %10 = vsyncpa %s9, 0
    %11 = vsyncpa [#allocation6], 0
    %12 = vsyncpa [#allocation4], 0
    %s13 = scalar_lea.sflag [#allocation4], 1
    %14 = vsyncpa %s13, 0
    loop: start=0, step=1, limit=4
    $region2: #{down_res_layer.7} parent=1 // loop_pre_header
      _
    $region3: #{down_res_layer.7} parent=1 // loop_header
      %s16 = sphi 0, %s20
      %p17 = scmp.ge.s32.totalorder %s16, 4
      %s26 = sphi 0, %s28
      %s29 = sphi 0, %s26
      %s30 = sphi 0, %s29
      %s46 = sphi 0, %s30
      %s50 = sphi 0, %s50
      %s52 = sphi 0, %s50
      %s53 = sphi 0, %s52
      %s67 = sphi 0, %s53
      %s71 = sphi 0, %s71
      %s73 = sphi 0, %s71
      %s74 = sphi 0, %s73
      %s88 = sphi 0, %s74
      %s94 = sphi 0, %s96
      %s97 = sphi 0, %s94
      %s98 = sphi 0, %s97
      %s114 = sphi 0, %s98
    $region4: #{down_res_layer.7} parent=1 // loop_header_branch
      %19 = sbr.rel (%p17) target = $region8
    $region5: #{down_res_layer.7} parent=1 // loop_body
      %s21 = ssub.s32 %s16, 1
      %s22 = ssub.s32 %s16, 2
      %s23 = sadd.s32 %s16, 1
      %s24 = ssub.s32 %s16, %s23
      %p25 = scmp.eq.s32.totalorder %s24, 0
      %s27 = sadd.s32 %s26, 1
      %s28 = scalar_select %p25, %s26, %s27
      %p31 = pneg %p25
      %p32 = scmp.eq.s32.totalorder %s16, 1
      %p33 = por %p31, %p32
      %p34 = scmp.ne.s32.totalorder %s26, %s29
      %p35 = scmp.eq.s32.totalorder %s16, 0
      %p36 = por %p34, %p35
      %p37 = scmp.ne.s32.totalorder %s26, %s29
      %p38 = scmp.eq.s32.totalorder %s21, 1
      %p39 = por %p37, %p38
      %p40 = scmp.ne.s32.totalorder %s29, %s30
      %p41 = scmp.eq.s32.totalorder %s21, 0
      %p42 = por %p40, %p41
      %p43 = scmp.ne.s32.totalorder %s29, %s30
      %p44 = scmp.eq.s32.totalorder %s22, 1
      %p45 = por %p43, %p44
      %p47 = scmp.ne.s32.totalorder %s30, %s46
      %p48 = scmp.eq.s32.totalorder %s22, 0
      %p49 = por %p47, %p48
      %s51 = sadd.s32 %s50, 1
      %p54 = scmp.eq.s32.totalorder %s16, 1
      %p55 = scmp.ne.s32.totalorder %s50, %s52
      %p56 = scmp.eq.s32.totalorder %s16, 0
      %p57 = por %p55, %p56
      %p58 = scmp.ne.s32.totalorder %s50, %s52
      %p59 = scmp.eq.s32.totalorder %s21, 1
      %p60 = por %p58, %p59
      %p61 = scmp.ne.s32.totalorder %s52, %s53
      %p62 = scmp.eq.s32.totalorder %s21, 0
      %p63 = por %p61, %p62
      %p64 = scmp.ne.s32.totalorder %s52, %s53
      %p65 = scmp.eq.s32.totalorder %s22, 1
      %p66 = por %p64, %p65
      %p68 = scmp.ne.s32.totalorder %s53, %s67
      %p69 = scmp.eq.s32.totalorder %s22, 0
      %p70 = por %p68, %p69
      %s72 = sadd.s32 %s71, 1
      %p75 = scmp.eq.s32.totalorder %s16, 1
      %p76 = scmp.ne.s32.totalorder %s71, %s73
      %p77 = scmp.eq.s32.totalorder %s16, 0
      %p78 = por %p76, %p77
      %p79 = scmp.ne.s32.totalorder %s71, %s73
      %p80 = scmp.eq.s32.totalorder %s21, 1
      %p81 = por %p79, %p80
      %p82 = scmp.ne.s32.totalorder %s73, %s74
      %p83 = scmp.eq.s32.totalorder %s21, 0
      %p84 = por %p82, %p83
      %p85 = scmp.ne.s32.totalorder %s73, %s74
      %p86 = scmp.eq.s32.totalorder %s22, 1
      %p87 = por %p85, %p86
      %p89 = scmp.ne.s32.totalorder %s74, %s88
      %p90 = scmp.eq.s32.totalorder %s22, 0
      %p91 = por %p89, %p90
      %s92 = ssub.s32 %s16, %s23
      %p93 = scmp.eq.s32.totalorder %s92, 0
      %s95 = sadd.s32 %s94, 1
      %s96 = scalar_select %p93, %s94, %s95
      %p99 = pneg %p93
      %p100 = scmp.eq.s32.totalorder %s16, 1
      %p101 = por %p99, %p100
      %p102 = scmp.ne.s32.totalorder %s94, %s97
      %p103 = scmp.eq.s32.totalorder %s16, 0
      %p104 = por %p102, %p103
      %p105 = scmp.ne.s32.totalorder %s94, %s97
      %p106 = scmp.eq.s32.totalorder %s21, 1
      %p107 = por %p105, %p106
      %p108 = scmp.ne.s32.totalorder %s97, %s98
      %p109 = scmp.eq.s32.totalorder %s21, 0
      %p110 = por %p108, %p109
      %p111 = scmp.ne.s32.totalorder %s97, %s98
      %p112 = scmp.eq.s32.totalorder %s22, 1
      %p113 = por %p111, %p112
      %p115 = scmp.ne.s32.totalorder %s98, %s114
      %p116 = scmp.eq.s32.totalorder %s22, 0
      %p117 = por %p115, %p116
      %p118 = scmp.le.s32.totalorder 1, %s16
      %p119 = scmp.lt.s32.totalorder %s16, 3
      %p120 = pnand %p118, %p119
      %p121 = pneg %p120
      // Predicated region
      $region9: #{down_res_layer.7} parent=5 // pred_check
        _
      $region10: #{down_res_layer.7} parent=5 // pred_check_branch
        %123 = sbr.rel (%p120) target = $region12
      $region11: #{down_res_layer.7} parent=5 // pred_region
        %s124 = ssub.s32 %s16, 1
        // Predicated region
        $region13: #{down_res_layer.7} parent=11 // pred_check
          %p125 = pneg %p63
        $region14: #{down_res_layer.7} parent=11 // pred_check_branch
          %127 = sbr.rel (%p125) target = $region16
        $region15: #{down_res_layer.7} parent=11 // pred_region
          %s129 = ssub.s32 16, 16
          %130 = vsyncadd [#allocation6], %s129
          %s132 = sshll.u32 [#allocation5], 4
          %s133 = int_to_ptr.vmem [resolvable:$true] %s132
          %135 = dma.hbm_to_vmem [thread:$0]  %s1, 16, %s133, [#allocation6]
        $region16: #{down_res_layer.7} parent=11 // pred_fallthru
          _
        // Predicated region
        $region17: #{down_res_layer.7} parent=11 // pred_check
          %p136 = pneg %p84
        $region18: #{down_res_layer.7} parent=11 // pred_check_branch
          %138 = sbr.rel (%p136) target = $region20
        $region19: #{down_res_layer.7} parent=11 // pred_region
          %s140 = ssub.s32 16, 16
          %141 = vsyncadd [#allocation6], %s140
          %s143 = sshll.u32 [#allocation7], 4
          %s144 = int_to_ptr.vmem [resolvable:$true] %s143
          %146 = dma.hbm_to_vmem [thread:$0]  %s2, 16, %s144, [#allocation6]
        $region20: #{down_res_layer.7} parent=11 // pred_fallthru
          _
      $region12: #{down_res_layer.7} parent=5 // pred_fallthru
        _
      %p147 = scmp.lt.s32.totalorder %s16, 2
      // Predicated region
      $region21: #{down_res_layer.7} parent=5 // pred_check
        %p148 = pneg %p147
      $region22: #{down_res_layer.7} parent=5 // pred_check_branch
        %150 = sbr.rel (%p148) target = $region24
      $region23: #{down_res_layer.7} parent=5 // pred_region
        // Predicated region
        $region25: #{down_res_layer.7} parent=23 // pred_check
          %p151 = pneg %p36
        $region26: #{down_res_layer.7} parent=23 // pred_check_branch
          %153 = sbr.rel (%p151) target = $region28
        $region27: #{down_res_layer.7} parent=23 // pred_region
          %s154 = sand.u32 %s26, 1
          %s155 = scalar_lea.sflag [#allocation3], %s154
          %s156 = sand.u32 %s26, 1
          %s157 = smul.addr %s156, 128
          %s158 = scalar_lea.vmem [#allocation2], %s157
          %s160 = ssub.s32 2048, 2048
          %161 = vsyncadd %s155, %s160
          %s162 = smul.addr %s16, 32
          %s163 = smul.addr %s162, 64
          %s164 = scalar_lea.hbm %s0, %s163
          %s165 = sshll.u32 %s158, 4
          %s166 = int_to_ptr.vmem [resolvable:$true] %s165
          %171 = dma.hbm_to_vmem [thread:$0]  %s164, 2048, %s166, %s155, 64, 64, 4
        $region28: #{down_res_layer.7} parent=23 // pred_fallthru
          _
      $region24: #{down_res_layer.7} parent=5 // pred_fallthru
        _
      %p172 = scmp.le.s32.totalorder 1, %s16
      %p173 = scmp.lt.s32.totalorder %s16, 3
      %p174 = pnand %p172, %p173
      %p175 = pneg %p174
      // Predicated region
      $region29: #{down_res_layer.7} parent=5 // pred_check
        _
      $region30: #{down_res_layer.7} parent=5 // pred_check_branch
        %177 = sbr.rel (%p174) target = $region32
      $region31: #{down_res_layer.7} parent=5 // pred_region
        %s178 = ssub.s32 %s16, 1
        %s179 = sand.u32 %s29, 1
        %s180 = scalar_lea.sflag [#allocation3], %s179
        %s181 = sand.u32 %s29, 1
        %s182 = smul.addr %s181, 128
        %s183 = scalar_lea.vmem [#allocation2], %s182
        // Predicated region
        $region33: #{down_res_layer.7} parent=31 // pred_check
          %p184 = pneg %p42
        $region34: #{down_res_layer.7} parent=31 // pred_check_branch
          %186 = sbr.rel (%p184) target = $region36
        $region35: #{down_res_layer.7} parent=31 // pred_region
          %187 = dma.done %s180, 2048
        $region36: #{down_res_layer.7} parent=31 // pred_fallthru
          _
        // Predicated region
        $region37: #{down_res_layer.7} parent=31 // pred_check
          %p188 = pneg %p63
        $region38: #{down_res_layer.7} parent=31 // pred_check_branch
          %190 = sbr.rel (%p188) target = $region40
        $region39: #{down_res_layer.7} parent=31 // pred_region
          %191 = dma.done [#allocation6], 16
        $region40: #{down_res_layer.7} parent=31 // pred_fallthru
          _
        // Predicated region
        $region41: #{down_res_layer.7} parent=31 // pred_check
          %p192 = pneg %p84
        $region42: #{down_res_layer.7} parent=31 // pred_check_branch
          %194 = sbr.rel (%p192) target = $region44
        $region43: #{down_res_layer.7} parent=31 // pred_region
          %195 = dma.done [#allocation6], 16
        $region44: #{down_res_layer.7} parent=31 // pred_fallthru
          _
        %s196 = sand.u32 %s29, 1
        %s197 = scalar_lea.sflag [#allocation3], %s196
        %s198 = sand.u32 %s29, 1
        %s199 = smul.addr %s198, 128
        %s200 = scalar_lea.vmem [#allocation2], %s199
        %p201 = pneg %p42
        %p202 = pneg %p39
        %p203 = pneg %p63
        %p204 = pneg %p60
        %p205 = pneg %p84
        %p206 = pneg %p81
        %p207 = pneg %p110
        %p208 = pneg %p107
        %s209 = sand.u32 %s97, 1
        %s210 = scalar_lea.sflag [#allocation4], %s209
        %s211 = sand.u32 %s97, 1
        %s212 = smul.addr %s211, 288
        %s213 = scalar_lea.vmem [#allocation8], %s212
        %v215 = vld [vmem:[%s183] sm:$0xf]
        %v216 = vld [vmem:[%s183 + $0x4] sm:$0xf]
        %v217 = vld [vmem:[%s183 + $0x8] sm:$0xf]
        %v218 = vld [vmem:[%s183 + $0xc] sm:$0xf]
        %v219 = vld [vmem:[%s183 + $0x10] sm:$0xf]
        %v220 = vld [vmem:[%s183 + $0x14] sm:$0xf]
        %v221 = vld [vmem:[%s183 + $0x18] sm:$0xf]
        %v222 = vld [vmem:[%s183 + $0x1c] sm:$0xf]
        %v223 = vld [vmem:[%s183 + $0x20] sm:$0xf]
        %v224 = vld [vmem:[%s183 + $0x24] sm:$0xf]
        %v225 = vld [vmem:[%s183 + $0x28] sm:$0xf]
        %v226 = vld [vmem:[%s183 + $0x2c] sm:$0xf]
        %v227 = vld [vmem:[%s183 + $0x30] sm:$0xf]
        %v228 = vld [vmem:[%s183 + $0x34] sm:$0xf]
        %v229 = vld [vmem:[%s183 + $0x38] sm:$0xf]
        %v230 = vld [vmem:[%s183 + $0x3c] sm:$0xf]
        %v231 = vld [vmem:[%s183 + $0x40] sm:$0xf]
        %v232 = vld [vmem:[%s183 + $0x44] sm:$0xf]
        %v233 = vld [vmem:[%s183 + $0x48] sm:$0xf]
        %v234 = vld [vmem:[%s183 + $0x4c] sm:$0xf]
        %v235 = vld [vmem:[%s183 + $0x50] sm:$0xf]
        %v236 = vld [vmem:[%s183 + $0x54] sm:$0xf]
        %v237 = vld [vmem:[%s183 + $0x58] sm:$0xf]
        %v238 = vld [vmem:[%s183 + $0x5c] sm:$0xf]
        %v239 = vld [vmem:[%s183 + $0x60] sm:$0xf]
        %v240 = vld [vmem:[%s183 + $0x64] sm:$0xf]
        %v241 = vld [vmem:[%s183 + $0x68] sm:$0xf]
        %v242 = vld [vmem:[%s183 + $0x6c] sm:$0xf]
        %v243 = vld [vmem:[%s183 + $0x70] sm:$0xf]
        %v244 = vld [vmem:[%s183 + $0x74] sm:$0xf]
        %v245 = vld [vmem:[%s183 + $0x78] sm:$0xf]
        %v246 = vld [vmem:[%s183 + $0x7c] sm:$0xf]
        %v247 = vunpack.c.l.bf16 %v215
        %v248 = vunpack.c.l.bf16 %v216
        %v249 = vunpack.c.l.bf16 %v217
        %v250 = vunpack.c.l.bf16 %v218
        %v251 = vunpack.c.l.bf16 %v219
        %v252 = vunpack.c.l.bf16 %v220
        %v253 = vunpack.c.l.bf16 %v221
        %v254 = vunpack.c.l.bf16 %v222
        %v255 = vunpack.c.l.bf16 %v223
        %v256 = vunpack.c.l.bf16 %v224
        %v257 = vunpack.c.l.bf16 %v225
        %v258 = vunpack.c.l.bf16 %v226
        %v259 = vunpack.c.l.bf16 %v227
        %v260 = vunpack.c.l.bf16 %v228
        %v261 = vunpack.c.l.bf16 %v229
        %v262 = vunpack.c.l.bf16 %v230
        %v263 = vunpack.c.l.bf16 %v231
        %v264 = vunpack.c.l.bf16 %v232
        %v265 = vunpack.c.l.bf16 %v233
        %v266 = vunpack.c.l.bf16 %v234
        %v267 = vunpack.c.l.bf16 %v235
        %v268 = vunpack.c.l.bf16 %v236
        %v269 = vunpack.c.l.bf16 %v237
        %v270 = vunpack.c.l.bf16 %v238
        %v271 = vunpack.c.l.bf16 %v239
        %v272 = vunpack.c.l.bf16 %v240
        %v273 = vunpack.c.l.bf16 %v241
        %v274 = vunpack.c.l.bf16 %v242
        %v275 = vunpack.c.l.bf16 %v243
        %v276 = vunpack.c.l.bf16 %v244
        %v277 = vunpack.c.l.bf16 %v245
        %v278 = vunpack.c.l.bf16 %v246
        %v279 = vld [vmem:[#allocation5] sm:$0x1]
        %v281 = vlaneseq
        %v282 = vshrl.u32 %v281, 7
        %v283 = vsub.s32 0, %v282
        %v284 = vrot.slane %v279, %v283
        %v286 = vmul.f32 %v247, %v284
        %v287 = vmul.f32 %v248, %v284
        %v288 = vmul.f32 %v249, %v284
        %v289 = vmul.f32 %v250, %v284
        %v290 = vmul.f32 %v251, %v284
        %v291 = vmul.f32 %v252, %v284
        %v292 = vmul.f32 %v253, %v284
        %v293 = vmul.f32 %v254, %v284
        %v294 = vmul.f32 %v255, %v284
        %v295 = vmul.f32 %v256, %v284
        %v296 = vmul.f32 %v257, %v284
        %v297 = vmul.f32 %v258, %v284
        %v298 = vmul.f32 %v259, %v284
        %v299 = vmul.f32 %v260, %v284
        %v300 = vmul.f32 %v261, %v284
        %v301 = vmul.f32 %v262, %v284
        %v302 = vmul.f32 %v263, %v284
        %v303 = vmul.f32 %v264, %v284
        %v304 = vmul.f32 %v265, %v284
        %v305 = vmul.f32 %v266, %v284
        %v306 = vmul.f32 %v267, %v284
        %v307 = vmul.f32 %v268, %v284
        %v308 = vmul.f32 %v269, %v284
        %v309 = vmul.f32 %v270, %v284
        %v310 = vmul.f32 %v271, %v284
        %v311 = vmul.f32 %v272, %v284
        %v312 = vmul.f32 %v273, %v284
        %v313 = vmul.f32 %v274, %v284
        %v314 = vmul.f32 %v275, %v284
        %v315 = vmul.f32 %v276, %v284
        %v316 = vmul.f32 %v277, %v284
        %v317 = vmul.f32 %v278, %v284
        %v318 = vld [vmem:[#allocation7] sm:$0x1]
        %v320 = vlaneseq
        %v321 = vshrl.u32 %v320, 7
        %v322 = vsub.s32 0, %v321
        %v323 = vrot.slane %v318, %v322
        %v325 = vadd.f32 %v286, %v323
        %v326 = vadd.f32 %v287, %v323
        %v327 = vadd.f32 %v288, %v323
        %v328 = vadd.f32 %v289, %v323
        %v329 = vadd.f32 %v290, %v323
        %v330 = vadd.f32 %v291, %v323
        %v331 = vadd.f32 %v292, %v323
        %v332 = vadd.f32 %v293, %v323
        %v333 = vadd.f32 %v294, %v323
        %v334 = vadd.f32 %v295, %v323
        %v335 = vadd.f32 %v296, %v323
        %v336 = vadd.f32 %v297, %v323
        %v337 = vadd.f32 %v298, %v323
        %v338 = vadd.f32 %v299, %v323
        %v339 = vadd.f32 %v300, %v323
        %v340 = vadd.f32 %v301, %v323
        %v341 = vadd.f32 %v302, %v323
        %v342 = vadd.f32 %v303, %v323
        %v343 = vadd.f32 %v304, %v323
        %v344 = vadd.f32 %v305, %v323
        %v345 = vadd.f32 %v306, %v323
        %v346 = vadd.f32 %v307, %v323
        %v347 = vadd.f32 %v308, %v323
        %v348 = vadd.f32 %v309, %v323
        %v349 = vadd.f32 %v310, %v323
        %v350 = vadd.f32 %v311, %v323
        %v351 = vadd.f32 %v312, %v323
        %v352 = vadd.f32 %v313, %v323
        %v353 = vadd.f32 %v314, %v323
        %v354 = vadd.f32 %v315, %v323
        %v355 = vadd.f32 %v316, %v323
        %v356 = vadd.f32 %v317, %v323
        %vm357 = vcmp.ge.f32.partialorder %v325, 0.0
        %vm358 = vcmp.ge.f32.partialorder %v326, 0.0
        %vm359 = vcmp.ge.f32.partialorder %v327, 0.0
        %vm360 = vcmp.ge.f32.partialorder %v328, 0.0
        %vm361 = vcmp.ge.f32.partialorder %v329, 0.0
        %vm362 = vcmp.ge.f32.partialorder %v330, 0.0
        %vm363 = vcmp.ge.f32.partialorder %v331, 0.0
        %vm364 = vcmp.ge.f32.partialorder %v332, 0.0
        %vm365 = vcmp.ge.f32.partialorder %v333, 0.0
        %vm366 = vcmp.ge.f32.partialorder %v334, 0.0
        %vm367 = vcmp.ge.f32.partialorder %v335, 0.0
        %vm368 = vcmp.ge.f32.partialorder %v336, 0.0
        %vm369 = vcmp.ge.f32.partialorder %v337, 0.0
        %vm370 = vcmp.ge.f32.partialorder %v338, 0.0
        %vm371 = vcmp.ge.f32.partialorder %v339, 0.0
        %vm372 = vcmp.ge.f32.partialorder %v340, 0.0
        %vm373 = vcmp.ge.f32.partialorder %v341, 0.0
        %vm374 = vcmp.ge.f32.partialorder %v342, 0.0
        %vm375 = vcmp.ge.f32.partialorder %v343, 0.0
        %vm376 = vcmp.ge.f32.partialorder %v344, 0.0
        %vm377 = vcmp.ge.f32.partialorder %v345, 0.0
        %vm378 = vcmp.ge.f32.partialorder %v346, 0.0
        %vm379 = vcmp.ge.f32.partialorder %v347, 0.0
        %vm380 = vcmp.ge.f32.partialorder %v348, 0.0
        %vm381 = vcmp.ge.f32.partialorder %v349, 0.0
        %vm382 = vcmp.ge.f32.partialorder %v350, 0.0
        %vm383 = vcmp.ge.f32.partialorder %v351, 0.0
        %vm384 = vcmp.ge.f32.partialorder %v352, 0.0
        %vm385 = vcmp.ge.f32.partialorder %v353, 0.0
        %vm386 = vcmp.ge.f32.partialorder %v354, 0.0
        %vm387 = vcmp.ge.f32.partialorder %v355, 0.0
        %vm388 = vcmp.ge.f32.partialorder %v356, 0.0
        %v389 = vmul.f32 %v325, 0.2
        %v390 = vmul.f32 %v326, 0.2
        %v391 = vmul.f32 %v327, 0.2
        %v392 = vmul.f32 %v328, 0.2
        %v393 = vmul.f32 %v329, 0.2
        %v394 = vmul.f32 %v330, 0.2
        %v395 = vmul.f32 %v331, 0.2
        %v396 = vmul.f32 %v332, 0.2
        %v397 = vmul.f32 %v333, 0.2
        %v398 = vmul.f32 %v334, 0.2
        %v399 = vmul.f32 %v335, 0.2
        %v400 = vmul.f32 %v336, 0.2
        %v401 = vmul.f32 %v337, 0.2
        %v402 = vmul.f32 %v338, 0.2
        %v403 = vmul.f32 %v339, 0.2
        %v404 = vmul.f32 %v340, 0.2
        %v405 = vmul.f32 %v341, 0.2
        %v406 = vmul.f32 %v342, 0.2
        %v407 = vmul.f32 %v343, 0.2
        %v408 = vmul.f32 %v344, 0.2
        %v409 = vmul.f32 %v345, 0.2
        %v410 = vmul.f32 %v346, 0.2
        %v411 = vmul.f32 %v347, 0.2
        %v412 = vmul.f32 %v348, 0.2
        %v413 = vmul.f32 %v349, 0.2
        %v414 = vmul.f32 %v350, 0.2
        %v415 = vmul.f32 %v351, 0.2
        %v416 = vmul.f32 %v352, 0.2
        %v417 = vmul.f32 %v353, 0.2
        %v418 = vmul.f32 %v354, 0.2
        %v419 = vmul.f32 %v355, 0.2
        %v420 = vmul.f32 %v356, 0.2
        %v421 = vsel %vm357, %v325, %v389
        %v422 = vsel %vm358, %v326, %v390
        %v423 = vsel %vm359, %v327, %v391
        %v424 = vsel %vm360, %v328, %v392
        %v425 = vsel %vm361, %v329, %v393
        %v426 = vsel %vm362, %v330, %v394
        %v427 = vsel %vm363, %v331, %v395
        %v428 = vsel %vm364, %v332, %v396
        %v429 = vsel %vm365, %v333, %v397
        %v430 = vsel %vm366, %v334, %v398
        %v431 = vsel %vm367, %v335, %v399
        %v432 = vsel %vm368, %v336, %v400
        %v433 = vsel %vm369, %v337, %v401
        %v434 = vsel %vm370, %v338, %v402
        %v435 = vsel %vm371, %v339, %v403
        %v436 = vsel %vm372, %v340, %v404
        %v437 = vsel %vm373, %v341, %v405
        %v438 = vsel %vm374, %v342, %v406
        %v439 = vsel %vm375, %v343, %v407
        %v440 = vsel %vm376, %v344, %v408
        %v441 = vsel %vm377, %v345, %v409
        %v442 = vsel %vm378, %v346, %v410
        %v443 = vsel %vm379, %v347, %v411
        %v444 = vsel %vm380, %v348, %v412
        %v445 = vsel %vm381, %v349, %v413
        %v446 = vsel %vm382, %v350, %v414
        %v447 = vsel %vm383, %v351, %v415
        %v448 = vsel %vm384, %v352, %v416
        %v449 = vsel %vm385, %v353, %v417
        %v450 = vsel %vm386, %v354, %v418
        %v451 = vsel %vm387, %v355, %v419
        %v452 = vsel %vm388, %v356, %v420
        %453 = vst [vmem:[%s213] sm:$0xf] 0
        %454 = vst [vmem:[%s213 + $0x4] sm:$0xf] 0
        %455 = vst [vmem:[%s213 + $0x8] sm:$0xf] 0
        %456 = vst [vmem:[%s213 + $0xc] sm:$0xf] 0
        %s457 = scalar_lea.vmem %s213, 272 [#allocation8]
        %458 = vst [vmem:[%s457] sm:$0xf] 0
        %459 = vst [vmem:[%s457 + $0x4] sm:$0xf] 0
        %460 = vst [vmem:[%s457 + $0x8] sm:$0xf] 0
        %461 = vst [vmem:[%s457 + $0xc] sm:$0xf] 0
        %s462 = scalar_lea.vmem %s213, 16 [#allocation8]
        %463 = vst [vmem:[%s462] sm:$0xf] 0
        %464 = vst [vmem:[%s462 + $0x10] sm:$0xf] 0
        %465 = vst [vmem:[%s462 + $0x20] sm:$0xf] 0
        %466 = vst [vmem:[%s462 + $0x30] sm:$0xf] 0
        %467 = vst [vmem:[%s462 + $0x40] sm:$0xf] 0
        %468 = vst [vmem:[%s462 + $0x50] sm:$0xf] 0
        %469 = vst [vmem:[%s462 + $0x60] sm:$0xf] 0
        %470 = vst [vmem:[%s462 + $0x70] sm:$0xf] 0
        %471 = vst [vmem:[%s462 + $0x80] sm:$0xf] 0
        %472 = vst [vmem:[%s462 + $0x90] sm:$0xf] 0
        %473 = vst [vmem:[%s462 + $0xa0] sm:$0xf] 0
        %474 = vst [vmem:[%s462 + $0xb0] sm:$0xf] 0
        %475 = vst [vmem:[%s462 + $0xc0] sm:$0xf] 0
        %476 = vst [vmem:[%s462 + $0xd0] sm:$0xf] 0
        %477 = vst [vmem:[%s462 + $0xe0] sm:$0xf] 0
        %478 = vst [vmem:[%s462 + $0xf0] sm:$0xf] 0
        %479 = vst [vmem:[%s462 + $0xc] sm:$0xf] 0
        %480 = vst [vmem:[%s462 + $0x1c] sm:$0xf] 0
        %481 = vst [vmem:[%s462 + $0x2c] sm:$0xf] 0
        %482 = vst [vmem:[%s462 + $0x3c] sm:$0xf] 0
        %483 = vst [vmem:[%s462 + $0x4c] sm:$0xf] 0
        %484 = vst [vmem:[%s462 + $0x5c] sm:$0xf] 0
        %485 = vst [vmem:[%s462 + $0x6c] sm:$0xf] 0
        %486 = vst [vmem:[%s462 + $0x7c] sm:$0xf] 0
        %487 = vst [vmem:[%s462 + $0x8c] sm:$0xf] 0
        %488 = vst [vmem:[%s462 + $0x9c] sm:$0xf] 0
        %489 = vst [vmem:[%s462 + $0xac] sm:$0xf] 0
        %490 = vst [vmem:[%s462 + $0xbc] sm:$0xf] 0
        %491 = vst [vmem:[%s462 + $0xcc] sm:$0xf] 0
        %492 = vst [vmem:[%s462 + $0xdc] sm:$0xf] 0
        %493 = vst [vmem:[%s462 + $0xec] sm:$0xf] 0
        %494 = vst [vmem:[%s462 + $0xfc] sm:$0xf] 0
        %v495 = vpack.c.bf16 %v422, %v421
        %v496 = vpack.c.bf16 %v424, %v423
        %v497 = vpack.c.bf16 %v426, %v425
        %v498 = vpack.c.bf16 %v428, %v427
        %v499 = vpack.c.bf16 %v430, %v429
        %v500 = vpack.c.bf16 %v432, %v431
        %v501 = vpack.c.bf16 %v434, %v433
        %v502 = vpack.c.bf16 %v436, %v435
        %v503 = vpack.c.bf16 %v438, %v437
        %v504 = vpack.c.bf16 %v440, %v439
        %v505 = vpack.c.bf16 %v442, %v441
        %v506 = vpack.c.bf16 %v444, %v443
        %v507 = vpack.c.bf16 %v446, %v445
        %v508 = vpack.c.bf16 %v448, %v447
        %v509 = vpack.c.bf16 %v450, %v449
        %v510 = vpack.c.bf16 %v452, %v451
        %v527 = vunpack.c.l.b16 %v495
        %v528 = vunpack.c.h.b16 %v495
        %v529 = vunpack.c.l.b16 %v496
        %v530 = vunpack.c.h.b16 %v496
        %v531 = vunpack.c.l.b16 %v497
        %v532 = vunpack.c.h.b16 %v497
        %v533 = vunpack.c.l.b16 %v498
        %v534 = vunpack.c.h.b16 %v498
        %v535 = vunpack.c.l.b16 %v499
        %v536 = vunpack.c.h.b16 %v499
        %v537 = vunpack.c.l.b16 %v500
        %v538 = vunpack.c.h.b16 %v500
        %v539 = vunpack.c.l.b16 %v501
        %v540 = vunpack.c.h.b16 %v501
        %v541 = vunpack.c.l.b16 %v502
        %v542 = vunpack.c.h.b16 %v502
        %v543 = vunpack.c.l.b16 %v503
        %v544 = vunpack.c.h.b16 %v503
        %v545 = vunpack.c.l.b16 %v504
        %v546 = vunpack.c.h.b16 %v504
        %v547 = vunpack.c.l.b16 %v505
        %v548 = vunpack.c.h.b16 %v505
        %v549 = vunpack.c.l.b16 %v506
        %v550 = vunpack.c.h.b16 %v506
        %v551 = vunpack.c.l.b16 %v507
        %v552 = vunpack.c.h.b16 %v507
        %v553 = vunpack.c.l.b16 %v508
        %v554 = vunpack.c.h.b16 %v508
        %v555 = vunpack.c.l.b16 %v509
        %v556 = vunpack.c.h.b16 %v509
        %v557 = vunpack.c.l.b16 %v510
        %v558 = vunpack.c.h.b16 %v510
        %v559 = vpack.c.b16 %v527, %v527
        %v560 = vpack.c.b16 %v528, %v528
        %v561 = vpack.c.b16 %v529, %v529
        %v562 = vpack.c.b16 %v530, %v530
        %v563 = vpack.c.b16 %v531, %v531
        %v564 = vpack.c.b16 %v532, %v532
        %v565 = vpack.c.b16 %v533, %v533
        %v566 = vpack.c.b16 %v534, %v534
        %v567 = vpack.c.b16 %v535, %v535
        %v568 = vpack.c.b16 %v536, %v536
        %v569 = vpack.c.b16 %v537, %v537
        %v570 = vpack.c.b16 %v538, %v538
        %v571 = vpack.c.b16 %v539, %v539
        %v572 = vpack.c.b16 %v540, %v540
        %v573 = vpack.c.b16 %v541, %v541
        %v574 = vpack.c.b16 %v542, %v542
        %v575 = vpack.c.b16 %v543, %v543
        %v576 = vpack.c.b16 %v544, %v544
        %v577 = vpack.c.b16 %v545, %v545
        %v578 = vpack.c.b16 %v546, %v546
        %v579 = vpack.c.b16 %v547, %v547
        %v580 = vpack.c.b16 %v548, %v548
        %v581 = vpack.c.b16 %v549, %v549
        %v582 = vpack.c.b16 %v550, %v550
        %v583 = vpack.c.b16 %v551, %v551
        %v584 = vpack.c.b16 %v552, %v552
        %v585 = vpack.c.b16 %v553, %v553
        %v586 = vpack.c.b16 %v554, %v554
        %v587 = vpack.c.b16 %v555, %v555
        %v588 = vpack.c.b16 %v556, %v556
        %v589 = vpack.c.b16 %v557, %v557
        %v590 = vpack.c.b16 %v558, %v558
        %623 = vst [vmem:[%s462 + $0x4] sm:$0xf] %v559
        %624 = vst [vmem:[%s462 + $0x8] sm:$0xf] %v560
        %625 = vst [vmem:[%s462 + $0x14] sm:$0xf] %v561
        %626 = vst [vmem:[%s462 + $0x18] sm:$0xf] %v562
        %627 = vst [vmem:[%s462 + $0x24] sm:$0xf] %v563
        %628 = vst [vmem:[%s462 + $0x28] sm:$0xf] %v564
        %629 = vst [vmem:[%s462 + $0x34] sm:$0xf] %v565
        %630 = vst [vmem:[%s462 + $0x38] sm:$0xf] %v566
        %631 = vst [vmem:[%s462 + $0x44] sm:$0xf] %v567
        %632 = vst [vmem:[%s462 + $0x48] sm:$0xf] %v568
        %633 = vst [vmem:[%s462 + $0x54] sm:$0xf] %v569
        %634 = vst [vmem:[%s462 + $0x58] sm:$0xf] %v570
        %635 = vst [vmem:[%s462 + $0x64] sm:$0xf] %v571
        %636 = vst [vmem:[%s462 + $0x68] sm:$0xf] %v572
        %637 = vst [vmem:[%s462 + $0x74] sm:$0xf] %v573
        %638 = vst [vmem:[%s462 + $0x78] sm:$0xf] %v574
        %639 = vst [vmem:[%s462 + $0x84] sm:$0xf] %v575
        %640 = vst [vmem:[%s462 + $0x88] sm:$0xf] %v576
        %641 = vst [vmem:[%s462 + $0x94] sm:$0xf] %v577
        %642 = vst [vmem:[%s462 + $0x98] sm:$0xf] %v578
        %643 = vst [vmem:[%s462 + $0xa4] sm:$0xf] %v579
        %644 = vst [vmem:[%s462 + $0xa8] sm:$0xf] %v580
        %645 = vst [vmem:[%s462 + $0xb4] sm:$0xf] %v581
        %646 = vst [vmem:[%s462 + $0xb8] sm:$0xf] %v582
        %647 = vst [vmem:[%s462 + $0xc4] sm:$0xf] %v583
        %648 = vst [vmem:[%s462 + $0xc8] sm:$0xf] %v584
        %649 = vst [vmem:[%s462 + $0xd4] sm:$0xf] %v585
        %650 = vst [vmem:[%s462 + $0xd8] sm:$0xf] %v586
        %651 = vst [vmem:[%s462 + $0xe4] sm:$0xf] %v587
        %652 = vst [vmem:[%s462 + $0xe8] sm:$0xf] %v588
        %653 = vst [vmem:[%s462 + $0xf4] sm:$0xf] %v589
        %654 = vst [vmem:[%s462 + $0xf8] sm:$0xf] %v590
        %s655 = sand.u32 %s97, 1
        %s656 = scalar_lea.sflag [#allocation4], %s655
        %s657 = sand.u32 %s97, 1
        %s658 = smul.addr %s657, 288
        %s659 = scalar_lea.vmem [#allocation8], %s658
        // Predicated region
        $region45: #{down_res_layer.7} parent=31 // pred_check
          %p660 = pneg %p107
        $region46: #{down_res_layer.7} parent=31 // pred_check_branch
          %662 = sbr.rel (%p660) target = $region48
        $region47: #{down_res_layer.7} parent=31 // pred_region
          %s664 = ssub.s32 4608, 4608
          %665 = vsyncadd %s656, %s664
          %s666 = smul.addr %s21, 72
          %s667 = smul.addr %s666, 64
          %s668 = scalar_lea.hbm %s3, %s667
          %s669 = sshll.u32 %s659, 4
          %s670 = int_to_ptr.vmem [resolvable:$true] %s669
          %675 = dma.vmem_to_hbm [thread:$0]  %s670, 4608, %s668, %s656, 64, 64, 4
        $region48: #{down_res_layer.7} parent=31 // pred_fallthru
          _
      $region32: #{down_res_layer.7} parent=5 // pred_fallthru
        _
      %p676 = scmp.le.s32.totalorder 2, %s16
      // Predicated region
      $region49: #{down_res_layer.7} parent=5 // pred_check
        %p677 = pneg %p676
      $region50: #{down_res_layer.7} parent=5 // pred_check_branch
        %679 = sbr.rel (%p677) target = $region52
      $region51: #{down_res_layer.7} parent=5 // pred_region
        %s680 = ssub.s32 %s16, 2
        // Predicated region
        $region53: #{down_res_layer.7} parent=51 // pred_check
          %p681 = pneg %p113
        $region54: #{down_res_layer.7} parent=51 // pred_check_branch
          %683 = sbr.rel (%p681) target = $region56
        $region55: #{down_res_layer.7} parent=51 // pred_region
          %s684 = sand.u32 %s98, 1
          %s685 = scalar_lea.sflag [#allocation4], %s684
          %s686 = sand.u32 %s98, 1
          %s687 = smul.addr %s686, 288
          %s688 = scalar_lea.vmem [#allocation8], %s687
          %689 = dma.done %s685, 4608
        $region56: #{down_res_layer.7} parent=51 // pred_fallthru
          _
      $region52: #{down_res_layer.7} parent=5 // pred_fallthru
        _
    $region6: #{down_res_layer.7} parent=1 // loop_footer
      %s20 = sadd.s32 1, %s16
    $region7: #{down_res_layer.7} parent=1 // loop_footer_branch
      %15 = sbr.rel target = $region3
    $region8: #{down_res_layer.7} parent=1 // loop_exit
      _
    %690 = vsyncpa [#allocation3], 1
    %s691 = scalar_lea.sflag [#allocation3], 1
    %692 = vsyncpa %s691, 1
    %693 = vsyncpa [#allocation6], 1
    %694 = vsyncpa [#allocation4], 1
    %s695 = scalar_lea.sflag [#allocation4], 1
    %696 = vsyncpa %s695, 1

// kernel: down_res_layer.9
$region0: #{down_res_layer.9}
  #allocation0 [shape = 'u32[]', space=smem, size = 0x4, offset = 0x4, fixed_abs, tag = 'smem constant byte address 0x4 - core index']
  #allocation1 [shape = 'u32[144,128]{1,0:T(1,128)}', space=vmem, size = 0x12000, scoped, tag = 'internal scratch']
  %s0 = inlined_call_operand.hbm [shape: bf16[2,16,16,128], index: 0, kind: input, shape index: {}]
  %s1 = inlined_call_operand.hbm [shape: bf16[1,128,128], index: 1, kind: input, shape index: {}]
  %s2 = inlined_call_operand.hbm [shape: bf16[2,256,128], index: 2, kind: output, shape index: {0}]
  %s3 = inlined_call_operand.hbm [shape: f32[2,2,128], index: 3, kind: output, shape index: {1}]
  %4 = xla_tuple %s2, %s3
  %s5 = sld [smem:[#allocation0]]
  $region57: #{down_res_layer.9} parent=0
    _
  %s7 = ssub.s32 1, %s5
  %s8 = scalar_select 0, %s7, %s5
  $region1: #{down_res_layer.9} parent=0
    #allocation2 [shape = 'u8[131072]{0}', space=vmem, size = 0x20000, scoped, tag = 'input window, operand 0']
    #allocation3 [shape = 's32[2]{0}', space=sflag, size = 0x8, scoped, tag = 'scoped memory for down_res_layer.9']
    #allocation4 [shape = 's32[2]{0}', space=sflag, size = 0x8, scoped, tag = 'scoped memory for down_res_layer.9']
    #allocation5 [shape = 'u8[32768]{0}', space=vmem, size = 0x8000, scoped, tag = 'input window, operand 1, single buffered']
    #allocation6 [shape = 's32[1]{0}', space=sflag, size = 0x4, scoped, tag = 'scoped memory for down_res_layer.9']
    #allocation7 [shape = 'u8[131072]{0}', space=vmem, size = 0x20000, scoped, tag = 'output window, operand 0']
    #allocation8 [shape = 'u8[2048]{0}', space=vmem, size = 0x800, scoped, tag = 'output window, operand 1']
    #allocation9 [shape = 's32[2]{0}', space=sflag, size = 0x8, scoped, tag = 'scoped memory for down_res_layer.9']
    %9 = vsyncpa [#allocation3], 0
    %s10 = scalar_lea.sflag [#allocation3], 1
    %11 = vsyncpa %s10, 0
    %12 = vsyncpa [#allocation6], 0
    %13 = vsyncpa [#allocation4], 0
    %s14 = scalar_lea.sflag [#allocation4], 1
    %15 = vsyncpa %s14, 0
    %16 = vsyncpa [#allocation9], 0
    %s17 = scalar_lea.sflag [#allocation9], 1
    %18 = vsyncpa %s17, 0
    loop: start=0, step=1, limit=4
    $region2: #{down_res_layer.9} parent=1 // loop_pre_header
      _
    $region3: #{down_res_layer.9} parent=1 // loop_header
      %s20 = sphi 0, %s24
      %p21 = scmp.ge.s32.totalorder %s20, 4
      %s30 = sphi 0, %s32
      %s33 = sphi 0, %s30
      %s34 = sphi 0, %s33
      %s50 = sphi 0, %s34
      %s54 = sphi 0, %s54
      %s56 = sphi 0, %s54
      %s57 = sphi 0, %s56
      %s71 = sphi 0, %s57
      %s77 = sphi 0, %s79
      %s80 = sphi 0, %s77
      %s81 = sphi 0, %s80
      %s97 = sphi 0, %s81
      %s103 = sphi 0, %s105
      %s106 = sphi 0, %s103
      %s107 = sphi 0, %s106
      %s123 = sphi 0, %s107
    $region4: #{down_res_layer.9} parent=1 // loop_header_branch
      %23 = sbr.rel (%p21) target = $region8
    $region5: #{down_res_layer.9} parent=1 // loop_body
      %s25 = ssub.s32 %s20, 1
      %s26 = ssub.s32 %s20, 2
      %s27 = sadd.s32 %s20, 1
      %s28 = ssub.s32 %s20, %s27
      %p29 = scmp.eq.s32.totalorder %s28, 0
      %s31 = sadd.s32 %s30, 1
      %s32 = scalar_select %p29, %s30, %s31
      %p35 = pneg %p29
      %p36 = scmp.eq.s32.totalorder %s20, 1
      %p37 = por %p35, %p36
      %p38 = scmp.ne.s32.totalorder %s30, %s33
      %p39 = scmp.eq.s32.totalorder %s20, 0
      %p40 = por %p38, %p39
      %p41 = scmp.ne.s32.totalorder %s30, %s33
      %p42 = scmp.eq.s32.totalorder %s25, 1
      %p43 = por %p41, %p42
      %p44 = scmp.ne.s32.totalorder %s33, %s34
      %p45 = scmp.eq.s32.totalorder %s25, 0
      %p46 = por %p44, %p45
      %p47 = scmp.ne.s32.totalorder %s33, %s34
      %p48 = scmp.eq.s32.totalorder %s26, 1
      %p49 = por %p47, %p48
      %p51 = scmp.ne.s32.totalorder %s34, %s50
      %p52 = scmp.eq.s32.totalorder %s26, 0
      %p53 = por %p51, %p52
      %s55 = sadd.s32 %s54, 1
      %p58 = scmp.eq.s32.totalorder %s20, 1
      %p59 = scmp.ne.s32.totalorder %s54, %s56
      %p60 = scmp.eq.s32.totalorder %s20, 0
      %p61 = por %p59, %p60
      %p62 = scmp.ne.s32.totalorder %s54, %s56
      %p63 = scmp.eq.s32.totalorder %s25, 1
      %p64 = por %p62, %p63
      %p65 = scmp.ne.s32.totalorder %s56, %s57
      %p66 = scmp.eq.s32.totalorder %s25, 0
      %p67 = por %p65, %p66
      %p68 = scmp.ne.s32.totalorder %s56, %s57
      %p69 = scmp.eq.s32.totalorder %s26, 1
      %p70 = por %p68, %p69
      %p72 = scmp.ne.s32.totalorder %s57, %s71
      %p73 = scmp.eq.s32.totalorder %s26, 0
      %p74 = por %p72, %p73
      %s75 = ssub.s32 %s20, %s27
      %p76 = scmp.eq.s32.totalorder %s75, 0
      %s78 = sadd.s32 %s77, 1
      %s79 = scalar_select %p76, %s77, %s78
      %p82 = pneg %p76
      %p83 = scmp.eq.s32.totalorder %s20, 1
      %p84 = por %p82, %p83
      %p85 = scmp.ne.s32.totalorder %s77, %s80
      %p86 = scmp.eq.s32.totalorder %s20, 0
      %p87 = por %p85, %p86
      %p88 = scmp.ne.s32.totalorder %s77, %s80
      %p89 = scmp.eq.s32.totalorder %s25, 1
      %p90 = por %p88, %p89
      %p91 = scmp.ne.s32.totalorder %s80, %s81
      %p92 = scmp.eq.s32.totalorder %s25, 0
      %p93 = por %p91, %p92
      %p94 = scmp.ne.s32.totalorder %s80, %s81
      %p95 = scmp.eq.s32.totalorder %s26, 1
      %p96 = por %p94, %p95
      %p98 = scmp.ne.s32.totalorder %s81, %s97
      %p99 = scmp.eq.s32.totalorder %s26, 0
      %p100 = por %p98, %p99
      %s101 = ssub.s32 %s20, %s27
      %p102 = scmp.eq.s32.totalorder %s101, 0
      %s104 = sadd.s32 %s103, 1
      %s105 = scalar_select %p102, %s103, %s104
      %p108 = pneg %p102
      %p109 = scmp.eq.s32.totalorder %s20, 1
      %p110 = por %p108, %p109
      %p111 = scmp.ne.s32.totalorder %s103, %s106
      %p112 = scmp.eq.s32.totalorder %s20, 0
      %p113 = por %p111, %p112
      %p114 = scmp.ne.s32.totalorder %s103, %s106
      %p115 = scmp.eq.s32.totalorder %s25, 1
      %p116 = por %p114, %p115
      %p117 = scmp.ne.s32.totalorder %s106, %s107
      %p118 = scmp.eq.s32.totalorder %s25, 0
      %p119 = por %p117, %p118
      %p120 = scmp.ne.s32.totalorder %s106, %s107
      %p121 = scmp.eq.s32.totalorder %s26, 1
      %p122 = por %p120, %p121
      %p124 = scmp.ne.s32.totalorder %s107, %s123
      %p125 = scmp.eq.s32.totalorder %s26, 0
      %p126 = por %p124, %p125
      %p127 = scmp.le.s32.totalorder 1, %s20
      %p128 = scmp.lt.s32.totalorder %s20, 3
      %p129 = pnand %p127, %p128
      %p130 = pneg %p129
      // Predicated region
      $region9: #{down_res_layer.9} parent=5 // pred_check
        _
      $region10: #{down_res_layer.9} parent=5 // pred_check_branch
        %132 = sbr.rel (%p129) target = $region12
      $region11: #{down_res_layer.9} parent=5 // pred_region
        %s133 = ssub.s32 %s20, 1
        // Predicated region
        $region13: #{down_res_layer.9} parent=11 // pred_check
          %p134 = pneg %p67
        $region14: #{down_res_layer.9} parent=11 // pred_check_branch
          %136 = sbr.rel (%p134) target = $region16
        $region15: #{down_res_layer.9} parent=11 // pred_region
          %s138 = ssub.s32 1024, 1024
          %139 = vsyncadd [#allocation6], %s138
          %s140 = sshll.u32 [#allocation5], 4
          %s141 = int_to_ptr.vmem [resolvable:$true] %s140
          %146 = dma.hbm_to_vmem [thread:$0]  %s1, 1024, %s141, [#allocation6], 64, 64, 4
        $region16: #{down_res_layer.9} parent=11 // pred_fallthru
          _
      $region12: #{down_res_layer.9} parent=5 // pred_fallthru
        _
      %p147 = scmp.lt.s32.totalorder %s20, 2
      // Predicated region
      $region17: #{down_res_layer.9} parent=5 // pred_check
        %p148 = pneg %p147
      $region18: #{down_res_layer.9} parent=5 // pred_check_branch
        %150 = sbr.rel (%p148) target = $region20
      $region19: #{down_res_layer.9} parent=5 // pred_region
        // Predicated region
        $region21: #{down_res_layer.9} parent=19 // pred_check
          %p151 = pneg %p40
        $region22: #{down_res_layer.9} parent=19 // pred_check_branch
          %153 = sbr.rel (%p151) target = $region24
        $region23: #{down_res_layer.9} parent=19 // pred_region
          %s154 = sand.u32 %s30, 1
          %s155 = scalar_lea.sflag [#allocation3], %s154
          %s156 = sand.u32 %s30, 1
          %s157 = smul.addr %s156, 128
          %s158 = scalar_lea.vmem [#allocation2], %s157
          %s160 = ssub.s32 2048, 2048
          %161 = vsyncadd %s155, %s160
          %s162 = smul.addr %s20, 32
          %s163 = smul.addr %s162, 64
          %s164 = scalar_lea.hbm %s0, %s163
          %s165 = sshll.u32 %s158, 4
          %s166 = int_to_ptr.vmem [resolvable:$true] %s165
          %171 = dma.hbm_to_vmem [thread:$0]  %s164, 2048, %s166, %s155, 64, 64, 4
        $region24: #{down_res_layer.9} parent=19 // pred_fallthru
          _
      $region20: #{down_res_layer.9} parent=5 // pred_fallthru
        _
      %p172 = scmp.le.s32.totalorder 1, %s20
      %p173 = scmp.lt.s32.totalorder %s20, 3
      %p174 = pnand %p172, %p173
      %p175 = pneg %p174
      // Predicated region
      $region25: #{down_res_layer.9} parent=5 // pred_check
        _
      $region26: #{down_res_layer.9} parent=5 // pred_check_branch
        %177 = sbr.rel (%p174) target = $region28
      $region27: #{down_res_layer.9} parent=5 // pred_region
        %s178 = ssub.s32 %s20, 1
        %s179 = sand.u32 %s33, 1
        %s180 = scalar_lea.sflag [#allocation3], %s179
        %s181 = sand.u32 %s33, 1
        %s182 = smul.addr %s181, 128
        %s183 = scalar_lea.vmem [#allocation2], %s182
        // Predicated region
        $region29: #{down_res_layer.9} parent=27 // pred_check
          %p184 = pneg %p46
        $region30: #{down_res_layer.9} parent=27 // pred_check_branch
          %186 = sbr.rel (%p184) target = $region32
        $region31: #{down_res_layer.9} parent=27 // pred_region
          %187 = dma.done %s180, 2048
        $region32: #{down_res_layer.9} parent=27 // pred_fallthru
          _
        // Predicated region
        $region33: #{down_res_layer.9} parent=27 // pred_check
          %p188 = pneg %p67
        $region34: #{down_res_layer.9} parent=27 // pred_check_branch
          %190 = sbr.rel (%p188) target = $region36
        $region35: #{down_res_layer.9} parent=27 // pred_region
          %191 = dma.done [#allocation6], 1024
        $region36: #{down_res_layer.9} parent=27 // pred_fallthru
          _
        %s192 = sand.u32 %s33, 1
        %s193 = scalar_lea.sflag [#allocation3], %s192
        %s194 = sand.u32 %s33, 1
        %s195 = smul.addr %s194, 128
        %s196 = scalar_lea.vmem [#allocation2], %s195
        %p197 = pneg %p46
        %p198 = pneg %p43
        %p199 = pneg %p67
        %p200 = pneg %p64
        %p201 = pneg %p93
        %p202 = pneg %p90
        %s203 = sand.u32 %s80, 1
        %s204 = scalar_lea.sflag [#allocation4], %s203
        %s205 = sand.u32 %s80, 1
        %s206 = smul.addr %s205, 128
        %s207 = scalar_lea.vmem [#allocation7], %s206
        %p208 = pneg %p119
        %p209 = pneg %p116
        %s210 = sand.u32 %s106, 1
        %s211 = scalar_lea.sflag [#allocation9], %s210
        %s212 = sand.u32 %s106, 1
        %s213 = smul.addr %s212, 2
        %s214 = scalar_lea.vmem [#allocation8], %s213
        %v216 = vld [vmem:[%s183] sm:$0xf]
        %v217 = vld [vmem:[%s183 + $0x4] sm:$0xf]
        %v218 = vld [vmem:[%s183 + $0x8] sm:$0xf]
        %v219 = vld [vmem:[%s183 + $0xc] sm:$0xf]
        %v220 = vld [vmem:[%s183 + $0x10] sm:$0xf]
        %v221 = vld [vmem:[%s183 + $0x14] sm:$0xf]
        %v222 = vld [vmem:[%s183 + $0x18] sm:$0xf]
        %v223 = vld [vmem:[%s183 + $0x1c] sm:$0xf]
        %v224 = vld [vmem:[%s183 + $0x20] sm:$0xf]
        %v225 = vld [vmem:[%s183 + $0x24] sm:$0xf]
        %v226 = vld [vmem:[%s183 + $0x28] sm:$0xf]
        %v227 = vld [vmem:[%s183 + $0x2c] sm:$0xf]
        %v228 = vld [vmem:[%s183 + $0x30] sm:$0xf]
        %v229 = vld [vmem:[%s183 + $0x34] sm:$0xf]
        %v230 = vld [vmem:[%s183 + $0x38] sm:$0xf]
        %v231 = vld [vmem:[%s183 + $0x3c] sm:$0xf]
        %v232 = vld [vmem:[%s183 + $0x40] sm:$0xf]
        %v233 = vld [vmem:[%s183 + $0x44] sm:$0xf]
        %v234 = vld [vmem:[%s183 + $0x48] sm:$0xf]
        %v235 = vld [vmem:[%s183 + $0x4c] sm:$0xf]
        %v236 = vld [vmem:[%s183 + $0x50] sm:$0xf]
        %v237 = vld [vmem:[%s183 + $0x54] sm:$0xf]
        %v238 = vld [vmem:[%s183 + $0x58] sm:$0xf]
        %v239 = vld [vmem:[%s183 + $0x5c] sm:$0xf]
        %v240 = vld [vmem:[%s183 + $0x60] sm:$0xf]
        %v241 = vld [vmem:[%s183 + $0x64] sm:$0xf]
        %v242 = vld [vmem:[%s183 + $0x68] sm:$0xf]
        %v243 = vld [vmem:[%s183 + $0x6c] sm:$0xf]
        %v244 = vld [vmem:[%s183 + $0x70] sm:$0xf]
        %v245 = vld [vmem:[%s183 + $0x74] sm:$0xf]
        %v246 = vld [vmem:[%s183 + $0x78] sm:$0xf]
        %v247 = vld [vmem:[%s183 + $0x7c] sm:$0xf]
        %v248 = vunpack.c.l.bf16 %v216
        %v249 = vunpack.c.l.bf16 %v217
        %v250 = vunpack.c.l.bf16 %v218
        %v251 = vunpack.c.l.bf16 %v219
        %v252 = vunpack.c.l.bf16 %v220
        %v253 = vunpack.c.l.bf16 %v221
        %v254 = vunpack.c.l.bf16 %v222
        %v255 = vunpack.c.l.bf16 %v223
        %v256 = vunpack.c.l.bf16 %v224
        %v257 = vunpack.c.l.bf16 %v225
        %v258 = vunpack.c.l.bf16 %v226
        %v259 = vunpack.c.l.bf16 %v227
        %v260 = vunpack.c.l.bf16 %v228
        %v261 = vunpack.c.l.bf16 %v229
        %v262 = vunpack.c.l.bf16 %v230
        %v263 = vunpack.c.l.bf16 %v231
        %v264 = vunpack.c.l.bf16 %v232
        %v265 = vunpack.c.l.bf16 %v233
        %v266 = vunpack.c.l.bf16 %v234
        %v267 = vunpack.c.l.bf16 %v235
        %v268 = vunpack.c.l.bf16 %v236
        %v269 = vunpack.c.l.bf16 %v237
        %v270 = vunpack.c.l.bf16 %v238
        %v271 = vunpack.c.l.bf16 %v239
        %v272 = vunpack.c.l.bf16 %v240
        %v273 = vunpack.c.l.bf16 %v241
        %v274 = vunpack.c.l.bf16 %v242
        %v275 = vunpack.c.l.bf16 %v243
        %v276 = vunpack.c.l.bf16 %v244
        %v277 = vunpack.c.l.bf16 %v245
        %v278 = vunpack.c.l.bf16 %v246
        %v279 = vunpack.c.l.bf16 %v247
        %v280 = vpack.c.bf16 %v249, %v248
        %v281 = vpack.c.bf16 %v251, %v250
        %v282 = vpack.c.bf16 %v253, %v252
        %v283 = vpack.c.bf16 %v255, %v254
        %v284 = vpack.c.bf16 %v257, %v256
        %v285 = vpack.c.bf16 %v259, %v258
        %v286 = vpack.c.bf16 %v261, %v260
        %v287 = vpack.c.bf16 %v263, %v262
        %v288 = vpack.c.bf16 %v265, %v264
        %v289 = vpack.c.bf16 %v267, %v266
        %v290 = vpack.c.bf16 %v269, %v268
        %v291 = vpack.c.bf16 %v271, %v270
        %v292 = vpack.c.bf16 %v273, %v272
        %v293 = vpack.c.bf16 %v275, %v274
        %v294 = vpack.c.bf16 %v277, %v276
        %v295 = vpack.c.bf16 %v279, %v278
        %v296 = vld [vmem:[#allocation5] sm:$0xf]
        %v297 = vld [vmem:[#allocation5 + $0x4] sm:$0xf]
        %v298 = vld [vmem:[#allocation5 + $0x8] sm:$0xf]
        %v299 = vld [vmem:[#allocation5 + $0xc] sm:$0xf]
        %v300 = vld [vmem:[#allocation5 + $0x10] sm:$0xf]
        %v301 = vld [vmem:[#allocation5 + $0x14] sm:$0xf]
        %v302 = vld [vmem:[#allocation5 + $0x18] sm:$0xf]
        %v303 = vld [vmem:[#allocation5 + $0x1c] sm:$0xf]
        %v304 = vld [vmem:[#allocation5 + $0x20] sm:$0xf]
        %v305 = vld [vmem:[#allocation5 + $0x24] sm:$0xf]
        %v306 = vld [vmem:[#allocation5 + $0x28] sm:$0xf]
        %v307 = vld [vmem:[#allocation5 + $0x2c] sm:$0xf]
        %v308 = vld [vmem:[#allocation5 + $0x30] sm:$0xf]
        %v309 = vld [vmem:[#allocation5 + $0x34] sm:$0xf]
        %v310 = vld [vmem:[#allocation5 + $0x38] sm:$0xf]
        %v311 = vld [vmem:[#allocation5 + $0x3c] sm:$0xf]
        %v328 = vunpack.c.l.b16 %v296
        %v329 = vunpack.c.l.b16 %v297
        %v330 = vunpack.c.l.b16 %v298
        %v331 = vunpack.c.l.b16 %v299
        %v332 = vunpack.c.l.b16 %v300
        %v333 = vunpack.c.l.b16 %v301
        %v334 = vunpack.c.l.b16 %v302
        %v335 = vunpack.c.l.b16 %v303
        %v336 = vunpack.c.l.b16 %v304
        %v337 = vunpack.c.l.b16 %v305
        %v338 = vunpack.c.l.b16 %v306
        %v339 = vunpack.c.l.b16 %v307
        %v340 = vunpack.c.l.b16 %v308
        %v341 = vunpack.c.l.b16 %v309
        %v342 = vunpack.c.l.b16 %v310
        %v343 = vunpack.c.l.b16 %v311
        %v344 = vpack.c.b16 %v329, %v328
        %v345 = vpack.c.b16 %v331, %v330
        %v346 = vpack.c.b16 %v333, %v332
        %v347 = vpack.c.b16 %v335, %v334
        %v348 = vpack.c.b16 %v337, %v336
        %v349 = vpack.c.b16 %v339, %v338
        %v350 = vpack.c.b16 %v341, %v340
        %v351 = vpack.c.b16 %v343, %v342
        %360 = vmatprep.subr.bf16.mxu0 0
        %361 = vmatpush1.bf16.msra.mxu0 %v344
        %362 = vmatprep.subr.bf16.mxu0 0
        %363 = vmatpush1.bf16.msra.mxu0 %v345
        %364 = vmatprep.subr.bf16.mxu0 0
        %365 = vmatpush1.bf16.msra.mxu0 %v346
        %366 = vmatprep.subr.bf16.mxu0 0
        %367 = vmatpush1.bf16.msra.mxu0 %v347
        %368 = vmatprep.subr.bf16.mxu0 0
        %369 = vmatpush1.bf16.msra.mxu0 %v348
        %370 = vmatprep.subr.bf16.mxu0 0
        %371 = vmatpush1.bf16.msra.mxu0 %v349
        %372 = vmatprep.subr.bf16.mxu0 0
        %373 = vmatpush1.bf16.msra.mxu0 %v350
        %374 = vmatprep.subr.bf16.mxu0 0
        %375 = vmatpush1.bf16.msra.mxu0 %v351
        %376 = vmatprep.subr.bf16.mxu0 0
        %377 = vmatpush1.bf16.msra.mxu0 0
        %378 = vmatprep.subr.bf16.mxu0 0
        %379 = vmatpush1.bf16.msra.mxu0 0
        %380 = vmatprep.subr.bf16.mxu0 0
        %381 = vmatpush1.bf16.msra.mxu0 0
        %382 = vmatprep.subr.bf16.mxu0 0
        %383 = vmatpush1.bf16.msra.mxu0 0
        %384 = vmatprep.subr.bf16.mxu0 0
        %385 = vmatpush1.bf16.msra.mxu0 0
        %386 = vmatprep.subr.bf16.mxu0 0
        %387 = vmatpush1.bf16.msra.mxu0 0
        %388 = vmatprep.subr.bf16.mxu0 0
        %389 = vmatpush1.bf16.msra.mxu0 0
        %390 = vmatprep.subr.bf16.mxu0 0
        %391 = vmatpush1.bf16.msra.mxu0 0
        %392 = vmatprep.mubr.bf16.mxu0 0
        %393 = vmatmul.mubr.bf16.gmra.mrb[0].mxu0 %v280
        %v394 = vpop.f32.mrb[0].mxu0
        %v395 = vadd.f32 0.0, %v394
        %v396 = vpop.f32.mrb[0].mxu0
        %v397 = vpop.f32.mrb[0].mxu0
        %v398 = vadd.f32 0.0, %v397
        %v399 = vpop.f32.mrb[0].mxu0
        %400 = vmatprep.mubr.bf16.mxu0 0
        %401 = vmatmul.mubr.bf16.gmra.mrb[0].mxu0 %v281
        %v402 = vpop.f32.mrb[0].mxu0
        %v403 = vadd.f32 0.0, %v402
        %v404 = vpop.f32.mrb[0].mxu0
        %v405 = vpop.f32.mrb[0].mxu0
        %v406 = vadd.f32 0.0, %v405
        %v407 = vpop.f32.mrb[0].mxu0
        %408 = vmatprep.mubr.bf16.mxu0 0
        %409 = vmatmul.mubr.bf16.gmra.mrb[0].mxu0 %v282
        %v410 = vpop.f32.mrb[0].mxu0
        %v411 = vadd.f32 0.0, %v410
        %v412 = vpop.f32.mrb[0].mxu0
        %v413 = vpop.f32.mrb[0].mxu0
        %v414 = vadd.f32 0.0, %v413
        %v415 = vpop.f32.mrb[0].mxu0
        %416 = vmatprep.mubr.bf16.mxu0 0
        %417 = vmatmul.mubr.bf16.gmra.mrb[0].mxu0 %v283
        %v418 = vpop.f32.mrb[0].mxu0
        %v419 = vadd.f32 0.0, %v418
        %v420 = vpop.f32.mrb[0].mxu0
        %v421 = vpop.f32.mrb[0].mxu0
        %v422 = vadd.f32 0.0, %v421
        %v423 = vpop.f32.mrb[0].mxu0
        %424 = vmatprep.mubr.bf16.mxu0 0
        %425 = vmatmul.mubr.bf16.gmra.mrb[0].mxu0 %v284
        %v426 = vpop.f32.mrb[0].mxu0
        %v427 = vadd.f32 0.0, %v426
        %v428 = vpop.f32.mrb[0].mxu0
        %v429 = vpop.f32.mrb[0].mxu0
        %v430 = vadd.f32 0.0, %v429
        %v431 = vpop.f32.mrb[0].mxu0
        %432 = vmatprep.mubr.bf16.mxu0 0
        %433 = vmatmul.mubr.bf16.gmra.mrb[0].mxu0 %v285
        %v434 = vpop.f32.mrb[0].mxu0
        %v435 = vadd.f32 0.0, %v434
        %v436 = vpop.f32.mrb[0].mxu0
        %v437 = vpop.f32.mrb[0].mxu0
        %v438 = vadd.f32 0.0, %v437
        %v439 = vpop.f32.mrb[0].mxu0
        %440 = vmatprep.mubr.bf16.mxu0 0
        %441 = vmatmul.mubr.bf16.gmra.mrb[0].mxu0 %v286
        %v442 = vpop.f32.mrb[0].mxu0
        %v443 = vadd.f32 0.0, %v442
        %v444 = vpop.f32.mrb[0].mxu0
        %v445 = vpop.f32.mrb[0].mxu0
        %v446 = vadd.f32 0.0, %v445
        %v447 = vpop.f32.mrb[0].mxu0
        %448 = vmatprep.mubr.bf16.mxu0 0
        %449 = vmatmul.mubr.bf16.gmra.mrb[0].mxu0 %v287
        %v450 = vpop.f32.mrb[0].mxu0
        %v451 = vadd.f32 0.0, %v450
        %v452 = vpop.f32.mrb[0].mxu0
        %v453 = vpop.f32.mrb[0].mxu0
        %v454 = vadd.f32 0.0, %v453
        %v455 = vpop.f32.mrb[0].mxu0
        %456 = vmatprep.mubr.bf16.mxu0 0
        %457 = vmatmul.mubr.bf16.gmra.mrb[0].mxu0 %v288
        %v458 = vpop.f32.mrb[0].mxu0
        %v459 = vadd.f32 0.0, %v458
        %v460 = vpop.f32.mrb[0].mxu0
        %v461 = vpop.f32.mrb[0].mxu0
        %v462 = vadd.f32 0.0, %v461
        %v463 = vpop.f32.mrb[0].mxu0
        %464 = vmatprep.mubr.bf16.mxu0 0
        %465 = vmatmul.mubr.bf16.gmra.mrb[0].mxu0 %v289
        %v466 = vpop.f32.mrb[0].mxu0
        %v467 = vadd.f32 0.0, %v466
        %v468 = vpop.f32.mrb[0].mxu0
        %v469 = vpop.f32.mrb[0].mxu0
        %v470 = vadd.f32 0.0, %v469
        %v471 = vpop.f32.mrb[0].mxu0
        %472 = vmatprep.mubr.bf16.mxu0 0
        %473 = vmatmul.mubr.bf16.gmra.mrb[0].mxu0 %v290
        %v474 = vpop.f32.mrb[0].mxu0
        %v475 = vadd.f32 0.0, %v474
        %v476 = vpop.f32.mrb[0].mxu0
        %v477 = vpop.f32.mrb[0].mxu0
        %v478 = vadd.f32 0.0, %v477
        %v479 = vpop.f32.mrb[0].mxu0
        %480 = vmatprep.mubr.bf16.mxu0 0
        %481 = vmatmul.mubr.bf16.gmra.mrb[0].mxu0 %v291
        %v482 = vpop.f32.mrb[0].mxu0
        %v483 = vadd.f32 0.0, %v482
        %v484 = vpop.f32.mrb[0].mxu0
        %v485 = vpop.f32.mrb[0].mxu0
        %v486 = vadd.f32 0.0, %v485
        %v487 = vpop.f32.mrb[0].mxu0
        %488 = vmatprep.mubr.bf16.mxu0 0
        %489 = vmatmul.mubr.bf16.gmra.mrb[0].mxu0 %v292
        %v490 = vpop.f32.mrb[0].mxu0
        %v491 = vadd.f32 0.0, %v490
        %v492 = vpop.f32.mrb[0].mxu0
        %v493 = vpop.f32.mrb[0].mxu0
        %v494 = vadd.f32 0.0, %v493
        %v495 = vpop.f32.mrb[0].mxu0
        %496 = vmatprep.mubr.bf16.mxu0 0
        %497 = vmatmul.mubr.bf16.gmra.mrb[0].mxu0 %v293
        %v498 = vpop.f32.mrb[0].mxu0
        %v499 = vadd.f32 0.0, %v498
        %v500 = vpop.f32.mrb[0].mxu0
        %v501 = vpop.f32.mrb[0].mxu0
        %v502 = vadd.f32 0.0, %v501
        %v503 = vpop.f32.mrb[0].mxu0
        %504 = vmatprep.mubr.bf16.mxu0 0
        %505 = vmatmul.mubr.bf16.gmra.mrb[0].mxu0 %v294
        %v506 = vpop.f32.mrb[0].mxu0
        %v507 = vadd.f32 0.0, %v506
        %v508 = vpop.f32.mrb[0].mxu0
        %v509 = vpop.f32.mrb[0].mxu0
        %v510 = vadd.f32 0.0, %v509
        %v511 = vpop.f32.mrb[0].mxu0
        %512 = vmatprep.mubr.bf16.mxu0 0
        %513 = vmatmul.mubr.bf16.gmra.mrb[0].mxu0 %v295
        %v514 = vpop.f32.mrb[0].mxu0
        %v515 = vadd.f32 0.0, %v514
        %v516 = vpop.f32.mrb[0].mxu0
        %v517 = vpop.f32.mrb[0].mxu0
        %v518 = vadd.f32 0.0, %v517
        %v519 = vpop.f32.mrb[0].mxu0
        %520 = vdwg.mxu0
        %v521 = vpack.c.bf16 %v398, %v395
        %v522 = vpack.c.bf16 %v406, %v403
        %v523 = vpack.c.bf16 %v414, %v411
        %v524 = vpack.c.bf16 %v422, %v419
        %v525 = vpack.c.bf16 %v430, %v427
        %v526 = vpack.c.bf16 %v438, %v435
        %v527 = vpack.c.bf16 %v446, %v443
        %v528 = vpack.c.bf16 %v454, %v451
        %v529 = vpack.c.bf16 %v462, %v459
        %v530 = vpack.c.bf16 %v470, %v467
        %v531 = vpack.c.bf16 %v478, %v475
        %v532 = vpack.c.bf16 %v486, %v483
        %v533 = vpack.c.bf16 %v494, %v491
        %v534 = vpack.c.bf16 %v502, %v499
        %v535 = vpack.c.bf16 %v510, %v507
        %v536 = vpack.c.bf16 %v518, %v515
        %v553 = vunpack.c.l.b16 %v521
        %v554 = vunpack.c.h.b16 %v521
        %v555 = vunpack.c.l.b16 %v522
        %v556 = vunpack.c.h.b16 %v522
        %v557 = vunpack.c.l.b16 %v523
        %v558 = vunpack.c.h.b16 %v523
        %v559 = vunpack.c.l.b16 %v524
        %v560 = vunpack.c.h.b16 %v524
        %v561 = vunpack.c.l.b16 %v525
        %v562 = vunpack.c.h.b16 %v525
        %v563 = vunpack.c.l.b16 %v526
        %v564 = vunpack.c.h.b16 %v526
        %v565 = vunpack.c.l.b16 %v527
        %v566 = vunpack.c.h.b16 %v527
        %v567 = vunpack.c.l.b16 %v528
        %v568 = vunpack.c.h.b16 %v528
        %v569 = vunpack.c.l.b16 %v529
        %v570 = vunpack.c.h.b16 %v529
        %v571 = vunpack.c.l.b16 %v530
        %v572 = vunpack.c.h.b16 %v530
        %v573 = vunpack.c.l.b16 %v531
        %v574 = vunpack.c.h.b16 %v531
        %v575 = vunpack.c.l.b16 %v532
        %v576 = vunpack.c.h.b16 %v532
        %v577 = vunpack.c.l.b16 %v533
        %v578 = vunpack.c.h.b16 %v533
        %v579 = vunpack.c.l.b16 %v534
        %v580 = vunpack.c.h.b16 %v534
        %v581 = vunpack.c.l.b16 %v535
        %v582 = vunpack.c.h.b16 %v535
        %v583 = vunpack.c.l.b16 %v536
        %v584 = vunpack.c.h.b16 %v536
        %v585 = vpack.c.b16 %v553, %v553
        %v586 = vpack.c.b16 %v554, %v554
        %v587 = vpack.c.b16 %v555, %v555
        %v588 = vpack.c.b16 %v556, %v556
        %v589 = vpack.c.b16 %v557, %v557
        %v590 = vpack.c.b16 %v558, %v558
        %v591 = vpack.c.b16 %v559, %v559
        %v592 = vpack.c.b16 %v560, %v560
        %v593 = vpack.c.b16 %v561, %v561
        %v594 = vpack.c.b16 %v562, %v562
        %v595 = vpack.c.b16 %v563, %v563
        %v596 = vpack.c.b16 %v564, %v564
        %v597 = vpack.c.b16 %v565, %v565
        %v598 = vpack.c.b16 %v566, %v566
        %v599 = vpack.c.b16 %v567, %v567
        %v600 = vpack.c.b16 %v568, %v568
        %v601 = vpack.c.b16 %v569, %v569
        %v602 = vpack.c.b16 %v570, %v570
        %v603 = vpack.c.b16 %v571, %v571
        %v604 = vpack.c.b16 %v572, %v572
        %v605 = vpack.c.b16 %v573, %v573
        %v606 = vpack.c.b16 %v574, %v574
        %v607 = vpack.c.b16 %v575, %v575
        %v608 = vpack.c.b16 %v576, %v576
        %v609 = vpack.c.b16 %v577, %v577
        %v610 = vpack.c.b16 %v578, %v578
        %v611 = vpack.c.b16 %v579, %v579
        %v612 = vpack.c.b16 %v580, %v580
        %v613 = vpack.c.b16 %v581, %v581
        %v614 = vpack.c.b16 %v582, %v582
        %v615 = vpack.c.b16 %v583, %v583
        %v616 = vpack.c.b16 %v584, %v584
        %649 = vst [vmem:[%s207] sm:$0xf] %v585
        %650 = vst [vmem:[%s207 + $0x4] sm:$0xf] %v586
        %651 = vst [vmem:[%s207 + $0x8] sm:$0xf] %v587
        %652 = vst [vmem:[%s207 + $0xc] sm:$0xf] %v588
        %653 = vst [vmem:[%s207 + $0x10] sm:$0xf] %v589
        %654 = vst [vmem:[%s207 + $0x14] sm:$0xf] %v590
        %655 = vst [vmem:[%s207 + $0x18] sm:$0xf] %v591
        %656 = vst [vmem:[%s207 + $0x1c] sm:$0xf] %v592
        %657 = vst [vmem:[%s207 + $0x20] sm:$0xf] %v593
        %658 = vst [vmem:[%s207 + $0x24] sm:$0xf] %v594
        %659 = vst [vmem:[%s207 + $0x28] sm:$0xf] %v595
        %660 = vst [vmem:[%s207 + $0x2c] sm:$0xf] %v596
        %661 = vst [vmem:[%s207 + $0x30] sm:$0xf] %v597
        %662 = vst [vmem:[%s207 + $0x34] sm:$0xf] %v598
        %663 = vst [vmem:[%s207 + $0x38] sm:$0xf] %v599
        %664 = vst [vmem:[%s207 + $0x3c] sm:$0xf] %v600
        %665 = vst [vmem:[%s207 + $0x40] sm:$0xf] %v601
        %666 = vst [vmem:[%s207 + $0x44] sm:$0xf] %v602
        %667 = vst [vmem:[%s207 + $0x48] sm:$0xf] %v603
        %668 = vst [vmem:[%s207 + $0x4c] sm:$0xf] %v604
        %669 = vst [vmem:[%s207 + $0x50] sm:$0xf] %v605
        %670 = vst [vmem:[%s207 + $0x54] sm:$0xf] %v606
        %671 = vst [vmem:[%s207 + $0x58] sm:$0xf] %v607
        %672 = vst [vmem:[%s207 + $0x5c] sm:$0xf] %v608
        %673 = vst [vmem:[%s207 + $0x60] sm:$0xf] %v609
        %674 = vst [vmem:[%s207 + $0x64] sm:$0xf] %v610
        %675 = vst [vmem:[%s207 + $0x68] sm:$0xf] %v611
        %676 = vst [vmem:[%s207 + $0x6c] sm:$0xf] %v612
        %677 = vst [vmem:[%s207 + $0x70] sm:$0xf] %v613
        %678 = vst [vmem:[%s207 + $0x74] sm:$0xf] %v614
        %679 = vst [vmem:[%s207 + $0x78] sm:$0xf] %v615
        %680 = vst [vmem:[%s207 + $0x7c] sm:$0xf] %v616
        %v681 = vadd.f32 %v395, %v398
        %v682 = vadd.f32 %v681, %v403
        %v683 = vadd.f32 %v682, %v406
        %v684 = vadd.f32 %v683, %v411
        %v685 = vadd.f32 %v684, %v414
        %v686 = vadd.f32 %v685, %v419
        %v687 = vadd.f32 %v686, %v422
        %v688 = vadd.f32 %v687, %v427
        %v689 = vadd.f32 %v688, %v430
        %v690 = vadd.f32 %v689, %v435
        %v691 = vadd.f32 %v690, %v438
        %v692 = vadd.f32 %v691, %v443
        %v693 = vadd.f32 %v692, %v446
        %v694 = vadd.f32 %v693, %v451
        %v695 = vadd.f32 %v694, %v454
        %v696 = vadd.f32 %v695, %v459
        %v697 = vadd.f32 %v696, %v462
        %v698 = vadd.f32 %v697, %v467
        %v699 = vadd.f32 %v698, %v470
        %v700 = vadd.f32 %v699, %v475
        %v701 = vadd.f32 %v700, %v478
        %v702 = vadd.f32 %v701, %v483
        %v703 = vadd.f32 %v702, %v486
        %v704 = vadd.f32 %v703, %v491
        %v705 = vadd.f32 %v704, %v494
        %v706 = vadd.f32 %v705, %v499
        %v707 = vadd.f32 %v706, %v502
        %v708 = vadd.f32 %v707, %v507
        %v709 = vadd.f32 %v708, %v510
        %v710 = vadd.f32 %v709, %v515
        %v711 = vadd.f32 %v710, %v518
        %v712 = vrot.slane %v711, 4
        %v713 = vadd.f32 %v711, %v712
        %v714 = vrot.slane %v713, 2
        %v715 = vadd.f32 %v713, %v714
        %v716 = vrot.slane %v715, 1
        %v717 = vadd.f32 %v715, %v716
        %718 = vst [vmem:[%s214] sm:$0x1] %v717
        %v719 = vmul.f32 %v395, %v395
        %v720 = vmul.f32 %v398, %v398
        %v721 = vmul.f32 %v403, %v403
        %v722 = vmul.f32 %v406, %v406
        %v723 = vmul.f32 %v411, %v411
        %v724 = vmul.f32 %v414, %v414
        %v725 = vmul.f32 %v419, %v419
        %v726 = vmul.f32 %v422, %v422
        %v727 = vmul.f32 %v427, %v427
        %v728 = vmul.f32 %v430, %v430
        %v729 = vmul.f32 %v435, %v435
        %v730 = vmul.f32 %v438, %v438
        %v731 = vmul.f32 %v443, %v443
        %v732 = vmul.f32 %v446, %v446
        %v733 = vmul.f32 %v451, %v451
        %v734 = vmul.f32 %v454, %v454
        %v735 = vmul.f32 %v459, %v459
        %v736 = vmul.f32 %v462, %v462
        %v737 = vmul.f32 %v467, %v467
        %v738 = vmul.f32 %v470, %v470
        %v739 = vmul.f32 %v475, %v475
        %v740 = vmul.f32 %v478, %v478
        %v741 = vmul.f32 %v483, %v483
        %v742 = vmul.f32 %v486, %v486
        %v743 = vmul.f32 %v491, %v491
        %v744 = vmul.f32 %v494, %v494
        %v745 = vmul.f32 %v499, %v499
        %v746 = vmul.f32 %v502, %v502
        %v747 = vmul.f32 %v507, %v507
        %v748 = vmul.f32 %v510, %v510
        %v749 = vmul.f32 %v515, %v515
        %v750 = vmul.f32 %v518, %v518
        %v751 = vadd.f32 %v719, %v720
        %v752 = vadd.f32 %v751, %v721
        %v753 = vadd.f32 %v752, %v722
        %v754 = vadd.f32 %v753, %v723
        %v755 = vadd.f32 %v754, %v724
        %v756 = vadd.f32 %v755, %v725
        %v757 = vadd.f32 %v756, %v726
        %v758 = vadd.f32 %v757, %v727
        %v759 = vadd.f32 %v758, %v728
        %v760 = vadd.f32 %v759, %v729
        %v761 = vadd.f32 %v760, %v730
        %v762 = vadd.f32 %v761, %v731
        %v763 = vadd.f32 %v762, %v732
        %v764 = vadd.f32 %v763, %v733
        %v765 = vadd.f32 %v764, %v734
        %v766 = vadd.f32 %v765, %v735
        %v767 = vadd.f32 %v766, %v736
        %v768 = vadd.f32 %v767, %v737
        %v769 = vadd.f32 %v768, %v738
        %v770 = vadd.f32 %v769, %v739
        %v771 = vadd.f32 %v770, %v740
        %v772 = vadd.f32 %v771, %v741
        %v773 = vadd.f32 %v772, %v742
        %v774 = vadd.f32 %v773, %v743
        %v775 = vadd.f32 %v774, %v744
        %v776 = vadd.f32 %v775, %v745
        %v777 = vadd.f32 %v776, %v746
        %v778 = vadd.f32 %v777, %v747
        %v779 = vadd.f32 %v778, %v748
        %v780 = vadd.f32 %v779, %v749
        %v781 = vadd.f32 %v780, %v750
        %v782 = vrot.slane %v781, 4
        %v783 = vadd.f32 %v781, %v782
        %v784 = vrot.slane %v783, 2
        %v785 = vadd.f32 %v783, %v784
        %v786 = vrot.slane %v785, 1
        %v787 = vadd.f32 %v785, %v786
        %788 = vst [vmem:[%s214 + $0x1] sm:$0x1] %v787
        %s789 = sand.u32 %s80, 1
        %s790 = scalar_lea.sflag [#allocation4], %s789
        %s791 = sand.u32 %s80, 1
        %s792 = smul.addr %s791, 128
        %s793 = scalar_lea.vmem [#allocation7], %s792
        %s794 = sand.u32 %s106, 1
        %s795 = scalar_lea.sflag [#allocation9], %s794
        %s796 = sand.u32 %s106, 1
        %s797 = smul.addr %s796, 2
        %s798 = scalar_lea.vmem [#allocation8], %s797
        // Predicated region
        $region37: #{down_res_layer.9} parent=27 // pred_check
          %p799 = pneg %p90
        $region38: #{down_res_layer.9} parent=27 // pred_check_branch
          %801 = sbr.rel (%p799) target = $region40
        $region39: #{down_res_layer.9} parent=27 // pred_region
          %s803 = ssub.s32 2048, 2048
          %804 = vsyncadd %s790, %s803
          %s805 = smul.addr %s25, 32
          %s806 = smul.addr %s805, 64
          %s807 = scalar_lea.hbm %s2, %s806
          %s808 = sshll.u32 %s793, 4
          %s809 = int_to_ptr.vmem [resolvable:$true] %s808
          %814 = dma.vmem_to_hbm [thread:$0]  %s809, 2048, %s807, %s790, 64, 64, 4
        $region40: #{down_res_layer.9} parent=27 // pred_fallthru
          _
        // Predicated region
        $region41: #{down_res_layer.9} parent=27 // pred_check
          %p815 = pneg %p116
        $region42: #{down_res_layer.9} parent=27 // pred_check_branch
          %817 = sbr.rel (%p815) target = $region44
        $region43: #{down_res_layer.9} parent=27 // pred_region
          %s819 = ssub.s32 32, 32
          %820 = vsyncadd %s795, %s819
          %s821 = smul.addr %s25, 32
          %s822 = scalar_lea.hbm %s3, %s821
          %s824 = sshll.u32 %s798, 4
          %s825 = int_to_ptr.vmem [resolvable:$true] %s824
          %827 = dma.vmem_to_hbm [thread:$0]  %s825, 32, %s822, %s795
        $region44: #{down_res_layer.9} parent=27 // pred_fallthru
          _
      $region28: #{down_res_layer.9} parent=5 // pred_fallthru
        _
      %p828 = scmp.le.s32.totalorder 2, %s20
      // Predicated region
      $region45: #{down_res_layer.9} parent=5 // pred_check
        %p829 = pneg %p828
      $region46: #{down_res_layer.9} parent=5 // pred_check_branch
        %831 = sbr.rel (%p829) target = $region48
      $region47: #{down_res_layer.9} parent=5 // pred_region
        %s832 = ssub.s32 %s20, 2
        // Predicated region
        $region49: #{down_res_layer.9} parent=47 // pred_check
          %p833 = pneg %p96
        $region50: #{down_res_layer.9} parent=47 // pred_check_branch
          %835 = sbr.rel (%p833) target = $region52
        $region51: #{down_res_layer.9} parent=47 // pred_region
          %s836 = sand.u32 %s81, 1
          %s837 = scalar_lea.sflag [#allocation4], %s836
          %s838 = sand.u32 %s81, 1
          %s839 = smul.addr %s838, 128
          %s840 = scalar_lea.vmem [#allocation7], %s839
          %841 = dma.done %s837, 2048
        $region52: #{down_res_layer.9} parent=47 // pred_fallthru
          _
        // Predicated region
        $region53: #{down_res_layer.9} parent=47 // pred_check
          %p842 = pneg %p122
        $region54: #{down_res_layer.9} parent=47 // pred_check_branch
          %844 = sbr.rel (%p842) target = $region56
        $region55: #{down_res_layer.9} parent=47 // pred_region
          %s845 = sand.u32 %s107, 1
          %s846 = scalar_lea.sflag [#allocation9], %s845
          %s847 = sand.u32 %s107, 1
          %s848 = smul.addr %s847, 2
          %s849 = scalar_lea.vmem [#allocation8], %s848
          %850 = dma.done %s846, 32
        $region56: #{down_res_layer.9} parent=47 // pred_fallthru
          _
      $region48: #{down_res_layer.9} parent=5 // pred_fallthru
        _
    $region6: #{down_res_layer.9} parent=1 // loop_footer
      %s24 = sadd.s32 1, %s20
    $region7: #{down_res_layer.9} parent=1 // loop_footer_branch
      %19 = sbr.rel target = $region3
    $region8: #{down_res_layer.9} parent=1 // loop_exit
      _
    %851 = vsyncpa [#allocation3], 1
    %s852 = scalar_lea.sflag [#allocation3], 1
    %853 = vsyncpa %s852, 1
    %854 = vsyncpa [#allocation6], 1
    %855 = vsyncpa [#allocation4], 1
    %s856 = scalar_lea.sflag [#allocation4], 1
    %857 = vsyncpa %s856, 1
    %858 = vsyncpa [#allocation9], 1
    %s859 = scalar_lea.sflag [#allocation9], 1
    %860 = vsyncpa %s859, 1

// kernel: down_res_layer.10
$region0: #{down_res_layer.10}
  #allocation0 [shape = 'u32[]', space=smem, size = 0x4, offset = 0x4, fixed_abs, tag = 'smem constant byte address 0x4 - core index']
  #allocation1 [shape = 'u32[144,128]{1,0:T(1,128)}', space=vmem, size = 0x12000, scoped, tag = 'internal scratch']
  %s0 = inlined_call_operand.hbm [shape: bf16[2,256,128], index: 0, kind: input, shape index: {}]
  %s1 = inlined_call_operand.hbm [shape: bf16[2,256,128], index: 1, kind: input, shape index: {}]
  %s2 = inlined_call_operand.hbm [shape: f32[1,128], index: 2, kind: input, shape index: {}]
  %s3 = inlined_call_operand.hbm [shape: f32[1,128], index: 3, kind: input, shape index: {}]
  %s4 = inlined_call_operand.hbm [shape: f32[1,128], index: 4, kind: input, shape index: {}]
  %s5 = inlined_call_operand.hbm [shape: f32[1,128], index: 5, kind: input, shape index: {}]
  %s6 = inlined_call_operand.hbm [shape: f32[2,2,128], index: 6, kind: output, shape index: {}]
  %s7 = sld [smem:[#allocation0]]
  $region81: #{down_res_layer.10} parent=0
    _
  %s9 = ssub.s32 1, %s7
  %s10 = scalar_select 0, %s9, %s7
  $region1: #{down_res_layer.10} parent=0
    #allocation2 [shape = 'u8[131072]{0}', space=vmem, size = 0x20000, scoped, tag = 'input window, operand 0']
    #allocation3 [shape = 's32[2]{0}', space=sflag, size = 0x8, scoped, tag = 'scoped memory for down_res_layer.10']
    #allocation4 [shape = 's32[2]{0}', space=sflag, size = 0x8, scoped, tag = 'scoped memory for down_res_layer.10']
    #allocation5 [shape = 'u8[131072]{0}', space=vmem, size = 0x20000, scoped, tag = 'input window, operand 1']
    #allocation6 [shape = 's32[2]{0}', space=sflag, size = 0x8, scoped, tag = 'scoped memory for down_res_layer.10']
    #allocation7 [shape = 'u8[512]{0}', space=vmem, size = 0x400, scoped, tag = 'input window, operand 2, single buffered']
    #allocation8 [shape = 'u8[512]{0}', space=vmem, size = 0x400, scoped, tag = 'input window, operand 3, single buffered']
    #allocation9 [shape = 's32[1]{0}', space=sflag, size = 0x4, scoped, tag = 'scoped memory for down_res_layer.10']
    #allocation10 [shape = 'u8[512]{0}', space=vmem, size = 0x400, scoped, tag = 'input window, operand 4, single buffered']
    #allocation11 [shape = 'u8[512]{0}', space=vmem, size = 0x400, scoped, tag = 'input window, operand 5, single buffered']
    #allocation12 [shape = 's32[1]{0}', space=sflag, size = 0x4, scoped, tag = 'scoped memory for down_res_layer.10']
    #allocation13 [shape = 'u8[2048]{0}', space=vmem, size = 0x800, scoped, tag = 'output window, operand 0']
    %11 = vsyncpa [#allocation3], 0
    %s12 = scalar_lea.sflag [#allocation3], 1
    %13 = vsyncpa %s12, 0
    %14 = vsyncpa [#allocation6], 0
    %s15 = scalar_lea.sflag [#allocation6], 1
    %16 = vsyncpa %s15, 0
    %17 = vsyncpa [#allocation9], 0
    %18 = vsyncpa [#allocation12], 0
    %19 = vsyncpa [#allocation4], 0
    %s20 = scalar_lea.sflag [#allocation4], 1
    %21 = vsyncpa %s20, 0
    loop: start=0, step=1, limit=4
    $region2: #{down_res_layer.10} parent=1 // loop_pre_header
      _
    $region3: #{down_res_layer.10} parent=1 // loop_header
      %s23 = sphi 0, %s27
      %p24 = scmp.ge.s32.totalorder %s23, 4
      %s33 = sphi 0, %s35
      %s36 = sphi 0, %s33
      %s37 = sphi 0, %s36
      %s53 = sphi 0, %s37
      %s59 = sphi 0, %s61
      %s62 = sphi 0, %s59
      %s63 = sphi 0, %s62
      %s79 = sphi 0, %s63
      %s83 = sphi 0, %s83
      %s85 = sphi 0, %s83
      %s86 = sphi 0, %s85
      %s100 = sphi 0, %s86
      %s104 = sphi 0, %s104
      %s106 = sphi 0, %s104
      %s107 = sphi 0, %s106
      %s121 = sphi 0, %s107
      %s125 = sphi 0, %s125
      %s127 = sphi 0, %s125
      %s128 = sphi 0, %s127
      %s142 = sphi 0, %s128
      %s146 = sphi 0, %s146
      %s148 = sphi 0, %s146
      %s149 = sphi 0, %s148
      %s163 = sphi 0, %s149
      %s169 = sphi 0, %s171
      %s172 = sphi 0, %s169
      %s173 = sphi 0, %s172
      %s189 = sphi 0, %s173
    $region4: #{down_res_layer.10} parent=1 // loop_header_branch
      %26 = sbr.rel (%p24) target = $region8
    $region5: #{down_res_layer.10} parent=1 // loop_body
      %s28 = ssub.s32 %s23, 1
      %s29 = ssub.s32 %s23, 2
      %s30 = sadd.s32 %s23, 1
      %s31 = ssub.s32 %s23, %s30
      %p32 = scmp.eq.s32.totalorder %s31, 0
      %s34 = sadd.s32 %s33, 1
      %s35 = scalar_select %p32, %s33, %s34
      %p38 = pneg %p32
      %p39 = scmp.eq.s32.totalorder %s23, 1
      %p40 = por %p38, %p39
      %p41 = scmp.ne.s32.totalorder %s33, %s36
      %p42 = scmp.eq.s32.totalorder %s23, 0
      %p43 = por %p41, %p42
      %p44 = scmp.ne.s32.totalorder %s33, %s36
      %p45 = scmp.eq.s32.totalorder %s28, 1
      %p46 = por %p44, %p45
      %p47 = scmp.ne.s32.totalorder %s36, %s37
      %p48 = scmp.eq.s32.totalorder %s28, 0
      %p49 = por %p47, %p48
      %p50 = scmp.ne.s32.totalorder %s36, %s37
      %p51 = scmp.eq.s32.totalorder %s29, 1
      %p52 = por %p50, %p51
      %p54 = scmp.ne.s32.totalorder %s37, %s53
      %p55 = scmp.eq.s32.totalorder %s29, 0
      %p56 = por %p54, %p55
      %s57 = ssub.s32 %s23, %s30
      %p58 = scmp.eq.s32.totalorder %s57, 0
      %s60 = sadd.s32 %s59, 1
      %s61 = scalar_select %p58, %s59, %s60
      %p64 = pneg %p58
      %p65 = scmp.eq.s32.totalorder %s23, 1
      %p66 = por %p64, %p65
      %p67 = scmp.ne.s32.totalorder %s59, %s62
      %p68 = scmp.eq.s32.totalorder %s23, 0
      %p69 = por %p67, %p68
      %p70 = scmp.ne.s32.totalorder %s59, %s62
      %p71 = scmp.eq.s32.totalorder %s28, 1
      %p72 = por %p70, %p71
      %p73 = scmp.ne.s32.totalorder %s62, %s63
      %p74 = scmp.eq.s32.totalorder %s28, 0
      %p75 = por %p73, %p74
      %p76 = scmp.ne.s32.totalorder %s62, %s63
      %p77 = scmp.eq.s32.totalorder %s29, 1
      %p78 = por %p76, %p77
      %p80 = scmp.ne.s32.totalorder %s63, %s79
      %p81 = scmp.eq.s32.totalorder %s29, 0
      %p82 = por %p80, %p81
      %s84 = sadd.s32 %s83, 1
      %p87 = scmp.eq.s32.totalorder %s23, 1
      %p88 = scmp.ne.s32.totalorder %s83, %s85
      %p89 = scmp.eq.s32.totalorder %s23, 0
      %p90 = por %p88, %p89
      %p91 = scmp.ne.s32.totalorder %s83, %s85
      %p92 = scmp.eq.s32.totalorder %s28, 1
      %p93 = por %p91, %p92
      %p94 = scmp.ne.s32.totalorder %s85, %s86
      %p95 = scmp.eq.s32.totalorder %s28, 0
      %p96 = por %p94, %p95
      %p97 = scmp.ne.s32.totalorder %s85, %s86
      %p98 = scmp.eq.s32.totalorder %s29, 1
      %p99 = por %p97, %p98
      %p101 = scmp.ne.s32.totalorder %s86, %s100
      %p102 = scmp.eq.s32.totalorder %s29, 0
      %p103 = por %p101, %p102
      %s105 = sadd.s32 %s104, 1
      %p108 = scmp.eq.s32.totalorder %s23, 1
      %p109 = scmp.ne.s32.totalorder %s104, %s106
      %p110 = scmp.eq.s32.totalorder %s23, 0
      %p111 = por %p109, %p110
      %p112 = scmp.ne.s32.totalorder %s104, %s106
      %p113 = scmp.eq.s32.totalorder %s28, 1
      %p114 = por %p112, %p113
      %p115 = scmp.ne.s32.totalorder %s106, %s107
      %p116 = scmp.eq.s32.totalorder %s28, 0
      %p117 = por %p115, %p116
      %p118 = scmp.ne.s32.totalorder %s106, %s107
      %p119 = scmp.eq.s32.totalorder %s29, 1
      %p120 = por %p118, %p119
      %p122 = scmp.ne.s32.totalorder %s107, %s121
      %p123 = scmp.eq.s32.totalorder %s29, 0
      %p124 = por %p122, %p123
      %s126 = sadd.s32 %s125, 1
      %p129 = scmp.eq.s32.totalorder %s23, 1
      %p130 = scmp.ne.s32.totalorder %s125, %s127
      %p131 = scmp.eq.s32.totalorder %s23, 0
      %p132 = por %p130, %p131
      %p133 = scmp.ne.s32.totalorder %s125, %s127
      %p134 = scmp.eq.s32.totalorder %s28, 1
      %p135 = por %p133, %p134
      %p136 = scmp.ne.s32.totalorder %s127, %s128
      %p137 = scmp.eq.s32.totalorder %s28, 0
      %p138 = por %p136, %p137
      %p139 = scmp.ne.s32.totalorder %s127, %s128
      %p140 = scmp.eq.s32.totalorder %s29, 1
      %p141 = por %p139, %p140
      %p143 = scmp.ne.s32.totalorder %s128, %s142
      %p144 = scmp.eq.s32.totalorder %s29, 0
      %p145 = por %p143, %p144
      %s147 = sadd.s32 %s146, 1
      %p150 = scmp.eq.s32.totalorder %s23, 1
      %p151 = scmp.ne.s32.totalorder %s146, %s148
      %p152 = scmp.eq.s32.totalorder %s23, 0
      %p153 = por %p151, %p152
      %p154 = scmp.ne.s32.totalorder %s146, %s148
      %p155 = scmp.eq.s32.totalorder %s28, 1
      %p156 = por %p154, %p155
      %p157 = scmp.ne.s32.totalorder %s148, %s149
      %p158 = scmp.eq.s32.totalorder %s28, 0
      %p159 = por %p157, %p158
      %p160 = scmp.ne.s32.totalorder %s148, %s149
      %p161 = scmp.eq.s32.totalorder %s29, 1
      %p162 = por %p160, %p161
      %p164 = scmp.ne.s32.totalorder %s149, %s163
      %p165 = scmp.eq.s32.totalorder %s29, 0
      %p166 = por %p164, %p165
      %s167 = ssub.s32 %s23, %s30
      %p168 = scmp.eq.s32.totalorder %s167, 0
      %s170 = sadd.s32 %s169, 1
      %s171 = scalar_select %p168, %s169, %s170
      %p174 = pneg %p168
      %p175 = scmp.eq.s32.totalorder %s23, 1
      %p176 = por %p174, %p175
      %p177 = scmp.ne.s32.totalorder %s169, %s172
      %p178 = scmp.eq.s32.totalorder %s23, 0
      %p179 = por %p177, %p178
      %p180 = scmp.ne.s32.totalorder %s169, %s172
      %p181 = scmp.eq.s32.totalorder %s28, 1
      %p182 = por %p180, %p181
      %p183 = scmp.ne.s32.totalorder %s172, %s173
      %p184 = scmp.eq.s32.totalorder %s28, 0
      %p185 = por %p183, %p184
      %p186 = scmp.ne.s32.totalorder %s172, %s173
      %p187 = scmp.eq.s32.totalorder %s29, 1
      %p188 = por %p186, %p187
      %p190 = scmp.ne.s32.totalorder %s173, %s189
      %p191 = scmp.eq.s32.totalorder %s29, 0
      %p192 = por %p190, %p191
      %p193 = scmp.le.s32.totalorder 1, %s23
      %p194 = scmp.lt.s32.totalorder %s23, 3
      %p195 = pnand %p193, %p194
      %p196 = pneg %p195
      // Predicated region
      $region9: #{down_res_layer.10} parent=5 // pred_check
        _
      $region10: #{down_res_layer.10} parent=5 // pred_check_branch
        %198 = sbr.rel (%p195) target = $region12
      $region11: #{down_res_layer.10} parent=5 // pred_region
        %s199 = ssub.s32 %s23, 1
        // Predicated region
        $region13: #{down_res_layer.10} parent=11 // pred_check
          %p200 = pneg %p96
        $region14: #{down_res_layer.10} parent=11 // pred_check_branch
          %202 = sbr.rel (%p200) target = $region16
        $region15: #{down_res_layer.10} parent=11 // pred_region
          %s204 = ssub.s32 16, 16
          %205 = vsyncadd [#allocation6], %s204
          %s207 = sshll.u32 [#allocation7], 4
          %s208 = int_to_ptr.vmem [resolvable:$true] %s207
          %210 = dma.hbm_to_vmem [thread:$0]  %s2, 16, %s208, [#allocation6]
        $region16: #{down_res_layer.10} parent=11 // pred_fallthru
          _
        // Predicated region
        $region17: #{down_res_layer.10} parent=11 // pred_check
          %p211 = pneg %p117
        $region18: #{down_res_layer.10} parent=11 // pred_check_branch
          %213 = sbr.rel (%p211) target = $region20
        $region19: #{down_res_layer.10} parent=11 // pred_region
          %s215 = ssub.s32 16, 16
          %216 = vsyncadd [#allocation9], %s215
          %s218 = sshll.u32 [#allocation8], 4
          %s219 = int_to_ptr.vmem [resolvable:$true] %s218
          %221 = dma.hbm_to_vmem [thread:$0]  %s3, 16, %s219, [#allocation9]
        $region20: #{down_res_layer.10} parent=11 // pred_fallthru
          _
        // Predicated region
        $region21: #{down_res_layer.10} parent=11 // pred_check
          %p222 = pneg %p138
        $region22: #{down_res_layer.10} parent=11 // pred_check_branch
          %224 = sbr.rel (%p222) target = $region24
        $region23: #{down_res_layer.10} parent=11 // pred_region
          %s226 = ssub.s32 16, 16
          %227 = vsyncadd [#allocation9], %s226
          %s229 = sshll.u32 [#allocation10], 4
          %s230 = int_to_ptr.vmem [resolvable:$true] %s229
          %232 = dma.hbm_to_vmem [thread:$0]  %s4, 16, %s230, [#allocation9]
        $region24: #{down_res_layer.10} parent=11 // pred_fallthru
          _
        // Predicated region
        $region25: #{down_res_layer.10} parent=11 // pred_check
          %p233 = pneg %p159
        $region26: #{down_res_layer.10} parent=11 // pred_check_branch
          %235 = sbr.rel (%p233) target = $region28
        $region27: #{down_res_layer.10} parent=11 // pred_region
          %s237 = ssub.s32 16, 16
          %238 = vsyncadd [#allocation12], %s237
          %s240 = sshll.u32 [#allocation11], 4
          %s241 = int_to_ptr.vmem [resolvable:$true] %s240
          %243 = dma.hbm_to_vmem [thread:$0]  %s5, 16, %s241, [#allocation12]
        $region28: #{down_res_layer.10} parent=11 // pred_fallthru
          _
      $region12: #{down_res_layer.10} parent=5 // pred_fallthru
        _
      %p244 = scmp.lt.s32.totalorder %s23, 2
      // Predicated region
      $region29: #{down_res_layer.10} parent=5 // pred_check
        %p245 = pneg %p244
      $region30: #{down_res_layer.10} parent=5 // pred_check_branch
        %247 = sbr.rel (%p245) target = $region32
      $region31: #{down_res_layer.10} parent=5 // pred_region
        // Predicated region
        $region33: #{down_res_layer.10} parent=31 // pred_check
          %p248 = pneg %p43
        $region34: #{down_res_layer.10} parent=31 // pred_check_branch
          %250 = sbr.rel (%p248) target = $region36
        $region35: #{down_res_layer.10} parent=31 // pred_region
          %s251 = sand.u32 %s33, 1
          %s252 = scalar_lea.sflag [#allocation3], %s251
          %s253 = sand.u32 %s33, 1
          %s254 = smul.addr %s253, 128
          %s255 = scalar_lea.vmem [#allocation2], %s254
          %s257 = ssub.s32 2048, 2048
          %258 = vsyncadd %s252, %s257
          %s259 = smul.addr %s23, 32
          %s260 = smul.addr %s259, 64
          %s261 = scalar_lea.hbm %s0, %s260
          %s262 = sshll.u32 %s255, 4
          %s263 = int_to_ptr.vmem [resolvable:$true] %s262
          %268 = dma.hbm_to_vmem [thread:$0]  %s261, 2048, %s263, %s252, 64, 64, 4
        $region36: #{down_res_layer.10} parent=31 // pred_fallthru
          _
        // Predicated region
        $region37: #{down_res_layer.10} parent=31 // pred_check
          %p269 = pneg %p69
        $region38: #{down_res_layer.10} parent=31 // pred_check_branch
          %271 = sbr.rel (%p269) target = $region40
        $region39: #{down_res_layer.10} parent=31 // pred_region
          %s272 = sand.u32 %s23, 1
          %s273 = scalar_lea.sflag [#allocation6], %s272
          %s274 = sand.u32 %s59, 1
          %s275 = smul.addr %s274, 128
          %s276 = scalar_lea.vmem [#allocation5], %s275
          %s278 = ssub.s32 2048, 2048
          %279 = vsyncadd %s273, %s278
          %s280 = smul.addr %s23, 32
          %s281 = smul.addr %s280, 64
          %s282 = scalar_lea.hbm %s1, %s281
          %s283 = sshll.u32 %s276, 4
          %s284 = int_to_ptr.vmem [resolvable:$true] %s283
          %289 = dma.hbm_to_vmem [thread:$0]  %s282, 2048, %s284, %s273, 64, 64, 4
        $region40: #{down_res_layer.10} parent=31 // pred_fallthru
          _
      $region32: #{down_res_layer.10} parent=5 // pred_fallthru
        _
      %p290 = scmp.le.s32.totalorder 1, %s23
      %p291 = scmp.lt.s32.totalorder %s23, 3
      %p292 = pnand %p290, %p291
      %p293 = pneg %p292
      // Predicated region
      $region41: #{down_res_layer.10} parent=5 // pred_check
        _
      $region42: #{down_res_layer.10} parent=5 // pred_check_branch
        %295 = sbr.rel (%p292) target = $region44
      $region43: #{down_res_layer.10} parent=5 // pred_region
        %s296 = ssub.s32 %s23, 1
        %s297 = sand.u32 %s36, 1
        %s298 = scalar_lea.sflag [#allocation3], %s297
        %s299 = sand.u32 %s36, 1
        %s300 = smul.addr %s299, 128
        %s301 = scalar_lea.vmem [#allocation2], %s300
        // Predicated region
        $region45: #{down_res_layer.10} parent=43 // pred_check
          %p302 = pneg %p49
        $region46: #{down_res_layer.10} parent=43 // pred_check_branch
          %304 = sbr.rel (%p302) target = $region48
        $region47: #{down_res_layer.10} parent=43 // pred_region
          %305 = dma.done %s298, 2048
        $region48: #{down_res_layer.10} parent=43 // pred_fallthru
          _
        %s306 = sand.u32 %s28, 1
        %s307 = scalar_lea.sflag [#allocation6], %s306
        %s308 = sand.u32 %s62, 1
        %s309 = smul.addr %s308, 128
        %s310 = scalar_lea.vmem [#allocation5], %s309
        // Predicated region
        $region49: #{down_res_layer.10} parent=43 // pred_check
          %p311 = pneg %p75
        $region50: #{down_res_layer.10} parent=43 // pred_check_branch
          %313 = sbr.rel (%p311) target = $region52
        $region51: #{down_res_layer.10} parent=43 // pred_region
          %314 = dma.done %s307, 2048
        $region52: #{down_res_layer.10} parent=43 // pred_fallthru
          _
        // Predicated region
        $region53: #{down_res_layer.10} parent=43 // pred_check
          %p315 = pneg %p96
        $region54: #{down_res_layer.10} parent=43 // pred_check_branch
          %317 = sbr.rel (%p315) target = $region56
        $region55: #{down_res_layer.10} parent=43 // pred_region
          %318 = dma.done [#allocation6], 16
        $region56: #{down_res_layer.10} parent=43 // pred_fallthru
          _
        // Predicated region
        $region57: #{down_res_layer.10} parent=43 // pred_check
          %p319 = pneg %p117
        $region58: #{down_res_layer.10} parent=43 // pred_check_branch
          %321 = sbr.rel (%p319) target = $region60
        $region59: #{down_res_layer.10} parent=43 // pred_region
          %322 = dma.done [#allocation9], 16
        $region60: #{down_res_layer.10} parent=43 // pred_fallthru
          _
        // Predicated region
        $region61: #{down_res_layer.10} parent=43 // pred_check
          %p323 = pneg %p138
        $region62: #{down_res_layer.10} parent=43 // pred_check_branch
          %325 = sbr.rel (%p323) target = $region64
        $region63: #{down_res_layer.10} parent=43 // pred_region
          %326 = dma.done [#allocation9], 16
        $region64: #{down_res_layer.10} parent=43 // pred_fallthru
          _
        // Predicated region
        $region65: #{down_res_layer.10} parent=43 // pred_check
          %p327 = pneg %p159
        $region66: #{down_res_layer.10} parent=43 // pred_check_branch
          %329 = sbr.rel (%p327) target = $region68
        $region67: #{down_res_layer.10} parent=43 // pred_region
          %330 = dma.done [#allocation12], 16
        $region68: #{down_res_layer.10} parent=43 // pred_fallthru
          _
        %s331 = sand.u32 %s36, 1
        %s332 = scalar_lea.sflag [#allocation3], %s331
        %s333 = sand.u32 %s36, 1
        %s334 = smul.addr %s333, 128
        %s335 = scalar_lea.vmem [#allocation2], %s334
        %p336 = pneg %p49
        %p337 = pneg %p46
        %s338 = sand.u32 %s28, 1
        %s339 = scalar_lea.sflag [#allocation6], %s338
        %s340 = sand.u32 %s62, 1
        %s341 = smul.addr %s340, 128
        %s342 = scalar_lea.vmem [#allocation5], %s341
        %p343 = pneg %p75
        %p344 = pneg %p72
        %p345 = pneg %p96
        %p346 = pneg %p93
        %p347 = pneg %p117
        %p348 = pneg %p114
        %p349 = pneg %p138
        %p350 = pneg %p135
        %p351 = pneg %p159
        %p352 = pneg %p156
        %p353 = pneg %p185
        %p354 = pneg %p182
        %s355 = sand.u32 %s172, 1
        %s356 = scalar_lea.sflag [#allocation4], %s355
        %s357 = sand.u32 %s172, 1
        %s358 = smul.addr %s357, 2
        %s359 = scalar_lea.vmem [#allocation13], %s358
        %v360 = vld [vmem:[%s301] sm:$0xf]
        %v361 = vld [vmem:[%s301 + $0x4] sm:$0xf]
        %v362 = vld [vmem:[%s301 + $0x8] sm:$0xf]
        %v363 = vld [vmem:[%s301 + $0xc] sm:$0xf]
        %v364 = vld [vmem:[%s301 + $0x10] sm:$0xf]
        %v365 = vld [vmem:[%s301 + $0x14] sm:$0xf]
        %v366 = vld [vmem:[%s301 + $0x18] sm:$0xf]
        %v367 = vld [vmem:[%s301 + $0x1c] sm:$0xf]
        %v368 = vld [vmem:[%s301 + $0x20] sm:$0xf]
        %v369 = vld [vmem:[%s301 + $0x24] sm:$0xf]
        %v370 = vld [vmem:[%s301 + $0x28] sm:$0xf]
        %v371 = vld [vmem:[%s301 + $0x2c] sm:$0xf]
        %v372 = vld [vmem:[%s301 + $0x30] sm:$0xf]
        %v373 = vld [vmem:[%s301 + $0x34] sm:$0xf]
        %v374 = vld [vmem:[%s301 + $0x38] sm:$0xf]
        %v375 = vld [vmem:[%s301 + $0x3c] sm:$0xf]
        %v376 = vld [vmem:[%s301 + $0x40] sm:$0xf]
        %v377 = vld [vmem:[%s301 + $0x44] sm:$0xf]
        %v378 = vld [vmem:[%s301 + $0x48] sm:$0xf]
        %v379 = vld [vmem:[%s301 + $0x4c] sm:$0xf]
        %v380 = vld [vmem:[%s301 + $0x50] sm:$0xf]
        %v381 = vld [vmem:[%s301 + $0x54] sm:$0xf]
        %v382 = vld [vmem:[%s301 + $0x58] sm:$0xf]
        %v383 = vld [vmem:[%s301 + $0x5c] sm:$0xf]
        %v384 = vld [vmem:[%s301 + $0x60] sm:$0xf]
        %v385 = vld [vmem:[%s301 + $0x64] sm:$0xf]
        %v386 = vld [vmem:[%s301 + $0x68] sm:$0xf]
        %v387 = vld [vmem:[%s301 + $0x6c] sm:$0xf]
        %v388 = vld [vmem:[%s301 + $0x70] sm:$0xf]
        %v389 = vld [vmem:[%s301 + $0x74] sm:$0xf]
        %v390 = vld [vmem:[%s301 + $0x78] sm:$0xf]
        %v391 = vld [vmem:[%s301 + $0x7c] sm:$0xf]
        %v392 = vunpack.c.l.bf16 %v360
        %v393 = vunpack.c.l.bf16 %v361
        %v394 = vunpack.c.l.bf16 %v362
        %v395 = vunpack.c.l.bf16 %v363
        %v396 = vunpack.c.l.bf16 %v364
        %v397 = vunpack.c.l.bf16 %v365
        %v398 = vunpack.c.l.bf16 %v366
        %v399 = vunpack.c.l.bf16 %v367
        %v400 = vunpack.c.l.bf16 %v368
        %v401 = vunpack.c.l.bf16 %v369
        %v402 = vunpack.c.l.bf16 %v370
        %v403 = vunpack.c.l.bf16 %v371
        %v404 = vunpack.c.l.bf16 %v372
        %v405 = vunpack.c.l.bf16 %v373
        %v406 = vunpack.c.l.bf16 %v374
        %v407 = vunpack.c.l.bf16 %v375
        %v408 = vunpack.c.l.bf16 %v376
        %v409 = vunpack.c.l.bf16 %v377
        %v410 = vunpack.c.l.bf16 %v378
        %v411 = vunpack.c.l.bf16 %v379
        %v412 = vunpack.c.l.bf16 %v380
        %v413 = vunpack.c.l.bf16 %v381
        %v414 = vunpack.c.l.bf16 %v382
        %v415 = vunpack.c.l.bf16 %v383
        %v416 = vunpack.c.l.bf16 %v384
        %v417 = vunpack.c.l.bf16 %v385
        %v418 = vunpack.c.l.bf16 %v386
        %v419 = vunpack.c.l.bf16 %v387
        %v420 = vunpack.c.l.bf16 %v388
        %v421 = vunpack.c.l.bf16 %v389
        %v422 = vunpack.c.l.bf16 %v390
        %v423 = vunpack.c.l.bf16 %v391
        %v424 = vld [vmem:[#allocation7] sm:$0x1]
        %v426 = vlaneseq
        %v427 = vshrl.u32 %v426, 7
        %v428 = vsub.s32 0, %v427
        %v429 = vrot.slane %v424, %v428
        %v431 = vmul.f32 %v392, %v429
        %v432 = vmul.f32 %v393, %v429
        %v433 = vmul.f32 %v394, %v429
        %v434 = vmul.f32 %v395, %v429
        %v435 = vmul.f32 %v396, %v429
        %v436 = vmul.f32 %v397, %v429
        %v437 = vmul.f32 %v398, %v429
        %v438 = vmul.f32 %v399, %v429
        %v439 = vmul.f32 %v400, %v429
        %v440 = vmul.f32 %v401, %v429
        %v441 = vmul.f32 %v402, %v429
        %v442 = vmul.f32 %v403, %v429
        %v443 = vmul.f32 %v404, %v429
        %v444 = vmul.f32 %v405, %v429
        %v445 = vmul.f32 %v406, %v429
        %v446 = vmul.f32 %v407, %v429
        %v447 = vmul.f32 %v408, %v429
        %v448 = vmul.f32 %v409, %v429
        %v449 = vmul.f32 %v410, %v429
        %v450 = vmul.f32 %v411, %v429
        %v451 = vmul.f32 %v412, %v429
        %v452 = vmul.f32 %v413, %v429
        %v453 = vmul.f32 %v414, %v429
        %v454 = vmul.f32 %v415, %v429
        %v455 = vmul.f32 %v416, %v429
        %v456 = vmul.f32 %v417, %v429
        %v457 = vmul.f32 %v418, %v429
        %v458 = vmul.f32 %v419, %v429
        %v459 = vmul.f32 %v420, %v429
        %v460 = vmul.f32 %v421, %v429
        %v461 = vmul.f32 %v422, %v429
        %v462 = vmul.f32 %v423, %v429
        %v463 = vld [vmem:[#allocation8] sm:$0x1]
        %v465 = vlaneseq
        %v466 = vshrl.u32 %v465, 7
        %v467 = vsub.s32 0, %v466
        %v468 = vrot.slane %v463, %v467
        %v470 = vadd.f32 %v431, %v468
        %v471 = vadd.f32 %v432, %v468
        %v472 = vadd.f32 %v433, %v468
        %v473 = vadd.f32 %v434, %v468
        %v474 = vadd.f32 %v435, %v468
        %v475 = vadd.f32 %v436, %v468
        %v476 = vadd.f32 %v437, %v468
        %v477 = vadd.f32 %v438, %v468
        %v478 = vadd.f32 %v439, %v468
        %v479 = vadd.f32 %v440, %v468
        %v480 = vadd.f32 %v441, %v468
        %v481 = vadd.f32 %v442, %v468
        %v482 = vadd.f32 %v443, %v468
        %v483 = vadd.f32 %v444, %v468
        %v484 = vadd.f32 %v445, %v468
        %v485 = vadd.f32 %v446, %v468
        %v486 = vadd.f32 %v447, %v468
        %v487 = vadd.f32 %v448, %v468
        %v488 = vadd.f32 %v449, %v468
        %v489 = vadd.f32 %v450, %v468
        %v490 = vadd.f32 %v451, %v468
        %v491 = vadd.f32 %v452, %v468
        %v492 = vadd.f32 %v453, %v468
        %v493 = vadd.f32 %v454, %v468
        %v494 = vadd.f32 %v455, %v468
        %v495 = vadd.f32 %v456, %v468
        %v496 = vadd.f32 %v457, %v468
        %v497 = vadd.f32 %v458, %v468
        %v498 = vadd.f32 %v459, %v468
        %v499 = vadd.f32 %v460, %v468
        %v500 = vadd.f32 %v461, %v468
        %v501 = vadd.f32 %v462, %v468
        %vm502 = vcmp.ge.f32.partialorder %v470, 0.0
        %vm503 = vcmp.ge.f32.partialorder %v471, 0.0
        %vm504 = vcmp.ge.f32.partialorder %v472, 0.0
        %vm505 = vcmp.ge.f32.partialorder %v473, 0.0
        %vm506 = vcmp.ge.f32.partialorder %v474, 0.0
        %vm507 = vcmp.ge.f32.partialorder %v475, 0.0
        %vm508 = vcmp.ge.f32.partialorder %v476, 0.0
        %vm509 = vcmp.ge.f32.partialorder %v477, 0.0
        %vm510 = vcmp.ge.f32.partialorder %v478, 0.0
        %vm511 = vcmp.ge.f32.partialorder %v479, 0.0
        %vm512 = vcmp.ge.f32.partialorder %v480, 0.0
        %vm513 = vcmp.ge.f32.partialorder %v481, 0.0
        %vm514 = vcmp.ge.f32.partialorder %v482, 0.0
        %vm515 = vcmp.ge.f32.partialorder %v483, 0.0
        %vm516 = vcmp.ge.f32.partialorder %v484, 0.0
        %vm517 = vcmp.ge.f32.partialorder %v485, 0.0
        %vm518 = vcmp.ge.f32.partialorder %v486, 0.0
        %vm519 = vcmp.ge.f32.partialorder %v487, 0.0
        %vm520 = vcmp.ge.f32.partialorder %v488, 0.0
        %vm521 = vcmp.ge.f32.partialorder %v489, 0.0
        %vm522 = vcmp.ge.f32.partialorder %v490, 0.0
        %vm523 = vcmp.ge.f32.partialorder %v491, 0.0
        %vm524 = vcmp.ge.f32.partialorder %v492, 0.0
        %vm525 = vcmp.ge.f32.partialorder %v493, 0.0
        %vm526 = vcmp.ge.f32.partialorder %v494, 0.0
        %vm527 = vcmp.ge.f32.partialorder %v495, 0.0
        %vm528 = vcmp.ge.f32.partialorder %v496, 0.0
        %vm529 = vcmp.ge.f32.partialorder %v497, 0.0
        %vm530 = vcmp.ge.f32.partialorder %v498, 0.0
        %vm531 = vcmp.ge.f32.partialorder %v499, 0.0
        %vm532 = vcmp.ge.f32.partialorder %v500, 0.0
        %vm533 = vcmp.ge.f32.partialorder %v501, 0.0
        %v534 = vmul.f32 %v470, 0.2
        %v535 = vmul.f32 %v471, 0.2
        %v536 = vmul.f32 %v472, 0.2
        %v537 = vmul.f32 %v473, 0.2
        %v538 = vmul.f32 %v474, 0.2
        %v539 = vmul.f32 %v475, 0.2
        %v540 = vmul.f32 %v476, 0.2
        %v541 = vmul.f32 %v477, 0.2
        %v542 = vmul.f32 %v478, 0.2
        %v543 = vmul.f32 %v479, 0.2
        %v544 = vmul.f32 %v480, 0.2
        %v545 = vmul.f32 %v481, 0.2
        %v546 = vmul.f32 %v482, 0.2
        %v547 = vmul.f32 %v483, 0.2
        %v548 = vmul.f32 %v484, 0.2
        %v549 = vmul.f32 %v485, 0.2
        %v550 = vmul.f32 %v486, 0.2
        %v551 = vmul.f32 %v487, 0.2
        %v552 = vmul.f32 %v488, 0.2
        %v553 = vmul.f32 %v489, 0.2
        %v554 = vmul.f32 %v490, 0.2
        %v555 = vmul.f32 %v491, 0.2
        %v556 = vmul.f32 %v492, 0.2
        %v557 = vmul.f32 %v493, 0.2
        %v558 = vmul.f32 %v494, 0.2
        %v559 = vmul.f32 %v495, 0.2
        %v560 = vmul.f32 %v496, 0.2
        %v561 = vmul.f32 %v497, 0.2
        %v562 = vmul.f32 %v498, 0.2
        %v563 = vmul.f32 %v499, 0.2
        %v564 = vmul.f32 %v500, 0.2
        %v565 = vmul.f32 %v501, 0.2
        %v566 = vsel %vm502, %v470, %v534
        %v567 = vsel %vm503, %v471, %v535
        %v568 = vsel %vm504, %v472, %v536
        %v569 = vsel %vm505, %v473, %v537
        %v570 = vsel %vm506, %v474, %v538
        %v571 = vsel %vm507, %v475, %v539
        %v572 = vsel %vm508, %v476, %v540
        %v573 = vsel %vm509, %v477, %v541
        %v574 = vsel %vm510, %v478, %v542
        %v575 = vsel %vm511, %v479, %v543
        %v576 = vsel %vm512, %v480, %v544
        %v577 = vsel %vm513, %v481, %v545
        %v578 = vsel %vm514, %v482, %v546
        %v579 = vsel %vm515, %v483, %v547
        %v580 = vsel %vm516, %v484, %v548
        %v581 = vsel %vm517, %v485, %v549
        %v582 = vsel %vm518, %v486, %v550
        %v583 = vsel %vm519, %v487, %v551
        %v584 = vsel %vm520, %v488, %v552
        %v585 = vsel %vm521, %v489, %v553
        %v586 = vsel %vm522, %v490, %v554
        %v587 = vsel %vm523, %v491, %v555
        %v588 = vsel %vm524, %v492, %v556
        %v589 = vsel %vm525, %v493, %v557
        %v590 = vsel %vm526, %v494, %v558
        %v591 = vsel %vm527, %v495, %v559
        %v592 = vsel %vm528, %v496, %v560
        %v593 = vsel %vm529, %v497, %v561
        %v594 = vsel %vm530, %v498, %v562
        %v595 = vsel %vm531, %v499, %v563
        %v596 = vsel %vm532, %v500, %v564
        %v597 = vsel %vm533, %v501, %v565
        %v598 = vld [vmem:[%s310] sm:$0xf]
        %v599 = vld [vmem:[%s310 + $0x4] sm:$0xf]
        %v600 = vld [vmem:[%s310 + $0x8] sm:$0xf]
        %v601 = vld [vmem:[%s310 + $0xc] sm:$0xf]
        %v602 = vld [vmem:[%s310 + $0x10] sm:$0xf]
        %v603 = vld [vmem:[%s310 + $0x14] sm:$0xf]
        %v604 = vld [vmem:[%s310 + $0x18] sm:$0xf]
        %v605 = vld [vmem:[%s310 + $0x1c] sm:$0xf]
        %v606 = vld [vmem:[%s310 + $0x20] sm:$0xf]
        %v607 = vld [vmem:[%s310 + $0x24] sm:$0xf]
        %v608 = vld [vmem:[%s310 + $0x28] sm:$0xf]
        %v609 = vld [vmem:[%s310 + $0x2c] sm:$0xf]
        %v610 = vld [vmem:[%s310 + $0x30] sm:$0xf]
        %v611 = vld [vmem:[%s310 + $0x34] sm:$0xf]
        %v612 = vld [vmem:[%s310 + $0x38] sm:$0xf]
        %v613 = vld [vmem:[%s310 + $0x3c] sm:$0xf]
        %v614 = vld [vmem:[%s310 + $0x40] sm:$0xf]
        %v615 = vld [vmem:[%s310 + $0x44] sm:$0xf]
        %v616 = vld [vmem:[%s310 + $0x48] sm:$0xf]
        %v617 = vld [vmem:[%s310 + $0x4c] sm:$0xf]
        %v618 = vld [vmem:[%s310 + $0x50] sm:$0xf]
        %v619 = vld [vmem:[%s310 + $0x54] sm:$0xf]
        %v620 = vld [vmem:[%s310 + $0x58] sm:$0xf]
        %v621 = vld [vmem:[%s310 + $0x5c] sm:$0xf]
        %v622 = vld [vmem:[%s310 + $0x60] sm:$0xf]
        %v623 = vld [vmem:[%s310 + $0x64] sm:$0xf]
        %v624 = vld [vmem:[%s310 + $0x68] sm:$0xf]
        %v625 = vld [vmem:[%s310 + $0x6c] sm:$0xf]
        %v626 = vld [vmem:[%s310 + $0x70] sm:$0xf]
        %v627 = vld [vmem:[%s310 + $0x74] sm:$0xf]
        %v628 = vld [vmem:[%s310 + $0x78] sm:$0xf]
        %v629 = vld [vmem:[%s310 + $0x7c] sm:$0xf]
        %v630 = vunpack.c.l.bf16 %v598
        %v631 = vunpack.c.l.bf16 %v599
        %v632 = vunpack.c.l.bf16 %v600
        %v633 = vunpack.c.l.bf16 %v601
        %v634 = vunpack.c.l.bf16 %v602
        %v635 = vunpack.c.l.bf16 %v603
        %v636 = vunpack.c.l.bf16 %v604
        %v637 = vunpack.c.l.bf16 %v605
        %v638 = vunpack.c.l.bf16 %v606
        %v639 = vunpack.c.l.bf16 %v607
        %v640 = vunpack.c.l.bf16 %v608
        %v641 = vunpack.c.l.bf16 %v609
        %v642 = vunpack.c.l.bf16 %v610
        %v643 = vunpack.c.l.bf16 %v611
        %v644 = vunpack.c.l.bf16 %v612
        %v645 = vunpack.c.l.bf16 %v613
        %v646 = vunpack.c.l.bf16 %v614
        %v647 = vunpack.c.l.bf16 %v615
        %v648 = vunpack.c.l.bf16 %v616
        %v649 = vunpack.c.l.bf16 %v617
        %v650 = vunpack.c.l.bf16 %v618
        %v651 = vunpack.c.l.bf16 %v619
        %v652 = vunpack.c.l.bf16 %v620
        %v653 = vunpack.c.l.bf16 %v621
        %v654 = vunpack.c.l.bf16 %v622
        %v655 = vunpack.c.l.bf16 %v623
        %v656 = vunpack.c.l.bf16 %v624
        %v657 = vunpack.c.l.bf16 %v625
        %v658 = vunpack.c.l.bf16 %v626
        %v659 = vunpack.c.l.bf16 %v627
        %v660 = vunpack.c.l.bf16 %v628
        %v661 = vunpack.c.l.bf16 %v629
        %v662 = vld [vmem:[#allocation10] sm:$0x1]
        %v664 = vlaneseq
        %v665 = vshrl.u32 %v664, 7
        %v666 = vsub.s32 0, %v665
        %v667 = vrot.slane %v662, %v666
        %v669 = vmul.f32 %v630, %v667
        %v670 = vmul.f32 %v631, %v667
        %v671 = vmul.f32 %v632, %v667
        %v672 = vmul.f32 %v633, %v667
        %v673 = vmul.f32 %v634, %v667
        %v674 = vmul.f32 %v635, %v667
        %v675 = vmul.f32 %v636, %v667
        %v676 = vmul.f32 %v637, %v667
        %v677 = vmul.f32 %v638, %v667
        %v678 = vmul.f32 %v639, %v667
        %v679 = vmul.f32 %v640, %v667
        %v680 = vmul.f32 %v641, %v667
        %v681 = vmul.f32 %v642, %v667
        %v682 = vmul.f32 %v643, %v667
        %v683 = vmul.f32 %v644, %v667
        %v684 = vmul.f32 %v645, %v667
        %v685 = vmul.f32 %v646, %v667
        %v686 = vmul.f32 %v647, %v667
        %v687 = vmul.f32 %v648, %v667
        %v688 = vmul.f32 %v649, %v667
        %v689 = vmul.f32 %v650, %v667
        %v690 = vmul.f32 %v651, %v667
        %v691 = vmul.f32 %v652, %v667
        %v692 = vmul.f32 %v653, %v667
        %v693 = vmul.f32 %v654, %v667
        %v694 = vmul.f32 %v655, %v667
        %v695 = vmul.f32 %v656, %v667
        %v696 = vmul.f32 %v657, %v667
        %v697 = vmul.f32 %v658, %v667
        %v698 = vmul.f32 %v659, %v667
        %v699 = vmul.f32 %v660, %v667
        %v700 = vmul.f32 %v661, %v667
        %v701 = vadd.f32 %v566, %v669
        %v702 = vadd.f32 %v567, %v670
        %v703 = vadd.f32 %v568, %v671
        %v704 = vadd.f32 %v569, %v672
        %v705 = vadd.f32 %v570, %v673
        %v706 = vadd.f32 %v571, %v674
        %v707 = vadd.f32 %v572, %v675
        %v708 = vadd.f32 %v573, %v676
        %v709 = vadd.f32 %v574, %v677
        %v710 = vadd.f32 %v575, %v678
        %v711 = vadd.f32 %v576, %v679
        %v712 = vadd.f32 %v577, %v680
        %v713 = vadd.f32 %v578, %v681
        %v714 = vadd.f32 %v579, %v682
        %v715 = vadd.f32 %v580, %v683
        %v716 = vadd.f32 %v581, %v684
        %v717 = vadd.f32 %v582, %v685
        %v718 = vadd.f32 %v583, %v686
        %v719 = vadd.f32 %v584, %v687
        %v720 = vadd.f32 %v585, %v688
        %v721 = vadd.f32 %v586, %v689
        %v722 = vadd.f32 %v587, %v690
        %v723 = vadd.f32 %v588, %v691
        %v724 = vadd.f32 %v589, %v692
        %v725 = vadd.f32 %v590, %v693
        %v726 = vadd.f32 %v591, %v694
        %v727 = vadd.f32 %v592, %v695
        %v728 = vadd.f32 %v593, %v696
        %v729 = vadd.f32 %v594, %v697
        %v730 = vadd.f32 %v595, %v698
        %v731 = vadd.f32 %v596, %v699
        %v732 = vadd.f32 %v597, %v700
        %v733 = vld [vmem:[#allocation11] sm:$0x1]
        %v735 = vlaneseq
        %v736 = vshrl.u32 %v735, 7
        %v737 = vsub.s32 0, %v736
        %v738 = vrot.slane %v733, %v737
        %v740 = vadd.f32 %v701, %v738
        %v741 = vadd.f32 %v702, %v738
        %v742 = vadd.f32 %v703, %v738
        %v743 = vadd.f32 %v704, %v738
        %v744 = vadd.f32 %v705, %v738
        %v745 = vadd.f32 %v706, %v738
        %v746 = vadd.f32 %v707, %v738
        %v747 = vadd.f32 %v708, %v738
        %v748 = vadd.f32 %v709, %v738
        %v749 = vadd.f32 %v710, %v738
        %v750 = vadd.f32 %v711, %v738
        %v751 = vadd.f32 %v712, %v738
        %v752 = vadd.f32 %v713, %v738
        %v753 = vadd.f32 %v714, %v738
        %v754 = vadd.f32 %v715, %v738
        %v755 = vadd.f32 %v716, %v738
        %v756 = vadd.f32 %v717, %v738
        %v757 = vadd.f32 %v718, %v738
        %v758 = vadd.f32 %v719, %v738
        %v759 = vadd.f32 %v720, %v738
        %v760 = vadd.f32 %v721, %v738
        %v761 = vadd.f32 %v722, %v738
        %v762 = vadd.f32 %v723, %v738
        %v763 = vadd.f32 %v724, %v738
        %v764 = vadd.f32 %v725, %v738
        %v765 = vadd.f32 %v726, %v738
        %v766 = vadd.f32 %v727, %v738
        %v767 = vadd.f32 %v728, %v738
        %v768 = vadd.f32 %v729, %v738
        %v769 = vadd.f32 %v730, %v738
        %v770 = vadd.f32 %v731, %v738
        %v771 = vadd.f32 %v732, %v738
        %v772 = vadd.f32 %v740, %v741
        %v773 = vadd.f32 %v772, %v742
        %v774 = vadd.f32 %v773, %v743
        %v775 = vadd.f32 %v774, %v744
        %v776 = vadd.f32 %v775, %v745
        %v777 = vadd.f32 %v776, %v746
        %v778 = vadd.f32 %v777, %v747
        %v779 = vadd.f32 %v778, %v748
        %v780 = vadd.f32 %v779, %v749
        %v781 = vadd.f32 %v780, %v750
        %v782 = vadd.f32 %v781, %v751
        %v783 = vadd.f32 %v782, %v752
        %v784 = vadd.f32 %v783, %v753
        %v785 = vadd.f32 %v784, %v754
        %v786 = vadd.f32 %v785, %v755
        %v787 = vadd.f32 %v786, %v756
        %v788 = vadd.f32 %v787, %v757
        %v789 = vadd.f32 %v788, %v758
        %v790 = vadd.f32 %v789, %v759
        %v791 = vadd.f32 %v790, %v760
        %v792 = vadd.f32 %v791, %v761
        %v793 = vadd.f32 %v792, %v762
        %v794 = vadd.f32 %v793, %v763
        %v795 = vadd.f32 %v794, %v764
        %v796 = vadd.f32 %v795, %v765
        %v797 = vadd.f32 %v796, %v766
        %v798 = vadd.f32 %v797, %v767
        %v799 = vadd.f32 %v798, %v768
        %v800 = vadd.f32 %v799, %v769
        %v801 = vadd.f32 %v800, %v770
        %v802 = vadd.f32 %v801, %v771
        %v803 = vrot.slane %v802, 4
        %v804 = vadd.f32 %v802, %v803
        %v805 = vrot.slane %v804, 2
        %v806 = vadd.f32 %v804, %v805
        %v807 = vrot.slane %v806, 1
        %v808 = vadd.f32 %v806, %v807
        %809 = vst [vmem:[%s359] sm:$0x1] %v808
        %v810 = vmul.f32 %v740, %v740
        %v811 = vmul.f32 %v741, %v741
        %v812 = vmul.f32 %v742, %v742
        %v813 = vmul.f32 %v743, %v743
        %v814 = vmul.f32 %v744, %v744
        %v815 = vmul.f32 %v745, %v745
        %v816 = vmul.f32 %v746, %v746
        %v817 = vmul.f32 %v747, %v747
        %v818 = vmul.f32 %v748, %v748
        %v819 = vmul.f32 %v749, %v749
        %v820 = vmul.f32 %v750, %v750
        %v821 = vmul.f32 %v751, %v751
        %v822 = vmul.f32 %v752, %v752
        %v823 = vmul.f32 %v753, %v753
        %v824 = vmul.f32 %v754, %v754
        %v825 = vmul.f32 %v755, %v755
        %v826 = vmul.f32 %v756, %v756
        %v827 = vmul.f32 %v757, %v757
        %v828 = vmul.f32 %v758, %v758
        %v829 = vmul.f32 %v759, %v759
        %v830 = vmul.f32 %v760, %v760
        %v831 = vmul.f32 %v761, %v761
        %v832 = vmul.f32 %v762, %v762
        %v833 = vmul.f32 %v763, %v763
        %v834 = vmul.f32 %v764, %v764
        %v835 = vmul.f32 %v765, %v765
        %v836 = vmul.f32 %v766, %v766
        %v837 = vmul.f32 %v767, %v767
        %v838 = vmul.f32 %v768, %v768
        %v839 = vmul.f32 %v769, %v769
        %v840 = vmul.f32 %v770, %v770
        %v841 = vmul.f32 %v771, %v771
        %v842 = vadd.f32 %v810, %v811
        %v843 = vadd.f32 %v842, %v812
        %v844 = vadd.f32 %v843, %v813
        %v845 = vadd.f32 %v844, %v814
        %v846 = vadd.f32 %v845, %v815
        %v847 = vadd.f32 %v846, %v816
        %v848 = vadd.f32 %v847, %v817
        %v849 = vadd.f32 %v848, %v818
        %v850 = vadd.f32 %v849, %v819
        %v851 = vadd.f32 %v850, %v820
        %v852 = vadd.f32 %v851, %v821
        %v853 = vadd.f32 %v852, %v822
        %v854 = vadd.f32 %v853, %v823
        %v855 = vadd.f32 %v854, %v824
        %v856 = vadd.f32 %v855, %v825
        %v857 = vadd.f32 %v856, %v826
        %v858 = vadd.f32 %v857, %v827
        %v859 = vadd.f32 %v858, %v828
        %v860 = vadd.f32 %v859, %v829
        %v861 = vadd.f32 %v860, %v830
        %v862 = vadd.f32 %v861, %v831
        %v863 = vadd.f32 %v862, %v832
        %v864 = vadd.f32 %v863, %v833
        %v865 = vadd.f32 %v864, %v834
        %v866 = vadd.f32 %v865, %v835
        %v867 = vadd.f32 %v866, %v836
        %v868 = vadd.f32 %v867, %v837
        %v869 = vadd.f32 %v868, %v838
        %v870 = vadd.f32 %v869, %v839
        %v871 = vadd.f32 %v870, %v840
        %v872 = vadd.f32 %v871, %v841
        %v873 = vrot.slane %v872, 4
        %v874 = vadd.f32 %v872, %v873
        %v875 = vrot.slane %v874, 2
        %v876 = vadd.f32 %v874, %v875
        %v877 = vrot.slane %v876, 1
        %v878 = vadd.f32 %v876, %v877
        %879 = vst [vmem:[%s359 + $0x1] sm:$0x1] %v878
        %s880 = sand.u32 %s172, 1
        %s881 = scalar_lea.sflag [#allocation4], %s880
        %s882 = sand.u32 %s172, 1
        %s883 = smul.addr %s882, 2
        %s884 = scalar_lea.vmem [#allocation13], %s883
        // Predicated region
        $region69: #{down_res_layer.10} parent=43 // pred_check
          %p885 = pneg %p182
        $region70: #{down_res_layer.10} parent=43 // pred_check_branch
          %887 = sbr.rel (%p885) target = $region72
        $region71: #{down_res_layer.10} parent=43 // pred_region
          %s889 = ssub.s32 32, 32
          %890 = vsyncadd %s881, %s889
          %s891 = smul.addr %s28, 32
          %s892 = scalar_lea.hbm %s6, %s891
          %s894 = sshll.u32 %s884, 4
          %s895 = int_to_ptr.vmem [resolvable:$true] %s894
          %897 = dma.vmem_to_hbm [thread:$0]  %s895, 32, %s892, %s881
        $region72: #{down_res_layer.10} parent=43 // pred_fallthru
          _
      $region44: #{down_res_layer.10} parent=5 // pred_fallthru
        _
      %p898 = scmp.le.s32.totalorder 2, %s23
      // Predicated region
      $region73: #{down_res_layer.10} parent=5 // pred_check
        %p899 = pneg %p898
      $region74: #{down_res_layer.10} parent=5 // pred_check_branch
        %901 = sbr.rel (%p899) target = $region76
      $region75: #{down_res_layer.10} parent=5 // pred_region
        %s902 = ssub.s32 %s23, 2
        // Predicated region
        $region77: #{down_res_layer.10} parent=75 // pred_check
          %p903 = pneg %p188
        $region78: #{down_res_layer.10} parent=75 // pred_check_branch
          %905 = sbr.rel (%p903) target = $region80
        $region79: #{down_res_layer.10} parent=75 // pred_region
          %s906 = sand.u32 %s173, 1
          %s907 = scalar_lea.sflag [#allocation4], %s906
          %s908 = sand.u32 %s173, 1
          %s909 = smul.addr %s908, 2
          %s910 = scalar_lea.vmem [#allocation13], %s909
          %911 = dma.done %s907, 32
        $region80: #{down_res_layer.10} parent=75 // pred_fallthru
          _
      $region76: #{down_res_layer.10} parent=5 // pred_fallthru
        _
    $region6: #{down_res_layer.10} parent=1 // loop_footer
      %s27 = sadd.s32 1, %s23
    $region7: #{down_res_layer.10} parent=1 // loop_footer_branch
      %22 = sbr.rel target = $region3
    $region8: #{down_res_layer.10} parent=1 // loop_exit
      _
    %912 = vsyncpa [#allocation3], 1
    %s913 = scalar_lea.sflag [#allocation3], 1
    %914 = vsyncpa %s913, 1
    %915 = vsyncpa [#allocation6], 1
    %s916 = scalar_lea.sflag [#allocation6], 1
    %917 = vsyncpa %s916, 1
    %918 = vsyncpa [#allocation9], 1
    %919 = vsyncpa [#allocation12], 1
    %920 = vsyncpa [#allocation4], 1
    %s921 = scalar_lea.sflag [#allocation4], 1
    %922 = vsyncpa %s921, 1

// kernel: down_res_layer.6
$region0: #{down_res_layer.6}
  #allocation0 [shape = 'u32[]', space=smem, size = 0x4, offset = 0x4, fixed_abs, tag = 'smem constant byte address 0x4 - core index']
  #allocation1 [shape = 'u32[144,128]{1,0:T(1,128)}', space=vmem, size = 0x12000, scoped, tag = 'internal scratch']
  %s0 = inlined_call_operand.hbm [shape: bf16[2,18,32,128], index: 0, kind: input, shape index: {}]
  %s1 = inlined_call_operand.hbm [shape: bf16[9,128,128], index: 1, kind: input, shape index: {}]
  %s2 = inlined_call_operand.hbm [shape: bf16[2,256,128], index: 2, kind: output, shape index: {0}]
  %s3 = inlined_call_operand.hbm [shape: f32[2,2,128], index: 3, kind: output, shape index: {1}]
  %4 = xla_tuple %s2, %s3
  %s5 = sld [smem:[#allocation0]]
  $region57: #{down_res_layer.6} parent=0
    _
  %s7 = ssub.s32 1, %s5
  %s8 = scalar_select 0, %s7, %s5
  $region1: #{down_res_layer.6} parent=0
    #allocation2 [shape = 'u8[294912]{0}', space=vmem, size = 0x48000, scoped, tag = 'input window, operand 0']
    #allocation3 [shape = 's32[2]{0}', space=sflag, size = 0x8, scoped, tag = 'scoped memory for down_res_layer.6']
    #allocation4 [shape = 's32[2]{0}', space=sflag, size = 0x8, scoped, tag = 'scoped memory for down_res_layer.6']
    #allocation5 [shape = 'u8[294912]{0}', space=vmem, size = 0x48000, scoped, tag = 'input window, operand 1, single buffered']
    #allocation6 [shape = 's32[1]{0}', space=sflag, size = 0x4, scoped, tag = 'scoped memory for down_res_layer.6']
    #allocation7 [shape = 'u8[131072]{0}', space=vmem, size = 0x20000, scoped, tag = 'output window, operand 0']
    #allocation8 [shape = 'u8[2048]{0}', space=vmem, size = 0x800, scoped, tag = 'output window, operand 1']
    #allocation9 [shape = 's32[2]{0}', space=sflag, size = 0x8, scoped, tag = 'scoped memory for down_res_layer.6']
    %9 = vsyncpa [#allocation3], 0
    %s10 = scalar_lea.sflag [#allocation3], 1
    %11 = vsyncpa %s10, 0
    %12 = vsyncpa [#allocation6], 0
    %13 = vsyncpa [#allocation4], 0
    %s14 = scalar_lea.sflag [#allocation4], 1
    %15 = vsyncpa %s14, 0
    %16 = vsyncpa [#allocation9], 0
    %s17 = scalar_lea.sflag [#allocation9], 1
    %18 = vsyncpa %s17, 0
    loop: start=0, step=1, limit=4
    $region2: #{down_res_layer.6} parent=1 // loop_pre_header
      _
    $region3: #{down_res_layer.6} parent=1 // loop_header
      %s20 = sphi 0, %s24
      %p21 = scmp.ge.s32.totalorder %s20, 4
      %s30 = sphi 0, %s32
      %s33 = sphi 0, %s30
      %s34 = sphi 0, %s33
      %s50 = sphi 0, %s34
      %s54 = sphi 0, %s54
      %s56 = sphi 0, %s54
      %s57 = sphi 0, %s56
      %s71 = sphi 0, %s57
      %s77 = sphi 0, %s79
      %s80 = sphi 0, %s77
      %s81 = sphi 0, %s80
      %s97 = sphi 0, %s81
      %s103 = sphi 0, %s105
      %s106 = sphi 0, %s103
      %s107 = sphi 0, %s106
      %s123 = sphi 0, %s107
    $region4: #{down_res_layer.6} parent=1 // loop_header_branch
      %23 = sbr.rel (%p21) target = $region8
    $region5: #{down_res_layer.6} parent=1 // loop_body
      %s25 = ssub.s32 %s20, 1
      %s26 = ssub.s32 %s20, 2
      %s27 = sadd.s32 %s20, 1
      %s28 = ssub.s32 %s20, %s27
      %p29 = scmp.eq.s32.totalorder %s28, 0
      %s31 = sadd.s32 %s30, 1
      %s32 = scalar_select %p29, %s30, %s31
      %p35 = pneg %p29
      %p36 = scmp.eq.s32.totalorder %s20, 1
      %p37 = por %p35, %p36
      %p38 = scmp.ne.s32.totalorder %s30, %s33
      %p39 = scmp.eq.s32.totalorder %s20, 0
      %p40 = por %p38, %p39
      %p41 = scmp.ne.s32.totalorder %s30, %s33
      %p42 = scmp.eq.s32.totalorder %s25, 1
      %p43 = por %p41, %p42
      %p44 = scmp.ne.s32.totalorder %s33, %s34
      %p45 = scmp.eq.s32.totalorder %s25, 0
      %p46 = por %p44, %p45
      %p47 = scmp.ne.s32.totalorder %s33, %s34
      %p48 = scmp.eq.s32.totalorder %s26, 1
      %p49 = por %p47, %p48
      %p51 = scmp.ne.s32.totalorder %s34, %s50
      %p52 = scmp.eq.s32.totalorder %s26, 0
      %p53 = por %p51, %p52
      %s55 = sadd.s32 %s54, 1
      %p58 = scmp.eq.s32.totalorder %s20, 1
      %p59 = scmp.ne.s32.totalorder %s54, %s56
      %p60 = scmp.eq.s32.totalorder %s20, 0
      %p61 = por %p59, %p60
      %p62 = scmp.ne.s32.totalorder %s54, %s56
      %p63 = scmp.eq.s32.totalorder %s25, 1
      %p64 = por %p62, %p63
      %p65 = scmp.ne.s32.totalorder %s56, %s57
      %p66 = scmp.eq.s32.totalorder %s25, 0
      %p67 = por %p65, %p66
      %p68 = scmp.ne.s32.totalorder %s56, %s57
      %p69 = scmp.eq.s32.totalorder %s26, 1
      %p70 = por %p68, %p69
      %p72 = scmp.ne.s32.totalorder %s57, %s71
      %p73 = scmp.eq.s32.totalorder %s26, 0
      %p74 = por %p72, %p73
      %s75 = ssub.s32 %s20, %s27
      %p76 = scmp.eq.s32.totalorder %s75, 0
      %s78 = sadd.s32 %s77, 1
      %s79 = scalar_select %p76, %s77, %s78
      %p82 = pneg %p76
      %p83 = scmp.eq.s32.totalorder %s20, 1
      %p84 = por %p82, %p83
      %p85 = scmp.ne.s32.totalorder %s77, %s80
      %p86 = scmp.eq.s32.totalorder %s20, 0
      %p87 = por %p85, %p86
      %p88 = scmp.ne.s32.totalorder %s77, %s80
      %p89 = scmp.eq.s32.totalorder %s25, 1
      %p90 = por %p88, %p89
      %p91 = scmp.ne.s32.totalorder %s80, %s81
      %p92 = scmp.eq.s32.totalorder %s25, 0
      %p93 = por %p91, %p92
      %p94 = scmp.ne.s32.totalorder %s80, %s81
      %p95 = scmp.eq.s32.totalorder %s26, 1
      %p96 = por %p94, %p95
      %p98 = scmp.ne.s32.totalorder %s81, %s97
      %p99 = scmp.eq.s32.totalorder %s26, 0
      %p100 = por %p98, %p99
      %s101 = ssub.s32 %s20, %s27
      %p102 = scmp.eq.s32.totalorder %s101, 0
      %s104 = sadd.s32 %s103, 1
      %s105 = scalar_select %p102, %s103, %s104
      %p108 = pneg %p102
      %p109 = scmp.eq.s32.totalorder %s20, 1
      %p110 = por %p108, %p109
      %p111 = scmp.ne.s32.totalorder %s103, %s106
      %p112 = scmp.eq.s32.totalorder %s20, 0
      %p113 = por %p111, %p112
      %p114 = scmp.ne.s32.totalorder %s103, %s106
      %p115 = scmp.eq.s32.totalorder %s25, 1
      %p116 = por %p114, %p115
      %p117 = scmp.ne.s32.totalorder %s106, %s107
      %p118 = scmp.eq.s32.totalorder %s25, 0
      %p119 = por %p117, %p118
      %p120 = scmp.ne.s32.totalorder %s106, %s107
      %p121 = scmp.eq.s32.totalorder %s26, 1
      %p122 = por %p120, %p121
      %p124 = scmp.ne.s32.totalorder %s107, %s123
      %p125 = scmp.eq.s32.totalorder %s26, 0
      %p126 = por %p124, %p125
      %p127 = scmp.le.s32.totalorder 1, %s20
      %p128 = scmp.lt.s32.totalorder %s20, 3
      %p129 = pnand %p127, %p128
      %p130 = pneg %p129
      // Predicated region
      $region9: #{down_res_layer.6} parent=5 // pred_check
        _
      $region10: #{down_res_layer.6} parent=5 // pred_check_branch
        %132 = sbr.rel (%p129) target = $region12
      $region11: #{down_res_layer.6} parent=5 // pred_region
        %s133 = ssub.s32 %s20, 1
        // Predicated region
        $region13: #{down_res_layer.6} parent=11 // pred_check
          %p134 = pneg %p67
        $region14: #{down_res_layer.6} parent=11 // pred_check_branch
          %136 = sbr.rel (%p134) target = $region16
        $region15: #{down_res_layer.6} parent=11 // pred_region
          %s138 = ssub.s32 9216, 9216
          %139 = vsyncadd [#allocation6], %s138
          %s140 = sshll.u32 [#allocation5], 4
          %s141 = int_to_ptr.vmem [resolvable:$true] %s140
          %146 = dma.hbm_to_vmem [thread:$0]  %s1, 9216, %s141, [#allocation6], 64, 64, 4
        $region16: #{down_res_layer.6} parent=11 // pred_fallthru
          _
      $region12: #{down_res_layer.6} parent=5 // pred_fallthru
        _
      %p147 = scmp.lt.s32.totalorder %s20, 2
      // Predicated region
      $region17: #{down_res_layer.6} parent=5 // pred_check
        %p148 = pneg %p147
      $region18: #{down_res_layer.6} parent=5 // pred_check_branch
        %150 = sbr.rel (%p148) target = $region20
      $region19: #{down_res_layer.6} parent=5 // pred_region
        // Predicated region
        $region21: #{down_res_layer.6} parent=19 // pred_check
          %p151 = pneg %p40
        $region22: #{down_res_layer.6} parent=19 // pred_check_branch
          %153 = sbr.rel (%p151) target = $region24
        $region23: #{down_res_layer.6} parent=19 // pred_region
          %s154 = sand.u32 %s30, 1
          %s155 = scalar_lea.sflag [#allocation3], %s154
          %s156 = sand.u32 %s30, 1
          %s157 = smul.addr %s156, 288
          %s158 = scalar_lea.vmem [#allocation2], %s157
          %s160 = ssub.s32 4608, 4608
          %161 = vsyncadd %s155, %s160
          %s162 = smul.addr %s20, 72
          %s163 = smul.addr %s162, 64
          %s164 = scalar_lea.hbm %s0, %s163
          %s165 = sshll.u32 %s158, 4
          %s166 = int_to_ptr.vmem [resolvable:$true] %s165
          %171 = dma.hbm_to_vmem [thread:$0]  %s164, 4608, %s166, %s155, 64, 64, 4
        $region24: #{down_res_layer.6} parent=19 // pred_fallthru
          _
      $region20: #{down_res_layer.6} parent=5 // pred_fallthru
        _
      %p172 = scmp.le.s32.totalorder 1, %s20
      %p173 = scmp.lt.s32.totalorder %s20, 3
      %p174 = pnand %p172, %p173
      %p175 = pneg %p174
      // Predicated region
      $region25: #{down_res_layer.6} parent=5 // pred_check
        _
      $region26: #{down_res_layer.6} parent=5 // pred_check_branch
        %177 = sbr.rel (%p174) target = $region28
      $region27: #{down_res_layer.6} parent=5 // pred_region
        %s178 = ssub.s32 %s20, 1
        %s179 = sand.u32 %s33, 1
        %s180 = scalar_lea.sflag [#allocation3], %s179
        %s181 = sand.u32 %s33, 1
        %s182 = smul.addr %s181, 288
        %s183 = scalar_lea.vmem [#allocation2], %s182
        // Predicated region
        $region29: #{down_res_layer.6} parent=27 // pred_check
          %p184 = pneg %p46
        $region30: #{down_res_layer.6} parent=27 // pred_check_branch
          %186 = sbr.rel (%p184) target = $region32
        $region31: #{down_res_layer.6} parent=27 // pred_region
          %187 = dma.done %s180, 4608
        $region32: #{down_res_layer.6} parent=27 // pred_fallthru
          _
        // Predicated region
        $region33: #{down_res_layer.6} parent=27 // pred_check
          %p188 = pneg %p67
        $region34: #{down_res_layer.6} parent=27 // pred_check_branch
          %190 = sbr.rel (%p188) target = $region36
        $region35: #{down_res_layer.6} parent=27 // pred_region
          %191 = dma.done [#allocation6], 9216
        $region36: #{down_res_layer.6} parent=27 // pred_fallthru
          _
        %s192 = sand.u32 %s33, 1
        %s193 = scalar_lea.sflag [#allocation3], %s192
        %s194 = sand.u32 %s33, 1
        %s195 = smul.addr %s194, 288
        %s196 = scalar_lea.vmem [#allocation2], %s195
        %p197 = pneg %p46
        %p198 = pneg %p43
        %p199 = pneg %p67
        %p200 = pneg %p64
        %p201 = pneg %p93
        %p202 = pneg %p90
        %s203 = sand.u32 %s80, 1
        %s204 = scalar_lea.sflag [#allocation4], %s203
        %s205 = sand.u32 %s80, 1
        %s206 = smul.addr %s205, 128
        %s207 = scalar_lea.vmem [#allocation7], %s206
        %p208 = pneg %p119
        %p209 = pneg %p116
        %s210 = sand.u32 %s106, 1
        %s211 = scalar_lea.sflag [#allocation9], %s210
        %s212 = sand.u32 %s106, 1
        %s213 = smul.addr %s212, 2
        %s214 = scalar_lea.vmem [#allocation8], %s213
        %v216 = vld [vmem:[%s183] sm:$0xf]
        %v217 = vld [vmem:[%s183 + $0x4] sm:$0xf]
        %v218 = vld [vmem:[%s183 + $0x8] sm:$0xf]
        %v219 = vld [vmem:[%s183 + $0xc] sm:$0xf]
        %v220 = vld [vmem:[%s183 + $0x10] sm:$0xf]
        %v221 = vld [vmem:[%s183 + $0x14] sm:$0xf]
        %v222 = vld [vmem:[%s183 + $0x18] sm:$0xf]
        %v223 = vld [vmem:[%s183 + $0x1c] sm:$0xf]
        %v224 = vld [vmem:[%s183 + $0x20] sm:$0xf]
        %v225 = vld [vmem:[%s183 + $0x24] sm:$0xf]
        %v226 = vld [vmem:[%s183 + $0x28] sm:$0xf]
        %v227 = vld [vmem:[%s183 + $0x2c] sm:$0xf]
        %v228 = vld [vmem:[%s183 + $0x30] sm:$0xf]
        %v229 = vld [vmem:[%s183 + $0x34] sm:$0xf]
        %v230 = vld [vmem:[%s183 + $0x38] sm:$0xf]
        %v231 = vld [vmem:[%s183 + $0x3c] sm:$0xf]
        %v232 = vld [vmem:[%s183 + $0x40] sm:$0xf]
        %v233 = vld [vmem:[%s183 + $0x44] sm:$0xf]
        %v234 = vld [vmem:[%s183 + $0x48] sm:$0xf]
        %v235 = vld [vmem:[%s183 + $0x4c] sm:$0xf]
        %v236 = vld [vmem:[%s183 + $0x50] sm:$0xf]
        %v237 = vld [vmem:[%s183 + $0x54] sm:$0xf]
        %v238 = vld [vmem:[%s183 + $0x58] sm:$0xf]
        %v239 = vld [vmem:[%s183 + $0x5c] sm:$0xf]
        %v240 = vld [vmem:[%s183 + $0x60] sm:$0xf]
        %v241 = vld [vmem:[%s183 + $0x64] sm:$0xf]
        %v242 = vld [vmem:[%s183 + $0x68] sm:$0xf]
        %v243 = vld [vmem:[%s183 + $0x6c] sm:$0xf]
        %v244 = vld [vmem:[%s183 + $0x70] sm:$0xf]
        %v245 = vld [vmem:[%s183 + $0x74] sm:$0xf]
        %v246 = vld [vmem:[%s183 + $0x78] sm:$0xf]
        %v247 = vld [vmem:[%s183 + $0x7c] sm:$0xf]
        %v248 = vld [vmem:[%s183 + $0x80] sm:$0xf]
        %v249 = vld [vmem:[%s183 + $0x84] sm:$0xf]
        %v250 = vld [vmem:[%s183 + $0x88] sm:$0xf]
        %v251 = vld [vmem:[%s183 + $0x8c] sm:$0xf]
        %v252 = vld [vmem:[%s183 + $0x90] sm:$0xf]
        %v253 = vld [vmem:[%s183 + $0x94] sm:$0xf]
        %v254 = vld [vmem:[%s183 + $0x98] sm:$0xf]
        %v255 = vld [vmem:[%s183 + $0x9c] sm:$0xf]
        %v256 = vld [vmem:[%s183 + $0xa0] sm:$0xf]
        %v257 = vld [vmem:[%s183 + $0xa4] sm:$0xf]
        %v258 = vld [vmem:[%s183 + $0xa8] sm:$0xf]
        %v259 = vld [vmem:[%s183 + $0xac] sm:$0xf]
        %v260 = vld [vmem:[%s183 + $0xb0] sm:$0xf]
        %v261 = vld [vmem:[%s183 + $0xb4] sm:$0xf]
        %v262 = vld [vmem:[%s183 + $0xb8] sm:$0xf]
        %v263 = vld [vmem:[%s183 + $0xbc] sm:$0xf]
        %v264 = vld [vmem:[%s183 + $0xc0] sm:$0xf]
        %v265 = vld [vmem:[%s183 + $0xc4] sm:$0xf]
        %v266 = vld [vmem:[%s183 + $0xc8] sm:$0xf]
        %v267 = vld [vmem:[%s183 + $0xcc] sm:$0xf]
        %v268 = vld [vmem:[%s183 + $0xd0] sm:$0xf]
        %v269 = vld [vmem:[%s183 + $0xd4] sm:$0xf]
        %v270 = vld [vmem:[%s183 + $0xd8] sm:$0xf]
        %v271 = vld [vmem:[%s183 + $0xdc] sm:$0xf]
        %v272 = vld [vmem:[%s183 + $0xe0] sm:$0xf]
        %v273 = vld [vmem:[%s183 + $0xe4] sm:$0xf]
        %v274 = vld [vmem:[%s183 + $0xe8] sm:$0xf]
        %v275 = vld [vmem:[%s183 + $0xec] sm:$0xf]
        %v276 = vld [vmem:[%s183 + $0xf0] sm:$0xf]
        %v277 = vld [vmem:[%s183 + $0xf4] sm:$0xf]
        %v278 = vld [vmem:[%s183 + $0xf8] sm:$0xf]
        %v279 = vld [vmem:[%s183 + $0xfc] sm:$0xf]
        %v280 = vld [vmem:[%s183 + $0x100] sm:$0xf]
        %v281 = vld [vmem:[%s183 + $0x104] sm:$0xf]
        %v282 = vld [vmem:[%s183 + $0x108] sm:$0xf]
        %v283 = vld [vmem:[%s183 + $0x10c] sm:$0xf]
        %v284 = vld [vmem:[%s183 + $0x110] sm:$0xf]
        %v285 = vld [vmem:[%s183 + $0x114] sm:$0xf]
        %v286 = vld [vmem:[%s183 + $0x118] sm:$0xf]
        %v287 = vld [vmem:[%s183 + $0x11c] sm:$0xf]
        %v288 = vunpack.c.l.bf16 %v216
        %v289 = vunpack.c.l.bf16 %v217
        %v290 = vunpack.c.l.bf16 %v218
        %v291 = vunpack.c.l.bf16 %v219
        %v292 = vunpack.c.l.bf16 %v220
        %v293 = vunpack.c.l.bf16 %v221
        %v294 = vunpack.c.l.bf16 %v222
        %v295 = vunpack.c.l.bf16 %v223
        %v296 = vunpack.c.l.bf16 %v224
        %v297 = vunpack.c.l.bf16 %v225
        %v298 = vunpack.c.l.bf16 %v226
        %v299 = vunpack.c.l.bf16 %v227
        %v300 = vunpack.c.l.bf16 %v228
        %v301 = vunpack.c.l.bf16 %v229
        %v302 = vunpack.c.l.bf16 %v230
        %v303 = vunpack.c.l.bf16 %v231
        %v304 = vunpack.c.l.bf16 %v232
        %v305 = vunpack.c.l.bf16 %v233
        %v306 = vunpack.c.l.bf16 %v234
        %v307 = vunpack.c.l.bf16 %v235
        %v308 = vunpack.c.l.bf16 %v236
        %v309 = vunpack.c.l.bf16 %v237
        %v310 = vunpack.c.l.bf16 %v238
        %v311 = vunpack.c.l.bf16 %v239
        %v312 = vunpack.c.l.bf16 %v240
        %v313 = vunpack.c.l.bf16 %v241
        %v314 = vunpack.c.l.bf16 %v242
        %v315 = vunpack.c.l.bf16 %v243
        %v316 = vunpack.c.l.bf16 %v244
        %v317 = vunpack.c.l.bf16 %v245
        %v318 = vunpack.c.l.bf16 %v246
        %v319 = vunpack.c.l.bf16 %v247
        %v320 = vunpack.c.l.bf16 %v248
        %v321 = vunpack.c.l.bf16 %v249
        %v322 = vunpack.c.l.bf16 %v250
        %v323 = vunpack.c.l.bf16 %v251
        %v324 = vunpack.c.l.bf16 %v252
        %v325 = vunpack.c.l.bf16 %v253
        %v326 = vunpack.c.l.bf16 %v254
        %v327 = vunpack.c.l.bf16 %v255
        %v328 = vunpack.c.l.bf16 %v256
        %v329 = vunpack.c.l.bf16 %v257
        %v330 = vunpack.c.l.bf16 %v258
        %v331 = vunpack.c.l.bf16 %v259
        %v332 = vunpack.c.l.bf16 %v260
        %v333 = vunpack.c.l.bf16 %v261
        %v334 = vunpack.c.l.bf16 %v262
        %v335 = vunpack.c.l.bf16 %v263
        %v336 = vunpack.c.l.bf16 %v264
        %v337 = vunpack.c.l.bf16 %v265
        %v338 = vunpack.c.l.bf16 %v266
        %v339 = vunpack.c.l.bf16 %v267
        %v340 = vunpack.c.l.bf16 %v268
        %v341 = vunpack.c.l.bf16 %v269
        %v342 = vunpack.c.l.bf16 %v270
        %v343 = vunpack.c.l.bf16 %v271
        %v344 = vunpack.c.l.bf16 %v272
        %v345 = vunpack.c.l.bf16 %v273
        %v346 = vunpack.c.l.bf16 %v274
        %v347 = vunpack.c.l.bf16 %v275
        %v348 = vunpack.c.l.bf16 %v276
        %v349 = vunpack.c.l.bf16 %v277
        %v350 = vunpack.c.l.bf16 %v278
        %v351 = vunpack.c.l.bf16 %v279
        %v352 = vunpack.c.l.bf16 %v280
        %v353 = vunpack.c.l.bf16 %v281
        %v354 = vunpack.c.l.bf16 %v282
        %v355 = vunpack.c.l.bf16 %v283
        %v356 = vunpack.c.l.bf16 %v284
        %v357 = vunpack.c.l.bf16 %v285
        %v358 = vunpack.c.l.bf16 %v286
        %v359 = vunpack.c.l.bf16 %v287
        %vm408 = vcmask 1040384
        %v409 = vrot.slane %v288, 7
        %v410 = vrot.slane %v289, 7
        %v411 = vsel %vm408, %v409, %v410
        %v412 = vrot.slane %v290, 7
        %v413 = vsel %vm408, %v410, %v412
        %v414 = vrot.slane %v292, 7
        %v415 = vrot.slane %v293, 7
        %v416 = vsel %vm408, %v414, %v415
        %v417 = vrot.slane %v294, 7
        %v418 = vsel %vm408, %v415, %v417
        %v419 = vrot.slane %v296, 7
        %v420 = vrot.slane %v297, 7
        %v421 = vsel %vm408, %v419, %v420
        %v422 = vrot.slane %v298, 7
        %v423 = vsel %vm408, %v420, %v422
        %v424 = vrot.slane %v300, 7
        %v425 = vrot.slane %v301, 7
        %v426 = vsel %vm408, %v424, %v425
        %v427 = vrot.slane %v302, 7
        %v428 = vsel %vm408, %v425, %v427
        %v429 = vrot.slane %v304, 7
        %v430 = vrot.slane %v305, 7
        %v431 = vsel %vm408, %v429, %v430
        %v432 = vrot.slane %v306, 7
        %v433 = vsel %vm408, %v430, %v432
        %v434 = vrot.slane %v308, 7
        %v435 = vrot.slane %v309, 7
        %v436 = vsel %vm408, %v434, %v435
        %v437 = vrot.slane %v310, 7
        %v438 = vsel %vm408, %v435, %v437
        %v439 = vrot.slane %v312, 7
        %v440 = vrot.slane %v313, 7
        %v441 = vsel %vm408, %v439, %v440
        %v442 = vrot.slane %v314, 7
        %v443 = vsel %vm408, %v440, %v442
        %v444 = vrot.slane %v316, 7
        %v445 = vrot.slane %v317, 7
        %v446 = vsel %vm408, %v444, %v445
        %v447 = vrot.slane %v318, 7
        %v448 = vsel %vm408, %v445, %v447
        %v449 = vrot.slane %v320, 7
        %v450 = vrot.slane %v321, 7
        %v451 = vsel %vm408, %v449, %v450
        %v452 = vrot.slane %v322, 7
        %v453 = vsel %vm408, %v450, %v452
        %v454 = vrot.slane %v324, 7
        %v455 = vrot.slane %v325, 7
        %v456 = vsel %vm408, %v454, %v455
        %v457 = vrot.slane %v326, 7
        %v458 = vsel %vm408, %v455, %v457
        %v459 = vrot.slane %v328, 7
        %v460 = vrot.slane %v329, 7
        %v461 = vsel %vm408, %v459, %v460
        %v462 = vrot.slane %v330, 7
        %v463 = vsel %vm408, %v460, %v462
        %v464 = vrot.slane %v332, 7
        %v465 = vrot.slane %v333, 7
        %v466 = vsel %vm408, %v464, %v465
        %v467 = vrot.slane %v334, 7
        %v468 = vsel %vm408, %v465, %v467
        %v469 = vrot.slane %v336, 7
        %v470 = vrot.slane %v337, 7
        %v471 = vsel %vm408, %v469, %v470
        %v472 = vrot.slane %v338, 7
        %v473 = vsel %vm408, %v470, %v472
        %v474 = vrot.slane %v340, 7
        %v475 = vrot.slane %v341, 7
        %v476 = vsel %vm408, %v474, %v475
        %v477 = vrot.slane %v342, 7
        %v478 = vsel %vm408, %v475, %v477
        %v479 = vrot.slane %v344, 7
        %v480 = vrot.slane %v345, 7
        %v481 = vsel %vm408, %v479, %v480
        %v482 = vrot.slane %v346, 7
        %v483 = vsel %vm408, %v480, %v482
        %v484 = vrot.slane %v348, 7
        %v485 = vrot.slane %v349, 7
        %v486 = vsel %vm408, %v484, %v485
        %v487 = vrot.slane %v350, 7
        %v488 = vsel %vm408, %v485, %v487
        %v521 = vpack.c.bf16 %v413, %v411
        %v522 = vpack.c.bf16 %v418, %v416
        %v523 = vpack.c.bf16 %v423, %v421
        %v524 = vpack.c.bf16 %v428, %v426
        %v525 = vpack.c.bf16 %v433, %v431
        %v526 = vpack.c.bf16 %v438, %v436
        %v527 = vpack.c.bf16 %v443, %v441
        %v528 = vpack.c.bf16 %v448, %v446
        %v529 = vpack.c.bf16 %v453, %v451
        %v530 = vpack.c.bf16 %v458, %v456
        %v531 = vpack.c.bf16 %v463, %v461
        %v532 = vpack.c.bf16 %v468, %v466
        %v533 = vpack.c.bf16 %v473, %v471
        %v534 = vpack.c.bf16 %v478, %v476
        %v535 = vpack.c.bf16 %v483, %v481
        %v536 = vpack.c.bf16 %v488, %v486
        %v537 = vld [vmem:[#allocation5] sm:$0xf]
        %v538 = vld [vmem:[#allocation5 + $0x4] sm:$0xf]
        %v539 = vld [vmem:[#allocation5 + $0x8] sm:$0xf]
        %v540 = vld [vmem:[#allocation5 + $0xc] sm:$0xf]
        %v541 = vld [vmem:[#allocation5 + $0x10] sm:$0xf]
        %v542 = vld [vmem:[#allocation5 + $0x14] sm:$0xf]
        %v543 = vld [vmem:[#allocation5 + $0x18] sm:$0xf]
        %v544 = vld [vmem:[#allocation5 + $0x1c] sm:$0xf]
        %v545 = vld [vmem:[#allocation5 + $0x20] sm:$0xf]
        %v546 = vld [vmem:[#allocation5 + $0x24] sm:$0xf]
        %v547 = vld [vmem:[#allocation5 + $0x28] sm:$0xf]
        %v548 = vld [vmem:[#allocation5 + $0x2c] sm:$0xf]
        %v549 = vld [vmem:[#allocation5 + $0x30] sm:$0xf]
        %v550 = vld [vmem:[#allocation5 + $0x34] sm:$0xf]
        %v551 = vld [vmem:[#allocation5 + $0x38] sm:$0xf]
        %v552 = vld [vmem:[#allocation5 + $0x3c] sm:$0xf]
        %v553 = vpack.c.bf16 %v290, %v289
        %v554 = vpack.c.bf16 %v294, %v293
        %v555 = vpack.c.bf16 %v298, %v297
        %v556 = vpack.c.bf16 %v302, %v301
        %v557 = vpack.c.bf16 %v306, %v305
        %v558 = vpack.c.bf16 %v310, %v309
        %v559 = vpack.c.bf16 %v314, %v313
        %v560 = vpack.c.bf16 %v318, %v317
        %v561 = vpack.c.bf16 %v322, %v321
        %v562 = vpack.c.bf16 %v326, %v325
        %v563 = vpack.c.bf16 %v330, %v329
        %v564 = vpack.c.bf16 %v334, %v333
        %v565 = vpack.c.bf16 %v338, %v337
        %v566 = vpack.c.bf16 %v342, %v341
        %v567 = vpack.c.bf16 %v346, %v345
        %v568 = vpack.c.bf16 %v350, %v349
        %s569 = scalar_lea.vmem [#allocation5], 64
        %v570 = vld [vmem:[%s569] sm:$0xf]
        %v571 = vld [vmem:[%s569 + $0x4] sm:$0xf]
        %v572 = vld [vmem:[%s569 + $0x8] sm:$0xf]
        %v573 = vld [vmem:[%s569 + $0xc] sm:$0xf]
        %v574 = vld [vmem:[%s569 + $0x10] sm:$0xf]
        %v575 = vld [vmem:[%s569 + $0x14] sm:$0xf]
        %v576 = vld [vmem:[%s569 + $0x18] sm:$0xf]
        %v577 = vld [vmem:[%s569 + $0x1c] sm:$0xf]
        %v578 = vld [vmem:[%s569 + $0x20] sm:$0xf]
        %v579 = vld [vmem:[%s569 + $0x24] sm:$0xf]
        %v580 = vld [vmem:[%s569 + $0x28] sm:$0xf]
        %v581 = vld [vmem:[%s569 + $0x2c] sm:$0xf]
        %v582 = vld [vmem:[%s569 + $0x30] sm:$0xf]
        %v583 = vld [vmem:[%s569 + $0x34] sm:$0xf]
        %v584 = vld [vmem:[%s569 + $0x38] sm:$0xf]
        %v585 = vld [vmem:[%s569 + $0x3c] sm:$0xf]
        %v602 = vunpack.c.l.b16 %v570
        %v603 = vunpack.c.l.b16 %v571
        %v604 = vunpack.c.l.b16 %v572
        %v605 = vunpack.c.l.b16 %v573
        %v606 = vunpack.c.l.b16 %v574
        %v607 = vunpack.c.l.b16 %v575
        %v608 = vunpack.c.l.b16 %v576
        %v609 = vunpack.c.l.b16 %v577
        %v610 = vunpack.c.l.b16 %v578
        %v611 = vunpack.c.l.b16 %v579
        %v612 = vunpack.c.l.b16 %v580
        %v613 = vunpack.c.l.b16 %v581
        %v614 = vunpack.c.l.b16 %v582
        %v615 = vunpack.c.l.b16 %v583
        %v616 = vunpack.c.l.b16 %v584
        %v617 = vunpack.c.l.b16 %v585
        %v618 = vpack.c.b16 %v603, %v602
        %v619 = vpack.c.b16 %v605, %v604
        %v620 = vpack.c.b16 %v607, %v606
        %v621 = vpack.c.b16 %v609, %v608
        %v622 = vpack.c.b16 %v611, %v610
        %v623 = vpack.c.b16 %v613, %v612
        %v624 = vpack.c.b16 %v615, %v614
        %v625 = vpack.c.b16 %v617, %v616
        %634 = vmatprep.subr.bf16.mxu0 0
        %635 = vmatpush1.bf16.msra.mxu0 %v618
        %636 = vmatprep.subr.bf16.mxu0 0
        %637 = vmatpush1.bf16.msra.mxu0 %v619
        %638 = vmatprep.subr.bf16.mxu0 0
        %639 = vmatpush1.bf16.msra.mxu0 %v620
        %640 = vmatprep.subr.bf16.mxu0 0
        %641 = vmatpush1.bf16.msra.mxu0 %v621
        %642 = vmatprep.subr.bf16.mxu0 0
        %643 = vmatpush1.bf16.msra.mxu0 %v622
        %644 = vmatprep.subr.bf16.mxu0 0
        %645 = vmatpush1.bf16.msra.mxu0 %v623
        %646 = vmatprep.subr.bf16.mxu0 0
        %647 = vmatpush1.bf16.msra.mxu0 %v624
        %648 = vmatprep.subr.bf16.mxu0 0
        %649 = vmatpush1.bf16.msra.mxu0 %v625
        %650 = vmatprep.subr.bf16.mxu0 0
        %651 = vmatpush1.bf16.msra.mxu0 0
        %652 = vmatprep.subr.bf16.mxu0 0
        %653 = vmatpush1.bf16.msra.mxu0 0
        %654 = vmatprep.subr.bf16.mxu0 0
        %655 = vmatpush1.bf16.msra.mxu0 0
        %656 = vmatprep.subr.bf16.mxu0 0
        %657 = vmatpush1.bf16.msra.mxu0 0
        %658 = vmatprep.subr.bf16.mxu0 0
        %659 = vmatpush1.bf16.msra.mxu0 0
        %660 = vmatprep.subr.bf16.mxu0 0
        %661 = vmatpush1.bf16.msra.mxu0 0
        %662 = vmatprep.subr.bf16.mxu0 0
        %663 = vmatpush1.bf16.msra.mxu0 0
        %664 = vmatprep.subr.bf16.mxu0 0
        %665 = vmatpush1.bf16.msra.mxu0 0
        %666 = vmatprep.mubr.bf16.mxu0 0
        %667 = vmatmul.mubr.bf16.gmra.mrb[0].mxu0 %v553
        %v668 = vpop.f32.mrb[0].mxu0
        %v669 = vadd.f32 0.0, %v668
        %v670 = vpop.f32.mrb[0].mxu0
        %v671 = vpop.f32.mrb[0].mxu0
        %v672 = vadd.f32 0.0, %v671
        %v673 = vpop.f32.mrb[0].mxu0
        %674 = vmatprep.mubr.bf16.mxu0 0
        %675 = vmatmul.mubr.bf16.gmra.mrb[0].mxu0 %v554
        %v676 = vpop.f32.mrb[0].mxu0
        %v677 = vadd.f32 0.0, %v676
        %v678 = vpop.f32.mrb[0].mxu0
        %v679 = vpop.f32.mrb[0].mxu0
        %v680 = vadd.f32 0.0, %v679
        %v681 = vpop.f32.mrb[0].mxu0
        %682 = vmatprep.mubr.bf16.mxu0 0
        %683 = vmatmul.mubr.bf16.gmra.mrb[0].mxu0 %v555
        %v684 = vpop.f32.mrb[0].mxu0
        %v685 = vadd.f32 0.0, %v684
        %v686 = vpop.f32.mrb[0].mxu0
        %v687 = vpop.f32.mrb[0].mxu0
        %v688 = vadd.f32 0.0, %v687
        %v689 = vpop.f32.mrb[0].mxu0
        %690 = vmatprep.mubr.bf16.mxu0 0
        %691 = vmatmul.mubr.bf16.gmra.mrb[0].mxu0 %v556
        %v692 = vpop.f32.mrb[0].mxu0
        %v693 = vadd.f32 0.0, %v692
        %v694 = vpop.f32.mrb[0].mxu0
        %v695 = vpop.f32.mrb[0].mxu0
        %v696 = vadd.f32 0.0, %v695
        %v697 = vpop.f32.mrb[0].mxu0
        %698 = vmatprep.mubr.bf16.mxu0 0
        %699 = vmatmul.mubr.bf16.gmra.mrb[0].mxu0 %v557
        %v700 = vpop.f32.mrb[0].mxu0
        %v701 = vadd.f32 0.0, %v700
        %v702 = vpop.f32.mrb[0].mxu0
        %v703 = vpop.f32.mrb[0].mxu0
        %v704 = vadd.f32 0.0, %v703
        %v705 = vpop.f32.mrb[0].mxu0
        %706 = vmatprep.mubr.bf16.mxu0 0
        %707 = vmatmul.mubr.bf16.gmra.mrb[0].mxu0 %v558
        %v708 = vpop.f32.mrb[0].mxu0
        %v709 = vadd.f32 0.0, %v708
        %v710 = vpop.f32.mrb[0].mxu0
        %v711 = vpop.f32.mrb[0].mxu0
        %v712 = vadd.f32 0.0, %v711
        %v713 = vpop.f32.mrb[0].mxu0
        %714 = vmatprep.mubr.bf16.mxu0 0
        %715 = vmatmul.mubr.bf16.gmra.mrb[0].mxu0 %v559
        %v716 = vpop.f32.mrb[0].mxu0
        %v717 = vadd.f32 0.0, %v716
        %v718 = vpop.f32.mrb[0].mxu0
        %v719 = vpop.f32.mrb[0].mxu0
        %v720 = vadd.f32 0.0, %v719
        %v721 = vpop.f32.mrb[0].mxu0
        %722 = vmatprep.mubr.bf16.mxu0 0
        %723 = vmatmul.mubr.bf16.gmra.mrb[0].mxu0 %v560
        %v724 = vpop.f32.mrb[0].mxu0
        %v725 = vadd.f32 0.0, %v724
        %v726 = vpop.f32.mrb[0].mxu0
        %v727 = vpop.f32.mrb[0].mxu0
        %v728 = vadd.f32 0.0, %v727
        %v729 = vpop.f32.mrb[0].mxu0
        %730 = vmatprep.mubr.bf16.mxu0 0
        %731 = vmatmul.mubr.bf16.gmra.mrb[0].mxu0 %v561
        %v732 = vpop.f32.mrb[0].mxu0
        %v733 = vadd.f32 0.0, %v732
        %v734 = vpop.f32.mrb[0].mxu0
        %v735 = vpop.f32.mrb[0].mxu0
        %v736 = vadd.f32 0.0, %v735
        %v737 = vpop.f32.mrb[0].mxu0
        %738 = vmatprep.mubr.bf16.mxu0 0
        %739 = vmatmul.mubr.bf16.gmra.mrb[0].mxu0 %v562
        %v740 = vpop.f32.mrb[0].mxu0
        %v741 = vadd.f32 0.0, %v740
        %v742 = vpop.f32.mrb[0].mxu0
        %v743 = vpop.f32.mrb[0].mxu0
        %v744 = vadd.f32 0.0, %v743
        %v745 = vpop.f32.mrb[0].mxu0
        %746 = vmatprep.mubr.bf16.mxu0 0
        %747 = vmatmul.mubr.bf16.gmra.mrb[0].mxu0 %v563
        %v748 = vpop.f32.mrb[0].mxu0
        %v749 = vadd.f32 0.0, %v748
        %v750 = vpop.f32.mrb[0].mxu0
        %v751 = vpop.f32.mrb[0].mxu0
        %v752 = vadd.f32 0.0, %v751
        %v753 = vpop.f32.mrb[0].mxu0
        %754 = vmatprep.mubr.bf16.mxu0 0
        %755 = vmatmul.mubr.bf16.gmra.mrb[0].mxu0 %v564
        %v756 = vpop.f32.mrb[0].mxu0
        %v757 = vadd.f32 0.0, %v756
        %v758 = vpop.f32.mrb[0].mxu0
        %v759 = vpop.f32.mrb[0].mxu0
        %v760 = vadd.f32 0.0, %v759
        %v761 = vpop.f32.mrb[0].mxu0
        %762 = vmatprep.mubr.bf16.mxu0 0
        %763 = vmatmul.mubr.bf16.gmra.mrb[0].mxu0 %v565
        %v764 = vpop.f32.mrb[0].mxu0
        %v765 = vadd.f32 0.0, %v764
        %v766 = vpop.f32.mrb[0].mxu0
        %v767 = vpop.f32.mrb[0].mxu0
        %v768 = vadd.f32 0.0, %v767
        %v769 = vpop.f32.mrb[0].mxu0
        %770 = vmatprep.mubr.bf16.mxu0 0
        %771 = vmatmul.mubr.bf16.gmra.mrb[0].mxu0 %v566
        %v772 = vpop.f32.mrb[0].mxu0
        %v773 = vadd.f32 0.0, %v772
        %v774 = vpop.f32.mrb[0].mxu0
        %v775 = vpop.f32.mrb[0].mxu0
        %v776 = vadd.f32 0.0, %v775
        %v777 = vpop.f32.mrb[0].mxu0
        %778 = vmatprep.mubr.bf16.mxu0 0
        %779 = vmatmul.mubr.bf16.gmra.mrb[0].mxu0 %v567
        %v780 = vpop.f32.mrb[0].mxu0
        %v781 = vadd.f32 0.0, %v780
        %v782 = vpop.f32.mrb[0].mxu0
        %v783 = vpop.f32.mrb[0].mxu0
        %v784 = vadd.f32 0.0, %v783
        %v785 = vpop.f32.mrb[0].mxu0
        %786 = vmatprep.mubr.bf16.mxu0 0
        %787 = vmatmul.mubr.bf16.gmra.mrb[0].mxu0 %v568
        %v788 = vpop.f32.mrb[0].mxu0
        %v789 = vadd.f32 0.0, %v788
        %v790 = vpop.f32.mrb[0].mxu0
        %v791 = vpop.f32.mrb[0].mxu0
        %v792 = vadd.f32 0.0, %v791
        %v793 = vpop.f32.mrb[0].mxu0
        %794 = vdwg.mxu0
        %v811 = vunpack.c.l.b16 %v537
        %v812 = vunpack.c.l.b16 %v538
        %v813 = vunpack.c.l.b16 %v539
        %v814 = vunpack.c.l.b16 %v540
        %v815 = vunpack.c.l.b16 %v541
        %v816 = vunpack.c.l.b16 %v542
        %v817 = vunpack.c.l.b16 %v543
        %v818 = vunpack.c.l.b16 %v544
        %v819 = vunpack.c.l.b16 %v545
        %v820 = vunpack.c.l.b16 %v546
        %v821 = vunpack.c.l.b16 %v547
        %v822 = vunpack.c.l.b16 %v548
        %v823 = vunpack.c.l.b16 %v549
        %v824 = vunpack.c.l.b16 %v550
        %v825 = vunpack.c.l.b16 %v551
        %v826 = vunpack.c.l.b16 %v552
        %v827 = vpack.c.b16 %v812, %v811
        %v828 = vpack.c.b16 %v814, %v813
        %v829 = vpack.c.b16 %v816, %v815
        %v830 = vpack.c.b16 %v818, %v817
        %v831 = vpack.c.b16 %v820, %v819
        %v832 = vpack.c.b16 %v822, %v821
        %v833 = vpack.c.b16 %v824, %v823
        %v834 = vpack.c.b16 %v826, %v825
        %843 = vmatprep.subr.bf16.mxu0 0
        %844 = vmatpush1.bf16.msra.mxu0 %v827
        %845 = vmatprep.subr.bf16.mxu0 0
        %846 = vmatpush1.bf16.msra.mxu0 %v828
        %847 = vmatprep.subr.bf16.mxu0 0
        %848 = vmatpush1.bf16.msra.mxu0 %v829
        %849 = vmatprep.subr.bf16.mxu0 0
        %850 = vmatpush1.bf16.msra.mxu0 %v830
        %851 = vmatprep.subr.bf16.mxu0 0
        %852 = vmatpush1.bf16.msra.mxu0 %v831
        %853 = vmatprep.subr.bf16.mxu0 0
        %854 = vmatpush1.bf16.msra.mxu0 %v832
        %855 = vmatprep.subr.bf16.mxu0 0
        %856 = vmatpush1.bf16.msra.mxu0 %v833
        %857 = vmatprep.subr.bf16.mxu0 0
        %858 = vmatpush1.bf16.msra.mxu0 %v834
        %859 = vmatprep.subr.bf16.mxu0 0
        %860 = vmatpush1.bf16.msra.mxu0 0
        %861 = vmatprep.subr.bf16.mxu0 0
        %862 = vmatpush1.bf16.msra.mxu0 0
        %863 = vmatprep.subr.bf16.mxu0 0
        %864 = vmatpush1.bf16.msra.mxu0 0
        %865 = vmatprep.subr.bf16.mxu0 0
        %866 = vmatpush1.bf16.msra.mxu0 0
        %867 = vmatprep.subr.bf16.mxu0 0
        %868 = vmatpush1.bf16.msra.mxu0 0
        %869 = vmatprep.subr.bf16.mxu0 0
        %870 = vmatpush1.bf16.msra.mxu0 0
        %871 = vmatprep.subr.bf16.mxu0 0
        %872 = vmatpush1.bf16.msra.mxu0 0
        %873 = vmatprep.subr.bf16.mxu0 0
        %874 = vmatpush1.bf16.msra.mxu0 0
        %875 = vmatprep.mubr.bf16.mxu0 0
        %876 = vmatmul.mubr.bf16.gmra.mrb[0].mxu0 %v521
        %v877 = vpop.f32.mrb[0].mxu0
        %v878 = vadd.f32 %v669, %v877
        %v879 = vpop.f32.mrb[0].mxu0
        %v880 = vpop.f32.mrb[0].mxu0
        %v881 = vadd.f32 %v672, %v880
        %v882 = vpop.f32.mrb[0].mxu0
        %883 = vmatprep.mubr.bf16.mxu0 0
        %884 = vmatmul.mubr.bf16.gmra.mrb[0].mxu0 %v522
        %v885 = vpop.f32.mrb[0].mxu0
        %v886 = vadd.f32 %v677, %v885
        %v887 = vpop.f32.mrb[0].mxu0
        %v888 = vpop.f32.mrb[0].mxu0
        %v889 = vadd.f32 %v680, %v888
        %v890 = vpop.f32.mrb[0].mxu0
        %891 = vmatprep.mubr.bf16.mxu0 0
        %892 = vmatmul.mubr.bf16.gmra.mrb[0].mxu0 %v523
        %v893 = vpop.f32.mrb[0].mxu0
        %v894 = vadd.f32 %v685, %v893
        %v895 = vpop.f32.mrb[0].mxu0
        %v896 = vpop.f32.mrb[0].mxu0
        %v897 = vadd.f32 %v688, %v896
        %v898 = vpop.f32.mrb[0].mxu0
        %899 = vmatprep.mubr.bf16.mxu0 0
        %900 = vmatmul.mubr.bf16.gmra.mrb[0].mxu0 %v524
        %v901 = vpop.f32.mrb[0].mxu0
        %v902 = vadd.f32 %v693, %v901
        %v903 = vpop.f32.mrb[0].mxu0
        %v904 = vpop.f32.mrb[0].mxu0
        %v905 = vadd.f32 %v696, %v904
        %v906 = vpop.f32.mrb[0].mxu0
        %907 = vmatprep.mubr.bf16.mxu0 0
        %908 = vmatmul.mubr.bf16.gmra.mrb[0].mxu0 %v525
        %v909 = vpop.f32.mrb[0].mxu0
        %v910 = vadd.f32 %v701, %v909
        %v911 = vpop.f32.mrb[0].mxu0
        %v912 = vpop.f32.mrb[0].mxu0
        %v913 = vadd.f32 %v704, %v912
        %v914 = vpop.f32.mrb[0].mxu0
        %915 = vmatprep.mubr.bf16.mxu0 0
        %916 = vmatmul.mubr.bf16.gmra.mrb[0].mxu0 %v526
        %v917 = vpop.f32.mrb[0].mxu0
        %v918 = vadd.f32 %v709, %v917
        %v919 = vpop.f32.mrb[0].mxu0
        %v920 = vpop.f32.mrb[0].mxu0
        %v921 = vadd.f32 %v712, %v920
        %v922 = vpop.f32.mrb[0].mxu0
        %923 = vmatprep.mubr.bf16.mxu0 0
        %924 = vmatmul.mubr.bf16.gmra.mrb[0].mxu0 %v527
        %v925 = vpop.f32.mrb[0].mxu0
        %v926 = vadd.f32 %v717, %v925
        %v927 = vpop.f32.mrb[0].mxu0
        %v928 = vpop.f32.mrb[0].mxu0
        %v929 = vadd.f32 %v720, %v928
        %v930 = vpop.f32.mrb[0].mxu0
        %931 = vmatprep.mubr.bf16.mxu0 0
        %932 = vmatmul.mubr.bf16.gmra.mrb[0].mxu0 %v528
        %v933 = vpop.f32.mrb[0].mxu0
        %v934 = vadd.f32 %v725, %v933
        %v935 = vpop.f32.mrb[0].mxu0
        %v936 = vpop.f32.mrb[0].mxu0
        %v937 = vadd.f32 %v728, %v936
        %v938 = vpop.f32.mrb[0].mxu0
        %939 = vmatprep.mubr.bf16.mxu0 0
        %940 = vmatmul.mubr.bf16.gmra.mrb[0].mxu0 %v529
        %v941 = vpop.f32.mrb[0].mxu0
        %v942 = vadd.f32 %v733, %v941
        %v943 = vpop.f32.mrb[0].mxu0
        %v944 = vpop.f32.mrb[0].mxu0
        %v945 = vadd.f32 %v736, %v944
        %v946 = vpop.f32.mrb[0].mxu0
        %947 = vmatprep.mubr.bf16.mxu0 0
        %948 = vmatmul.mubr.bf16.gmra.mrb[0].mxu0 %v530
        %v949 = vpop.f32.mrb[0].mxu0
        %v950 = vadd.f32 %v741, %v949
        %v951 = vpop.f32.mrb[0].mxu0
        %v952 = vpop.f32.mrb[0].mxu0
        %v953 = vadd.f32 %v744, %v952
        %v954 = vpop.f32.mrb[0].mxu0
        %955 = vmatprep.mubr.bf16.mxu0 0
        %956 = vmatmul.mubr.bf16.gmra.mrb[0].mxu0 %v531
        %v957 = vpop.f32.mrb[0].mxu0
        %v958 = vadd.f32 %v749, %v957
        %v959 = vpop.f32.mrb[0].mxu0
        %v960 = vpop.f32.mrb[0].mxu0
        %v961 = vadd.f32 %v752, %v960
        %v962 = vpop.f32.mrb[0].mxu0
        %963 = vmatprep.mubr.bf16.mxu0 0
        %964 = vmatmul.mubr.bf16.gmra.mrb[0].mxu0 %v532
        %v965 = vpop.f32.mrb[0].mxu0
        %v966 = vadd.f32 %v757, %v965
        %v967 = vpop.f32.mrb[0].mxu0
        %v968 = vpop.f32.mrb[0].mxu0
        %v969 = vadd.f32 %v760, %v968
        %v970 = vpop.f32.mrb[0].mxu0
        %971 = vmatprep.mubr.bf16.mxu0 0
        %972 = vmatmul.mubr.bf16.gmra.mrb[0].mxu0 %v533
        %v973 = vpop.f32.mrb[0].mxu0
        %v974 = vadd.f32 %v765, %v973
        %v975 = vpop.f32.mrb[0].mxu0
        %v976 = vpop.f32.mrb[0].mxu0
        %v977 = vadd.f32 %v768, %v976
        %v978 = vpop.f32.mrb[0].mxu0
        %979 = vmatprep.mubr.bf16.mxu0 0
        %980 = vmatmul.mubr.bf16.gmra.mrb[0].mxu0 %v534
        %v981 = vpop.f32.mrb[0].mxu0
        %v982 = vadd.f32 %v773, %v981
        %v983 = vpop.f32.mrb[0].mxu0
        %v984 = vpop.f32.mrb[0].mxu0
        %v985 = vadd.f32 %v776, %v984
        %v986 = vpop.f32.mrb[0].mxu0
        %987 = vmatprep.mubr.bf16.mxu0 0
        %988 = vmatmul.mubr.bf16.gmra.mrb[0].mxu0 %v535
        %v989 = vpop.f32.mrb[0].mxu0
        %v990 = vadd.f32 %v781, %v989
        %v991 = vpop.f32.mrb[0].mxu0
        %v992 = vpop.f32.mrb[0].mxu0
        %v993 = vadd.f32 %v784, %v992
        %v994 = vpop.f32.mrb[0].mxu0
        %995 = vmatprep.mubr.bf16.mxu0 0
        %996 = vmatmul.mubr.bf16.gmra.mrb[0].mxu0 %v536
        %v997 = vpop.f32.mrb[0].mxu0
        %v998 = vadd.f32 %v789, %v997
        %v999 = vpop.f32.mrb[0].mxu0
        %v1000 = vpop.f32.mrb[0].mxu0
        %v1001 = vadd.f32 %v792, %v1000
        %v1002 = vpop.f32.mrb[0].mxu0
        %1003 = vdwg.mxu0
        %vm1020 = vcmask 1046528
        %v1021 = vrot.slane %v289, 1
        %v1022 = vrot.slane %v290, 1
        %v1023 = vsel %vm1020, %v1021, %v1022
        %v1024 = vrot.slane %v291, 1
        %v1025 = vsel %vm1020, %v1022, %v1024
        %v1026 = vrot.slane %v293, 1
        %v1027 = vrot.slane %v294, 1
        %v1028 = vsel %vm1020, %v1026, %v1027
        %v1029 = vrot.slane %v295, 1
        %v1030 = vsel %vm1020, %v1027, %v1029
        %v1031 = vrot.slane %v297, 1
        %v1032 = vrot.slane %v298, 1
        %v1033 = vsel %vm1020, %v1031, %v1032
        %v1034 = vrot.slane %v299, 1
        %v1035 = vsel %vm1020, %v1032, %v1034
        %v1036 = vrot.slane %v301, 1
        %v1037 = vrot.slane %v302, 1
        %v1038 = vsel %vm1020, %v1036, %v1037
        %v1039 = vrot.slane %v303, 1
        %v1040 = vsel %vm1020, %v1037, %v1039
        %v1041 = vrot.slane %v305, 1
        %v1042 = vrot.slane %v306, 1
        %v1043 = vsel %vm1020, %v1041, %v1042
        %v1044 = vrot.slane %v307, 1
        %v1045 = vsel %vm1020, %v1042, %v1044
        %v1046 = vrot.slane %v309, 1
        %v1047 = vrot.slane %v310, 1
        %v1048 = vsel %vm1020, %v1046, %v1047
        %v1049 = vrot.slane %v311, 1
        %v1050 = vsel %vm1020, %v1047, %v1049
        %v1051 = vrot.slane %v313, 1
        %v1052 = vrot.slane %v314, 1
        %v1053 = vsel %vm1020, %v1051, %v1052
        %v1054 = vrot.slane %v315, 1
        %v1055 = vsel %vm1020, %v1052, %v1054
        %v1056 = vrot.slane %v317, 1
        %v1057 = vrot.slane %v318, 1
        %v1058 = vsel %vm1020, %v1056, %v1057
        %v1059 = vrot.slane %v319, 1
        %v1060 = vsel %vm1020, %v1057, %v1059
        %v1061 = vrot.slane %v321, 1
        %v1062 = vrot.slane %v322, 1
        %v1063 = vsel %vm1020, %v1061, %v1062
        %v1064 = vrot.slane %v323, 1
        %v1065 = vsel %vm1020, %v1062, %v1064
        %v1066 = vrot.slane %v325, 1
        %v1067 = vrot.slane %v326, 1
        %v1068 = vsel %vm1020, %v1066, %v1067
        %v1069 = vrot.slane %v327, 1
        %v1070 = vsel %vm1020, %v1067, %v1069
        %v1071 = vrot.slane %v329, 1
        %v1072 = vrot.slane %v330, 1
        %v1073 = vsel %vm1020, %v1071, %v1072
        %v1074 = vrot.slane %v331, 1
        %v1075 = vsel %vm1020, %v1072, %v1074
        %v1076 = vrot.slane %v333, 1
        %v1077 = vrot.slane %v334, 1
        %v1078 = vsel %vm1020, %v1076, %v1077
        %v1079 = vrot.slane %v335, 1
        %v1080 = vsel %vm1020, %v1077, %v1079
        %v1081 = vrot.slane %v337, 1
        %v1082 = vrot.slane %v338, 1
        %v1083 = vsel %vm1020, %v1081, %v1082
        %v1084 = vrot.slane %v339, 1
        %v1085 = vsel %vm1020, %v1082, %v1084
        %v1086 = vrot.slane %v341, 1
        %v1087 = vrot.slane %v342, 1
        %v1088 = vsel %vm1020, %v1086, %v1087
        %v1089 = vrot.slane %v343, 1
        %v1090 = vsel %vm1020, %v1087, %v1089
        %v1091 = vrot.slane %v345, 1
        %v1092 = vrot.slane %v346, 1
        %v1093 = vsel %vm1020, %v1091, %v1092
        %v1094 = vrot.slane %v347, 1
        %v1095 = vsel %vm1020, %v1092, %v1094
        %v1096 = vrot.slane %v349, 1
        %v1097 = vrot.slane %v350, 1
        %v1098 = vsel %vm1020, %v1096, %v1097
        %v1099 = vrot.slane %v351, 1
        %v1100 = vsel %vm1020, %v1097, %v1099
        %v1133 = vpack.c.bf16 %v1025, %v1023
        %v1134 = vpack.c.bf16 %v1030, %v1028
        %v1135 = vpack.c.bf16 %v1035, %v1033
        %v1136 = vpack.c.bf16 %v1040, %v1038
        %v1137 = vpack.c.bf16 %v1045, %v1043
        %v1138 = vpack.c.bf16 %v1050, %v1048
        %v1139 = vpack.c.bf16 %v1055, %v1053
        %v1140 = vpack.c.bf16 %v1060, %v1058
        %v1141 = vpack.c.bf16 %v1065, %v1063
        %v1142 = vpack.c.bf16 %v1070, %v1068
        %v1143 = vpack.c.bf16 %v1075, %v1073
        %v1144 = vpack.c.bf16 %v1080, %v1078
        %v1145 = vpack.c.bf16 %v1085, %v1083
        %v1146 = vpack.c.bf16 %v1090, %v1088
        %v1147 = vpack.c.bf16 %v1095, %v1093
        %v1148 = vpack.c.bf16 %v1100, %v1098
        %s1149 = scalar_lea.vmem [#allocation5], 128
        %v1150 = vld [vmem:[%s1149] sm:$0xf]
        %v1151 = vld [vmem:[%s1149 + $0x4] sm:$0xf]
        %v1152 = vld [vmem:[%s1149 + $0x8] sm:$0xf]
        %v1153 = vld [vmem:[%s1149 + $0xc] sm:$0xf]
        %v1154 = vld [vmem:[%s1149 + $0x10] sm:$0xf]
        %v1155 = vld [vmem:[%s1149 + $0x14] sm:$0xf]
        %v1156 = vld [vmem:[%s1149 + $0x18] sm:$0xf]
        %v1157 = vld [vmem:[%s1149 + $0x1c] sm:$0xf]
        %v1158 = vld [vmem:[%s1149 + $0x20] sm:$0xf]
        %v1159 = vld [vmem:[%s1149 + $0x24] sm:$0xf]
        %v1160 = vld [vmem:[%s1149 + $0x28] sm:$0xf]
        %v1161 = vld [vmem:[%s1149 + $0x2c] sm:$0xf]
        %v1162 = vld [vmem:[%s1149 + $0x30] sm:$0xf]
        %v1163 = vld [vmem:[%s1149 + $0x34] sm:$0xf]
        %v1164 = vld [vmem:[%s1149 + $0x38] sm:$0xf]
        %v1165 = vld [vmem:[%s1149 + $0x3c] sm:$0xf]
        %v1182 = vunpack.c.l.b16 %v1150
        %v1183 = vunpack.c.l.b16 %v1151
        %v1184 = vunpack.c.l.b16 %v1152
        %v1185 = vunpack.c.l.b16 %v1153
        %v1186 = vunpack.c.l.b16 %v1154
        %v1187 = vunpack.c.l.b16 %v1155
        %v1188 = vunpack.c.l.b16 %v1156
        %v1189 = vunpack.c.l.b16 %v1157
        %v1190 = vunpack.c.l.b16 %v1158
        %v1191 = vunpack.c.l.b16 %v1159
        %v1192 = vunpack.c.l.b16 %v1160
        %v1193 = vunpack.c.l.b16 %v1161
        %v1194 = vunpack.c.l.b16 %v1162
        %v1195 = vunpack.c.l.b16 %v1163
        %v1196 = vunpack.c.l.b16 %v1164
        %v1197 = vunpack.c.l.b16 %v1165
        %v1198 = vpack.c.b16 %v1183, %v1182
        %v1199 = vpack.c.b16 %v1185, %v1184
        %v1200 = vpack.c.b16 %v1187, %v1186
        %v1201 = vpack.c.b16 %v1189, %v1188
        %v1202 = vpack.c.b16 %v1191, %v1190
        %v1203 = vpack.c.b16 %v1193, %v1192
        %v1204 = vpack.c.b16 %v1195, %v1194
        %v1205 = vpack.c.b16 %v1197, %v1196
        %1214 = vmatprep.subr.bf16.mxu0 0
        %1215 = vmatpush1.bf16.msra.mxu0 %v1198
        %1216 = vmatprep.subr.bf16.mxu0 0
        %1217 = vmatpush1.bf16.msra.mxu0 %v1199
        %1218 = vmatprep.subr.bf16.mxu0 0
        %1219 = vmatpush1.bf16.msra.mxu0 %v1200
        %1220 = vmatprep.subr.bf16.mxu0 0
        %1221 = vmatpush1.bf16.msra.mxu0 %v1201
        %1222 = vmatprep.subr.bf16.mxu0 0
        %1223 = vmatpush1.bf16.msra.mxu0 %v1202
        %1224 = vmatprep.subr.bf16.mxu0 0
        %1225 = vmatpush1.bf16.msra.mxu0 %v1203
        %1226 = vmatprep.subr.bf16.mxu0 0
        %1227 = vmatpush1.bf16.msra.mxu0 %v1204
        %1228 = vmatprep.subr.bf16.mxu0 0
        %1229 = vmatpush1.bf16.msra.mxu0 %v1205
        %1230 = vmatprep.subr.bf16.mxu0 0
        %1231 = vmatpush1.bf16.msra.mxu0 0
        %1232 = vmatprep.subr.bf16.mxu0 0
        %1233 = vmatpush1.bf16.msra.mxu0 0
        %1234 = vmatprep.subr.bf16.mxu0 0
        %1235 = vmatpush1.bf16.msra.mxu0 0
        %1236 = vmatprep.subr.bf16.mxu0 0
        %1237 = vmatpush1.bf16.msra.mxu0 0
        %1238 = vmatprep.subr.bf16.mxu0 0
        %1239 = vmatpush1.bf16.msra.mxu0 0
        %1240 = vmatprep.subr.bf16.mxu0 0
        %1241 = vmatpush1.bf16.msra.mxu0 0
        %1242 = vmatprep.subr.bf16.mxu0 0
        %1243 = vmatpush1.bf16.msra.mxu0 0
        %1244 = vmatprep.subr.bf16.mxu0 0
        %1245 = vmatpush1.bf16.msra.mxu0 0
        %1246 = vmatprep.mubr.bf16.mxu0 0
        %1247 = vmatmul.mubr.bf16.gmra.mrb[0].mxu0 %v1133
        %v1248 = vpop.f32.mrb[0].mxu0
        %v1249 = vadd.f32 0.0, %v1248
        %v1250 = vpop.f32.mrb[0].mxu0
        %v1251 = vpop.f32.mrb[0].mxu0
        %v1252 = vadd.f32 0.0, %v1251
        %v1253 = vpop.f32.mrb[0].mxu0
        %1254 = vmatprep.mubr.bf16.mxu0 0
        %1255 = vmatmul.mubr.bf16.gmra.mrb[0].mxu0 %v1134
        %v1256 = vpop.f32.mrb[0].mxu0
        %v1257 = vadd.f32 0.0, %v1256
        %v1258 = vpop.f32.mrb[0].mxu0
        %v1259 = vpop.f32.mrb[0].mxu0
        %v1260 = vadd.f32 0.0, %v1259
        %v1261 = vpop.f32.mrb[0].mxu0
        %1262 = vmatprep.mubr.bf16.mxu0 0
        %1263 = vmatmul.mubr.bf16.gmra.mrb[0].mxu0 %v1135
        %v1264 = vpop.f32.mrb[0].mxu0
        %v1265 = vadd.f32 0.0, %v1264
        %v1266 = vpop.f32.mrb[0].mxu0
        %v1267 = vpop.f32.mrb[0].mxu0
        %v1268 = vadd.f32 0.0, %v1267
        %v1269 = vpop.f32.mrb[0].mxu0
        %1270 = vmatprep.mubr.bf16.mxu0 0
        %1271 = vmatmul.mubr.bf16.gmra.mrb[0].mxu0 %v1136
        %v1272 = vpop.f32.mrb[0].mxu0
        %v1273 = vadd.f32 0.0, %v1272
        %v1274 = vpop.f32.mrb[0].mxu0
        %v1275 = vpop.f32.mrb[0].mxu0
        %v1276 = vadd.f32 0.0, %v1275
        %v1277 = vpop.f32.mrb[0].mxu0
        %1278 = vmatprep.mubr.bf16.mxu0 0
        %1279 = vmatmul.mubr.bf16.gmra.mrb[0].mxu0 %v1137
        %v1280 = vpop.f32.mrb[0].mxu0
        %v1281 = vadd.f32 0.0, %v1280
        %v1282 = vpop.f32.mrb[0].mxu0
        %v1283 = vpop.f32.mrb[0].mxu0
        %v1284 = vadd.f32 0.0, %v1283
        %v1285 = vpop.f32.mrb[0].mxu0
        %1286 = vmatprep.mubr.bf16.mxu0 0
        %1287 = vmatmul.mubr.bf16.gmra.mrb[0].mxu0 %v1138
        %v1288 = vpop.f32.mrb[0].mxu0
        %v1289 = vadd.f32 0.0, %v1288
        %v1290 = vpop.f32.mrb[0].mxu0
        %v1291 = vpop.f32.mrb[0].mxu0
        %v1292 = vadd.f32 0.0, %v1291
        %v1293 = vpop.f32.mrb[0].mxu0
        %1294 = vmatprep.mubr.bf16.mxu0 0
        %1295 = vmatmul.mubr.bf16.gmra.mrb[0].mxu0 %v1139
        %v1296 = vpop.f32.mrb[0].mxu0
        %v1297 = vadd.f32 0.0, %v1296
        %v1298 = vpop.f32.mrb[0].mxu0
        %v1299 = vpop.f32.mrb[0].mxu0
        %v1300 = vadd.f32 0.0, %v1299
        %v1301 = vpop.f32.mrb[0].mxu0
        %1302 = vmatprep.mubr.bf16.mxu0 0
        %1303 = vmatmul.mubr.bf16.gmra.mrb[0].mxu0 %v1140
        %v1304 = vpop.f32.mrb[0].mxu0
        %v1305 = vadd.f32 0.0, %v1304
        %v1306 = vpop.f32.mrb[0].mxu0
        %v1307 = vpop.f32.mrb[0].mxu0
        %v1308 = vadd.f32 0.0, %v1307
        %v1309 = vpop.f32.mrb[0].mxu0
        %1310 = vmatprep.mubr.bf16.mxu0 0
        %1311 = vmatmul.mubr.bf16.gmra.mrb[0].mxu0 %v1141
        %v1312 = vpop.f32.mrb[0].mxu0
        %v1313 = vadd.f32 0.0, %v1312
        %v1314 = vpop.f32.mrb[0].mxu0
        %v1315 = vpop.f32.mrb[0].mxu0
        %v1316 = vadd.f32 0.0, %v1315
        %v1317 = vpop.f32.mrb[0].mxu0
        %1318 = vmatprep.mubr.bf16.mxu0 0
        %1319 = vmatmul.mubr.bf16.gmra.mrb[0].mxu0 %v1142
        %v1320 = vpop.f32.mrb[0].mxu0
        %v1321 = vadd.f32 0.0, %v1320
        %v1322 = vpop.f32.mrb[0].mxu0
        %v1323 = vpop.f32.mrb[0].mxu0
        %v1324 = vadd.f32 0.0, %v1323
        %v1325 = vpop.f32.mrb[0].mxu0
        %1326 = vmatprep.mubr.bf16.mxu0 0
        %1327 = vmatmul.mubr.bf16.gmra.mrb[0].mxu0 %v1143
        %v1328 = vpop.f32.mrb[0].mxu0
        %v1329 = vadd.f32 0.0, %v1328
        %v1330 = vpop.f32.mrb[0].mxu0
        %v1331 = vpop.f32.mrb[0].mxu0
        %v1332 = vadd.f32 0.0, %v1331
        %v1333 = vpop.f32.mrb[0].mxu0
        %1334 = vmatprep.mubr.bf16.mxu0 0
        %1335 = vmatmul.mubr.bf16.gmra.mrb[0].mxu0 %v1144
        %v1336 = vpop.f32.mrb[0].mxu0
        %v1337 = vadd.f32 0.0, %v1336
        %v1338 = vpop.f32.mrb[0].mxu0
        %v1339 = vpop.f32.mrb[0].mxu0
        %v1340 = vadd.f32 0.0, %v1339
        %v1341 = vpop.f32.mrb[0].mxu0
        %1342 = vmatprep.mubr.bf16.mxu0 0
        %1343 = vmatmul.mubr.bf16.gmra.mrb[0].mxu0 %v1145
        %v1344 = vpop.f32.mrb[0].mxu0
        %v1345 = vadd.f32 0.0, %v1344
        %v1346 = vpop.f32.mrb[0].mxu0
        %v1347 = vpop.f32.mrb[0].mxu0
        %v1348 = vadd.f32 0.0, %v1347
        %v1349 = vpop.f32.mrb[0].mxu0
        %1350 = vmatprep.mubr.bf16.mxu0 0
        %1351 = vmatmul.mubr.bf16.gmra.mrb[0].mxu0 %v1146
        %v1352 = vpop.f32.mrb[0].mxu0
        %v1353 = vadd.f32 0.0, %v1352
        %v1354 = vpop.f32.mrb[0].mxu0
        %v1355 = vpop.f32.mrb[0].mxu0
        %v1356 = vadd.f32 0.0, %v1355
        %v1357 = vpop.f32.mrb[0].mxu0
        %1358 = vmatprep.mubr.bf16.mxu0 0
        %1359 = vmatmul.mubr.bf16.gmra.mrb[0].mxu0 %v1147
        %v1360 = vpop.f32.mrb[0].mxu0
        %v1361 = vadd.f32 0.0, %v1360
        %v1362 = vpop.f32.mrb[0].mxu0
        %v1363 = vpop.f32.mrb[0].mxu0
        %v1364 = vadd.f32 0.0, %v1363
        %v1365 = vpop.f32.mrb[0].mxu0
        %1366 = vmatprep.mubr.bf16.mxu0 0
        %1367 = vmatmul.mubr.bf16.gmra.mrb[0].mxu0 %v1148
        %v1368 = vpop.f32.mrb[0].mxu0
        %v1369 = vadd.f32 0.0, %v1368
        %v1370 = vpop.f32.mrb[0].mxu0
        %v1371 = vpop.f32.mrb[0].mxu0
        %v1372 = vadd.f32 0.0, %v1371
        %v1373 = vpop.f32.mrb[0].mxu0
        %1374 = vdwg.mxu0
        %v1375 = vadd.f32 %v878, %v1249
        %v1376 = vadd.f32 %v881, %v1252
        %v1377 = vadd.f32 %v886, %v1257
        %v1378 = vadd.f32 %v889, %v1260
        %v1379 = vadd.f32 %v894, %v1265
        %v1380 = vadd.f32 %v897, %v1268
        %v1381 = vadd.f32 %v902, %v1273
        %v1382 = vadd.f32 %v905, %v1276
        %v1383 = vadd.f32 %v910, %v1281
        %v1384 = vadd.f32 %v913, %v1284
        %v1385 = vadd.f32 %v918, %v1289
        %v1386 = vadd.f32 %v921, %v1292
        %v1387 = vadd.f32 %v926, %v1297
        %v1388 = vadd.f32 %v929, %v1300
        %v1389 = vadd.f32 %v934, %v1305
        %v1390 = vadd.f32 %v937, %v1308
        %v1391 = vadd.f32 %v942, %v1313
        %v1392 = vadd.f32 %v945, %v1316
        %v1393 = vadd.f32 %v950, %v1321
        %v1394 = vadd.f32 %v953, %v1324
        %v1395 = vadd.f32 %v958, %v1329
        %v1396 = vadd.f32 %v961, %v1332
        %v1397 = vadd.f32 %v966, %v1337
        %v1398 = vadd.f32 %v969, %v1340
        %v1399 = vadd.f32 %v974, %v1345
        %v1400 = vadd.f32 %v977, %v1348
        %v1401 = vadd.f32 %v982, %v1353
        %v1402 = vadd.f32 %v985, %v1356
        %v1403 = vadd.f32 %v990, %v1361
        %v1404 = vadd.f32 %v993, %v1364
        %v1405 = vadd.f32 %v998, %v1369
        %v1406 = vadd.f32 %v1001, %v1372
        %v1410 = vrot.slane %v352, 7
        %v1411 = vrot.slane %v353, 7
        %v1412 = vsel %vm408, %v1410, %v1411
        %v1413 = vrot.slane %v354, 7
        %v1414 = vsel %vm408, %v1411, %v1413
        %v1417 = vpack.c.bf16 %v1414, %v1412
        %s1418 = scalar_lea.vmem [#allocation5], 192
        %v1419 = vld [vmem:[%s1418] sm:$0xf]
        %v1420 = vld [vmem:[%s1418 + $0x4] sm:$0xf]
        %v1421 = vld [vmem:[%s1418 + $0x8] sm:$0xf]
        %v1422 = vld [vmem:[%s1418 + $0xc] sm:$0xf]
        %v1423 = vld [vmem:[%s1418 + $0x10] sm:$0xf]
        %v1424 = vld [vmem:[%s1418 + $0x14] sm:$0xf]
        %v1425 = vld [vmem:[%s1418 + $0x18] sm:$0xf]
        %v1426 = vld [vmem:[%s1418 + $0x1c] sm:$0xf]
        %v1427 = vld [vmem:[%s1418 + $0x20] sm:$0xf]
        %v1428 = vld [vmem:[%s1418 + $0x24] sm:$0xf]
        %v1429 = vld [vmem:[%s1418 + $0x28] sm:$0xf]
        %v1430 = vld [vmem:[%s1418 + $0x2c] sm:$0xf]
        %v1431 = vld [vmem:[%s1418 + $0x30] sm:$0xf]
        %v1432 = vld [vmem:[%s1418 + $0x34] sm:$0xf]
        %v1433 = vld [vmem:[%s1418 + $0x38] sm:$0xf]
        %v1434 = vld [vmem:[%s1418 + $0x3c] sm:$0xf]
        %v1451 = vunpack.c.l.b16 %v1419
        %v1452 = vunpack.c.l.b16 %v1420
        %v1453 = vunpack.c.l.b16 %v1421
        %v1454 = vunpack.c.l.b16 %v1422
        %v1455 = vunpack.c.l.b16 %v1423
        %v1456 = vunpack.c.l.b16 %v1424
        %v1457 = vunpack.c.l.b16 %v1425
        %v1458 = vunpack.c.l.b16 %v1426
        %v1459 = vunpack.c.l.b16 %v1427
        %v1460 = vunpack.c.l.b16 %v1428
        %v1461 = vunpack.c.l.b16 %v1429
        %v1462 = vunpack.c.l.b16 %v1430
        %v1463 = vunpack.c.l.b16 %v1431
        %v1464 = vunpack.c.l.b16 %v1432
        %v1465 = vunpack.c.l.b16 %v1433
        %v1466 = vunpack.c.l.b16 %v1434
        %v1467 = vpack.c.b16 %v1452, %v1451
        %v1468 = vpack.c.b16 %v1454, %v1453
        %v1469 = vpack.c.b16 %v1456, %v1455
        %v1470 = vpack.c.b16 %v1458, %v1457
        %v1471 = vpack.c.b16 %v1460, %v1459
        %v1472 = vpack.c.b16 %v1462, %v1461
        %v1473 = vpack.c.b16 %v1464, %v1463
        %v1474 = vpack.c.b16 %v1466, %v1465
        %1483 = vmatprep.subr.bf16.mxu0 0
        %1484 = vmatpush1.bf16.msra.mxu0 %v1467
        %1485 = vmatprep.subr.bf16.mxu0 0
        %1486 = vmatpush1.bf16.msra.mxu0 %v1468
        %1487 = vmatprep.subr.bf16.mxu0 0
        %1488 = vmatpush1.bf16.msra.mxu0 %v1469
        %1489 = vmatprep.subr.bf16.mxu0 0
        %1490 = vmatpush1.bf16.msra.mxu0 %v1470
        %1491 = vmatprep.subr.bf16.mxu0 0
        %1492 = vmatpush1.bf16.msra.mxu0 %v1471
        %1493 = vmatprep.subr.bf16.mxu0 0
        %1494 = vmatpush1.bf16.msra.mxu0 %v1472
        %1495 = vmatprep.subr.bf16.mxu0 0
        %1496 = vmatpush1.bf16.msra.mxu0 %v1473
        %1497 = vmatprep.subr.bf16.mxu0 0
        %1498 = vmatpush1.bf16.msra.mxu0 %v1474
        %1499 = vmatprep.subr.bf16.mxu0 0
        %1500 = vmatpush1.bf16.msra.mxu0 0
        %1501 = vmatprep.subr.bf16.mxu0 0
        %1502 = vmatpush1.bf16.msra.mxu0 0
        %1503 = vmatprep.subr.bf16.mxu0 0
        %1504 = vmatpush1.bf16.msra.mxu0 0
        %1505 = vmatprep.subr.bf16.mxu0 0
        %1506 = vmatpush1.bf16.msra.mxu0 0
        %1507 = vmatprep.subr.bf16.mxu0 0
        %1508 = vmatpush1.bf16.msra.mxu0 0
        %1509 = vmatprep.subr.bf16.mxu0 0
        %1510 = vmatpush1.bf16.msra.mxu0 0
        %1511 = vmatprep.subr.bf16.mxu0 0
        %1512 = vmatpush1.bf16.msra.mxu0 0
        %1513 = vmatprep.subr.bf16.mxu0 0
        %1514 = vmatpush1.bf16.msra.mxu0 0
        %1515 = vmatprep.mubr.bf16.mxu0 0
        %1516 = vmatmul.mubr.bf16.gmra.mrb[0].mxu0 %v522
        %v1517 = vpop.f32.mrb[0].mxu0
        %v1518 = vadd.f32 0.0, %v1517
        %v1519 = vpop.f32.mrb[0].mxu0
        %v1520 = vpop.f32.mrb[0].mxu0
        %v1521 = vadd.f32 0.0, %v1520
        %v1522 = vpop.f32.mrb[0].mxu0
        %1523 = vmatprep.mubr.bf16.mxu0 0
        %1524 = vmatmul.mubr.bf16.gmra.mrb[0].mxu0 %v523
        %v1525 = vpop.f32.mrb[0].mxu0
        %v1526 = vadd.f32 0.0, %v1525
        %v1527 = vpop.f32.mrb[0].mxu0
        %v1528 = vpop.f32.mrb[0].mxu0
        %v1529 = vadd.f32 0.0, %v1528
        %v1530 = vpop.f32.mrb[0].mxu0
        %1531 = vmatprep.mubr.bf16.mxu0 0
        %1532 = vmatmul.mubr.bf16.gmra.mrb[0].mxu0 %v524
        %v1533 = vpop.f32.mrb[0].mxu0
        %v1534 = vadd.f32 0.0, %v1533
        %v1535 = vpop.f32.mrb[0].mxu0
        %v1536 = vpop.f32.mrb[0].mxu0
        %v1537 = vadd.f32 0.0, %v1536
        %v1538 = vpop.f32.mrb[0].mxu0
        %1539 = vmatprep.mubr.bf16.mxu0 0
        %1540 = vmatmul.mubr.bf16.gmra.mrb[0].mxu0 %v525
        %v1541 = vpop.f32.mrb[0].mxu0
        %v1542 = vadd.f32 0.0, %v1541
        %v1543 = vpop.f32.mrb[0].mxu0
        %v1544 = vpop.f32.mrb[0].mxu0
        %v1545 = vadd.f32 0.0, %v1544
        %v1546 = vpop.f32.mrb[0].mxu0
        %1547 = vmatprep.mubr.bf16.mxu0 0
        %1548 = vmatmul.mubr.bf16.gmra.mrb[0].mxu0 %v526
        %v1549 = vpop.f32.mrb[0].mxu0
        %v1550 = vadd.f32 0.0, %v1549
        %v1551 = vpop.f32.mrb[0].mxu0
        %v1552 = vpop.f32.mrb[0].mxu0
        %v1553 = vadd.f32 0.0, %v1552
        %v1554 = vpop.f32.mrb[0].mxu0
        %1555 = vmatprep.mubr.bf16.mxu0 0
        %1556 = vmatmul.mubr.bf16.gmra.mrb[0].mxu0 %v527
        %v1557 = vpop.f32.mrb[0].mxu0
        %v1558 = vadd.f32 0.0, %v1557
        %v1559 = vpop.f32.mrb[0].mxu0
        %v1560 = vpop.f32.mrb[0].mxu0
        %v1561 = vadd.f32 0.0, %v1560
        %v1562 = vpop.f32.mrb[0].mxu0
        %1563 = vmatprep.mubr.bf16.mxu0 0
        %1564 = vmatmul.mubr.bf16.gmra.mrb[0].mxu0 %v528
        %v1565 = vpop.f32.mrb[0].mxu0
        %v1566 = vadd.f32 0.0, %v1565
        %v1567 = vpop.f32.mrb[0].mxu0
        %v1568 = vpop.f32.mrb[0].mxu0
        %v1569 = vadd.f32 0.0, %v1568
        %v1570 = vpop.f32.mrb[0].mxu0
        %1571 = vmatprep.mubr.bf16.mxu0 0
        %1572 = vmatmul.mubr.bf16.gmra.mrb[0].mxu0 %v529
        %v1573 = vpop.f32.mrb[0].mxu0
        %v1574 = vadd.f32 0.0, %v1573
        %v1575 = vpop.f32.mrb[0].mxu0
        %v1576 = vpop.f32.mrb[0].mxu0
        %v1577 = vadd.f32 0.0, %v1576
        %v1578 = vpop.f32.mrb[0].mxu0
        %1579 = vmatprep.mubr.bf16.mxu0 0
        %1580 = vmatmul.mubr.bf16.gmra.mrb[0].mxu0 %v530
        %v1581 = vpop.f32.mrb[0].mxu0
        %v1582 = vadd.f32 0.0, %v1581
        %v1583 = vpop.f32.mrb[0].mxu0
        %v1584 = vpop.f32.mrb[0].mxu0
        %v1585 = vadd.f32 0.0, %v1584
        %v1586 = vpop.f32.mrb[0].mxu0
        %1587 = vmatprep.mubr.bf16.mxu0 0
        %1588 = vmatmul.mubr.bf16.gmra.mrb[0].mxu0 %v531
        %v1589 = vpop.f32.mrb[0].mxu0
        %v1590 = vadd.f32 0.0, %v1589
        %v1591 = vpop.f32.mrb[0].mxu0
        %v1592 = vpop.f32.mrb[0].mxu0
        %v1593 = vadd.f32 0.0, %v1592
        %v1594 = vpop.f32.mrb[0].mxu0
        %1595 = vmatprep.mubr.bf16.mxu0 0
        %1596 = vmatmul.mubr.bf16.gmra.mrb[0].mxu0 %v532
        %v1597 = vpop.f32.mrb[0].mxu0
        %v1598 = vadd.f32 0.0, %v1597
        %v1599 = vpop.f32.mrb[0].mxu0
        %v1600 = vpop.f32.mrb[0].mxu0
        %v1601 = vadd.f32 0.0, %v1600
        %v1602 = vpop.f32.mrb[0].mxu0
        %1603 = vmatprep.mubr.bf16.mxu0 0
        %1604 = vmatmul.mubr.bf16.gmra.mrb[0].mxu0 %v533
        %v1605 = vpop.f32.mrb[0].mxu0
        %v1606 = vadd.f32 0.0, %v1605
        %v1607 = vpop.f32.mrb[0].mxu0
        %v1608 = vpop.f32.mrb[0].mxu0
        %v1609 = vadd.f32 0.0, %v1608
        %v1610 = vpop.f32.mrb[0].mxu0
        %1611 = vmatprep.mubr.bf16.mxu0 0
        %1612 = vmatmul.mubr.bf16.gmra.mrb[0].mxu0 %v534
        %v1613 = vpop.f32.mrb[0].mxu0
        %v1614 = vadd.f32 0.0, %v1613
        %v1615 = vpop.f32.mrb[0].mxu0
        %v1616 = vpop.f32.mrb[0].mxu0
        %v1617 = vadd.f32 0.0, %v1616
        %v1618 = vpop.f32.mrb[0].mxu0
        %1619 = vmatprep.mubr.bf16.mxu0 0
        %1620 = vmatmul.mubr.bf16.gmra.mrb[0].mxu0 %v535
        %v1621 = vpop.f32.mrb[0].mxu0
        %v1622 = vadd.f32 0.0, %v1621
        %v1623 = vpop.f32.mrb[0].mxu0
        %v1624 = vpop.f32.mrb[0].mxu0
        %v1625 = vadd.f32 0.0, %v1624
        %v1626 = vpop.f32.mrb[0].mxu0
        %1627 = vmatprep.mubr.bf16.mxu0 0
        %1628 = vmatmul.mubr.bf16.gmra.mrb[0].mxu0 %v536
        %v1629 = vpop.f32.mrb[0].mxu0
        %v1630 = vadd.f32 0.0, %v1629
        %v1631 = vpop.f32.mrb[0].mxu0
        %v1632 = vpop.f32.mrb[0].mxu0
        %v1633 = vadd.f32 0.0, %v1632
        %v1634 = vpop.f32.mrb[0].mxu0
        %1635 = vmatprep.mubr.bf16.mxu0 0
        %1636 = vmatmul.mubr.bf16.gmra.mrb[0].mxu0 %v1417
        %v1637 = vpop.f32.mrb[0].mxu0
        %v1638 = vadd.f32 0.0, %v1637
        %v1639 = vpop.f32.mrb[0].mxu0
        %v1640 = vpop.f32.mrb[0].mxu0
        %v1641 = vadd.f32 0.0, %v1640
        %v1642 = vpop.f32.mrb[0].mxu0
        %1643 = vdwg.mxu0
        %v1644 = vadd.f32 %v1375, %v1518
        %v1645 = vadd.f32 %v1376, %v1521
        %v1646 = vadd.f32 %v1377, %v1526
        %v1647 = vadd.f32 %v1378, %v1529
        %v1648 = vadd.f32 %v1379, %v1534
        %v1649 = vadd.f32 %v1380, %v1537
        %v1650 = vadd.f32 %v1381, %v1542
        %v1651 = vadd.f32 %v1382, %v1545
        %v1652 = vadd.f32 %v1383, %v1550
        %v1653 = vadd.f32 %v1384, %v1553
        %v1654 = vadd.f32 %v1385, %v1558
        %v1655 = vadd.f32 %v1386, %v1561
        %v1656 = vadd.f32 %v1387, %v1566
        %v1657 = vadd.f32 %v1388, %v1569
        %v1658 = vadd.f32 %v1389, %v1574
        %v1659 = vadd.f32 %v1390, %v1577
        %v1660 = vadd.f32 %v1391, %v1582
        %v1661 = vadd.f32 %v1392, %v1585
        %v1662 = vadd.f32 %v1393, %v1590
        %v1663 = vadd.f32 %v1394, %v1593
        %v1664 = vadd.f32 %v1395, %v1598
        %v1665 = vadd.f32 %v1396, %v1601
        %v1666 = vadd.f32 %v1397, %v1606
        %v1667 = vadd.f32 %v1398, %v1609
        %v1668 = vadd.f32 %v1399, %v1614
        %v1669 = vadd.f32 %v1400, %v1617
        %v1670 = vadd.f32 %v1401, %v1622
        %v1671 = vadd.f32 %v1402, %v1625
        %v1672 = vadd.f32 %v1403, %v1630
        %v1673 = vadd.f32 %v1404, %v1633
        %v1674 = vadd.f32 %v1405, %v1638
        %v1675 = vadd.f32 %v1406, %v1641
        %v1676 = vpack.c.bf16 %v354, %v353
        %s1677 = scalar_lea.vmem [#allocation5], 256
        %v1678 = vld [vmem:[%s1677] sm:$0xf]
        %v1679 = vld [vmem:[%s1677 + $0x4] sm:$0xf]
        %v1680 = vld [vmem:[%s1677 + $0x8] sm:$0xf]
        %v1681 = vld [vmem:[%s1677 + $0xc] sm:$0xf]
        %v1682 = vld [vmem:[%s1677 + $0x10] sm:$0xf]
        %v1683 = vld [vmem:[%s1677 + $0x14] sm:$0xf]
        %v1684 = vld [vmem:[%s1677 + $0x18] sm:$0xf]
        %v1685 = vld [vmem:[%s1677 + $0x1c] sm:$0xf]
        %v1686 = vld [vmem:[%s1677 + $0x20] sm:$0xf]
        %v1687 = vld [vmem:[%s1677 + $0x24] sm:$0xf]
        %v1688 = vld [vmem:[%s1677 + $0x28] sm:$0xf]
        %v1689 = vld [vmem:[%s1677 + $0x2c] sm:$0xf]
        %v1690 = vld [vmem:[%s1677 + $0x30] sm:$0xf]
        %v1691 = vld [vmem:[%s1677 + $0x34] sm:$0xf]
        %v1692 = vld [vmem:[%s1677 + $0x38] sm:$0xf]
        %v1693 = vld [vmem:[%s1677 + $0x3c] sm:$0xf]
        %v1710 = vunpack.c.l.b16 %v1678
        %v1711 = vunpack.c.l.b16 %v1679
        %v1712 = vunpack.c.l.b16 %v1680
        %v1713 = vunpack.c.l.b16 %v1681
        %v1714 = vunpack.c.l.b16 %v1682
        %v1715 = vunpack.c.l.b16 %v1683
        %v1716 = vunpack.c.l.b16 %v1684
        %v1717 = vunpack.c.l.b16 %v1685
        %v1718 = vunpack.c.l.b16 %v1686
        %v1719 = vunpack.c.l.b16 %v1687
        %v1720 = vunpack.c.l.b16 %v1688
        %v1721 = vunpack.c.l.b16 %v1689
        %v1722 = vunpack.c.l.b16 %v1690
        %v1723 = vunpack.c.l.b16 %v1691
        %v1724 = vunpack.c.l.b16 %v1692
        %v1725 = vunpack.c.l.b16 %v1693
        %v1726 = vpack.c.b16 %v1711, %v1710
        %v1727 = vpack.c.b16 %v1713, %v1712
        %v1728 = vpack.c.b16 %v1715, %v1714
        %v1729 = vpack.c.b16 %v1717, %v1716
        %v1730 = vpack.c.b16 %v1719, %v1718
        %v1731 = vpack.c.b16 %v1721, %v1720
        %v1732 = vpack.c.b16 %v1723, %v1722
        %v1733 = vpack.c.b16 %v1725, %v1724
        %1742 = vmatprep.subr.bf16.mxu0 0
        %1743 = vmatpush1.bf16.msra.mxu0 %v1726
        %1744 = vmatprep.subr.bf16.mxu0 0
        %1745 = vmatpush1.bf16.msra.mxu0 %v1727
        %1746 = vmatprep.subr.bf16.mxu0 0
        %1747 = vmatpush1.bf16.msra.mxu0 %v1728
        %1748 = vmatprep.subr.bf16.mxu0 0
        %1749 = vmatpush1.bf16.msra.mxu0 %v1729
        %1750 = vmatprep.subr.bf16.mxu0 0
        %1751 = vmatpush1.bf16.msra.mxu0 %v1730
        %1752 = vmatprep.subr.bf16.mxu0 0
        %1753 = vmatpush1.bf16.msra.mxu0 %v1731
        %1754 = vmatprep.subr.bf16.mxu0 0
        %1755 = vmatpush1.bf16.msra.mxu0 %v1732
        %1756 = vmatprep.subr.bf16.mxu0 0
        %1757 = vmatpush1.bf16.msra.mxu0 %v1733
        %1758 = vmatprep.subr.bf16.mxu0 0
        %1759 = vmatpush1.bf16.msra.mxu0 0
        %1760 = vmatprep.subr.bf16.mxu0 0
        %1761 = vmatpush1.bf16.msra.mxu0 0
        %1762 = vmatprep.subr.bf16.mxu0 0
        %1763 = vmatpush1.bf16.msra.mxu0 0
        %1764 = vmatprep.subr.bf16.mxu0 0
        %1765 = vmatpush1.bf16.msra.mxu0 0
        %1766 = vmatprep.subr.bf16.mxu0 0
        %1767 = vmatpush1.bf16.msra.mxu0 0
        %1768 = vmatprep.subr.bf16.mxu0 0
        %1769 = vmatpush1.bf16.msra.mxu0 0
        %1770 = vmatprep.subr.bf16.mxu0 0
        %1771 = vmatpush1.bf16.msra.mxu0 0
        %1772 = vmatprep.subr.bf16.mxu0 0
        %1773 = vmatpush1.bf16.msra.mxu0 0
        %1774 = vmatprep.mubr.bf16.mxu0 0
        %1775 = vmatmul.mubr.bf16.gmra.mrb[0].mxu0 %v554
        %v1776 = vpop.f32.mrb[0].mxu0
        %v1777 = vadd.f32 0.0, %v1776
        %v1778 = vpop.f32.mrb[0].mxu0
        %v1779 = vpop.f32.mrb[0].mxu0
        %v1780 = vadd.f32 0.0, %v1779
        %v1781 = vpop.f32.mrb[0].mxu0
        %1782 = vmatprep.mubr.bf16.mxu0 0
        %1783 = vmatmul.mubr.bf16.gmra.mrb[0].mxu0 %v555
        %v1784 = vpop.f32.mrb[0].mxu0
        %v1785 = vadd.f32 0.0, %v1784
        %v1786 = vpop.f32.mrb[0].mxu0
        %v1787 = vpop.f32.mrb[0].mxu0
        %v1788 = vadd.f32 0.0, %v1787
        %v1789 = vpop.f32.mrb[0].mxu0
        %1790 = vmatprep.mubr.bf16.mxu0 0
        %1791 = vmatmul.mubr.bf16.gmra.mrb[0].mxu0 %v556
        %v1792 = vpop.f32.mrb[0].mxu0
        %v1793 = vadd.f32 0.0, %v1792
        %v1794 = vpop.f32.mrb[0].mxu0
        %v1795 = vpop.f32.mrb[0].mxu0
        %v1796 = vadd.f32 0.0, %v1795
        %v1797 = vpop.f32.mrb[0].mxu0
        %1798 = vmatprep.mubr.bf16.mxu0 0
        %1799 = vmatmul.mubr.bf16.gmra.mrb[0].mxu0 %v557
        %v1800 = vpop.f32.mrb[0].mxu0
        %v1801 = vadd.f32 0.0, %v1800
        %v1802 = vpop.f32.mrb[0].mxu0
        %v1803 = vpop.f32.mrb[0].mxu0
        %v1804 = vadd.f32 0.0, %v1803
        %v1805 = vpop.f32.mrb[0].mxu0
        %1806 = vmatprep.mubr.bf16.mxu0 0
        %1807 = vmatmul.mubr.bf16.gmra.mrb[0].mxu0 %v558
        %v1808 = vpop.f32.mrb[0].mxu0
        %v1809 = vadd.f32 0.0, %v1808
        %v1810 = vpop.f32.mrb[0].mxu0
        %v1811 = vpop.f32.mrb[0].mxu0
        %v1812 = vadd.f32 0.0, %v1811
        %v1813 = vpop.f32.mrb[0].mxu0
        %1814 = vmatprep.mubr.bf16.mxu0 0
        %1815 = vmatmul.mubr.bf16.gmra.mrb[0].mxu0 %v559
        %v1816 = vpop.f32.mrb[0].mxu0
        %v1817 = vadd.f32 0.0, %v1816
        %v1818 = vpop.f32.mrb[0].mxu0
        %v1819 = vpop.f32.mrb[0].mxu0
        %v1820 = vadd.f32 0.0, %v1819
        %v1821 = vpop.f32.mrb[0].mxu0
        %1822 = vmatprep.mubr.bf16.mxu0 0
        %1823 = vmatmul.mubr.bf16.gmra.mrb[0].mxu0 %v560
        %v1824 = vpop.f32.mrb[0].mxu0
        %v1825 = vadd.f32 0.0, %v1824
        %v1826 = vpop.f32.mrb[0].mxu0
        %v1827 = vpop.f32.mrb[0].mxu0
        %v1828 = vadd.f32 0.0, %v1827
        %v1829 = vpop.f32.mrb[0].mxu0
        %1830 = vmatprep.mubr.bf16.mxu0 0
        %1831 = vmatmul.mubr.bf16.gmra.mrb[0].mxu0 %v561
        %v1832 = vpop.f32.mrb[0].mxu0
        %v1833 = vadd.f32 0.0, %v1832
        %v1834 = vpop.f32.mrb[0].mxu0
        %v1835 = vpop.f32.mrb[0].mxu0
        %v1836 = vadd.f32 0.0, %v1835
        %v1837 = vpop.f32.mrb[0].mxu0
        %1838 = vmatprep.mubr.bf16.mxu0 0
        %1839 = vmatmul.mubr.bf16.gmra.mrb[0].mxu0 %v562
        %v1840 = vpop.f32.mrb[0].mxu0
        %v1841 = vadd.f32 0.0, %v1840
        %v1842 = vpop.f32.mrb[0].mxu0
        %v1843 = vpop.f32.mrb[0].mxu0
        %v1844 = vadd.f32 0.0, %v1843
        %v1845 = vpop.f32.mrb[0].mxu0
        %1846 = vmatprep.mubr.bf16.mxu0 0
        %1847 = vmatmul.mubr.bf16.gmra.mrb[0].mxu0 %v563
        %v1848 = vpop.f32.mrb[0].mxu0
        %v1849 = vadd.f32 0.0, %v1848
        %v1850 = vpop.f32.mrb[0].mxu0
        %v1851 = vpop.f32.mrb[0].mxu0
        %v1852 = vadd.f32 0.0, %v1851
        %v1853 = vpop.f32.mrb[0].mxu0
        %1854 = vmatprep.mubr.bf16.mxu0 0
        %1855 = vmatmul.mubr.bf16.gmra.mrb[0].mxu0 %v564
        %v1856 = vpop.f32.mrb[0].mxu0
        %v1857 = vadd.f32 0.0, %v1856
        %v1858 = vpop.f32.mrb[0].mxu0
        %v1859 = vpop.f32.mrb[0].mxu0
        %v1860 = vadd.f32 0.0, %v1859
        %v1861 = vpop.f32.mrb[0].mxu0
        %1862 = vmatprep.mubr.bf16.mxu0 0
        %1863 = vmatmul.mubr.bf16.gmra.mrb[0].mxu0 %v565
        %v1864 = vpop.f32.mrb[0].mxu0
        %v1865 = vadd.f32 0.0, %v1864
        %v1866 = vpop.f32.mrb[0].mxu0
        %v1867 = vpop.f32.mrb[0].mxu0
        %v1868 = vadd.f32 0.0, %v1867
        %v1869 = vpop.f32.mrb[0].mxu0
        %1870 = vmatprep.mubr.bf16.mxu0 0
        %1871 = vmatmul.mubr.bf16.gmra.mrb[0].mxu0 %v566
        %v1872 = vpop.f32.mrb[0].mxu0
        %v1873 = vadd.f32 0.0, %v1872
        %v1874 = vpop.f32.mrb[0].mxu0
        %v1875 = vpop.f32.mrb[0].mxu0
        %v1876 = vadd.f32 0.0, %v1875
        %v1877 = vpop.f32.mrb[0].mxu0
        %1878 = vmatprep.mubr.bf16.mxu0 0
        %1879 = vmatmul.mubr.bf16.gmra.mrb[0].mxu0 %v567
        %v1880 = vpop.f32.mrb[0].mxu0
        %v1881 = vadd.f32 0.0, %v1880
        %v1882 = vpop.f32.mrb[0].mxu0
        %v1883 = vpop.f32.mrb[0].mxu0
        %v1884 = vadd.f32 0.0, %v1883
        %v1885 = vpop.f32.mrb[0].mxu0
        %1886 = vmatprep.mubr.bf16.mxu0 0
        %1887 = vmatmul.mubr.bf16.gmra.mrb[0].mxu0 %v568
        %v1888 = vpop.f32.mrb[0].mxu0
        %v1889 = vadd.f32 0.0, %v1888
        %v1890 = vpop.f32.mrb[0].mxu0
        %v1891 = vpop.f32.mrb[0].mxu0
        %v1892 = vadd.f32 0.0, %v1891
        %v1893 = vpop.f32.mrb[0].mxu0
        %1894 = vmatprep.mubr.bf16.mxu0 0
        %1895 = vmatmul.mubr.bf16.gmra.mrb[0].mxu0 %v1676
        %v1896 = vpop.f32.mrb[0].mxu0
        %v1897 = vadd.f32 0.0, %v1896
        %v1898 = vpop.f32.mrb[0].mxu0
        %v1899 = vpop.f32.mrb[0].mxu0
        %v1900 = vadd.f32 0.0, %v1899
        %v1901 = vpop.f32.mrb[0].mxu0
        %1902 = vdwg.mxu0
        %v1903 = vadd.f32 %v1644, %v1777
        %v1904 = vadd.f32 %v1645, %v1780
        %v1905 = vadd.f32 %v1646, %v1785
        %v1906 = vadd.f32 %v1647, %v1788
        %v1907 = vadd.f32 %v1648, %v1793
        %v1908 = vadd.f32 %v1649, %v1796
        %v1909 = vadd.f32 %v1650, %v1801
        %v1910 = vadd.f32 %v1651, %v1804
        %v1911 = vadd.f32 %v1652, %v1809
        %v1912 = vadd.f32 %v1653, %v1812
        %v1913 = vadd.f32 %v1654, %v1817
        %v1914 = vadd.f32 %v1655, %v1820
        %v1915 = vadd.f32 %v1656, %v1825
        %v1916 = vadd.f32 %v1657, %v1828
        %v1917 = vadd.f32 %v1658, %v1833
        %v1918 = vadd.f32 %v1659, %v1836
        %v1919 = vadd.f32 %v1660, %v1841
        %v1920 = vadd.f32 %v1661, %v1844
        %v1921 = vadd.f32 %v1662, %v1849
        %v1922 = vadd.f32 %v1663, %v1852
        %v1923 = vadd.f32 %v1664, %v1857
        %v1924 = vadd.f32 %v1665, %v1860
        %v1925 = vadd.f32 %v1666, %v1865
        %v1926 = vadd.f32 %v1667, %v1868
        %v1927 = vadd.f32 %v1668, %v1873
        %v1928 = vadd.f32 %v1669, %v1876
        %v1929 = vadd.f32 %v1670, %v1881
        %v1930 = vadd.f32 %v1671, %v1884
        %v1931 = vadd.f32 %v1672, %v1889
        %v1932 = vadd.f32 %v1673, %v1892
        %v1933 = vadd.f32 %v1674, %v1897
        %v1934 = vadd.f32 %v1675, %v1900
        %v1936 = vrot.slane %v353, 1
        %v1937 = vrot.slane %v354, 1
        %v1938 = vsel %vm1020, %v1936, %v1937
        %v1939 = vrot.slane %v355, 1
        %v1940 = vsel %vm1020, %v1937, %v1939
        %v1943 = vpack.c.bf16 %v1940, %v1938
        %s1944 = scalar_lea.vmem [#allocation5], 320
        %v1945 = vld [vmem:[%s1944] sm:$0xf]
        %v1946 = vld [vmem:[%s1944 + $0x4] sm:$0xf]
        %v1947 = vld [vmem:[%s1944 + $0x8] sm:$0xf]
        %v1948 = vld [vmem:[%s1944 + $0xc] sm:$0xf]
        %v1949 = vld [vmem:[%s1944 + $0x10] sm:$0xf]
        %v1950 = vld [vmem:[%s1944 + $0x14] sm:$0xf]
        %v1951 = vld [vmem:[%s1944 + $0x18] sm:$0xf]
        %v1952 = vld [vmem:[%s1944 + $0x1c] sm:$0xf]
        %v1953 = vld [vmem:[%s1944 + $0x20] sm:$0xf]
        %v1954 = vld [vmem:[%s1944 + $0x24] sm:$0xf]
        %v1955 = vld [vmem:[%s1944 + $0x28] sm:$0xf]
        %v1956 = vld [vmem:[%s1944 + $0x2c] sm:$0xf]
        %v1957 = vld [vmem:[%s1944 + $0x30] sm:$0xf]
        %v1958 = vld [vmem:[%s1944 + $0x34] sm:$0xf]
        %v1959 = vld [vmem:[%s1944 + $0x38] sm:$0xf]
        %v1960 = vld [vmem:[%s1944 + $0x3c] sm:$0xf]
        %v1977 = vunpack.c.l.b16 %v1945
        %v1978 = vunpack.c.l.b16 %v1946
        %v1979 = vunpack.c.l.b16 %v1947
        %v1980 = vunpack.c.l.b16 %v1948
        %v1981 = vunpack.c.l.b16 %v1949
        %v1982 = vunpack.c.l.b16 %v1950
        %v1983 = vunpack.c.l.b16 %v1951
        %v1984 = vunpack.c.l.b16 %v1952
        %v1985 = vunpack.c.l.b16 %v1953
        %v1986 = vunpack.c.l.b16 %v1954
        %v1987 = vunpack.c.l.b16 %v1955
        %v1988 = vunpack.c.l.b16 %v1956
        %v1989 = vunpack.c.l.b16 %v1957
        %v1990 = vunpack.c.l.b16 %v1958
        %v1991 = vunpack.c.l.b16 %v1959
        %v1992 = vunpack.c.l.b16 %v1960
        %v1993 = vpack.c.b16 %v1978, %v1977
        %v1994 = vpack.c.b16 %v1980, %v1979
        %v1995 = vpack.c.b16 %v1982, %v1981
        %v1996 = vpack.c.b16 %v1984, %v1983
        %v1997 = vpack.c.b16 %v1986, %v1985
        %v1998 = vpack.c.b16 %v1988, %v1987
        %v1999 = vpack.c.b16 %v1990, %v1989
        %v2000 = vpack.c.b16 %v1992, %v1991
        %2009 = vmatprep.subr.bf16.mxu0 0
        %2010 = vmatpush1.bf16.msra.mxu0 %v1993
        %2011 = vmatprep.subr.bf16.mxu0 0
        %2012 = vmatpush1.bf16.msra.mxu0 %v1994
        %2013 = vmatprep.subr.bf16.mxu0 0
        %2014 = vmatpush1.bf16.msra.mxu0 %v1995
        %2015 = vmatprep.subr.bf16.mxu0 0
        %2016 = vmatpush1.bf16.msra.mxu0 %v1996
        %2017 = vmatprep.subr.bf16.mxu0 0
        %2018 = vmatpush1.bf16.msra.mxu0 %v1997
        %2019 = vmatprep.subr.bf16.mxu0 0
        %2020 = vmatpush1.bf16.msra.mxu0 %v1998
        %2021 = vmatprep.subr.bf16.mxu0 0
        %2022 = vmatpush1.bf16.msra.mxu0 %v1999
        %2023 = vmatprep.subr.bf16.mxu0 0
        %2024 = vmatpush1.bf16.msra.mxu0 %v2000
        %2025 = vmatprep.subr.bf16.mxu0 0
        %2026 = vmatpush1.bf16.msra.mxu0 0
        %2027 = vmatprep.subr.bf16.mxu0 0
        %2028 = vmatpush1.bf16.msra.mxu0 0
        %2029 = vmatprep.subr.bf16.mxu0 0
        %2030 = vmatpush1.bf16.msra.mxu0 0
        %2031 = vmatprep.subr.bf16.mxu0 0
        %2032 = vmatpush1.bf16.msra.mxu0 0
        %2033 = vmatprep.subr.bf16.mxu0 0
        %2034 = vmatpush1.bf16.msra.mxu0 0
        %2035 = vmatprep.subr.bf16.mxu0 0
        %2036 = vmatpush1.bf16.msra.mxu0 0
        %2037 = vmatprep.subr.bf16.mxu0 0
        %2038 = vmatpush1.bf16.msra.mxu0 0
        %2039 = vmatprep.subr.bf16.mxu0 0
        %2040 = vmatpush1.bf16.msra.mxu0 0
        %2041 = vmatprep.mubr.bf16.mxu0 0
        %2042 = vmatmul.mubr.bf16.gmra.mrb[0].mxu0 %v1134
        %v2043 = vpop.f32.mrb[0].mxu0
        %v2044 = vadd.f32 0.0, %v2043
        %v2045 = vpop.f32.mrb[0].mxu0
        %v2046 = vpop.f32.mrb[0].mxu0
        %v2047 = vadd.f32 0.0, %v2046
        %v2048 = vpop.f32.mrb[0].mxu0
        %2049 = vmatprep.mubr.bf16.mxu0 0
        %2050 = vmatmul.mubr.bf16.gmra.mrb[0].mxu0 %v1135
        %v2051 = vpop.f32.mrb[0].mxu0
        %v2052 = vadd.f32 0.0, %v2051
        %v2053 = vpop.f32.mrb[0].mxu0
        %v2054 = vpop.f32.mrb[0].mxu0
        %v2055 = vadd.f32 0.0, %v2054
        %v2056 = vpop.f32.mrb[0].mxu0
        %2057 = vmatprep.mubr.bf16.mxu0 0
        %2058 = vmatmul.mubr.bf16.gmra.mrb[0].mxu0 %v1136
        %v2059 = vpop.f32.mrb[0].mxu0
        %v2060 = vadd.f32 0.0, %v2059
        %v2061 = vpop.f32.mrb[0].mxu0
        %v2062 = vpop.f32.mrb[0].mxu0
        %v2063 = vadd.f32 0.0, %v2062
        %v2064 = vpop.f32.mrb[0].mxu0
        %2065 = vmatprep.mubr.bf16.mxu0 0
        %2066 = vmatmul.mubr.bf16.gmra.mrb[0].mxu0 %v1137
        %v2067 = vpop.f32.mrb[0].mxu0
        %v2068 = vadd.f32 0.0, %v2067
        %v2069 = vpop.f32.mrb[0].mxu0
        %v2070 = vpop.f32.mrb[0].mxu0
        %v2071 = vadd.f32 0.0, %v2070
        %v2072 = vpop.f32.mrb[0].mxu0
        %2073 = vmatprep.mubr.bf16.mxu0 0
        %2074 = vmatmul.mubr.bf16.gmra.mrb[0].mxu0 %v1138
        %v2075 = vpop.f32.mrb[0].mxu0
        %v2076 = vadd.f32 0.0, %v2075
        %v2077 = vpop.f32.mrb[0].mxu0
        %v2078 = vpop.f32.mrb[0].mxu0
        %v2079 = vadd.f32 0.0, %v2078
        %v2080 = vpop.f32.mrb[0].mxu0
        %2081 = vmatprep.mubr.bf16.mxu0 0
        %2082 = vmatmul.mubr.bf16.gmra.mrb[0].mxu0 %v1139
        %v2083 = vpop.f32.mrb[0].mxu0
        %v2084 = vadd.f32 0.0, %v2083
        %v2085 = vpop.f32.mrb[0].mxu0
        %v2086 = vpop.f32.mrb[0].mxu0
        %v2087 = vadd.f32 0.0, %v2086
        %v2088 = vpop.f32.mrb[0].mxu0
        %2089 = vmatprep.mubr.bf16.mxu0 0
        %2090 = vmatmul.mubr.bf16.gmra.mrb[0].mxu0 %v1140
        %v2091 = vpop.f32.mrb[0].mxu0
        %v2092 = vadd.f32 0.0, %v2091
        %v2093 = vpop.f32.mrb[0].mxu0
        %v2094 = vpop.f32.mrb[0].mxu0
        %v2095 = vadd.f32 0.0, %v2094
        %v2096 = vpop.f32.mrb[0].mxu0
        %2097 = vmatprep.mubr.bf16.mxu0 0
        %2098 = vmatmul.mubr.bf16.gmra.mrb[0].mxu0 %v1141
        %v2099 = vpop.f32.mrb[0].mxu0
        %v2100 = vadd.f32 0.0, %v2099
        %v2101 = vpop.f32.mrb[0].mxu0
        %v2102 = vpop.f32.mrb[0].mxu0
        %v2103 = vadd.f32 0.0, %v2102
        %v2104 = vpop.f32.mrb[0].mxu0
        %2105 = vmatprep.mubr.bf16.mxu0 0
        %2106 = vmatmul.mubr.bf16.gmra.mrb[0].mxu0 %v1142
        %v2107 = vpop.f32.mrb[0].mxu0
        %v2108 = vadd.f32 0.0, %v2107
        %v2109 = vpop.f32.mrb[0].mxu0
        %v2110 = vpop.f32.mrb[0].mxu0
        %v2111 = vadd.f32 0.0, %v2110
        %v2112 = vpop.f32.mrb[0].mxu0
        %2113 = vmatprep.mubr.bf16.mxu0 0
        %2114 = vmatmul.mubr.bf16.gmra.mrb[0].mxu0 %v1143
        %v2115 = vpop.f32.mrb[0].mxu0
        %v2116 = vadd.f32 0.0, %v2115
        %v2117 = vpop.f32.mrb[0].mxu0
        %v2118 = vpop.f32.mrb[0].mxu0
        %v2119 = vadd.f32 0.0, %v2118
        %v2120 = vpop.f32.mrb[0].mxu0
        %2121 = vmatprep.mubr.bf16.mxu0 0
        %2122 = vmatmul.mubr.bf16.gmra.mrb[0].mxu0 %v1144
        %v2123 = vpop.f32.mrb[0].mxu0
        %v2124 = vadd.f32 0.0, %v2123
        %v2125 = vpop.f32.mrb[0].mxu0
        %v2126 = vpop.f32.mrb[0].mxu0
        %v2127 = vadd.f32 0.0, %v2126
        %v2128 = vpop.f32.mrb[0].mxu0
        %2129 = vmatprep.mubr.bf16.mxu0 0
        %2130 = vmatmul.mubr.bf16.gmra.mrb[0].mxu0 %v1145
        %v2131 = vpop.f32.mrb[0].mxu0
        %v2132 = vadd.f32 0.0, %v2131
        %v2133 = vpop.f32.mrb[0].mxu0
        %v2134 = vpop.f32.mrb[0].mxu0
        %v2135 = vadd.f32 0.0, %v2134
        %v2136 = vpop.f32.mrb[0].mxu0
        %2137 = vmatprep.mubr.bf16.mxu0 0
        %2138 = vmatmul.mubr.bf16.gmra.mrb[0].mxu0 %v1146
        %v2139 = vpop.f32.mrb[0].mxu0
        %v2140 = vadd.f32 0.0, %v2139
        %v2141 = vpop.f32.mrb[0].mxu0
        %v2142 = vpop.f32.mrb[0].mxu0
        %v2143 = vadd.f32 0.0, %v2142
        %v2144 = vpop.f32.mrb[0].mxu0
        %2145 = vmatprep.mubr.bf16.mxu0 0
        %2146 = vmatmul.mubr.bf16.gmra.mrb[0].mxu0 %v1147
        %v2147 = vpop.f32.mrb[0].mxu0
        %v2148 = vadd.f32 0.0, %v2147
        %v2149 = vpop.f32.mrb[0].mxu0
        %v2150 = vpop.f32.mrb[0].mxu0
        %v2151 = vadd.f32 0.0, %v2150
        %v2152 = vpop.f32.mrb[0].mxu0
        %2153 = vmatprep.mubr.bf16.mxu0 0
        %2154 = vmatmul.mubr.bf16.gmra.mrb[0].mxu0 %v1148
        %v2155 = vpop.f32.mrb[0].mxu0
        %v2156 = vadd.f32 0.0, %v2155
        %v2157 = vpop.f32.mrb[0].mxu0
        %v2158 = vpop.f32.mrb[0].mxu0
        %v2159 = vadd.f32 0.0, %v2158
        %v2160 = vpop.f32.mrb[0].mxu0
        %2161 = vmatprep.mubr.bf16.mxu0 0
        %2162 = vmatmul.mubr.bf16.gmra.mrb[0].mxu0 %v1943
        %v2163 = vpop.f32.mrb[0].mxu0
        %v2164 = vadd.f32 0.0, %v2163
        %v2165 = vpop.f32.mrb[0].mxu0
        %v2166 = vpop.f32.mrb[0].mxu0
        %v2167 = vadd.f32 0.0, %v2166
        %v2168 = vpop.f32.mrb[0].mxu0
        %2169 = vdwg.mxu0
        %v2170 = vadd.f32 %v1903, %v2044
        %v2171 = vadd.f32 %v1904, %v2047
        %v2172 = vadd.f32 %v1905, %v2052
        %v2173 = vadd.f32 %v1906, %v2055
        %v2174 = vadd.f32 %v1907, %v2060
        %v2175 = vadd.f32 %v1908, %v2063
        %v2176 = vadd.f32 %v1909, %v2068
        %v2177 = vadd.f32 %v1910, %v2071
        %v2178 = vadd.f32 %v1911, %v2076
        %v2179 = vadd.f32 %v1912, %v2079
        %v2180 = vadd.f32 %v1913, %v2084
        %v2181 = vadd.f32 %v1914, %v2087
        %v2182 = vadd.f32 %v1915, %v2092
        %v2183 = vadd.f32 %v1916, %v2095
        %v2184 = vadd.f32 %v1917, %v2100
        %v2185 = vadd.f32 %v1918, %v2103
        %v2186 = vadd.f32 %v1919, %v2108
        %v2187 = vadd.f32 %v1920, %v2111
        %v2188 = vadd.f32 %v1921, %v2116
        %v2189 = vadd.f32 %v1922, %v2119
        %v2190 = vadd.f32 %v1923, %v2124
        %v2191 = vadd.f32 %v1924, %v2127
        %v2192 = vadd.f32 %v1925, %v2132
        %v2193 = vadd.f32 %v1926, %v2135
        %v2194 = vadd.f32 %v1927, %v2140
        %v2195 = vadd.f32 %v1928, %v2143
        %v2196 = vadd.f32 %v1929, %v2148
        %v2197 = vadd.f32 %v1930, %v2151
        %v2198 = vadd.f32 %v1931, %v2156
        %v2199 = vadd.f32 %v1932, %v2159
        %v2200 = vadd.f32 %v1933, %v2164
        %v2201 = vadd.f32 %v1934, %v2167
        %v2205 = vrot.slane %v356, 7
        %v2206 = vrot.slane %v357, 7
        %v2207 = vsel %vm408, %v2205, %v2206
        %v2208 = vrot.slane %v358, 7
        %v2209 = vsel %vm408, %v2206, %v2208
        %v2212 = vpack.c.bf16 %v2209, %v2207
        %s2213 = scalar_lea.vmem [#allocation5], 384
        %v2214 = vld [vmem:[%s2213] sm:$0xf]
        %v2215 = vld [vmem:[%s2213 + $0x4] sm:$0xf]
        %v2216 = vld [vmem:[%s2213 + $0x8] sm:$0xf]
        %v2217 = vld [vmem:[%s2213 + $0xc] sm:$0xf]
        %v2218 = vld [vmem:[%s2213 + $0x10] sm:$0xf]
        %v2219 = vld [vmem:[%s2213 + $0x14] sm:$0xf]
        %v2220 = vld [vmem:[%s2213 + $0x18] sm:$0xf]
        %v2221 = vld [vmem:[%s2213 + $0x1c] sm:$0xf]
        %v2222 = vld [vmem:[%s2213 + $0x20] sm:$0xf]
        %v2223 = vld [vmem:[%s2213 + $0x24] sm:$0xf]
        %v2224 = vld [vmem:[%s2213 + $0x28] sm:$0xf]
        %v2225 = vld [vmem:[%s2213 + $0x2c] sm:$0xf]
        %v2226 = vld [vmem:[%s2213 + $0x30] sm:$0xf]
        %v2227 = vld [vmem:[%s2213 + $0x34] sm:$0xf]
        %v2228 = vld [vmem:[%s2213 + $0x38] sm:$0xf]
        %v2229 = vld [vmem:[%s2213 + $0x3c] sm:$0xf]
        %v2246 = vunpack.c.l.b16 %v2214
        %v2247 = vunpack.c.l.b16 %v2215
        %v2248 = vunpack.c.l.b16 %v2216
        %v2249 = vunpack.c.l.b16 %v2217
        %v2250 = vunpack.c.l.b16 %v2218
        %v2251 = vunpack.c.l.b16 %v2219
        %v2252 = vunpack.c.l.b16 %v2220
        %v2253 = vunpack.c.l.b16 %v2221
        %v2254 = vunpack.c.l.b16 %v2222
        %v2255 = vunpack.c.l.b16 %v2223
        %v2256 = vunpack.c.l.b16 %v2224
        %v2257 = vunpack.c.l.b16 %v2225
        %v2258 = vunpack.c.l.b16 %v2226
        %v2259 = vunpack.c.l.b16 %v2227
        %v2260 = vunpack.c.l.b16 %v2228
        %v2261 = vunpack.c.l.b16 %v2229
        %v2262 = vpack.c.b16 %v2247, %v2246
        %v2263 = vpack.c.b16 %v2249, %v2248
        %v2264 = vpack.c.b16 %v2251, %v2250
        %v2265 = vpack.c.b16 %v2253, %v2252
        %v2266 = vpack.c.b16 %v2255, %v2254
        %v2267 = vpack.c.b16 %v2257, %v2256
        %v2268 = vpack.c.b16 %v2259, %v2258
        %v2269 = vpack.c.b16 %v2261, %v2260
        %2278 = vmatprep.subr.bf16.mxu0 0
        %2279 = vmatpush1.bf16.msra.mxu0 %v2262
        %2280 = vmatprep.subr.bf16.mxu0 0
        %2281 = vmatpush1.bf16.msra.mxu0 %v2263
        %2282 = vmatprep.subr.bf16.mxu0 0
        %2283 = vmatpush1.bf16.msra.mxu0 %v2264
        %2284 = vmatprep.subr.bf16.mxu0 0
        %2285 = vmatpush1.bf16.msra.mxu0 %v2265
        %2286 = vmatprep.subr.bf16.mxu0 0
        %2287 = vmatpush1.bf16.msra.mxu0 %v2266
        %2288 = vmatprep.subr.bf16.mxu0 0
        %2289 = vmatpush1.bf16.msra.mxu0 %v2267
        %2290 = vmatprep.subr.bf16.mxu0 0
        %2291 = vmatpush1.bf16.msra.mxu0 %v2268
        %2292 = vmatprep.subr.bf16.mxu0 0
        %2293 = vmatpush1.bf16.msra.mxu0 %v2269
        %2294 = vmatprep.subr.bf16.mxu0 0
        %2295 = vmatpush1.bf16.msra.mxu0 0
        %2296 = vmatprep.subr.bf16.mxu0 0
        %2297 = vmatpush1.bf16.msra.mxu0 0
        %2298 = vmatprep.subr.bf16.mxu0 0
        %2299 = vmatpush1.bf16.msra.mxu0 0
        %2300 = vmatprep.subr.bf16.mxu0 0
        %2301 = vmatpush1.bf16.msra.mxu0 0
        %2302 = vmatprep.subr.bf16.mxu0 0
        %2303 = vmatpush1.bf16.msra.mxu0 0
        %2304 = vmatprep.subr.bf16.mxu0 0
        %2305 = vmatpush1.bf16.msra.mxu0 0
        %2306 = vmatprep.subr.bf16.mxu0 0
        %2307 = vmatpush1.bf16.msra.mxu0 0
        %2308 = vmatprep.subr.bf16.mxu0 0
        %2309 = vmatpush1.bf16.msra.mxu0 0
        %2310 = vmatprep.mubr.bf16.mxu0 0
        %2311 = vmatmul.mubr.bf16.gmra.mrb[0].mxu0 %v523
        %v2312 = vpop.f32.mrb[0].mxu0
        %v2313 = vadd.f32 0.0, %v2312
        %v2314 = vpop.f32.mrb[0].mxu0
        %v2315 = vpop.f32.mrb[0].mxu0
        %v2316 = vadd.f32 0.0, %v2315
        %v2317 = vpop.f32.mrb[0].mxu0
        %2318 = vmatprep.mubr.bf16.mxu0 0
        %2319 = vmatmul.mubr.bf16.gmra.mrb[0].mxu0 %v524
        %v2320 = vpop.f32.mrb[0].mxu0
        %v2321 = vadd.f32 0.0, %v2320
        %v2322 = vpop.f32.mrb[0].mxu0
        %v2323 = vpop.f32.mrb[0].mxu0
        %v2324 = vadd.f32 0.0, %v2323
        %v2325 = vpop.f32.mrb[0].mxu0
        %2326 = vmatprep.mubr.bf16.mxu0 0
        %2327 = vmatmul.mubr.bf16.gmra.mrb[0].mxu0 %v525
        %v2328 = vpop.f32.mrb[0].mxu0
        %v2329 = vadd.f32 0.0, %v2328
        %v2330 = vpop.f32.mrb[0].mxu0
        %v2331 = vpop.f32.mrb[0].mxu0
        %v2332 = vadd.f32 0.0, %v2331
        %v2333 = vpop.f32.mrb[0].mxu0
        %2334 = vmatprep.mubr.bf16.mxu0 0
        %2335 = vmatmul.mubr.bf16.gmra.mrb[0].mxu0 %v526
        %v2336 = vpop.f32.mrb[0].mxu0
        %v2337 = vadd.f32 0.0, %v2336
        %v2338 = vpop.f32.mrb[0].mxu0
        %v2339 = vpop.f32.mrb[0].mxu0
        %v2340 = vadd.f32 0.0, %v2339
        %v2341 = vpop.f32.mrb[0].mxu0
        %2342 = vmatprep.mubr.bf16.mxu0 0
        %2343 = vmatmul.mubr.bf16.gmra.mrb[0].mxu0 %v527
        %v2344 = vpop.f32.mrb[0].mxu0
        %v2345 = vadd.f32 0.0, %v2344
        %v2346 = vpop.f32.mrb[0].mxu0
        %v2347 = vpop.f32.mrb[0].mxu0
        %v2348 = vadd.f32 0.0, %v2347
        %v2349 = vpop.f32.mrb[0].mxu0
        %2350 = vmatprep.mubr.bf16.mxu0 0
        %2351 = vmatmul.mubr.bf16.gmra.mrb[0].mxu0 %v528
        %v2352 = vpop.f32.mrb[0].mxu0
        %v2353 = vadd.f32 0.0, %v2352
        %v2354 = vpop.f32.mrb[0].mxu0
        %v2355 = vpop.f32.mrb[0].mxu0
        %v2356 = vadd.f32 0.0, %v2355
        %v2357 = vpop.f32.mrb[0].mxu0
        %2358 = vmatprep.mubr.bf16.mxu0 0
        %2359 = vmatmul.mubr.bf16.gmra.mrb[0].mxu0 %v529
        %v2360 = vpop.f32.mrb[0].mxu0
        %v2361 = vadd.f32 0.0, %v2360
        %v2362 = vpop.f32.mrb[0].mxu0
        %v2363 = vpop.f32.mrb[0].mxu0
        %v2364 = vadd.f32 0.0, %v2363
        %v2365 = vpop.f32.mrb[0].mxu0
        %2366 = vmatprep.mubr.bf16.mxu0 0
        %2367 = vmatmul.mubr.bf16.gmra.mrb[0].mxu0 %v530
        %v2368 = vpop.f32.mrb[0].mxu0
        %v2369 = vadd.f32 0.0, %v2368
        %v2370 = vpop.f32.mrb[0].mxu0
        %v2371 = vpop.f32.mrb[0].mxu0
        %v2372 = vadd.f32 0.0, %v2371
        %v2373 = vpop.f32.mrb[0].mxu0
        %2374 = vmatprep.mubr.bf16.mxu0 0
        %2375 = vmatmul.mubr.bf16.gmra.mrb[0].mxu0 %v531
        %v2376 = vpop.f32.mrb[0].mxu0
        %v2377 = vadd.f32 0.0, %v2376
        %v2378 = vpop.f32.mrb[0].mxu0
        %v2379 = vpop.f32.mrb[0].mxu0
        %v2380 = vadd.f32 0.0, %v2379
        %v2381 = vpop.f32.mrb[0].mxu0
        %2382 = vmatprep.mubr.bf16.mxu0 0
        %2383 = vmatmul.mubr.bf16.gmra.mrb[0].mxu0 %v532
        %v2384 = vpop.f32.mrb[0].mxu0
        %v2385 = vadd.f32 0.0, %v2384
        %v2386 = vpop.f32.mrb[0].mxu0
        %v2387 = vpop.f32.mrb[0].mxu0
        %v2388 = vadd.f32 0.0, %v2387
        %v2389 = vpop.f32.mrb[0].mxu0
        %2390 = vmatprep.mubr.bf16.mxu0 0
        %2391 = vmatmul.mubr.bf16.gmra.mrb[0].mxu0 %v533
        %v2392 = vpop.f32.mrb[0].mxu0
        %v2393 = vadd.f32 0.0, %v2392
        %v2394 = vpop.f32.mrb[0].mxu0
        %v2395 = vpop.f32.mrb[0].mxu0
        %v2396 = vadd.f32 0.0, %v2395
        %v2397 = vpop.f32.mrb[0].mxu0
        %2398 = vmatprep.mubr.bf16.mxu0 0
        %2399 = vmatmul.mubr.bf16.gmra.mrb[0].mxu0 %v534
        %v2400 = vpop.f32.mrb[0].mxu0
        %v2401 = vadd.f32 0.0, %v2400
        %v2402 = vpop.f32.mrb[0].mxu0
        %v2403 = vpop.f32.mrb[0].mxu0
        %v2404 = vadd.f32 0.0, %v2403
        %v2405 = vpop.f32.mrb[0].mxu0
        %2406 = vmatprep.mubr.bf16.mxu0 0
        %2407 = vmatmul.mubr.bf16.gmra.mrb[0].mxu0 %v535
        %v2408 = vpop.f32.mrb[0].mxu0
        %v2409 = vadd.f32 0.0, %v2408
        %v2410 = vpop.f32.mrb[0].mxu0
        %v2411 = vpop.f32.mrb[0].mxu0
        %v2412 = vadd.f32 0.0, %v2411
        %v2413 = vpop.f32.mrb[0].mxu0
        %2414 = vmatprep.mubr.bf16.mxu0 0
        %2415 = vmatmul.mubr.bf16.gmra.mrb[0].mxu0 %v536
        %v2416 = vpop.f32.mrb[0].mxu0
        %v2417 = vadd.f32 0.0, %v2416
        %v2418 = vpop.f32.mrb[0].mxu0
        %v2419 = vpop.f32.mrb[0].mxu0
        %v2420 = vadd.f32 0.0, %v2419
        %v2421 = vpop.f32.mrb[0].mxu0
        %2422 = vmatprep.mubr.bf16.mxu0 0
        %2423 = vmatmul.mubr.bf16.gmra.mrb[0].mxu0 %v1417
        %v2424 = vpop.f32.mrb[0].mxu0
        %v2425 = vadd.f32 0.0, %v2424
        %v2426 = vpop.f32.mrb[0].mxu0
        %v2427 = vpop.f32.mrb[0].mxu0
        %v2428 = vadd.f32 0.0, %v2427
        %v2429 = vpop.f32.mrb[0].mxu0
        %2430 = vmatprep.mubr.bf16.mxu0 0
        %2431 = vmatmul.mubr.bf16.gmra.mrb[0].mxu0 %v2212
        %v2432 = vpop.f32.mrb[0].mxu0
        %v2433 = vadd.f32 0.0, %v2432
        %v2434 = vpop.f32.mrb[0].mxu0
        %v2435 = vpop.f32.mrb[0].mxu0
        %v2436 = vadd.f32 0.0, %v2435
        %v2437 = vpop.f32.mrb[0].mxu0
        %2438 = vdwg.mxu0
        %v2439 = vadd.f32 %v2170, %v2313
        %v2440 = vadd.f32 %v2171, %v2316
        %v2441 = vadd.f32 %v2172, %v2321
        %v2442 = vadd.f32 %v2173, %v2324
        %v2443 = vadd.f32 %v2174, %v2329
        %v2444 = vadd.f32 %v2175, %v2332
        %v2445 = vadd.f32 %v2176, %v2337
        %v2446 = vadd.f32 %v2177, %v2340
        %v2447 = vadd.f32 %v2178, %v2345
        %v2448 = vadd.f32 %v2179, %v2348
        %v2449 = vadd.f32 %v2180, %v2353
        %v2450 = vadd.f32 %v2181, %v2356
        %v2451 = vadd.f32 %v2182, %v2361
        %v2452 = vadd.f32 %v2183, %v2364
        %v2453 = vadd.f32 %v2184, %v2369
        %v2454 = vadd.f32 %v2185, %v2372
        %v2455 = vadd.f32 %v2186, %v2377
        %v2456 = vadd.f32 %v2187, %v2380
        %v2457 = vadd.f32 %v2188, %v2385
        %v2458 = vadd.f32 %v2189, %v2388
        %v2459 = vadd.f32 %v2190, %v2393
        %v2460 = vadd.f32 %v2191, %v2396
        %v2461 = vadd.f32 %v2192, %v2401
        %v2462 = vadd.f32 %v2193, %v2404
        %v2463 = vadd.f32 %v2194, %v2409
        %v2464 = vadd.f32 %v2195, %v2412
        %v2465 = vadd.f32 %v2196, %v2417
        %v2466 = vadd.f32 %v2197, %v2420
        %v2467 = vadd.f32 %v2198, %v2425
        %v2468 = vadd.f32 %v2199, %v2428
        %v2469 = vadd.f32 %v2200, %v2433
        %v2470 = vadd.f32 %v2201, %v2436
        %v2471 = vpack.c.bf16 %v358, %v357
        %s2472 = scalar_lea.vmem [#allocation5], 448
        %v2473 = vld [vmem:[%s2472] sm:$0xf]
        %v2474 = vld [vmem:[%s2472 + $0x4] sm:$0xf]
        %v2475 = vld [vmem:[%s2472 + $0x8] sm:$0xf]
        %v2476 = vld [vmem:[%s2472 + $0xc] sm:$0xf]
        %v2477 = vld [vmem:[%s2472 + $0x10] sm:$0xf]
        %v2478 = vld [vmem:[%s2472 + $0x14] sm:$0xf]
        %v2479 = vld [vmem:[%s2472 + $0x18] sm:$0xf]
        %v2480 = vld [vmem:[%s2472 + $0x1c] sm:$0xf]
        %v2481 = vld [vmem:[%s2472 + $0x20] sm:$0xf]
        %v2482 = vld [vmem:[%s2472 + $0x24] sm:$0xf]
        %v2483 = vld [vmem:[%s2472 + $0x28] sm:$0xf]
        %v2484 = vld [vmem:[%s2472 + $0x2c] sm:$0xf]
        %v2485 = vld [vmem:[%s2472 + $0x30] sm:$0xf]
        %v2486 = vld [vmem:[%s2472 + $0x34] sm:$0xf]
        %v2487 = vld [vmem:[%s2472 + $0x38] sm:$0xf]
        %v2488 = vld [vmem:[%s2472 + $0x3c] sm:$0xf]
        %v2505 = vunpack.c.l.b16 %v2473
        %v2506 = vunpack.c.l.b16 %v2474
        %v2507 = vunpack.c.l.b16 %v2475
        %v2508 = vunpack.c.l.b16 %v2476
        %v2509 = vunpack.c.l.b16 %v2477
        %v2510 = vunpack.c.l.b16 %v2478
        %v2511 = vunpack.c.l.b16 %v2479
        %v2512 = vunpack.c.l.b16 %v2480
        %v2513 = vunpack.c.l.b16 %v2481
        %v2514 = vunpack.c.l.b16 %v2482
        %v2515 = vunpack.c.l.b16 %v2483
        %v2516 = vunpack.c.l.b16 %v2484
        %v2517 = vunpack.c.l.b16 %v2485
        %v2518 = vunpack.c.l.b16 %v2486
        %v2519 = vunpack.c.l.b16 %v2487
        %v2520 = vunpack.c.l.b16 %v2488
        %v2521 = vpack.c.b16 %v2506, %v2505
        %v2522 = vpack.c.b16 %v2508, %v2507
        %v2523 = vpack.c.b16 %v2510, %v2509
        %v2524 = vpack.c.b16 %v2512, %v2511
        %v2525 = vpack.c.b16 %v2514, %v2513
        %v2526 = vpack.c.b16 %v2516, %v2515
        %v2527 = vpack.c.b16 %v2518, %v2517
        %v2528 = vpack.c.b16 %v2520, %v2519
        %2537 = vmatprep.subr.bf16.mxu0 0
        %2538 = vmatpush1.bf16.msra.mxu0 %v2521
        %2539 = vmatprep.subr.bf16.mxu0 0
        %2540 = vmatpush1.bf16.msra.mxu0 %v2522
        %2541 = vmatprep.subr.bf16.mxu0 0
        %2542 = vmatpush1.bf16.msra.mxu0 %v2523
        %2543 = vmatprep.subr.bf16.mxu0 0
        %2544 = vmatpush1.bf16.msra.mxu0 %v2524
        %2545 = vmatprep.subr.bf16.mxu0 0
        %2546 = vmatpush1.bf16.msra.mxu0 %v2525
        %2547 = vmatprep.subr.bf16.mxu0 0
        %2548 = vmatpush1.bf16.msra.mxu0 %v2526
        %2549 = vmatprep.subr.bf16.mxu0 0
        %2550 = vmatpush1.bf16.msra.mxu0 %v2527
        %2551 = vmatprep.subr.bf16.mxu0 0
        %2552 = vmatpush1.bf16.msra.mxu0 %v2528
        %2553 = vmatprep.subr.bf16.mxu0 0
        %2554 = vmatpush1.bf16.msra.mxu0 0
        %2555 = vmatprep.subr.bf16.mxu0 0
        %2556 = vmatpush1.bf16.msra.mxu0 0
        %2557 = vmatprep.subr.bf16.mxu0 0
        %2558 = vmatpush1.bf16.msra.mxu0 0
        %2559 = vmatprep.subr.bf16.mxu0 0
        %2560 = vmatpush1.bf16.msra.mxu0 0
        %2561 = vmatprep.subr.bf16.mxu0 0
        %2562 = vmatpush1.bf16.msra.mxu0 0
        %2563 = vmatprep.subr.bf16.mxu0 0
        %2564 = vmatpush1.bf16.msra.mxu0 0
        %2565 = vmatprep.subr.bf16.mxu0 0
        %2566 = vmatpush1.bf16.msra.mxu0 0
        %2567 = vmatprep.subr.bf16.mxu0 0
        %2568 = vmatpush1.bf16.msra.mxu0 0
        %2569 = vmatprep.mubr.bf16.mxu0 0
        %2570 = vmatmul.mubr.bf16.gmra.mrb[0].mxu0 %v555
        %v2571 = vpop.f32.mrb[0].mxu0
        %v2572 = vadd.f32 0.0, %v2571
        %v2573 = vpop.f32.mrb[0].mxu0
        %v2574 = vpop.f32.mrb[0].mxu0
        %v2575 = vadd.f32 0.0, %v2574
        %v2576 = vpop.f32.mrb[0].mxu0
        %2577 = vmatprep.mubr.bf16.mxu0 0
        %2578 = vmatmul.mubr.bf16.gmra.mrb[0].mxu0 %v556
        %v2579 = vpop.f32.mrb[0].mxu0
        %v2580 = vadd.f32 0.0, %v2579
        %v2581 = vpop.f32.mrb[0].mxu0
        %v2582 = vpop.f32.mrb[0].mxu0
        %v2583 = vadd.f32 0.0, %v2582
        %v2584 = vpop.f32.mrb[0].mxu0
        %2585 = vmatprep.mubr.bf16.mxu0 0
        %2586 = vmatmul.mubr.bf16.gmra.mrb[0].mxu0 %v557
        %v2587 = vpop.f32.mrb[0].mxu0
        %v2588 = vadd.f32 0.0, %v2587
        %v2589 = vpop.f32.mrb[0].mxu0
        %v2590 = vpop.f32.mrb[0].mxu0
        %v2591 = vadd.f32 0.0, %v2590
        %v2592 = vpop.f32.mrb[0].mxu0
        %2593 = vmatprep.mubr.bf16.mxu0 0
        %2594 = vmatmul.mubr.bf16.gmra.mrb[0].mxu0 %v558
        %v2595 = vpop.f32.mrb[0].mxu0
        %v2596 = vadd.f32 0.0, %v2595
        %v2597 = vpop.f32.mrb[0].mxu0
        %v2598 = vpop.f32.mrb[0].mxu0
        %v2599 = vadd.f32 0.0, %v2598
        %v2600 = vpop.f32.mrb[0].mxu0
        %2601 = vmatprep.mubr.bf16.mxu0 0
        %2602 = vmatmul.mubr.bf16.gmra.mrb[0].mxu0 %v559
        %v2603 = vpop.f32.mrb[0].mxu0
        %v2604 = vadd.f32 0.0, %v2603
        %v2605 = vpop.f32.mrb[0].mxu0
        %v2606 = vpop.f32.mrb[0].mxu0
        %v2607 = vadd.f32 0.0, %v2606
        %v2608 = vpop.f32.mrb[0].mxu0
        %2609 = vmatprep.mubr.bf16.mxu0 0
        %2610 = vmatmul.mubr.bf16.gmra.mrb[0].mxu0 %v560
        %v2611 = vpop.f32.mrb[0].mxu0
        %v2612 = vadd.f32 0.0, %v2611
        %v2613 = vpop.f32.mrb[0].mxu0
        %v2614 = vpop.f32.mrb[0].mxu0
        %v2615 = vadd.f32 0.0, %v2614
        %v2616 = vpop.f32.mrb[0].mxu0
        %2617 = vmatprep.mubr.bf16.mxu0 0
        %2618 = vmatmul.mubr.bf16.gmra.mrb[0].mxu0 %v561
        %v2619 = vpop.f32.mrb[0].mxu0
        %v2620 = vadd.f32 0.0, %v2619
        %v2621 = vpop.f32.mrb[0].mxu0
        %v2622 = vpop.f32.mrb[0].mxu0
        %v2623 = vadd.f32 0.0, %v2622
        %v2624 = vpop.f32.mrb[0].mxu0
        %2625 = vmatprep.mubr.bf16.mxu0 0
        %2626 = vmatmul.mubr.bf16.gmra.mrb[0].mxu0 %v562
        %v2627 = vpop.f32.mrb[0].mxu0
        %v2628 = vadd.f32 0.0, %v2627
        %v2629 = vpop.f32.mrb[0].mxu0
        %v2630 = vpop.f32.mrb[0].mxu0
        %v2631 = vadd.f32 0.0, %v2630
        %v2632 = vpop.f32.mrb[0].mxu0
        %2633 = vmatprep.mubr.bf16.mxu0 0
        %2634 = vmatmul.mubr.bf16.gmra.mrb[0].mxu0 %v563
        %v2635 = vpop.f32.mrb[0].mxu0
        %v2636 = vadd.f32 0.0, %v2635
        %v2637 = vpop.f32.mrb[0].mxu0
        %v2638 = vpop.f32.mrb[0].mxu0
        %v2639 = vadd.f32 0.0, %v2638
        %v2640 = vpop.f32.mrb[0].mxu0
        %2641 = vmatprep.mubr.bf16.mxu0 0
        %2642 = vmatmul.mubr.bf16.gmra.mrb[0].mxu0 %v564
        %v2643 = vpop.f32.mrb[0].mxu0
        %v2644 = vadd.f32 0.0, %v2643
        %v2645 = vpop.f32.mrb[0].mxu0
        %v2646 = vpop.f32.mrb[0].mxu0
        %v2647 = vadd.f32 0.0, %v2646
        %v2648 = vpop.f32.mrb[0].mxu0
        %2649 = vmatprep.mubr.bf16.mxu0 0
        %2650 = vmatmul.mubr.bf16.gmra.mrb[0].mxu0 %v565
        %v2651 = vpop.f32.mrb[0].mxu0
        %v2652 = vadd.f32 0.0, %v2651
        %v2653 = vpop.f32.mrb[0].mxu0
        %v2654 = vpop.f32.mrb[0].mxu0
        %v2655 = vadd.f32 0.0, %v2654
        %v2656 = vpop.f32.mrb[0].mxu0
        %2657 = vmatprep.mubr.bf16.mxu0 0
        %2658 = vmatmul.mubr.bf16.gmra.mrb[0].mxu0 %v566
        %v2659 = vpop.f32.mrb[0].mxu0
        %v2660 = vadd.f32 0.0, %v2659
        %v2661 = vpop.f32.mrb[0].mxu0
        %v2662 = vpop.f32.mrb[0].mxu0
        %v2663 = vadd.f32 0.0, %v2662
        %v2664 = vpop.f32.mrb[0].mxu0
        %2665 = vmatprep.mubr.bf16.mxu0 0
        %2666 = vmatmul.mubr.bf16.gmra.mrb[0].mxu0 %v567
        %v2667 = vpop.f32.mrb[0].mxu0
        %v2668 = vadd.f32 0.0, %v2667
        %v2669 = vpop.f32.mrb[0].mxu0
        %v2670 = vpop.f32.mrb[0].mxu0
        %v2671 = vadd.f32 0.0, %v2670
        %v2672 = vpop.f32.mrb[0].mxu0
        %2673 = vmatprep.mubr.bf16.mxu0 0
        %2674 = vmatmul.mubr.bf16.gmra.mrb[0].mxu0 %v568
        %v2675 = vpop.f32.mrb[0].mxu0
        %v2676 = vadd.f32 0.0, %v2675
        %v2677 = vpop.f32.mrb[0].mxu0
        %v2678 = vpop.f32.mrb[0].mxu0
        %v2679 = vadd.f32 0.0, %v2678
        %v2680 = vpop.f32.mrb[0].mxu0
        %2681 = vmatprep.mubr.bf16.mxu0 0
        %2682 = vmatmul.mubr.bf16.gmra.mrb[0].mxu0 %v1676
        %v2683 = vpop.f32.mrb[0].mxu0
        %v2684 = vadd.f32 0.0, %v2683
        %v2685 = vpop.f32.mrb[0].mxu0
        %v2686 = vpop.f32.mrb[0].mxu0
        %v2687 = vadd.f32 0.0, %v2686
        %v2688 = vpop.f32.mrb[0].mxu0
        %2689 = vmatprep.mubr.bf16.mxu0 0
        %2690 = vmatmul.mubr.bf16.gmra.mrb[0].mxu0 %v2471
        %v2691 = vpop.f32.mrb[0].mxu0
        %v2692 = vadd.f32 0.0, %v2691
        %v2693 = vpop.f32.mrb[0].mxu0
        %v2694 = vpop.f32.mrb[0].mxu0
        %v2695 = vadd.f32 0.0, %v2694
        %v2696 = vpop.f32.mrb[0].mxu0
        %2697 = vdwg.mxu0
        %v2698 = vadd.f32 %v2439, %v2572
        %v2699 = vadd.f32 %v2440, %v2575
        %v2700 = vadd.f32 %v2441, %v2580
        %v2701 = vadd.f32 %v2442, %v2583
        %v2702 = vadd.f32 %v2443, %v2588
        %v2703 = vadd.f32 %v2444, %v2591
        %v2704 = vadd.f32 %v2445, %v2596
        %v2705 = vadd.f32 %v2446, %v2599
        %v2706 = vadd.f32 %v2447, %v2604
        %v2707 = vadd.f32 %v2448, %v2607
        %v2708 = vadd.f32 %v2449, %v2612
        %v2709 = vadd.f32 %v2450, %v2615
        %v2710 = vadd.f32 %v2451, %v2620
        %v2711 = vadd.f32 %v2452, %v2623
        %v2712 = vadd.f32 %v2453, %v2628
        %v2713 = vadd.f32 %v2454, %v2631
        %v2714 = vadd.f32 %v2455, %v2636
        %v2715 = vadd.f32 %v2456, %v2639
        %v2716 = vadd.f32 %v2457, %v2644
        %v2717 = vadd.f32 %v2458, %v2647
        %v2718 = vadd.f32 %v2459, %v2652
        %v2719 = vadd.f32 %v2460, %v2655
        %v2720 = vadd.f32 %v2461, %v2660
        %v2721 = vadd.f32 %v2462, %v2663
        %v2722 = vadd.f32 %v2463, %v2668
        %v2723 = vadd.f32 %v2464, %v2671
        %v2724 = vadd.f32 %v2465, %v2676
        %v2725 = vadd.f32 %v2466, %v2679
        %v2726 = vadd.f32 %v2467, %v2684
        %v2727 = vadd.f32 %v2468, %v2687
        %v2728 = vadd.f32 %v2469, %v2692
        %v2729 = vadd.f32 %v2470, %v2695
        %v2731 = vrot.slane %v357, 1
        %v2732 = vrot.slane %v358, 1
        %v2733 = vsel %vm1020, %v2731, %v2732
        %v2734 = vrot.slane %v359, 1
        %v2735 = vsel %vm1020, %v2732, %v2734
        %v2738 = vpack.c.bf16 %v2735, %v2733
        %s2739 = scalar_lea.vmem [#allocation5], 512
        %v2740 = vld [vmem:[%s2739] sm:$0xf]
        %v2741 = vld [vmem:[%s2739 + $0x4] sm:$0xf]
        %v2742 = vld [vmem:[%s2739 + $0x8] sm:$0xf]
        %v2743 = vld [vmem:[%s2739 + $0xc] sm:$0xf]
        %v2744 = vld [vmem:[%s2739 + $0x10] sm:$0xf]
        %v2745 = vld [vmem:[%s2739 + $0x14] sm:$0xf]
        %v2746 = vld [vmem:[%s2739 + $0x18] sm:$0xf]
        %v2747 = vld [vmem:[%s2739 + $0x1c] sm:$0xf]
        %v2748 = vld [vmem:[%s2739 + $0x20] sm:$0xf]
        %v2749 = vld [vmem:[%s2739 + $0x24] sm:$0xf]
        %v2750 = vld [vmem:[%s2739 + $0x28] sm:$0xf]
        %v2751 = vld [vmem:[%s2739 + $0x2c] sm:$0xf]
        %v2752 = vld [vmem:[%s2739 + $0x30] sm:$0xf]
        %v2753 = vld [vmem:[%s2739 + $0x34] sm:$0xf]
        %v2754 = vld [vmem:[%s2739 + $0x38] sm:$0xf]
        %v2755 = vld [vmem:[%s2739 + $0x3c] sm:$0xf]
        %v2772 = vunpack.c.l.b16 %v2740
        %v2773 = vunpack.c.l.b16 %v2741
        %v2774 = vunpack.c.l.b16 %v2742
        %v2775 = vunpack.c.l.b16 %v2743
        %v2776 = vunpack.c.l.b16 %v2744
        %v2777 = vunpack.c.l.b16 %v2745
        %v2778 = vunpack.c.l.b16 %v2746
        %v2779 = vunpack.c.l.b16 %v2747
        %v2780 = vunpack.c.l.b16 %v2748
        %v2781 = vunpack.c.l.b16 %v2749
        %v2782 = vunpack.c.l.b16 %v2750
        %v2783 = vunpack.c.l.b16 %v2751
        %v2784 = vunpack.c.l.b16 %v2752
        %v2785 = vunpack.c.l.b16 %v2753
        %v2786 = vunpack.c.l.b16 %v2754
        %v2787 = vunpack.c.l.b16 %v2755
        %v2788 = vpack.c.b16 %v2773, %v2772
        %v2789 = vpack.c.b16 %v2775, %v2774
        %v2790 = vpack.c.b16 %v2777, %v2776
        %v2791 = vpack.c.b16 %v2779, %v2778
        %v2792 = vpack.c.b16 %v2781, %v2780
        %v2793 = vpack.c.b16 %v2783, %v2782
        %v2794 = vpack.c.b16 %v2785, %v2784
        %v2795 = vpack.c.b16 %v2787, %v2786
        %2804 = vmatprep.subr.bf16.mxu0 0
        %2805 = vmatpush1.bf16.msra.mxu0 %v2788
        %2806 = vmatprep.subr.bf16.mxu0 0
        %2807 = vmatpush1.bf16.msra.mxu0 %v2789
        %2808 = vmatprep.subr.bf16.mxu0 0
        %2809 = vmatpush1.bf16.msra.mxu0 %v2790
        %2810 = vmatprep.subr.bf16.mxu0 0
        %2811 = vmatpush1.bf16.msra.mxu0 %v2791
        %2812 = vmatprep.subr.bf16.mxu0 0
        %2813 = vmatpush1.bf16.msra.mxu0 %v2792
        %2814 = vmatprep.subr.bf16.mxu0 0
        %2815 = vmatpush1.bf16.msra.mxu0 %v2793
        %2816 = vmatprep.subr.bf16.mxu0 0
        %2817 = vmatpush1.bf16.msra.mxu0 %v2794
        %2818 = vmatprep.subr.bf16.mxu0 0
        %2819 = vmatpush1.bf16.msra.mxu0 %v2795
        %2820 = vmatprep.subr.bf16.mxu0 0
        %2821 = vmatpush1.bf16.msra.mxu0 0
        %2822 = vmatprep.subr.bf16.mxu0 0
        %2823 = vmatpush1.bf16.msra.mxu0 0
        %2824 = vmatprep.subr.bf16.mxu0 0
        %2825 = vmatpush1.bf16.msra.mxu0 0
        %2826 = vmatprep.subr.bf16.mxu0 0
        %2827 = vmatpush1.bf16.msra.mxu0 0
        %2828 = vmatprep.subr.bf16.mxu0 0
        %2829 = vmatpush1.bf16.msra.mxu0 0
        %2830 = vmatprep.subr.bf16.mxu0 0
        %2831 = vmatpush1.bf16.msra.mxu0 0
        %2832 = vmatprep.subr.bf16.mxu0 0
        %2833 = vmatpush1.bf16.msra.mxu0 0
        %2834 = vmatprep.subr.bf16.mxu0 0
        %2835 = vmatpush1.bf16.msra.mxu0 0
        %2836 = vmatprep.mubr.bf16.mxu0 0
        %2837 = vmatmul.mubr.bf16.gmra.mrb[0].mxu0 %v1135
        %v2838 = vpop.f32.mrb[0].mxu0
        %v2839 = vadd.f32 0.0, %v2838
        %v2840 = vpop.f32.mrb[0].mxu0
        %v2841 = vpop.f32.mrb[0].mxu0
        %v2842 = vadd.f32 0.0, %v2841
        %v2843 = vpop.f32.mrb[0].mxu0
        %2844 = vmatprep.mubr.bf16.mxu0 0
        %2845 = vmatmul.mubr.bf16.gmra.mrb[0].mxu0 %v1136
        %v2846 = vpop.f32.mrb[0].mxu0
        %v2847 = vadd.f32 0.0, %v2846
        %v2848 = vpop.f32.mrb[0].mxu0
        %v2849 = vpop.f32.mrb[0].mxu0
        %v2850 = vadd.f32 0.0, %v2849
        %v2851 = vpop.f32.mrb[0].mxu0
        %2852 = vmatprep.mubr.bf16.mxu0 0
        %2853 = vmatmul.mubr.bf16.gmra.mrb[0].mxu0 %v1137
        %v2854 = vpop.f32.mrb[0].mxu0
        %v2855 = vadd.f32 0.0, %v2854
        %v2856 = vpop.f32.mrb[0].mxu0
        %v2857 = vpop.f32.mrb[0].mxu0
        %v2858 = vadd.f32 0.0, %v2857
        %v2859 = vpop.f32.mrb[0].mxu0
        %2860 = vmatprep.mubr.bf16.mxu0 0
        %2861 = vmatmul.mubr.bf16.gmra.mrb[0].mxu0 %v1138
        %v2862 = vpop.f32.mrb[0].mxu0
        %v2863 = vadd.f32 0.0, %v2862
        %v2864 = vpop.f32.mrb[0].mxu0
        %v2865 = vpop.f32.mrb[0].mxu0
        %v2866 = vadd.f32 0.0, %v2865
        %v2867 = vpop.f32.mrb[0].mxu0
        %2868 = vmatprep.mubr.bf16.mxu0 0
        %2869 = vmatmul.mubr.bf16.gmra.mrb[0].mxu0 %v1139
        %v2870 = vpop.f32.mrb[0].mxu0
        %v2871 = vadd.f32 0.0, %v2870
        %v2872 = vpop.f32.mrb[0].mxu0
        %v2873 = vpop.f32.mrb[0].mxu0
        %v2874 = vadd.f32 0.0, %v2873
        %v2875 = vpop.f32.mrb[0].mxu0
        %2876 = vmatprep.mubr.bf16.mxu0 0
        %2877 = vmatmul.mubr.bf16.gmra.mrb[0].mxu0 %v1140
        %v2878 = vpop.f32.mrb[0].mxu0
        %v2879 = vadd.f32 0.0, %v2878
        %v2880 = vpop.f32.mrb[0].mxu0
        %v2881 = vpop.f32.mrb[0].mxu0
        %v2882 = vadd.f32 0.0, %v2881
        %v2883 = vpop.f32.mrb[0].mxu0
        %2884 = vmatprep.mubr.bf16.mxu0 0
        %2885 = vmatmul.mubr.bf16.gmra.mrb[0].mxu0 %v1141
        %v2886 = vpop.f32.mrb[0].mxu0
        %v2887 = vadd.f32 0.0, %v2886
        %v2888 = vpop.f32.mrb[0].mxu0
        %v2889 = vpop.f32.mrb[0].mxu0
        %v2890 = vadd.f32 0.0, %v2889
        %v2891 = vpop.f32.mrb[0].mxu0
        %2892 = vmatprep.mubr.bf16.mxu0 0
        %2893 = vmatmul.mubr.bf16.gmra.mrb[0].mxu0 %v1142
        %v2894 = vpop.f32.mrb[0].mxu0
        %v2895 = vadd.f32 0.0, %v2894
        %v2896 = vpop.f32.mrb[0].mxu0
        %v2897 = vpop.f32.mrb[0].mxu0
        %v2898 = vadd.f32 0.0, %v2897
        %v2899 = vpop.f32.mrb[0].mxu0
        %2900 = vmatprep.mubr.bf16.mxu0 0
        %2901 = vmatmul.mubr.bf16.gmra.mrb[0].mxu0 %v1143
        %v2902 = vpop.f32.mrb[0].mxu0
        %v2903 = vadd.f32 0.0, %v2902
        %v2904 = vpop.f32.mrb[0].mxu0
        %v2905 = vpop.f32.mrb[0].mxu0
        %v2906 = vadd.f32 0.0, %v2905
        %v2907 = vpop.f32.mrb[0].mxu0
        %2908 = vmatprep.mubr.bf16.mxu0 0
        %2909 = vmatmul.mubr.bf16.gmra.mrb[0].mxu0 %v1144
        %v2910 = vpop.f32.mrb[0].mxu0
        %v2911 = vadd.f32 0.0, %v2910
        %v2912 = vpop.f32.mrb[0].mxu0
        %v2913 = vpop.f32.mrb[0].mxu0
        %v2914 = vadd.f32 0.0, %v2913
        %v2915 = vpop.f32.mrb[0].mxu0
        %2916 = vmatprep.mubr.bf16.mxu0 0
        %2917 = vmatmul.mubr.bf16.gmra.mrb[0].mxu0 %v1145
        %v2918 = vpop.f32.mrb[0].mxu0
        %v2919 = vadd.f32 0.0, %v2918
        %v2920 = vpop.f32.mrb[0].mxu0
        %v2921 = vpop.f32.mrb[0].mxu0
        %v2922 = vadd.f32 0.0, %v2921
        %v2923 = vpop.f32.mrb[0].mxu0
        %2924 = vmatprep.mubr.bf16.mxu0 0
        %2925 = vmatmul.mubr.bf16.gmra.mrb[0].mxu0 %v1146
        %v2926 = vpop.f32.mrb[0].mxu0
        %v2927 = vadd.f32 0.0, %v2926
        %v2928 = vpop.f32.mrb[0].mxu0
        %v2929 = vpop.f32.mrb[0].mxu0
        %v2930 = vadd.f32 0.0, %v2929
        %v2931 = vpop.f32.mrb[0].mxu0
        %2932 = vmatprep.mubr.bf16.mxu0 0
        %2933 = vmatmul.mubr.bf16.gmra.mrb[0].mxu0 %v1147
        %v2934 = vpop.f32.mrb[0].mxu0
        %v2935 = vadd.f32 0.0, %v2934
        %v2936 = vpop.f32.mrb[0].mxu0
        %v2937 = vpop.f32.mrb[0].mxu0
        %v2938 = vadd.f32 0.0, %v2937
        %v2939 = vpop.f32.mrb[0].mxu0
        %2940 = vmatprep.mubr.bf16.mxu0 0
        %2941 = vmatmul.mubr.bf16.gmra.mrb[0].mxu0 %v1148
        %v2942 = vpop.f32.mrb[0].mxu0
        %v2943 = vadd.f32 0.0, %v2942
        %v2944 = vpop.f32.mrb[0].mxu0
        %v2945 = vpop.f32.mrb[0].mxu0
        %v2946 = vadd.f32 0.0, %v2945
        %v2947 = vpop.f32.mrb[0].mxu0
        %2948 = vmatprep.mubr.bf16.mxu0 0
        %2949 = vmatmul.mubr.bf16.gmra.mrb[0].mxu0 %v1943
        %v2950 = vpop.f32.mrb[0].mxu0
        %v2951 = vadd.f32 0.0, %v2950
        %v2952 = vpop.f32.mrb[0].mxu0
        %v2953 = vpop.f32.mrb[0].mxu0
        %v2954 = vadd.f32 0.0, %v2953
        %v2955 = vpop.f32.mrb[0].mxu0
        %2956 = vmatprep.mubr.bf16.mxu0 0
        %2957 = vmatmul.mubr.bf16.gmra.mrb[0].mxu0 %v2738
        %v2958 = vpop.f32.mrb[0].mxu0
        %v2959 = vadd.f32 0.0, %v2958
        %v2960 = vpop.f32.mrb[0].mxu0
        %v2961 = vpop.f32.mrb[0].mxu0
        %v2962 = vadd.f32 0.0, %v2961
        %v2963 = vpop.f32.mrb[0].mxu0
        %2964 = vdwg.mxu0
        %v2965 = vadd.f32 %v2698, %v2839
        %v2966 = vadd.f32 %v2699, %v2842
        %v2967 = vadd.f32 %v2700, %v2847
        %v2968 = vadd.f32 %v2701, %v2850
        %v2969 = vadd.f32 %v2702, %v2855
        %v2970 = vadd.f32 %v2703, %v2858
        %v2971 = vadd.f32 %v2704, %v2863
        %v2972 = vadd.f32 %v2705, %v2866
        %v2973 = vadd.f32 %v2706, %v2871
        %v2974 = vadd.f32 %v2707, %v2874
        %v2975 = vadd.f32 %v2708, %v2879
        %v2976 = vadd.f32 %v2709, %v2882
        %v2977 = vadd.f32 %v2710, %v2887
        %v2978 = vadd.f32 %v2711, %v2890
        %v2979 = vadd.f32 %v2712, %v2895
        %v2980 = vadd.f32 %v2713, %v2898
        %v2981 = vadd.f32 %v2714, %v2903
        %v2982 = vadd.f32 %v2715, %v2906
        %v2983 = vadd.f32 %v2716, %v2911
        %v2984 = vadd.f32 %v2717, %v2914
        %v2985 = vadd.f32 %v2718, %v2919
        %v2986 = vadd.f32 %v2719, %v2922
        %v2987 = vadd.f32 %v2720, %v2927
        %v2988 = vadd.f32 %v2721, %v2930
        %v2989 = vadd.f32 %v2722, %v2935
        %v2990 = vadd.f32 %v2723, %v2938
        %v2991 = vadd.f32 %v2724, %v2943
        %v2992 = vadd.f32 %v2725, %v2946
        %v2993 = vadd.f32 %v2726, %v2951
        %v2994 = vadd.f32 %v2727, %v2954
        %v2995 = vadd.f32 %v2728, %v2959
        %v2996 = vadd.f32 %v2729, %v2962
        %v2997 = vpack.c.bf16 %v2966, %v2965
        %v2998 = vpack.c.bf16 %v2968, %v2967
        %v2999 = vpack.c.bf16 %v2970, %v2969
        %v3000 = vpack.c.bf16 %v2972, %v2971
        %v3001 = vpack.c.bf16 %v2974, %v2973
        %v3002 = vpack.c.bf16 %v2976, %v2975
        %v3003 = vpack.c.bf16 %v2978, %v2977
        %v3004 = vpack.c.bf16 %v2980, %v2979
        %v3005 = vpack.c.bf16 %v2982, %v2981
        %v3006 = vpack.c.bf16 %v2984, %v2983
        %v3007 = vpack.c.bf16 %v2986, %v2985
        %v3008 = vpack.c.bf16 %v2988, %v2987
        %v3009 = vpack.c.bf16 %v2990, %v2989
        %v3010 = vpack.c.bf16 %v2992, %v2991
        %v3011 = vpack.c.bf16 %v2994, %v2993
        %v3012 = vpack.c.bf16 %v2996, %v2995
        %v3029 = vunpack.c.l.b16 %v2997
        %v3030 = vunpack.c.h.b16 %v2997
        %v3031 = vunpack.c.l.b16 %v2998
        %v3032 = vunpack.c.h.b16 %v2998
        %v3033 = vunpack.c.l.b16 %v2999
        %v3034 = vunpack.c.h.b16 %v2999
        %v3035 = vunpack.c.l.b16 %v3000
        %v3036 = vunpack.c.h.b16 %v3000
        %v3037 = vunpack.c.l.b16 %v3001
        %v3038 = vunpack.c.h.b16 %v3001
        %v3039 = vunpack.c.l.b16 %v3002
        %v3040 = vunpack.c.h.b16 %v3002
        %v3041 = vunpack.c.l.b16 %v3003
        %v3042 = vunpack.c.h.b16 %v3003
        %v3043 = vunpack.c.l.b16 %v3004
        %v3044 = vunpack.c.h.b16 %v3004
        %v3045 = vunpack.c.l.b16 %v3005
        %v3046 = vunpack.c.h.b16 %v3005
        %v3047 = vunpack.c.l.b16 %v3006
        %v3048 = vunpack.c.h.b16 %v3006
        %v3049 = vunpack.c.l.b16 %v3007
        %v3050 = vunpack.c.h.b16 %v3007
        %v3051 = vunpack.c.l.b16 %v3008
        %v3052 = vunpack.c.h.b16 %v3008
        %v3053 = vunpack.c.l.b16 %v3009
        %v3054 = vunpack.c.h.b16 %v3009
        %v3055 = vunpack.c.l.b16 %v3010
        %v3056 = vunpack.c.h.b16 %v3010
        %v3057 = vunpack.c.l.b16 %v3011
        %v3058 = vunpack.c.h.b16 %v3011
        %v3059 = vunpack.c.l.b16 %v3012
        %v3060 = vunpack.c.h.b16 %v3012
        %v3061 = vpack.c.b16 %v3029, %v3029
        %v3062 = vpack.c.b16 %v3030, %v3030
        %v3063 = vpack.c.b16 %v3031, %v3031
        %v3064 = vpack.c.b16 %v3032, %v3032
        %v3065 = vpack.c.b16 %v3033, %v3033
        %v3066 = vpack.c.b16 %v3034, %v3034
        %v3067 = vpack.c.b16 %v3035, %v3035
        %v3068 = vpack.c.b16 %v3036, %v3036
        %v3069 = vpack.c.b16 %v3037, %v3037
        %v3070 = vpack.c.b16 %v3038, %v3038
        %v3071 = vpack.c.b16 %v3039, %v3039
        %v3072 = vpack.c.b16 %v3040, %v3040
        %v3073 = vpack.c.b16 %v3041, %v3041
        %v3074 = vpack.c.b16 %v3042, %v3042
        %v3075 = vpack.c.b16 %v3043, %v3043
        %v3076 = vpack.c.b16 %v3044, %v3044
        %v3077 = vpack.c.b16 %v3045, %v3045
        %v3078 = vpack.c.b16 %v3046, %v3046
        %v3079 = vpack.c.b16 %v3047, %v3047
        %v3080 = vpack.c.b16 %v3048, %v3048
        %v3081 = vpack.c.b16 %v3049, %v3049
        %v3082 = vpack.c.b16 %v3050, %v3050
        %v3083 = vpack.c.b16 %v3051, %v3051
        %v3084 = vpack.c.b16 %v3052, %v3052
        %v3085 = vpack.c.b16 %v3053, %v3053
        %v3086 = vpack.c.b16 %v3054, %v3054
        %v3087 = vpack.c.b16 %v3055, %v3055
        %v3088 = vpack.c.b16 %v3056, %v3056
        %v3089 = vpack.c.b16 %v3057, %v3057
        %v3090 = vpack.c.b16 %v3058, %v3058
        %v3091 = vpack.c.b16 %v3059, %v3059
        %v3092 = vpack.c.b16 %v3060, %v3060
        %3125 = vst [vmem:[%s207] sm:$0xf] %v3061
        %3126 = vst [vmem:[%s207 + $0x4] sm:$0xf] %v3062
        %3127 = vst [vmem:[%s207 + $0x8] sm:$0xf] %v3063
        %3128 = vst [vmem:[%s207 + $0xc] sm:$0xf] %v3064
        %3129 = vst [vmem:[%s207 + $0x10] sm:$0xf] %v3065
        %3130 = vst [vmem:[%s207 + $0x14] sm:$0xf] %v3066
        %3131 = vst [vmem:[%s207 + $0x18] sm:$0xf] %v3067
        %3132 = vst [vmem:[%s207 + $0x1c] sm:$0xf] %v3068
        %3133 = vst [vmem:[%s207 + $0x20] sm:$0xf] %v3069
        %3134 = vst [vmem:[%s207 + $0x24] sm:$0xf] %v3070
        %3135 = vst [vmem:[%s207 + $0x28] sm:$0xf] %v3071
        %3136 = vst [vmem:[%s207 + $0x2c] sm:$0xf] %v3072
        %3137 = vst [vmem:[%s207 + $0x30] sm:$0xf] %v3073
        %3138 = vst [vmem:[%s207 + $0x34] sm:$0xf] %v3074
        %3139 = vst [vmem:[%s207 + $0x38] sm:$0xf] %v3075
        %3140 = vst [vmem:[%s207 + $0x3c] sm:$0xf] %v3076
        %3141 = vst [vmem:[%s207 + $0x40] sm:$0xf] %v3077
        %3142 = vst [vmem:[%s207 + $0x44] sm:$0xf] %v3078
        %3143 = vst [vmem:[%s207 + $0x48] sm:$0xf] %v3079
        %3144 = vst [vmem:[%s207 + $0x4c] sm:$0xf] %v3080
        %3145 = vst [vmem:[%s207 + $0x50] sm:$0xf] %v3081
        %3146 = vst [vmem:[%s207 + $0x54] sm:$0xf] %v3082
        %3147 = vst [vmem:[%s207 + $0x58] sm:$0xf] %v3083
        %3148 = vst [vmem:[%s207 + $0x5c] sm:$0xf] %v3084
        %3149 = vst [vmem:[%s207 + $0x60] sm:$0xf] %v3085
        %3150 = vst [vmem:[%s207 + $0x64] sm:$0xf] %v3086
        %3151 = vst [vmem:[%s207 + $0x68] sm:$0xf] %v3087
        %3152 = vst [vmem:[%s207 + $0x6c] sm:$0xf] %v3088
        %3153 = vst [vmem:[%s207 + $0x70] sm:$0xf] %v3089
        %3154 = vst [vmem:[%s207 + $0x74] sm:$0xf] %v3090
        %3155 = vst [vmem:[%s207 + $0x78] sm:$0xf] %v3091
        %3156 = vst [vmem:[%s207 + $0x7c] sm:$0xf] %v3092
        %v3157 = vadd.f32 %v2965, %v2966
        %v3158 = vadd.f32 %v3157, %v2967
        %v3159 = vadd.f32 %v3158, %v2968
        %v3160 = vadd.f32 %v3159, %v2969
        %v3161 = vadd.f32 %v3160, %v2970
        %v3162 = vadd.f32 %v3161, %v2971
        %v3163 = vadd.f32 %v3162, %v2972
        %v3164 = vadd.f32 %v3163, %v2973
        %v3165 = vadd.f32 %v3164, %v2974
        %v3166 = vadd.f32 %v3165, %v2975
        %v3167 = vadd.f32 %v3166, %v2976
        %v3168 = vadd.f32 %v3167, %v2977
        %v3169 = vadd.f32 %v3168, %v2978
        %v3170 = vadd.f32 %v3169, %v2979
        %v3171 = vadd.f32 %v3170, %v2980
        %v3172 = vadd.f32 %v3171, %v2981
        %v3173 = vadd.f32 %v3172, %v2982
        %v3174 = vadd.f32 %v3173, %v2983
        %v3175 = vadd.f32 %v3174, %v2984
        %v3176 = vadd.f32 %v3175, %v2985
        %v3177 = vadd.f32 %v3176, %v2986
        %v3178 = vadd.f32 %v3177, %v2987
        %v3179 = vadd.f32 %v3178, %v2988
        %v3180 = vadd.f32 %v3179, %v2989
        %v3181 = vadd.f32 %v3180, %v2990
        %v3182 = vadd.f32 %v3181, %v2991
        %v3183 = vadd.f32 %v3182, %v2992
        %v3184 = vadd.f32 %v3183, %v2993
        %v3185 = vadd.f32 %v3184, %v2994
        %v3186 = vadd.f32 %v3185, %v2995
        %v3187 = vadd.f32 %v3186, %v2996
        %v3188 = vrot.slane %v3187, 4
        %v3189 = vadd.f32 %v3187, %v3188
        %v3190 = vrot.slane %v3189, 2
        %v3191 = vadd.f32 %v3189, %v3190
        %v3192 = vrot.slane %v3191, 1
        %v3193 = vadd.f32 %v3191, %v3192
        %3194 = vst [vmem:[%s214] sm:$0x1] %v3193
        %v3195 = vmul.f32 %v2965, %v2965
        %v3196 = vmul.f32 %v2966, %v2966
        %v3197 = vmul.f32 %v2967, %v2967
        %v3198 = vmul.f32 %v2968, %v2968
        %v3199 = vmul.f32 %v2969, %v2969
        %v3200 = vmul.f32 %v2970, %v2970
        %v3201 = vmul.f32 %v2971, %v2971
        %v3202 = vmul.f32 %v2972, %v2972
        %v3203 = vmul.f32 %v2973, %v2973
        %v3204 = vmul.f32 %v2974, %v2974
        %v3205 = vmul.f32 %v2975, %v2975
        %v3206 = vmul.f32 %v2976, %v2976
        %v3207 = vmul.f32 %v2977, %v2977
        %v3208 = vmul.f32 %v2978, %v2978
        %v3209 = vmul.f32 %v2979, %v2979
        %v3210 = vmul.f32 %v2980, %v2980
        %v3211 = vmul.f32 %v2981, %v2981
        %v3212 = vmul.f32 %v2982, %v2982
        %v3213 = vmul.f32 %v2983, %v2983
        %v3214 = vmul.f32 %v2984, %v2984
        %v3215 = vmul.f32 %v2985, %v2985
        %v3216 = vmul.f32 %v2986, %v2986
        %v3217 = vmul.f32 %v2987, %v2987
        %v3218 = vmul.f32 %v2988, %v2988
        %v3219 = vmul.f32 %v2989, %v2989
        %v3220 = vmul.f32 %v2990, %v2990
        %v3221 = vmul.f32 %v2991, %v2991
        %v3222 = vmul.f32 %v2992, %v2992
        %v3223 = vmul.f32 %v2993, %v2993
        %v3224 = vmul.f32 %v2994, %v2994
        %v3225 = vmul.f32 %v2995, %v2995
        %v3226 = vmul.f32 %v2996, %v2996
        %v3227 = vadd.f32 %v3195, %v3196
        %v3228 = vadd.f32 %v3227, %v3197
        %v3229 = vadd.f32 %v3228, %v3198
        %v3230 = vadd.f32 %v3229, %v3199
        %v3231 = vadd.f32 %v3230, %v3200
        %v3232 = vadd.f32 %v3231, %v3201
        %v3233 = vadd.f32 %v3232, %v3202
        %v3234 = vadd.f32 %v3233, %v3203
        %v3235 = vadd.f32 %v3234, %v3204
        %v3236 = vadd.f32 %v3235, %v3205
        %v3237 = vadd.f32 %v3236, %v3206
        %v3238 = vadd.f32 %v3237, %v3207
        %v3239 = vadd.f32 %v3238, %v3208
        %v3240 = vadd.f32 %v3239, %v3209
        %v3241 = vadd.f32 %v3240, %v3210
        %v3242 = vadd.f32 %v3241, %v3211
        %v3243 = vadd.f32 %v3242, %v3212
        %v3244 = vadd.f32 %v3243, %v3213
        %v3245 = vadd.f32 %v3244, %v3214
        %v3246 = vadd.f32 %v3245, %v3215
        %v3247 = vadd.f32 %v3246, %v3216
        %v3248 = vadd.f32 %v3247, %v3217
        %v3249 = vadd.f32 %v3248, %v3218
        %v3250 = vadd.f32 %v3249, %v3219
        %v3251 = vadd.f32 %v3250, %v3220
        %v3252 = vadd.f32 %v3251, %v3221
        %v3253 = vadd.f32 %v3252, %v3222
        %v3254 = vadd.f32 %v3253, %v3223
        %v3255 = vadd.f32 %v3254, %v3224
        %v3256 = vadd.f32 %v3255, %v3225
        %v3257 = vadd.f32 %v3256, %v3226
        %v3258 = vrot.slane %v3257, 4
        %v3259 = vadd.f32 %v3257, %v3258
        %v3260 = vrot.slane %v3259, 2
        %v3261 = vadd.f32 %v3259, %v3260
        %v3262 = vrot.slane %v3261, 1
        %v3263 = vadd.f32 %v3261, %v3262
        %3264 = vst [vmem:[%s214 + $0x1] sm:$0x1] %v3263
        %s3265 = sand.u32 %s80, 1
        %s3266 = scalar_lea.sflag [#allocation4], %s3265
        %s3267 = sand.u32 %s80, 1
        %s3268 = smul.addr %s3267, 128
        %s3269 = scalar_lea.vmem [#allocation7], %s3268
        %s3270 = sand.u32 %s106, 1
        %s3271 = scalar_lea.sflag [#allocation9], %s3270
        %s3272 = sand.u32 %s106, 1
        %s3273 = smul.addr %s3272, 2
        %s3274 = scalar_lea.vmem [#allocation8], %s3273
        // Predicated region
        $region37: #{down_res_layer.6} parent=27 // pred_check
          %p3275 = pneg %p90
        $region38: #{down_res_layer.6} parent=27 // pred_check_branch
          %3277 = sbr.rel (%p3275) target = $region40
        $region39: #{down_res_layer.6} parent=27 // pred_region
          %s3279 = ssub.s32 2048, 2048
          %3280 = vsyncadd %s3266, %s3279
          %s3281 = smul.addr %s25, 32
          %s3282 = smul.addr %s3281, 64
          %s3283 = scalar_lea.hbm %s2, %s3282
          %s3284 = sshll.u32 %s3269, 4
          %s3285 = int_to_ptr.vmem [resolvable:$true] %s3284
          %3290 = dma.vmem_to_hbm [thread:$0]  %s3285, 2048, %s3283, %s3266, 64, 64, 4
        $region40: #{down_res_layer.6} parent=27 // pred_fallthru
          _
        // Predicated region
        $region41: #{down_res_layer.6} parent=27 // pred_check
          %p3291 = pneg %p116
        $region42: #{down_res_layer.6} parent=27 // pred_check_branch
          %3293 = sbr.rel (%p3291) target = $region44
        $region43: #{down_res_layer.6} parent=27 // pred_region
          %s3295 = ssub.s32 32, 32
          %3296 = vsyncadd %s3271, %s3295
          %s3297 = smul.addr %s25, 32
          %s3298 = scalar_lea.hbm %s3, %s3297
          %s3300 = sshll.u32 %s3274, 4
          %s3301 = int_to_ptr.vmem [resolvable:$true] %s3300
          %3303 = dma.vmem_to_hbm [thread:$0]  %s3301, 32, %s3298, %s3271
        $region44: #{down_res_layer.6} parent=27 // pred_fallthru
          _
      $region28: #{down_res_layer.6} parent=5 // pred_fallthru
        _
      %p3304 = scmp.le.s32.totalorder 2, %s20
      // Predicated region
      $region45: #{down_res_layer.6} parent=5 // pred_check
        %p3305 = pneg %p3304
      $region46: #{down_res_layer.6} parent=5 // pred_check_branch
        %3307 = sbr.rel (%p3305) target = $region48
      $region47: #{down_res_layer.6} parent=5 // pred_region
        %s3308 = ssub.s32 %s20, 2
        // Predicated region
        $region49: #{down_res_layer.6} parent=47 // pred_check
          %p3309 = pneg %p96
        $region50: #{down_res_layer.6} parent=47 // pred_check_branch
          %3311 = sbr.rel (%p3309) target = $region52
        $region51: #{down_res_layer.6} parent=47 // pred_region
          %s3312 = sand.u32 %s81, 1
          %s3313 = scalar_lea.sflag [#allocation4], %s3312
          %s3314 = sand.u32 %s81, 1
          %s3315 = smul.addr %s3314, 128
          %s3316 = scalar_lea.vmem [#allocation7], %s3315
          %3317 = dma.done %s3313, 2048
        $region52: #{down_res_layer.6} parent=47 // pred_fallthru
          _
        // Predicated region
        $region53: #{down_res_layer.6} parent=47 // pred_check
          %p3318 = pneg %p122
        $region54: #{down_res_layer.6} parent=47 // pred_check_branch
          %3320 = sbr.rel (%p3318) target = $region56
        $region55: #{down_res_layer.6} parent=47 // pred_region
          %s3321 = sand.u32 %s107, 1
          %s3322 = scalar_lea.sflag [#allocation9], %s3321
          %s3323 = sand.u32 %s107, 1
          %s3324 = smul.addr %s3323, 2
          %s3325 = scalar_lea.vmem [#allocation8], %s3324
          %3326 = dma.done %s3322, 32
        $region56: #{down_res_layer.6} parent=47 // pred_fallthru
          _
      $region48: #{down_res_layer.6} parent=5 // pred_fallthru
        _
    $region6: #{down_res_layer.6} parent=1 // loop_footer
      %s24 = sadd.s32 1, %s20
    $region7: #{down_res_layer.6} parent=1 // loop_footer_branch
      %19 = sbr.rel target = $region3
    $region8: #{down_res_layer.6} parent=1 // loop_exit
      _
    %3327 = vsyncpa [#allocation3], 1
    %s3328 = scalar_lea.sflag [#allocation3], 1
    %3329 = vsyncpa %s3328, 1
    %3330 = vsyncpa [#allocation6], 1
    %3331 = vsyncpa [#allocation4], 1
    %s3332 = scalar_lea.sflag [#allocation4], 1
    %3333 = vsyncpa %s3332, 1
    %3334 = vsyncpa [#allocation9], 1
    %s3335 = scalar_lea.sflag [#allocation9], 1
    %3336 = vsyncpa %s3335, 1

// kernel: down_res_layer.11
$region0: #{down_res_layer.11}
  #allocation0 [shape = 'u32[]', space=smem, size = 0x4, offset = 0x4, fixed_abs, tag = 'smem constant byte address 0x4 - core index']
  #allocation1 [shape = 'u32[144,128]{1,0:T(1,128)}', space=vmem, size = 0x12000, scoped, tag = 'internal scratch']
  %s0 = inlined_call_operand.hbm [shape: bf16[2,16,8,256], index: 0, kind: input, shape index: {}]
  %s1 = inlined_call_operand.hbm [shape: bf16[2,16,8,256], index: 1, kind: input, shape index: {}]
  %s2 = inlined_call_operand.hbm [shape: f32[1,128], index: 2, kind: input, shape index: {}]
  %s3 = inlined_call_operand.hbm [shape: f32[1,128], index: 3, kind: input, shape index: {}]
  %s4 = inlined_call_operand.hbm [shape: f32[1,128], index: 4, kind: input, shape index: {}]
  %s5 = inlined_call_operand.hbm [shape: f32[1,128], index: 5, kind: input, shape index: {}]
  %s6 = inlined_call_operand.hbm [shape: f32[1,128], index: 6, kind: input, shape index: {}]
  %s7 = inlined_call_operand.hbm [shape: f32[1,128], index: 7, kind: input, shape index: {}]
  %s8 = inlined_call_operand.hbm [shape: f32[2,8,8,128], index: 8, kind: output, shape index: {}]
  %s9 = sld [smem:[#allocation0]]
  $region97: #{down_res_layer.11} parent=0
    _
  %s11 = ssub.s32 1, %s9
  %s12 = scalar_select 0, %s11, %s9
  $region1: #{down_res_layer.11} parent=0
    #allocation2 [shape = 'u8[131072]{0}', space=vmem, size = 0x20000, scoped, tag = 'input window, operand 0']
    #allocation3 [shape = 's32[2]{0}', space=sflag, size = 0x8, scoped, tag = 'scoped memory for down_res_layer.11']
    #allocation4 [shape = 's32[2]{0}', space=sflag, size = 0x8, scoped, tag = 'scoped memory for down_res_layer.11']
    #allocation5 [shape = 'u8[131072]{0}', space=vmem, size = 0x20000, scoped, tag = 'input window, operand 1']
    #allocation6 [shape = 's32[2]{0}', space=sflag, size = 0x8, scoped, tag = 'scoped memory for down_res_layer.11']
    #allocation7 [shape = 'u8[512]{0}', space=vmem, size = 0x400, scoped, tag = 'input window, operand 2, single buffered']
    #allocation8 [shape = 'u8[512]{0}', space=vmem, size = 0x400, scoped, tag = 'input window, operand 3, single buffered']
    #allocation9 [shape = 's32[1]{0}', space=sflag, size = 0x4, scoped, tag = 'scoped memory for down_res_layer.11']
    #allocation10 [shape = 'u8[512]{0}', space=vmem, size = 0x400, scoped, tag = 'input window, operand 4, single buffered']
    #allocation11 [shape = 'u8[512]{0}', space=vmem, size = 0x400, scoped, tag = 'input window, operand 5, single buffered']
    #allocation12 [shape = 's32[1]{0}', space=sflag, size = 0x4, scoped, tag = 'scoped memory for down_res_layer.11']
    #allocation13 [shape = 'u8[512]{0}', space=vmem, size = 0x400, scoped, tag = 'input window, operand 6, single buffered']
    #allocation14 [shape = 'u8[512]{0}', space=vmem, size = 0x400, scoped, tag = 'input window, operand 7, single buffered']
    #allocation15 [shape = 's32[1]{0}', space=sflag, size = 0x4, scoped, tag = 'scoped memory for down_res_layer.11']
    #allocation16 [shape = 'u8[65536]{0}', space=vmem, size = 0x10000, scoped, tag = 'output window, operand 0']
    %13 = vsyncpa [#allocation3], 0
    %s14 = scalar_lea.sflag [#allocation3], 1
    %15 = vsyncpa %s14, 0
    %16 = vsyncpa [#allocation6], 0
    %s17 = scalar_lea.sflag [#allocation6], 1
    %18 = vsyncpa %s17, 0
    %19 = vsyncpa [#allocation9], 0
    %20 = vsyncpa [#allocation12], 0
    %21 = vsyncpa [#allocation15], 0
    %22 = vsyncpa [#allocation4], 0
    %s23 = scalar_lea.sflag [#allocation4], 1
    %24 = vsyncpa %s23, 0
    loop: start=0, step=1, limit=4
    $region2: #{down_res_layer.11} parent=1 // loop_pre_header
      _
    $region3: #{down_res_layer.11} parent=1 // loop_header
      %s26 = sphi 0, %s30
      %p27 = scmp.ge.s32.totalorder %s26, 4
      %s36 = sphi 0, %s38
      %s39 = sphi 0, %s36
      %s40 = sphi 0, %s39
      %s56 = sphi 0, %s40
      %s62 = sphi 0, %s64
      %s65 = sphi 0, %s62
      %s66 = sphi 0, %s65
      %s82 = sphi 0, %s66
      %s86 = sphi 0, %s86
      %s88 = sphi 0, %s86
      %s89 = sphi 0, %s88
      %s103 = sphi 0, %s89
      %s107 = sphi 0, %s107
      %s109 = sphi 0, %s107
      %s110 = sphi 0, %s109
      %s124 = sphi 0, %s110
      %s128 = sphi 0, %s128
      %s130 = sphi 0, %s128
      %s131 = sphi 0, %s130
      %s145 = sphi 0, %s131
      %s149 = sphi 0, %s149
      %s151 = sphi 0, %s149
      %s152 = sphi 0, %s151
      %s166 = sphi 0, %s152
      %s170 = sphi 0, %s170
      %s172 = sphi 0, %s170
      %s173 = sphi 0, %s172
      %s187 = sphi 0, %s173
      %s191 = sphi 0, %s191
      %s193 = sphi 0, %s191
      %s194 = sphi 0, %s193
      %s208 = sphi 0, %s194
      %s214 = sphi 0, %s216
      %s217 = sphi 0, %s214
      %s218 = sphi 0, %s217
      %s234 = sphi 0, %s218
    $region4: #{down_res_layer.11} parent=1 // loop_header_branch
      %29 = sbr.rel (%p27) target = $region8
    $region5: #{down_res_layer.11} parent=1 // loop_body
      %s31 = ssub.s32 %s26, 1
      %s32 = ssub.s32 %s26, 2
      %s33 = sadd.s32 %s26, 1
      %s34 = ssub.s32 %s26, %s33
      %p35 = scmp.eq.s32.totalorder %s34, 0
      %s37 = sadd.s32 %s36, 1
      %s38 = scalar_select %p35, %s36, %s37
      %p41 = pneg %p35
      %p42 = scmp.eq.s32.totalorder %s26, 1
      %p43 = por %p41, %p42
      %p44 = scmp.ne.s32.totalorder %s36, %s39
      %p45 = scmp.eq.s32.totalorder %s26, 0
      %p46 = por %p44, %p45
      %p47 = scmp.ne.s32.totalorder %s36, %s39
      %p48 = scmp.eq.s32.totalorder %s31, 1
      %p49 = por %p47, %p48
      %p50 = scmp.ne.s32.totalorder %s39, %s40
      %p51 = scmp.eq.s32.totalorder %s31, 0
      %p52 = por %p50, %p51
      %p53 = scmp.ne.s32.totalorder %s39, %s40
      %p54 = scmp.eq.s32.totalorder %s32, 1
      %p55 = por %p53, %p54
      %p57 = scmp.ne.s32.totalorder %s40, %s56
      %p58 = scmp.eq.s32.totalorder %s32, 0
      %p59 = por %p57, %p58
      %s60 = ssub.s32 %s26, %s33
      %p61 = scmp.eq.s32.totalorder %s60, 0
      %s63 = sadd.s32 %s62, 1
      %s64 = scalar_select %p61, %s62, %s63
      %p67 = pneg %p61
      %p68 = scmp.eq.s32.totalorder %s26, 1
      %p69 = por %p67, %p68
      %p70 = scmp.ne.s32.totalorder %s62, %s65
      %p71 = scmp.eq.s32.totalorder %s26, 0
      %p72 = por %p70, %p71
      %p73 = scmp.ne.s32.totalorder %s62, %s65
      %p74 = scmp.eq.s32.totalorder %s31, 1
      %p75 = por %p73, %p74
      %p76 = scmp.ne.s32.totalorder %s65, %s66
      %p77 = scmp.eq.s32.totalorder %s31, 0
      %p78 = por %p76, %p77
      %p79 = scmp.ne.s32.totalorder %s65, %s66
      %p80 = scmp.eq.s32.totalorder %s32, 1
      %p81 = por %p79, %p80
      %p83 = scmp.ne.s32.totalorder %s66, %s82
      %p84 = scmp.eq.s32.totalorder %s32, 0
      %p85 = por %p83, %p84
      %s87 = sadd.s32 %s86, 1
      %p90 = scmp.eq.s32.totalorder %s26, 1
      %p91 = scmp.ne.s32.totalorder %s86, %s88
      %p92 = scmp.eq.s32.totalorder %s26, 0
      %p93 = por %p91, %p92
      %p94 = scmp.ne.s32.totalorder %s86, %s88
      %p95 = scmp.eq.s32.totalorder %s31, 1
      %p96 = por %p94, %p95
      %p97 = scmp.ne.s32.totalorder %s88, %s89
      %p98 = scmp.eq.s32.totalorder %s31, 0
      %p99 = por %p97, %p98
      %p100 = scmp.ne.s32.totalorder %s88, %s89
      %p101 = scmp.eq.s32.totalorder %s32, 1
      %p102 = por %p100, %p101
      %p104 = scmp.ne.s32.totalorder %s89, %s103
      %p105 = scmp.eq.s32.totalorder %s32, 0
      %p106 = por %p104, %p105
      %s108 = sadd.s32 %s107, 1
      %p111 = scmp.eq.s32.totalorder %s26, 1
      %p112 = scmp.ne.s32.totalorder %s107, %s109
      %p113 = scmp.eq.s32.totalorder %s26, 0
      %p114 = por %p112, %p113
      %p115 = scmp.ne.s32.totalorder %s107, %s109
      %p116 = scmp.eq.s32.totalorder %s31, 1
      %p117 = por %p115, %p116
      %p118 = scmp.ne.s32.totalorder %s109, %s110
      %p119 = scmp.eq.s32.totalorder %s31, 0
      %p120 = por %p118, %p119
      %p121 = scmp.ne.s32.totalorder %s109, %s110
      %p122 = scmp.eq.s32.totalorder %s32, 1
      %p123 = por %p121, %p122
      %p125 = scmp.ne.s32.totalorder %s110, %s124
      %p126 = scmp.eq.s32.totalorder %s32, 0
      %p127 = por %p125, %p126
      %s129 = sadd.s32 %s128, 1
      %p132 = scmp.eq.s32.totalorder %s26, 1
      %p133 = scmp.ne.s32.totalorder %s128, %s130
      %p134 = scmp.eq.s32.totalorder %s26, 0
      %p135 = por %p133, %p134
      %p136 = scmp.ne.s32.totalorder %s128, %s130
      %p137 = scmp.eq.s32.totalorder %s31, 1
      %p138 = por %p136, %p137
      %p139 = scmp.ne.s32.totalorder %s130, %s131
      %p140 = scmp.eq.s32.totalorder %s31, 0
      %p141 = por %p139, %p140
      %p142 = scmp.ne.s32.totalorder %s130, %s131
      %p143 = scmp.eq.s32.totalorder %s32, 1
      %p144 = por %p142, %p143
      %p146 = scmp.ne.s32.totalorder %s131, %s145
      %p147 = scmp.eq.s32.totalorder %s32, 0
      %p148 = por %p146, %p147
      %s150 = sadd.s32 %s149, 1
      %p153 = scmp.eq.s32.totalorder %s26, 1
      %p154 = scmp.ne.s32.totalorder %s149, %s151
      %p155 = scmp.eq.s32.totalorder %s26, 0
      %p156 = por %p154, %p155
      %p157 = scmp.ne.s32.totalorder %s149, %s151
      %p158 = scmp.eq.s32.totalorder %s31, 1
      %p159 = por %p157, %p158
      %p160 = scmp.ne.s32.totalorder %s151, %s152
      %p161 = scmp.eq.s32.totalorder %s31, 0
      %p162 = por %p160, %p161
      %p163 = scmp.ne.s32.totalorder %s151, %s152
      %p164 = scmp.eq.s32.totalorder %s32, 1
      %p165 = por %p163, %p164
      %p167 = scmp.ne.s32.totalorder %s152, %s166
      %p168 = scmp.eq.s32.totalorder %s32, 0
      %p169 = por %p167, %p168
      %s171 = sadd.s32 %s170, 1
      %p174 = scmp.eq.s32.totalorder %s26, 1
      %p175 = scmp.ne.s32.totalorder %s170, %s172
      %p176 = scmp.eq.s32.totalorder %s26, 0
      %p177 = por %p175, %p176
      %p178 = scmp.ne.s32.totalorder %s170, %s172
      %p179 = scmp.eq.s32.totalorder %s31, 1
      %p180 = por %p178, %p179
      %p181 = scmp.ne.s32.totalorder %s172, %s173
      %p182 = scmp.eq.s32.totalorder %s31, 0
      %p183 = por %p181, %p182
      %p184 = scmp.ne.s32.totalorder %s172, %s173
      %p185 = scmp.eq.s32.totalorder %s32, 1
      %p186 = por %p184, %p185
      %p188 = scmp.ne.s32.totalorder %s173, %s187
      %p189 = scmp.eq.s32.totalorder %s32, 0
      %p190 = por %p188, %p189
      %s192 = sadd.s32 %s191, 1
      %p195 = scmp.eq.s32.totalorder %s26, 1
      %p196 = scmp.ne.s32.totalorder %s191, %s193
      %p197 = scmp.eq.s32.totalorder %s26, 0
      %p198 = por %p196, %p197
      %p199 = scmp.ne.s32.totalorder %s191, %s193
      %p200 = scmp.eq.s32.totalorder %s31, 1
      %p201 = por %p199, %p200
      %p202 = scmp.ne.s32.totalorder %s193, %s194
      %p203 = scmp.eq.s32.totalorder %s31, 0
      %p204 = por %p202, %p203
      %p205 = scmp.ne.s32.totalorder %s193, %s194
      %p206 = scmp.eq.s32.totalorder %s32, 1
      %p207 = por %p205, %p206
      %p209 = scmp.ne.s32.totalorder %s194, %s208
      %p210 = scmp.eq.s32.totalorder %s32, 0
      %p211 = por %p209, %p210
      %s212 = ssub.s32 %s26, %s33
      %p213 = scmp.eq.s32.totalorder %s212, 0
      %s215 = sadd.s32 %s214, 1
      %s216 = scalar_select %p213, %s214, %s215
      %p219 = pneg %p213
      %p220 = scmp.eq.s32.totalorder %s26, 1
      %p221 = por %p219, %p220
      %p222 = scmp.ne.s32.totalorder %s214, %s217
      %p223 = scmp.eq.s32.totalorder %s26, 0
      %p224 = por %p222, %p223
      %p225 = scmp.ne.s32.totalorder %s214, %s217
      %p226 = scmp.eq.s32.totalorder %s31, 1
      %p227 = por %p225, %p226
      %p228 = scmp.ne.s32.totalorder %s217, %s218
      %p229 = scmp.eq.s32.totalorder %s31, 0
      %p230 = por %p228, %p229
      %p231 = scmp.ne.s32.totalorder %s217, %s218
      %p232 = scmp.eq.s32.totalorder %s32, 1
      %p233 = por %p231, %p232
      %p235 = scmp.ne.s32.totalorder %s218, %s234
      %p236 = scmp.eq.s32.totalorder %s32, 0
      %p237 = por %p235, %p236
      %p238 = scmp.le.s32.totalorder 1, %s26
      %p239 = scmp.lt.s32.totalorder %s26, 3
      %p240 = pnand %p238, %p239
      %p241 = pneg %p240
      // Predicated region
      $region9: #{down_res_layer.11} parent=5 // pred_check
        _
      $region10: #{down_res_layer.11} parent=5 // pred_check_branch
        %243 = sbr.rel (%p240) target = $region12
      $region11: #{down_res_layer.11} parent=5 // pred_region
        %s244 = ssub.s32 %s26, 1
        // Predicated region
        $region13: #{down_res_layer.11} parent=11 // pred_check
          %p245 = pneg %p99
        $region14: #{down_res_layer.11} parent=11 // pred_check_branch
          %247 = sbr.rel (%p245) target = $region16
        $region15: #{down_res_layer.11} parent=11 // pred_region
          %s249 = ssub.s32 16, 16
          %250 = vsyncadd [#allocation6], %s249
          %s252 = sshll.u32 [#allocation7], 4
          %s253 = int_to_ptr.vmem [resolvable:$true] %s252
          %255 = dma.hbm_to_vmem [thread:$0]  %s2, 16, %s253, [#allocation6]
        $region16: #{down_res_layer.11} parent=11 // pred_fallthru
          _
        // Predicated region
        $region17: #{down_res_layer.11} parent=11 // pred_check
          %p256 = pneg %p120
        $region18: #{down_res_layer.11} parent=11 // pred_check_branch
          %258 = sbr.rel (%p256) target = $region20
        $region19: #{down_res_layer.11} parent=11 // pred_region
          %s260 = ssub.s32 16, 16
          %261 = vsyncadd [#allocation9], %s260
          %s263 = sshll.u32 [#allocation8], 4
          %s264 = int_to_ptr.vmem [resolvable:$true] %s263
          %266 = dma.hbm_to_vmem [thread:$0]  %s3, 16, %s264, [#allocation9]
        $region20: #{down_res_layer.11} parent=11 // pred_fallthru
          _
        // Predicated region
        $region21: #{down_res_layer.11} parent=11 // pred_check
          %p267 = pneg %p141
        $region22: #{down_res_layer.11} parent=11 // pred_check_branch
          %269 = sbr.rel (%p267) target = $region24
        $region23: #{down_res_layer.11} parent=11 // pred_region
          %s271 = ssub.s32 16, 16
          %272 = vsyncadd [#allocation9], %s271
          %s274 = sshll.u32 [#allocation10], 4
          %s275 = int_to_ptr.vmem [resolvable:$true] %s274
          %277 = dma.hbm_to_vmem [thread:$0]  %s4, 16, %s275, [#allocation9]
        $region24: #{down_res_layer.11} parent=11 // pred_fallthru
          _
        // Predicated region
        $region25: #{down_res_layer.11} parent=11 // pred_check
          %p278 = pneg %p162
        $region26: #{down_res_layer.11} parent=11 // pred_check_branch
          %280 = sbr.rel (%p278) target = $region28
        $region27: #{down_res_layer.11} parent=11 // pred_region
          %s282 = ssub.s32 16, 16
          %283 = vsyncadd [#allocation12], %s282
          %s285 = sshll.u32 [#allocation11], 4
          %s286 = int_to_ptr.vmem [resolvable:$true] %s285
          %288 = dma.hbm_to_vmem [thread:$0]  %s5, 16, %s286, [#allocation12]
        $region28: #{down_res_layer.11} parent=11 // pred_fallthru
          _
        // Predicated region
        $region29: #{down_res_layer.11} parent=11 // pred_check
          %p289 = pneg %p183
        $region30: #{down_res_layer.11} parent=11 // pred_check_branch
          %291 = sbr.rel (%p289) target = $region32
        $region31: #{down_res_layer.11} parent=11 // pred_region
          %s293 = ssub.s32 16, 16
          %294 = vsyncadd [#allocation12], %s293
          %s296 = sshll.u32 [#allocation13], 4
          %s297 = int_to_ptr.vmem [resolvable:$true] %s296
          %299 = dma.hbm_to_vmem [thread:$0]  %s6, 16, %s297, [#allocation12]
        $region32: #{down_res_layer.11} parent=11 // pred_fallthru
          _
        // Predicated region
        $region33: #{down_res_layer.11} parent=11 // pred_check
          %p300 = pneg %p204
        $region34: #{down_res_layer.11} parent=11 // pred_check_branch
          %302 = sbr.rel (%p300) target = $region36
        $region35: #{down_res_layer.11} parent=11 // pred_region
          %s304 = ssub.s32 16, 16
          %305 = vsyncadd [#allocation15], %s304
          %s307 = sshll.u32 [#allocation14], 4
          %s308 = int_to_ptr.vmem [resolvable:$true] %s307
          %310 = dma.hbm_to_vmem [thread:$0]  %s7, 16, %s308, [#allocation15]
        $region36: #{down_res_layer.11} parent=11 // pred_fallthru
          _
      $region12: #{down_res_layer.11} parent=5 // pred_fallthru
        _
      %p311 = scmp.lt.s32.totalorder %s26, 2
      // Predicated region
      $region37: #{down_res_layer.11} parent=5 // pred_check
        %p312 = pneg %p311
      $region38: #{down_res_layer.11} parent=5 // pred_check_branch
        %314 = sbr.rel (%p312) target = $region40
      $region39: #{down_res_layer.11} parent=5 // pred_region
        // Predicated region
        $region41: #{down_res_layer.11} parent=39 // pred_check
          %p315 = pneg %p46
        $region42: #{down_res_layer.11} parent=39 // pred_check_branch
          %317 = sbr.rel (%p315) target = $region44
        $region43: #{down_res_layer.11} parent=39 // pred_region
          %s318 = sand.u32 %s36, 1
          %s319 = scalar_lea.sflag [#allocation3], %s318
          %s320 = sand.u32 %s36, 1
          %s321 = smul.addr %s320, 128
          %s322 = scalar_lea.vmem [#allocation2], %s321
          %s324 = ssub.s32 2048, 2048
          %325 = vsyncadd %s319, %s324
          %s326 = smul.addr %s26, 32
          %s327 = smul.addr %s326, 64
          %s328 = scalar_lea.hbm %s0, %s327
          %s329 = sshll.u32 %s322, 4
          %s330 = int_to_ptr.vmem [resolvable:$true] %s329
          %335 = dma.hbm_to_vmem [thread:$0]  %s328, 2048, %s330, %s319, 128, 128, 8
        $region44: #{down_res_layer.11} parent=39 // pred_fallthru
          _
        // Predicated region
        $region45: #{down_res_layer.11} parent=39 // pred_check
          %p336 = pneg %p72
        $region46: #{down_res_layer.11} parent=39 // pred_check_branch
          %338 = sbr.rel (%p336) target = $region48
        $region47: #{down_res_layer.11} parent=39 // pred_region
          %s339 = sand.u32 %s26, 1
          %s340 = scalar_lea.sflag [#allocation6], %s339
          %s341 = sand.u32 %s62, 1
          %s342 = smul.addr %s341, 128
          %s343 = scalar_lea.vmem [#allocation5], %s342
          %s345 = ssub.s32 2048, 2048
          %346 = vsyncadd %s340, %s345
          %s347 = smul.addr %s26, 32
          %s348 = smul.addr %s347, 64
          %s349 = scalar_lea.hbm %s1, %s348
          %s350 = sshll.u32 %s343, 4
          %s351 = int_to_ptr.vmem [resolvable:$true] %s350
          %356 = dma.hbm_to_vmem [thread:$0]  %s349, 2048, %s351, %s340, 128, 128, 8
        $region48: #{down_res_layer.11} parent=39 // pred_fallthru
          _
      $region40: #{down_res_layer.11} parent=5 // pred_fallthru
        _
      %p357 = scmp.le.s32.totalorder 1, %s26
      %p358 = scmp.lt.s32.totalorder %s26, 3
      %p359 = pnand %p357, %p358
      %p360 = pneg %p359
      // Predicated region
      $region49: #{down_res_layer.11} parent=5 // pred_check
        _
      $region50: #{down_res_layer.11} parent=5 // pred_check_branch
        %362 = sbr.rel (%p359) target = $region52
      $region51: #{down_res_layer.11} parent=5 // pred_region
        %s363 = ssub.s32 %s26, 1
        %s364 = sand.u32 %s39, 1
        %s365 = scalar_lea.sflag [#allocation3], %s364
        %s366 = sand.u32 %s39, 1
        %s367 = smul.addr %s366, 128
        %s368 = scalar_lea.vmem [#allocation2], %s367
        // Predicated region
        $region53: #{down_res_layer.11} parent=51 // pred_check
          %p369 = pneg %p52
        $region54: #{down_res_layer.11} parent=51 // pred_check_branch
          %371 = sbr.rel (%p369) target = $region56
        $region55: #{down_res_layer.11} parent=51 // pred_region
          %372 = dma.done %s365, 2048
        $region56: #{down_res_layer.11} parent=51 // pred_fallthru
          _
        %s373 = sand.u32 %s31, 1
        %s374 = scalar_lea.sflag [#allocation6], %s373
        %s375 = sand.u32 %s65, 1
        %s376 = smul.addr %s375, 128
        %s377 = scalar_lea.vmem [#allocation5], %s376
        // Predicated region
        $region57: #{down_res_layer.11} parent=51 // pred_check
          %p378 = pneg %p78
        $region58: #{down_res_layer.11} parent=51 // pred_check_branch
          %380 = sbr.rel (%p378) target = $region60
        $region59: #{down_res_layer.11} parent=51 // pred_region
          %381 = dma.done %s374, 2048
        $region60: #{down_res_layer.11} parent=51 // pred_fallthru
          _
        // Predicated region
        $region61: #{down_res_layer.11} parent=51 // pred_check
          %p382 = pneg %p99
        $region62: #{down_res_layer.11} parent=51 // pred_check_branch
          %384 = sbr.rel (%p382) target = $region64
        $region63: #{down_res_layer.11} parent=51 // pred_region
          %385 = dma.done [#allocation6], 16
        $region64: #{down_res_layer.11} parent=51 // pred_fallthru
          _
        // Predicated region
        $region65: #{down_res_layer.11} parent=51 // pred_check
          %p386 = pneg %p120
        $region66: #{down_res_layer.11} parent=51 // pred_check_branch
          %388 = sbr.rel (%p386) target = $region68
        $region67: #{down_res_layer.11} parent=51 // pred_region
          %389 = dma.done [#allocation9], 16
        $region68: #{down_res_layer.11} parent=51 // pred_fallthru
          _
        // Predicated region
        $region69: #{down_res_layer.11} parent=51 // pred_check
          %p390 = pneg %p141
        $region70: #{down_res_layer.11} parent=51 // pred_check_branch
          %392 = sbr.rel (%p390) target = $region72
        $region71: #{down_res_layer.11} parent=51 // pred_region
          %393 = dma.done [#allocation9], 16
        $region72: #{down_res_layer.11} parent=51 // pred_fallthru
          _
        // Predicated region
        $region73: #{down_res_layer.11} parent=51 // pred_check
          %p394 = pneg %p162
        $region74: #{down_res_layer.11} parent=51 // pred_check_branch
          %396 = sbr.rel (%p394) target = $region76
        $region75: #{down_res_layer.11} parent=51 // pred_region
          %397 = dma.done [#allocation12], 16
        $region76: #{down_res_layer.11} parent=51 // pred_fallthru
          _
        // Predicated region
        $region77: #{down_res_layer.11} parent=51 // pred_check
          %p398 = pneg %p183
        $region78: #{down_res_layer.11} parent=51 // pred_check_branch
          %400 = sbr.rel (%p398) target = $region80
        $region79: #{down_res_layer.11} parent=51 // pred_region
          %401 = dma.done [#allocation12], 16
        $region80: #{down_res_layer.11} parent=51 // pred_fallthru
          _
        // Predicated region
        $region81: #{down_res_layer.11} parent=51 // pred_check
          %p402 = pneg %p204
        $region82: #{down_res_layer.11} parent=51 // pred_check_branch
          %404 = sbr.rel (%p402) target = $region84
        $region83: #{down_res_layer.11} parent=51 // pred_region
          %405 = dma.done [#allocation15], 16
        $region84: #{down_res_layer.11} parent=51 // pred_fallthru
          _
        %s406 = sand.u32 %s39, 1
        %s407 = scalar_lea.sflag [#allocation3], %s406
        %s408 = sand.u32 %s39, 1
        %s409 = smul.addr %s408, 128
        %s410 = scalar_lea.vmem [#allocation2], %s409
        %p411 = pneg %p52
        %p412 = pneg %p49
        %s413 = sand.u32 %s31, 1
        %s414 = scalar_lea.sflag [#allocation6], %s413
        %s415 = sand.u32 %s65, 1
        %s416 = smul.addr %s415, 128
        %s417 = scalar_lea.vmem [#allocation5], %s416
        %p418 = pneg %p78
        %p419 = pneg %p75
        %p420 = pneg %p99
        %p421 = pneg %p96
        %p422 = pneg %p120
        %p423 = pneg %p117
        %p424 = pneg %p141
        %p425 = pneg %p138
        %p426 = pneg %p162
        %p427 = pneg %p159
        %p428 = pneg %p183
        %p429 = pneg %p180
        %p430 = pneg %p204
        %p431 = pneg %p201
        %p432 = pneg %p230
        %p433 = pneg %p227
        %s434 = sand.u32 %s217, 1
        %s435 = scalar_lea.sflag [#allocation4], %s434
        %s436 = sand.u32 %s217, 1
        %s437 = smul.addr %s436, 64
        %s438 = scalar_lea.vmem [#allocation16], %s437
        %v439 = vld [vmem:[#allocation7] sm:$0x1]
        %v440 = vld [vmem:[#allocation8] sm:$0x1]
        %v441 = vld [vmem:[#allocation10] sm:$0x1]
        %v442 = vld [vmem:[#allocation11] sm:$0x1]
        %v443 = vld [vmem:[#allocation13] sm:$0x1]
        %v444 = vld [vmem:[#allocation14] sm:$0x1]
        %v445 = vld [vmem:[%s368] sm:$0xf]
        %v446 = vld [vmem:[%s368 + $0x8] sm:$0xf]
        %v447 = vld [vmem:[%s368 + $0x10] sm:$0xf]
        %v448 = vld [vmem:[%s368 + $0x18] sm:$0xf]
        %v449 = vld [vmem:[%s368 + $0x20] sm:$0xf]
        %v450 = vld [vmem:[%s368 + $0x28] sm:$0xf]
        %v451 = vld [vmem:[%s368 + $0x30] sm:$0xf]
        %v452 = vld [vmem:[%s368 + $0x38] sm:$0xf]
        %v453 = vld [vmem:[%s368 + $0x40] sm:$0xf]
        %v454 = vld [vmem:[%s368 + $0x48] sm:$0xf]
        %v455 = vld [vmem:[%s368 + $0x50] sm:$0xf]
        %v456 = vld [vmem:[%s368 + $0x58] sm:$0xf]
        %v457 = vld [vmem:[%s368 + $0x60] sm:$0xf]
        %v458 = vld [vmem:[%s368 + $0x68] sm:$0xf]
        %v459 = vld [vmem:[%s368 + $0x70] sm:$0xf]
        %v460 = vld [vmem:[%s368 + $0x78] sm:$0xf]
        %v461 = vunpack.c.l.bf16 %v445
        %v462 = vunpack.c.l.bf16 %v446
        %v463 = vunpack.c.l.bf16 %v447
        %v464 = vunpack.c.l.bf16 %v448
        %v465 = vunpack.c.l.bf16 %v449
        %v466 = vunpack.c.l.bf16 %v450
        %v467 = vunpack.c.l.bf16 %v451
        %v468 = vunpack.c.l.bf16 %v452
        %v469 = vunpack.c.l.bf16 %v453
        %v470 = vunpack.c.l.bf16 %v454
        %v471 = vunpack.c.l.bf16 %v455
        %v472 = vunpack.c.l.bf16 %v456
        %v473 = vunpack.c.l.bf16 %v457
        %v474 = vunpack.c.l.bf16 %v458
        %v475 = vunpack.c.l.bf16 %v459
        %v476 = vunpack.c.l.bf16 %v460
        %v477 = vld [vmem:[%s377] sm:$0xf]
        %v478 = vld [vmem:[%s377 + $0x8] sm:$0xf]
        %v479 = vld [vmem:[%s377 + $0x10] sm:$0xf]
        %v480 = vld [vmem:[%s377 + $0x18] sm:$0xf]
        %v481 = vld [vmem:[%s377 + $0x20] sm:$0xf]
        %v482 = vld [vmem:[%s377 + $0x28] sm:$0xf]
        %v483 = vld [vmem:[%s377 + $0x30] sm:$0xf]
        %v484 = vld [vmem:[%s377 + $0x38] sm:$0xf]
        %v485 = vld [vmem:[%s377 + $0x40] sm:$0xf]
        %v486 = vld [vmem:[%s377 + $0x48] sm:$0xf]
        %v487 = vld [vmem:[%s377 + $0x50] sm:$0xf]
        %v488 = vld [vmem:[%s377 + $0x58] sm:$0xf]
        %v489 = vld [vmem:[%s377 + $0x60] sm:$0xf]
        %v490 = vld [vmem:[%s377 + $0x68] sm:$0xf]
        %v491 = vld [vmem:[%s377 + $0x70] sm:$0xf]
        %v492 = vld [vmem:[%s377 + $0x78] sm:$0xf]
        %v493 = vunpack.c.l.bf16 %v477
        %v494 = vunpack.c.l.bf16 %v478
        %v495 = vunpack.c.l.bf16 %v479
        %v496 = vunpack.c.l.bf16 %v480
        %v497 = vunpack.c.l.bf16 %v481
        %v498 = vunpack.c.l.bf16 %v482
        %v499 = vunpack.c.l.bf16 %v483
        %v500 = vunpack.c.l.bf16 %v484
        %v501 = vunpack.c.l.bf16 %v485
        %v502 = vunpack.c.l.bf16 %v486
        %v503 = vunpack.c.l.bf16 %v487
        %v504 = vunpack.c.l.bf16 %v488
        %v505 = vunpack.c.l.bf16 %v489
        %v506 = vunpack.c.l.bf16 %v490
        %v507 = vunpack.c.l.bf16 %v491
        %v508 = vunpack.c.l.bf16 %v492
        %v510 = vlaneseq
        %v511 = vshrl.u32 %v510, 7
        %v512 = vsub.s32 0, %v511
        %v513 = vrot.slane %v439, %v512
        %v515 = vmul.f32 %v461, %v513
        %v516 = vmul.f32 %v462, %v513
        %v517 = vmul.f32 %v463, %v513
        %v518 = vmul.f32 %v464, %v513
        %v519 = vmul.f32 %v465, %v513
        %v520 = vmul.f32 %v466, %v513
        %v521 = vmul.f32 %v467, %v513
        %v522 = vmul.f32 %v468, %v513
        %v523 = vmul.f32 %v469, %v513
        %v524 = vmul.f32 %v470, %v513
        %v525 = vmul.f32 %v471, %v513
        %v526 = vmul.f32 %v472, %v513
        %v527 = vmul.f32 %v473, %v513
        %v528 = vmul.f32 %v474, %v513
        %v529 = vmul.f32 %v475, %v513
        %v530 = vmul.f32 %v476, %v513
        %v532 = vlaneseq
        %v533 = vshrl.u32 %v532, 7
        %v534 = vsub.s32 0, %v533
        %v535 = vrot.slane %v440, %v534
        %v537 = vadd.f32 %v515, %v535
        %v538 = vadd.f32 %v516, %v535
        %v539 = vadd.f32 %v517, %v535
        %v540 = vadd.f32 %v518, %v535
        %v541 = vadd.f32 %v519, %v535
        %v542 = vadd.f32 %v520, %v535
        %v543 = vadd.f32 %v521, %v535
        %v544 = vadd.f32 %v522, %v535
        %v545 = vadd.f32 %v523, %v535
        %v546 = vadd.f32 %v524, %v535
        %v547 = vadd.f32 %v525, %v535
        %v548 = vadd.f32 %v526, %v535
        %v549 = vadd.f32 %v527, %v535
        %v550 = vadd.f32 %v528, %v535
        %v551 = vadd.f32 %v529, %v535
        %v552 = vadd.f32 %v530, %v535
        %vm553 = vcmp.ge.f32.partialorder %v537, 0.0
        %vm554 = vcmp.ge.f32.partialorder %v538, 0.0
        %vm555 = vcmp.ge.f32.partialorder %v539, 0.0
        %vm556 = vcmp.ge.f32.partialorder %v540, 0.0
        %vm557 = vcmp.ge.f32.partialorder %v541, 0.0
        %vm558 = vcmp.ge.f32.partialorder %v542, 0.0
        %vm559 = vcmp.ge.f32.partialorder %v543, 0.0
        %vm560 = vcmp.ge.f32.partialorder %v544, 0.0
        %vm561 = vcmp.ge.f32.partialorder %v545, 0.0
        %vm562 = vcmp.ge.f32.partialorder %v546, 0.0
        %vm563 = vcmp.ge.f32.partialorder %v547, 0.0
        %vm564 = vcmp.ge.f32.partialorder %v548, 0.0
        %vm565 = vcmp.ge.f32.partialorder %v549, 0.0
        %vm566 = vcmp.ge.f32.partialorder %v550, 0.0
        %vm567 = vcmp.ge.f32.partialorder %v551, 0.0
        %vm568 = vcmp.ge.f32.partialorder %v552, 0.0
        %v569 = vmul.f32 %v537, 0.2
        %v570 = vmul.f32 %v538, 0.2
        %v571 = vmul.f32 %v539, 0.2
        %v572 = vmul.f32 %v540, 0.2
        %v573 = vmul.f32 %v541, 0.2
        %v574 = vmul.f32 %v542, 0.2
        %v575 = vmul.f32 %v543, 0.2
        %v576 = vmul.f32 %v544, 0.2
        %v577 = vmul.f32 %v545, 0.2
        %v578 = vmul.f32 %v546, 0.2
        %v579 = vmul.f32 %v547, 0.2
        %v580 = vmul.f32 %v548, 0.2
        %v581 = vmul.f32 %v549, 0.2
        %v582 = vmul.f32 %v550, 0.2
        %v583 = vmul.f32 %v551, 0.2
        %v584 = vmul.f32 %v552, 0.2
        %v585 = vsel %vm553, %v537, %v569
        %v586 = vsel %vm554, %v538, %v570
        %v587 = vsel %vm555, %v539, %v571
        %v588 = vsel %vm556, %v540, %v572
        %v589 = vsel %vm557, %v541, %v573
        %v590 = vsel %vm558, %v542, %v574
        %v591 = vsel %vm559, %v543, %v575
        %v592 = vsel %vm560, %v544, %v576
        %v593 = vsel %vm561, %v545, %v577
        %v594 = vsel %vm562, %v546, %v578
        %v595 = vsel %vm563, %v547, %v579
        %v596 = vsel %vm564, %v548, %v580
        %v597 = vsel %vm565, %v549, %v581
        %v598 = vsel %vm566, %v550, %v582
        %v599 = vsel %vm567, %v551, %v583
        %v600 = vsel %vm568, %v552, %v584
        %v602 = vlaneseq
        %v603 = vshrl.u32 %v602, 7
        %v604 = vsub.s32 0, %v603
        %v605 = vrot.slane %v441, %v604
        %v607 = vmul.f32 %v493, %v605
        %v608 = vmul.f32 %v494, %v605
        %v609 = vmul.f32 %v495, %v605
        %v610 = vmul.f32 %v496, %v605
        %v611 = vmul.f32 %v497, %v605
        %v612 = vmul.f32 %v498, %v605
        %v613 = vmul.f32 %v499, %v605
        %v614 = vmul.f32 %v500, %v605
        %v615 = vmul.f32 %v501, %v605
        %v616 = vmul.f32 %v502, %v605
        %v617 = vmul.f32 %v503, %v605
        %v618 = vmul.f32 %v504, %v605
        %v619 = vmul.f32 %v505, %v605
        %v620 = vmul.f32 %v506, %v605
        %v621 = vmul.f32 %v507, %v605
        %v622 = vmul.f32 %v508, %v605
        %v623 = vadd.f32 %v585, %v607
        %v624 = vadd.f32 %v586, %v608
        %v625 = vadd.f32 %v587, %v609
        %v626 = vadd.f32 %v588, %v610
        %v627 = vadd.f32 %v589, %v611
        %v628 = vadd.f32 %v590, %v612
        %v629 = vadd.f32 %v591, %v613
        %v630 = vadd.f32 %v592, %v614
        %v631 = vadd.f32 %v593, %v615
        %v632 = vadd.f32 %v594, %v616
        %v633 = vadd.f32 %v595, %v617
        %v634 = vadd.f32 %v596, %v618
        %v635 = vadd.f32 %v597, %v619
        %v636 = vadd.f32 %v598, %v620
        %v637 = vadd.f32 %v599, %v621
        %v638 = vadd.f32 %v600, %v622
        %v640 = vlaneseq
        %v641 = vshrl.u32 %v640, 7
        %v642 = vsub.s32 0, %v641
        %v643 = vrot.slane %v442, %v642
        %v645 = vadd.f32 %v623, %v643
        %v646 = vadd.f32 %v624, %v643
        %v647 = vadd.f32 %v625, %v643
        %v648 = vadd.f32 %v626, %v643
        %v649 = vadd.f32 %v627, %v643
        %v650 = vadd.f32 %v628, %v643
        %v651 = vadd.f32 %v629, %v643
        %v652 = vadd.f32 %v630, %v643
        %v653 = vadd.f32 %v631, %v643
        %v654 = vadd.f32 %v632, %v643
        %v655 = vadd.f32 %v633, %v643
        %v656 = vadd.f32 %v634, %v643
        %v657 = vadd.f32 %v635, %v643
        %v658 = vadd.f32 %v636, %v643
        %v659 = vadd.f32 %v637, %v643
        %v660 = vadd.f32 %v638, %v643
        %v662 = vlaneseq
        %v663 = vshrl.u32 %v662, 7
        %v664 = vsub.s32 0, %v663
        %v665 = vrot.slane %v443, %v664
        %v667 = vmul.f32 %v645, %v665
        %v668 = vmul.f32 %v646, %v665
        %v669 = vmul.f32 %v647, %v665
        %v670 = vmul.f32 %v648, %v665
        %v671 = vmul.f32 %v649, %v665
        %v672 = vmul.f32 %v650, %v665
        %v673 = vmul.f32 %v651, %v665
        %v674 = vmul.f32 %v652, %v665
        %v675 = vmul.f32 %v653, %v665
        %v676 = vmul.f32 %v654, %v665
        %v677 = vmul.f32 %v655, %v665
        %v678 = vmul.f32 %v656, %v665
        %v679 = vmul.f32 %v657, %v665
        %v680 = vmul.f32 %v658, %v665
        %v681 = vmul.f32 %v659, %v665
        %v682 = vmul.f32 %v660, %v665
        %v684 = vlaneseq
        %v685 = vshrl.u32 %v684, 7
        %v686 = vsub.s32 0, %v685
        %v687 = vrot.slane %v444, %v686
        %v689 = vadd.f32 %v667, %v687
        %v690 = vadd.f32 %v668, %v687
        %v691 = vadd.f32 %v669, %v687
        %v692 = vadd.f32 %v670, %v687
        %v693 = vadd.f32 %v671, %v687
        %v694 = vadd.f32 %v672, %v687
        %v695 = vadd.f32 %v673, %v687
        %v696 = vadd.f32 %v674, %v687
        %v697 = vadd.f32 %v675, %v687
        %v698 = vadd.f32 %v676, %v687
        %v699 = vadd.f32 %v677, %v687
        %v700 = vadd.f32 %v678, %v687
        %v701 = vadd.f32 %v679, %v687
        %v702 = vadd.f32 %v680, %v687
        %v703 = vadd.f32 %v681, %v687
        %v704 = vadd.f32 %v682, %v687
        %vm705 = vcmp.ge.f32.partialorder %v689, 0.0
        %vm706 = vcmp.ge.f32.partialorder %v690, 0.0
        %vm707 = vcmp.ge.f32.partialorder %v691, 0.0
        %vm708 = vcmp.ge.f32.partialorder %v692, 0.0
        %vm709 = vcmp.ge.f32.partialorder %v693, 0.0
        %vm710 = vcmp.ge.f32.partialorder %v694, 0.0
        %vm711 = vcmp.ge.f32.partialorder %v695, 0.0
        %vm712 = vcmp.ge.f32.partialorder %v696, 0.0
        %vm713 = vcmp.ge.f32.partialorder %v697, 0.0
        %vm714 = vcmp.ge.f32.partialorder %v698, 0.0
        %vm715 = vcmp.ge.f32.partialorder %v699, 0.0
        %vm716 = vcmp.ge.f32.partialorder %v700, 0.0
        %vm717 = vcmp.ge.f32.partialorder %v701, 0.0
        %vm718 = vcmp.ge.f32.partialorder %v702, 0.0
        %vm719 = vcmp.ge.f32.partialorder %v703, 0.0
        %vm720 = vcmp.ge.f32.partialorder %v704, 0.0
        %v721 = vmul.f32 %v689, 0.2
        %v722 = vmul.f32 %v690, 0.2
        %v723 = vmul.f32 %v691, 0.2
        %v724 = vmul.f32 %v692, 0.2
        %v725 = vmul.f32 %v693, 0.2
        %v726 = vmul.f32 %v694, 0.2
        %v727 = vmul.f32 %v695, 0.2
        %v728 = vmul.f32 %v696, 0.2
        %v729 = vmul.f32 %v697, 0.2
        %v730 = vmul.f32 %v698, 0.2
        %v731 = vmul.f32 %v699, 0.2
        %v732 = vmul.f32 %v700, 0.2
        %v733 = vmul.f32 %v701, 0.2
        %v734 = vmul.f32 %v702, 0.2
        %v735 = vmul.f32 %v703, 0.2
        %v736 = vmul.f32 %v704, 0.2
        %v737 = vsel %vm705, %v689, %v721
        %v738 = vsel %vm706, %v690, %v722
        %v739 = vsel %vm707, %v691, %v723
        %v740 = vsel %vm708, %v692, %v724
        %v741 = vsel %vm709, %v693, %v725
        %v742 = vsel %vm710, %v694, %v726
        %v743 = vsel %vm711, %v695, %v727
        %v744 = vsel %vm712, %v696, %v728
        %v745 = vsel %vm713, %v697, %v729
        %v746 = vsel %vm714, %v698, %v730
        %v747 = vsel %vm715, %v699, %v731
        %v748 = vsel %vm716, %v700, %v732
        %v749 = vsel %vm717, %v701, %v733
        %v750 = vsel %vm718, %v702, %v734
        %v751 = vsel %vm719, %v703, %v735
        %v752 = vsel %vm720, %v704, %v736
        %v753 = vld [vmem:[%s368 + $0x4] sm:$0xf]
        %v754 = vld [vmem:[%s368 + $0xc] sm:$0xf]
        %v755 = vld [vmem:[%s368 + $0x14] sm:$0xf]
        %v756 = vld [vmem:[%s368 + $0x1c] sm:$0xf]
        %v757 = vld [vmem:[%s368 + $0x24] sm:$0xf]
        %v758 = vld [vmem:[%s368 + $0x2c] sm:$0xf]
        %v759 = vld [vmem:[%s368 + $0x34] sm:$0xf]
        %v760 = vld [vmem:[%s368 + $0x3c] sm:$0xf]
        %v761 = vld [vmem:[%s368 + $0x44] sm:$0xf]
        %v762 = vld [vmem:[%s368 + $0x4c] sm:$0xf]
        %v763 = vld [vmem:[%s368 + $0x54] sm:$0xf]
        %v764 = vld [vmem:[%s368 + $0x5c] sm:$0xf]
        %v765 = vld [vmem:[%s368 + $0x64] sm:$0xf]
        %v766 = vld [vmem:[%s368 + $0x6c] sm:$0xf]
        %v767 = vld [vmem:[%s368 + $0x74] sm:$0xf]
        %v768 = vld [vmem:[%s368 + $0x7c] sm:$0xf]
        %v769 = vunpack.c.l.bf16 %v753
        %v770 = vunpack.c.l.bf16 %v754
        %v771 = vunpack.c.l.bf16 %v755
        %v772 = vunpack.c.l.bf16 %v756
        %v773 = vunpack.c.l.bf16 %v757
        %v774 = vunpack.c.l.bf16 %v758
        %v775 = vunpack.c.l.bf16 %v759
        %v776 = vunpack.c.l.bf16 %v760
        %v777 = vunpack.c.l.bf16 %v761
        %v778 = vunpack.c.l.bf16 %v762
        %v779 = vunpack.c.l.bf16 %v763
        %v780 = vunpack.c.l.bf16 %v764
        %v781 = vunpack.c.l.bf16 %v765
        %v782 = vunpack.c.l.bf16 %v766
        %v783 = vunpack.c.l.bf16 %v767
        %v784 = vunpack.c.l.bf16 %v768
        %v785 = vld [vmem:[%s377 + $0x4] sm:$0xf]
        %v786 = vld [vmem:[%s377 + $0xc] sm:$0xf]
        %v787 = vld [vmem:[%s377 + $0x14] sm:$0xf]
        %v788 = vld [vmem:[%s377 + $0x1c] sm:$0xf]
        %v789 = vld [vmem:[%s377 + $0x24] sm:$0xf]
        %v790 = vld [vmem:[%s377 + $0x2c] sm:$0xf]
        %v791 = vld [vmem:[%s377 + $0x34] sm:$0xf]
        %v792 = vld [vmem:[%s377 + $0x3c] sm:$0xf]
        %v793 = vld [vmem:[%s377 + $0x44] sm:$0xf]
        %v794 = vld [vmem:[%s377 + $0x4c] sm:$0xf]
        %v795 = vld [vmem:[%s377 + $0x54] sm:$0xf]
        %v796 = vld [vmem:[%s377 + $0x5c] sm:$0xf]
        %v797 = vld [vmem:[%s377 + $0x64] sm:$0xf]
        %v798 = vld [vmem:[%s377 + $0x6c] sm:$0xf]
        %v799 = vld [vmem:[%s377 + $0x74] sm:$0xf]
        %v800 = vld [vmem:[%s377 + $0x7c] sm:$0xf]
        %v801 = vunpack.c.l.bf16 %v785
        %v802 = vunpack.c.l.bf16 %v786
        %v803 = vunpack.c.l.bf16 %v787
        %v804 = vunpack.c.l.bf16 %v788
        %v805 = vunpack.c.l.bf16 %v789
        %v806 = vunpack.c.l.bf16 %v790
        %v807 = vunpack.c.l.bf16 %v791
        %v808 = vunpack.c.l.bf16 %v792
        %v809 = vunpack.c.l.bf16 %v793
        %v810 = vunpack.c.l.bf16 %v794
        %v811 = vunpack.c.l.bf16 %v795
        %v812 = vunpack.c.l.bf16 %v796
        %v813 = vunpack.c.l.bf16 %v797
        %v814 = vunpack.c.l.bf16 %v798
        %v815 = vunpack.c.l.bf16 %v799
        %v816 = vunpack.c.l.bf16 %v800
        %v817 = vmul.f32 %v769, %v513
        %v818 = vmul.f32 %v770, %v513
        %v819 = vmul.f32 %v771, %v513
        %v820 = vmul.f32 %v772, %v513
        %v821 = vmul.f32 %v773, %v513
        %v822 = vmul.f32 %v774, %v513
        %v823 = vmul.f32 %v775, %v513
        %v824 = vmul.f32 %v776, %v513
        %v825 = vmul.f32 %v777, %v513
        %v826 = vmul.f32 %v778, %v513
        %v827 = vmul.f32 %v779, %v513
        %v828 = vmul.f32 %v780, %v513
        %v829 = vmul.f32 %v781, %v513
        %v830 = vmul.f32 %v782, %v513
        %v831 = vmul.f32 %v783, %v513
        %v832 = vmul.f32 %v784, %v513
        %v833 = vadd.f32 %v817, %v535
        %v834 = vadd.f32 %v818, %v535
        %v835 = vadd.f32 %v819, %v535
        %v836 = vadd.f32 %v820, %v535
        %v837 = vadd.f32 %v821, %v535
        %v838 = vadd.f32 %v822, %v535
        %v839 = vadd.f32 %v823, %v535
        %v840 = vadd.f32 %v824, %v535
        %v841 = vadd.f32 %v825, %v535
        %v842 = vadd.f32 %v826, %v535
        %v843 = vadd.f32 %v827, %v535
        %v844 = vadd.f32 %v828, %v535
        %v845 = vadd.f32 %v829, %v535
        %v846 = vadd.f32 %v830, %v535
        %v847 = vadd.f32 %v831, %v535
        %v848 = vadd.f32 %v832, %v535
        %vm849 = vcmp.ge.f32.partialorder %v833, 0.0
        %vm850 = vcmp.ge.f32.partialorder %v834, 0.0
        %vm851 = vcmp.ge.f32.partialorder %v835, 0.0
        %vm852 = vcmp.ge.f32.partialorder %v836, 0.0
        %vm853 = vcmp.ge.f32.partialorder %v837, 0.0
        %vm854 = vcmp.ge.f32.partialorder %v838, 0.0
        %vm855 = vcmp.ge.f32.partialorder %v839, 0.0
        %vm856 = vcmp.ge.f32.partialorder %v840, 0.0
        %vm857 = vcmp.ge.f32.partialorder %v841, 0.0
        %vm858 = vcmp.ge.f32.partialorder %v842, 0.0
        %vm859 = vcmp.ge.f32.partialorder %v843, 0.0
        %vm860 = vcmp.ge.f32.partialorder %v844, 0.0
        %vm861 = vcmp.ge.f32.partialorder %v845, 0.0
        %vm862 = vcmp.ge.f32.partialorder %v846, 0.0
        %vm863 = vcmp.ge.f32.partialorder %v847, 0.0
        %vm864 = vcmp.ge.f32.partialorder %v848, 0.0
        %v865 = vmul.f32 %v833, 0.2
        %v866 = vmul.f32 %v834, 0.2
        %v867 = vmul.f32 %v835, 0.2
        %v868 = vmul.f32 %v836, 0.2
        %v869 = vmul.f32 %v837, 0.2
        %v870 = vmul.f32 %v838, 0.2
        %v871 = vmul.f32 %v839, 0.2
        %v872 = vmul.f32 %v840, 0.2
        %v873 = vmul.f32 %v841, 0.2
        %v874 = vmul.f32 %v842, 0.2
        %v875 = vmul.f32 %v843, 0.2
        %v876 = vmul.f32 %v844, 0.2
        %v877 = vmul.f32 %v845, 0.2
        %v878 = vmul.f32 %v846, 0.2
        %v879 = vmul.f32 %v847, 0.2
        %v880 = vmul.f32 %v848, 0.2
        %v881 = vsel %vm849, %v833, %v865
        %v882 = vsel %vm850, %v834, %v866
        %v883 = vsel %vm851, %v835, %v867
        %v884 = vsel %vm852, %v836, %v868
        %v885 = vsel %vm853, %v837, %v869
        %v886 = vsel %vm854, %v838, %v870
        %v887 = vsel %vm855, %v839, %v871
        %v888 = vsel %vm856, %v840, %v872
        %v889 = vsel %vm857, %v841, %v873
        %v890 = vsel %vm858, %v842, %v874
        %v891 = vsel %vm859, %v843, %v875
        %v892 = vsel %vm860, %v844, %v876
        %v893 = vsel %vm861, %v845, %v877
        %v894 = vsel %vm862, %v846, %v878
        %v895 = vsel %vm863, %v847, %v879
        %v896 = vsel %vm864, %v848, %v880
        %v897 = vmul.f32 %v801, %v605
        %v898 = vmul.f32 %v802, %v605
        %v899 = vmul.f32 %v803, %v605
        %v900 = vmul.f32 %v804, %v605
        %v901 = vmul.f32 %v805, %v605
        %v902 = vmul.f32 %v806, %v605
        %v903 = vmul.f32 %v807, %v605
        %v904 = vmul.f32 %v808, %v605
        %v905 = vmul.f32 %v809, %v605
        %v906 = vmul.f32 %v810, %v605
        %v907 = vmul.f32 %v811, %v605
        %v908 = vmul.f32 %v812, %v605
        %v909 = vmul.f32 %v813, %v605
        %v910 = vmul.f32 %v814, %v605
        %v911 = vmul.f32 %v815, %v605
        %v912 = vmul.f32 %v816, %v605
        %v913 = vadd.f32 %v881, %v897
        %v914 = vadd.f32 %v882, %v898
        %v915 = vadd.f32 %v883, %v899
        %v916 = vadd.f32 %v884, %v900
        %v917 = vadd.f32 %v885, %v901
        %v918 = vadd.f32 %v886, %v902
        %v919 = vadd.f32 %v887, %v903
        %v920 = vadd.f32 %v888, %v904
        %v921 = vadd.f32 %v889, %v905
        %v922 = vadd.f32 %v890, %v906
        %v923 = vadd.f32 %v891, %v907
        %v924 = vadd.f32 %v892, %v908
        %v925 = vadd.f32 %v893, %v909
        %v926 = vadd.f32 %v894, %v910
        %v927 = vadd.f32 %v895, %v911
        %v928 = vadd.f32 %v896, %v912
        %v929 = vadd.f32 %v913, %v643
        %v930 = vadd.f32 %v914, %v643
        %v931 = vadd.f32 %v915, %v643
        %v932 = vadd.f32 %v916, %v643
        %v933 = vadd.f32 %v917, %v643
        %v934 = vadd.f32 %v918, %v643
        %v935 = vadd.f32 %v919, %v643
        %v936 = vadd.f32 %v920, %v643
        %v937 = vadd.f32 %v921, %v643
        %v938 = vadd.f32 %v922, %v643
        %v939 = vadd.f32 %v923, %v643
        %v940 = vadd.f32 %v924, %v643
        %v941 = vadd.f32 %v925, %v643
        %v942 = vadd.f32 %v926, %v643
        %v943 = vadd.f32 %v927, %v643
        %v944 = vadd.f32 %v928, %v643
        %v945 = vmul.f32 %v929, %v665
        %v946 = vmul.f32 %v930, %v665
        %v947 = vmul.f32 %v931, %v665
        %v948 = vmul.f32 %v932, %v665
        %v949 = vmul.f32 %v933, %v665
        %v950 = vmul.f32 %v934, %v665
        %v951 = vmul.f32 %v935, %v665
        %v952 = vmul.f32 %v936, %v665
        %v953 = vmul.f32 %v937, %v665
        %v954 = vmul.f32 %v938, %v665
        %v955 = vmul.f32 %v939, %v665
        %v956 = vmul.f32 %v940, %v665
        %v957 = vmul.f32 %v941, %v665
        %v958 = vmul.f32 %v942, %v665
        %v959 = vmul.f32 %v943, %v665
        %v960 = vmul.f32 %v944, %v665
        %v961 = vadd.f32 %v945, %v687
        %v962 = vadd.f32 %v946, %v687
        %v963 = vadd.f32 %v947, %v687
        %v964 = vadd.f32 %v948, %v687
        %v965 = vadd.f32 %v949, %v687
        %v966 = vadd.f32 %v950, %v687
        %v967 = vadd.f32 %v951, %v687
        %v968 = vadd.f32 %v952, %v687
        %v969 = vadd.f32 %v953, %v687
        %v970 = vadd.f32 %v954, %v687
        %v971 = vadd.f32 %v955, %v687
        %v972 = vadd.f32 %v956, %v687
        %v973 = vadd.f32 %v957, %v687
        %v974 = vadd.f32 %v958, %v687
        %v975 = vadd.f32 %v959, %v687
        %v976 = vadd.f32 %v960, %v687
        %vm977 = vcmp.ge.f32.partialorder %v961, 0.0
        %vm978 = vcmp.ge.f32.partialorder %v962, 0.0
        %vm979 = vcmp.ge.f32.partialorder %v963, 0.0
        %vm980 = vcmp.ge.f32.partialorder %v964, 0.0
        %vm981 = vcmp.ge.f32.partialorder %v965, 0.0
        %vm982 = vcmp.ge.f32.partialorder %v966, 0.0
        %vm983 = vcmp.ge.f32.partialorder %v967, 0.0
        %vm984 = vcmp.ge.f32.partialorder %v968, 0.0
        %vm985 = vcmp.ge.f32.partialorder %v969, 0.0
        %vm986 = vcmp.ge.f32.partialorder %v970, 0.0
        %vm987 = vcmp.ge.f32.partialorder %v971, 0.0
        %vm988 = vcmp.ge.f32.partialorder %v972, 0.0
        %vm989 = vcmp.ge.f32.partialorder %v973, 0.0
        %vm990 = vcmp.ge.f32.partialorder %v974, 0.0
        %vm991 = vcmp.ge.f32.partialorder %v975, 0.0
        %vm992 = vcmp.ge.f32.partialorder %v976, 0.0
        %v993 = vmul.f32 %v961, 0.2
        %v994 = vmul.f32 %v962, 0.2
        %v995 = vmul.f32 %v963, 0.2
        %v996 = vmul.f32 %v964, 0.2
        %v997 = vmul.f32 %v965, 0.2
        %v998 = vmul.f32 %v966, 0.2
        %v999 = vmul.f32 %v967, 0.2
        %v1000 = vmul.f32 %v968, 0.2
        %v1001 = vmul.f32 %v969, 0.2
        %v1002 = vmul.f32 %v970, 0.2
        %v1003 = vmul.f32 %v971, 0.2
        %v1004 = vmul.f32 %v972, 0.2
        %v1005 = vmul.f32 %v973, 0.2
        %v1006 = vmul.f32 %v974, 0.2
        %v1007 = vmul.f32 %v975, 0.2
        %v1008 = vmul.f32 %v976, 0.2
        %v1009 = vsel %vm977, %v961, %v993
        %v1010 = vsel %vm978, %v962, %v994
        %v1011 = vsel %vm979, %v963, %v995
        %v1012 = vsel %vm980, %v964, %v996
        %v1013 = vsel %vm981, %v965, %v997
        %v1014 = vsel %vm982, %v966, %v998
        %v1015 = vsel %vm983, %v967, %v999
        %v1016 = vsel %vm984, %v968, %v1000
        %v1017 = vsel %vm985, %v969, %v1001
        %v1018 = vsel %vm986, %v970, %v1002
        %v1019 = vsel %vm987, %v971, %v1003
        %v1020 = vsel %vm988, %v972, %v1004
        %v1021 = vsel %vm989, %v973, %v1005
        %v1022 = vsel %vm990, %v974, %v1006
        %v1023 = vsel %vm991, %v975, %v1007
        %v1024 = vsel %vm992, %v976, %v1008
        %v1025 = vadd.f32 %v737, %v1009
        %v1026 = vadd.f32 %v738, %v1010
        %v1027 = vadd.f32 %v739, %v1011
        %v1028 = vadd.f32 %v740, %v1012
        %v1029 = vadd.f32 %v741, %v1013
        %v1030 = vadd.f32 %v742, %v1014
        %v1031 = vadd.f32 %v743, %v1015
        %v1032 = vadd.f32 %v744, %v1016
        %v1033 = vadd.f32 %v745, %v1017
        %v1034 = vadd.f32 %v746, %v1018
        %v1035 = vadd.f32 %v747, %v1019
        %v1036 = vadd.f32 %v748, %v1020
        %v1037 = vadd.f32 %v749, %v1021
        %v1038 = vadd.f32 %v750, %v1022
        %v1039 = vadd.f32 %v751, %v1023
        %v1040 = vadd.f32 %v752, %v1024
        %v1041 = vadd.f32 %v1025, %v1026
        %v1042 = vadd.f32 %v1027, %v1028
        %v1043 = vadd.f32 %v1029, %v1030
        %v1044 = vadd.f32 %v1031, %v1032
        %v1045 = vadd.f32 %v1033, %v1034
        %v1046 = vadd.f32 %v1035, %v1036
        %v1047 = vadd.f32 %v1037, %v1038
        %v1048 = vadd.f32 %v1039, %v1040
        %v1049 = vmul.f32 %v1041, 0.25
        %v1050 = vmul.f32 %v1042, 0.25
        %v1051 = vmul.f32 %v1043, 0.25
        %v1052 = vmul.f32 %v1044, 0.25
        %v1053 = vmul.f32 %v1045, 0.25
        %v1054 = vmul.f32 %v1046, 0.25
        %v1055 = vmul.f32 %v1047, 0.25
        %v1056 = vmul.f32 %v1048, 0.25
        %1057 = vst [vmem:[%s438] sm:$0xff] %v1049
        %1058 = vst [vmem:[%s438 + $0x8] sm:$0xff] %v1050
        %1059 = vst [vmem:[%s438 + $0x10] sm:$0xff] %v1051
        %1060 = vst [vmem:[%s438 + $0x18] sm:$0xff] %v1052
        %1061 = vst [vmem:[%s438 + $0x20] sm:$0xff] %v1053
        %1062 = vst [vmem:[%s438 + $0x28] sm:$0xff] %v1054
        %1063 = vst [vmem:[%s438 + $0x30] sm:$0xff] %v1055
        %1064 = vst [vmem:[%s438 + $0x38] sm:$0xff] %v1056
        %s1065 = sand.u32 %s217, 1
        %s1066 = scalar_lea.sflag [#allocation4], %s1065
        %s1067 = sand.u32 %s217, 1
        %s1068 = smul.addr %s1067, 64
        %s1069 = scalar_lea.vmem [#allocation16], %s1068
        // Predicated region
        $region85: #{down_res_layer.11} parent=51 // pred_check
          %p1070 = pneg %p227
        $region86: #{down_res_layer.11} parent=51 // pred_check_branch
          %1072 = sbr.rel (%p1070) target = $region88
        $region87: #{down_res_layer.11} parent=51 // pred_region
          %s1074 = ssub.s32 1024, 1024
          %1075 = vsyncadd %s1066, %s1074
          %s1076 = smul.addr %s31, 8
          %s1077 = smul.addr %s1076, 128
          %s1078 = scalar_lea.hbm %s8, %s1077
          %s1079 = sshll.u32 %s1069, 4
          %s1080 = int_to_ptr.vmem [resolvable:$true] %s1079
          %1085 = dma.vmem_to_hbm [thread:$0]  %s1080, 1024, %s1078, %s1066, 128, 128, 8
        $region88: #{down_res_layer.11} parent=51 // pred_fallthru
          _
      $region52: #{down_res_layer.11} parent=5 // pred_fallthru
        _
      %p1086 = scmp.le.s32.totalorder 2, %s26
      // Predicated region
      $region89: #{down_res_layer.11} parent=5 // pred_check
        %p1087 = pneg %p1086
      $region90: #{down_res_layer.11} parent=5 // pred_check_branch
        %1089 = sbr.rel (%p1087) target = $region92
      $region91: #{down_res_layer.11} parent=5 // pred_region
        %s1090 = ssub.s32 %s26, 2
        // Predicated region
        $region93: #{down_res_layer.11} parent=91 // pred_check
          %p1091 = pneg %p233
        $region94: #{down_res_layer.11} parent=91 // pred_check_branch
          %1093 = sbr.rel (%p1091) target = $region96
        $region95: #{down_res_layer.11} parent=91 // pred_region
          %s1094 = sand.u32 %s218, 1
          %s1095 = scalar_lea.sflag [#allocation4], %s1094
          %s1096 = sand.u32 %s218, 1
          %s1097 = smul.addr %s1096, 64
          %s1098 = scalar_lea.vmem [#allocation16], %s1097
          %1099 = dma.done %s1095, 1024
        $region96: #{down_res_layer.11} parent=91 // pred_fallthru
          _
      $region92: #{down_res_layer.11} parent=5 // pred_fallthru
        _
    $region6: #{down_res_layer.11} parent=1 // loop_footer
      %s30 = sadd.s32 1, %s26
    $region7: #{down_res_layer.11} parent=1 // loop_footer_branch
      %25 = sbr.rel target = $region3
    $region8: #{down_res_layer.11} parent=1 // loop_exit
      _
    %1100 = vsyncpa [#allocation3], 1
    %s1101 = scalar_lea.sflag [#allocation3], 1
    %1102 = vsyncpa %s1101, 1
    %1103 = vsyncpa [#allocation6], 1
    %s1104 = scalar_lea.sflag [#allocation6], 1
    %1105 = vsyncpa %s1104, 1
    %1106 = vsyncpa [#allocation9], 1
    %1107 = vsyncpa [#allocation12], 1
    %1108 = vsyncpa [#allocation15], 1
    %1109 = vsyncpa [#allocation4], 1
    %s1110 = scalar_lea.sflag [#allocation4], 1
    %1111 = vsyncpa %s1110, 1

</llo_original>
